<compile_context>
chip_gen: v6e
topology: v6e:2x2x1
jax: 0.10.0
libtpu: 0.0.40
codegen_flags: <defaults>
</compile_context>

<pallas_src>
import math

import jax
import jax.numpy as jnp
from jax.experimental import pallas as pl
from jax.experimental.pallas import tpu as pltpu

# ---------------- configuration (small shapes, consistent with the module) ----------------
B = 2            # batch
N = 8            # num_agents_max (sequence length)
D_SUB = 4        # d_subobs
D_EMB = 128      # d_embed_input == d_embed_context
D_MODEL = 128    # d_model == d_model_decoder
H = 8            # num_heads
DK = D_MODEL // H
D_FF = 256       # d_ff == d_ff_decoder
L_ENC = 2        # n_layers_encoder (n_layers_decoder = 1, single decoder block below)
EPS = 1e-5
CLIP_CONTROL = 8.0 / 15.0   # clip_action_control
CLIP_LOG_STD = 10.0         # clip_action_log_std
BIG = 1e9                   # masked_fill magnitude
# is_bias = False for attention / generator projections; FFN & embedding keep nn.Linear bias.
# dr_rate = 0 -> dropout is identity.

# Batch fusion: ITEMS_PER_STEP items are stacked along sublanes and processed per grid
# step.  Default = B (grid=(1,)): best on single-TC v5e / v6e.  On v7x set to B // 2 so
# the "parallel" grid axis keeps both TensorCores busy.
ITEMS_PER_STEP = B
G = ITEMS_PER_STEP
GRID = B // G
GN = G * N
D_OUT = 128                 # lane-dense padded output width; lanes [0:2*GN] = [mean, std]
assert B % G == 0 and 2 * GN <= D_OUT

# ---- slab indices -------------------------------------------------------------------------
# proj slab:  [wq_l, wkv_l, wo_l] per encoder layer, dec_wq, dec_wkv, dec_wo, gen_wq, gen_wk
P_DEC = 3 * L_ENC
P_GENQ = P_DEC + 3
P_GENK = P_DEC + 4
# ln slab:    [ln1_l, ln2_l] per encoder layer, enc_norm, dec_ln2, dec_ln3, dec_norm
LN_ENC_FINAL = 2 * L_ENC
LN_DEC2 = 2 * L_ENC + 1
LN_DEC3 = 2 * L_ENC + 2
LN_DEC_FINAL = 2 * L_ENC + 3

PARAM_ORDER = ["emb_w", "proj", "ffw1", "ffw2", "lnp", "b128", "b256"]


# ---------------- in-kernel helpers ----------------
def _layer_norm(x, gb):
    # gb: (2, D) -> gamma = gb[0], beta = gb[1]; torch LayerNorm (biased var)
    mu = jnp.mean(x, axis=-1, keepdims=True)
    var = jnp.mean((x - mu) ** 2, axis=-1, keepdims=True)
    return (x - mu) * jax.lax.rsqrt(var + EPS) * gb[0:1, :] + gb[1:2, :]


def _mha(q_in, kv_in, wq, wkv, wo, keep, fill):
    """MultiHeadAttentionLayer (q_fc / shared kv_fc / out_fc, no biases).

    q_in: (Tq, D_EMB) f32, kv_in: (Tk, D_EMB) f32.
    wq/wkv: (D_EMB, D_MODEL) bf16 (1/sqrt(d_k) pre-folded into wq), wo: (D_MODEL, D_EMB) bf16.
    keep: (Tq, Tk) 0/1, fill: (Tq, Tk) additive fill (0 / -1e9 in-item masked / -2e9 cross-item).
    Shared kv_fc => V == K (single projection).
    """
    q = jnp.dot(q_in.astype(jnp.bfloat16), wq, preferred_element_type=jnp.float32)     # (Tq,128)
    kv = jnp.dot(kv_in.astype(jnp.bfloat16), wkv, preferred_element_type=jnp.float32)  # (Tk,128)

    # head split only for the tiny score / PV step (static lane slices, leading-dim stack)
    q3 = jnp.stack([q[:, h * DK:(h + 1) * DK] for h in range(H)], axis=0)     # (H,Tq,DK)
    k3 = jnp.stack([kv[:, h * DK:(h + 1) * DK] for h in range(H)], axis=0)    # (H,Tk,DK)

    s = jnp.einsum('hqc,hkc->hqk', q3, k3, preferred_element_type=jnp.float32)  # (H,Tq,Tk)
    s = s * keep[None] + fill[None]        # exact masked_fill(-1e9) semantics
    s = s - jnp.max(s, axis=-1, keepdims=True)
    p = jnp.exp(s)
    p = p * pl.reciprocal(jnp.sum(p, axis=-1, keepdims=True), approx=True)
    ctx = jnp.einsum('hqk,hkc->hqc', p, k3, preferred_element_type=jnp.float32)  # (H,Tq,DK)

    ctx2 = jnp.concatenate([ctx[h] for h in range(H)], axis=-1)                  # (Tq,128)
    return jnp.dot(ctx2.astype(jnp.bfloat16), wo, preferred_element_type=jnp.float32)


# ---------------- the kernel (G fused batch items per grid step) ----------------
def policy_kernel(
    x_ref, src_keep_ref, src_fill_ref, tgt_keep_ref, tgt_fill_ref, ctx_keep_ref,
    emb_w_ref, proj_ref, ffw1_ref, ffw2_ref, lnp_ref, b128_ref, b256_ref,
    out_ref, hc_ref,
):
    x = x_ref[0]               # (GN, D_SUB)
    src_keep = src_keep_ref[0]  # (GN, GN)
    src_fill = src_fill_ref[0]  # (GN, GN)
    tgt_keep = tgt_keep_ref[0]  # (G, GN)
    tgt_fill = tgt_fill_ref[0]  # (G, GN)
    ctx_keep = ctx_keep_ref[0]  # (G, GN)  (pad == 1) / count(pad == 0), block-diagonal

    # --- src_embed: LinearEmbedding ---
    h = jnp.dot(x.astype(jnp.bfloat16), emb_w_ref[...],
                preferred_element_type=jnp.float32) + b128_ref[0]                 # (GN, D_EMB)

    # --- encoder: pre-LN residual blocks ---
    for l in range(L_ENC):
        y = _layer_norm(h, lnp_ref[2 * l])
        h = h + _mha(y, y, proj_ref[3 * l], proj_ref[3 * l + 1], proj_ref[3 * l + 2],
                     src_keep, src_fill)
        y = _layer_norm(h, lnp_ref[2 * l + 1])
        f = jnp.maximum(
            jnp.dot(y.astype(jnp.bfloat16), ffw1_ref[l],
                    preferred_element_type=jnp.float32) + b256_ref[l], 0.0)
        h = h + jnp.dot(f.astype(jnp.bfloat16), ffw2_ref[l],
                        preferred_element_type=jnp.float32) + b128_ref[1 + l]
    enc_out = _layer_norm(h, lnp_ref[LN_ENC_FINAL])                               # (GN, D_EMB)

    # --- get_context_node (reference arithmetic; 1/count folded into ctx_keep on host) ---
    h_c = jnp.dot(ctx_keep, enc_out, preferred_element_type=jnp.float32)          # (G, D_EMB)

    # --- decoder: single block, cross-attention + FFN, pre-LN residual, final norm ---
    t = h_c
    y = _layer_norm(t, lnp_ref[LN_DEC2])
    t = t + _mha(y, enc_out, proj_ref[P_DEC], proj_ref[P_DEC + 1], proj_ref[P_DEC + 2],
                 tgt_keep, tgt_fill)
    y = _layer_norm(t, lnp_ref[LN_DEC3])
    f = jnp.maximum(
        jnp.dot(y.astype(jnp.bfloat16), ffw1_ref[L_ENC],
                preferred_element_type=jnp.float32) + b256_ref[L_ENC], 0.0)
    t = t + jnp.dot(f.astype(jnp.bfloat16), ffw2_ref[L_ENC],
                    preferred_element_type=jnp.float32) + b128_ref[1 + L_ENC]
    dec_out = _layer_norm(t, lnp_ref[LN_DEC_FINAL])                               # (G, D_EMB)

    # --- GaussControlDistGenerator head (1/sqrt(d_model) folded into gen_wq) ---
    qg = jnp.dot(dec_out.astype(jnp.bfloat16), proj_ref[P_GENQ],
                 preferred_element_type=jnp.float32)                              # (G, D_MODEL)
    kg = jnp.dot(enc_out.astype(jnp.bfloat16), proj_ref[P_GENK],
                 preferred_element_type=jnp.float32)                              # (GN, D_MODEL)
    logits = jax.lax.dot_general(qg, kg, (((1,), (1,)), ((), ())),
                                 preferred_element_type=jnp.float32)              # (G, GN)
    mean = CLIP_CONTROL * jnp.tanh(logits) * tgt_keep
    # TODO(synk): exact GaussControlDistGenerator source unavailable; std head assumed to be
    #             the same pointer logits clipped to [-clip_action_log_std, -2] then exp().
    log_std = jnp.clip(logits, -CLIP_LOG_STD, -2.0)
    std = jnp.exp(log_std)

    # one lane-dense (G, 128) store: lanes [0:GN] = mean, [GN:2*GN] = std, rest zero
    out_ref[0] = jnp.concatenate(
        [mean, std, jnp.zeros((G, D_OUT - 2 * GN), jnp.float32)], axis=-1)
    hc_ref[0] = h_c


# ---------------- host-side wrapper (glue) ----------------
def _full_spec(shape):
    nd = len(shape)
    return pl.BlockSpec(shape, lambda s, _nd=nd: (0,) * _nd)


def _step_spec(shape):
    nd = len(shape)
    return pl.BlockSpec((1,) + tuple(shape[1:]), lambda s, _nd=nd: (s,) + (0,) * (_nd - 1))


def policy_forward(kparams, agent_embeddings, pad_tokens):
    """LazinessAllocator.forward (policy path): returns (out (B, 2N), h_c (B, 1, D_EMB))."""
    ae = agent_embeddings[:, :, :D_SUB].astype(jnp.float32).reshape(GRID, GN, D_SUB)
    pad = pad_tokens.astype(jnp.float32)

    # make_pad_mask: pad_idx == 1; the context token (zeros) is never pad.
    valid = (pad != 1.0).astype(jnp.float32)                                     # (B, N)
    valid_g = valid.reshape(GRID, G, N)
    valid_flat = valid_g.reshape(GRID, GN)
    eye_g = jnp.eye(G, dtype=jnp.float32)
    same_kk = jnp.kron(eye_g, jnp.ones((N, N), jnp.float32))                     # (GN, GN)
    same_qk = jnp.kron(eye_g, jnp.ones((1, N), jnp.float32))                     # (G, GN)

    # Encoder self-attn: keep = query-valid & key-valid & same-item; fill = 0 keep,
    # -1e9 in-item masked, -2e9 cross-item (fully-padded rows then normalize over their
    # own item's N keys, exactly like the unfused reference masked_fill arithmetic).
    src_keep = valid_flat[:, :, None] * valid_flat[:, None, :] * same_kk[None]   # (GRID,GN,GN)
    src_fill = (src_keep - 1.0) * BIG - (1.0 - same_kk[None]) * BIG
    # Decoder cross-attn / generator mask (context query is never padded).
    tgt_keep = valid_flat[:, None, :] * same_qk[None]                            # (GRID,G,GN)
    tgt_fill = (tgt_keep - 1.0) * BIG - (1.0 - same_qk[None]) * BIG
    # get_context_node: keep rows where pad == 1, divide by count of pad == 0 (as in the
    # reference); the 1/count is folded on the host so the kernel does one matvec.
    cnt = jnp.sum(valid_g, axis=2, keepdims=True)                                # (GRID,G,1)
    keep_gn = (1.0 - valid_g) / cnt                                              # (GRID,G,N)
    ctx_keep = (keep_gn[:, :, None, :] * eye_g[None, :, :, None]).reshape(GRID, G, GN)

    data = [ae, src_keep, src_fill, tgt_keep, tgt_fill, ctx_keep]
    weights = [kparams[k] for k in PARAM_ORDER]

    out, hc = pl.pallas_call(
        policy_kernel,
        out_shape=(jax.ShapeDtypeStruct((GRID, G, D_OUT), jnp.float32),
                   jax.ShapeDtypeStruct((GRID, G, D_EMB), jnp.float32)),
        grid_spec=pltpu.PrefetchScalarGridSpec(
            num_scalar_prefetch=0,
            grid=(GRID,),
            in_specs=[_step_spec(a.shape) for a in data]
                     + [_full_spec(w.shape) for w in weights],
            out_specs=(_step_spec((GRID, G, D_OUT)), _step_spec((GRID, G, D_EMB))),
        ),
        # "parallel": shards the (possibly >1) batch-group grid axis across TensorCores
        # on v7x; no-op on single-TC v5e/v6e where GRID == 1 anyway.
        compiler_params=pltpu.CompilerParams(dimension_semantics=("parallel",)),
    )(*data, *weights)

    # un-fuse: batch item b = step*G + g; extract its own N-wide block from the fused lanes.
    out2 = out.reshape(B, D_OUT)
    gidx = jnp.arange(G)
    mean = out2[:, :GN].reshape(GRID, G, G, N)[:, gidx, gidx, :].reshape(B, N)
    std = out2[:, GN:2 * GN].reshape(GRID, G, G, N)[:, gidx, gidx, :].reshape(B, N)
    x = jnp.concatenate([mean, std], axis=-1)                                    # (B, 2N)
    h_c = hc.reshape(B, 1, D_EMB)
    # decoder_out is not returned: MyRLlibTorchWrapperControl.forward never consumes it.
    return x, h_c


def wrapper_forward(kparams, obs):
    """MyRLlibTorchWrapperControl.forward (share_layers=True): returns (x, values)."""
    x, h_c = policy_forward(kparams, obs["agent_embeddings"], obs["pad_tokens"])
    values = h_c[:, 0, :]   # self.values = h_c_N.squeeze(1)
    # NOTE: value_branch is only used in value_function(), not in forward(); omitted here.
    return x, values


# ---------------- parameter init (torch-like f32 layout) + kernel-layout prep ----------------
def init_params(key):
    keys = jax.random.split(key, 16)

    def lin(k, fan_in, shape):
        return (1.0 / math.sqrt(fan_in)) * jax.random.normal(k, shape, dtype=jnp.float32)

    ln = jnp.stack([jnp.ones((D_EMB,), jnp.float32), jnp.zeros((D_EMB,), jnp.float32)])  # (2, D)
    p = {}
    p["emb_w"] = lin(keys[0], D_SUB, (D_SUB, D_EMB))
    p["emb_b"] = jnp.zeros((1, D_EMB), jnp.float32)
    p["enc_wq"] = lin(keys[1], D_EMB, (L_ENC, D_EMB, D_MODEL))
    p["enc_wkv"] = lin(keys[2], D_EMB, (L_ENC, D_EMB, D_MODEL))
    p["enc_wo"] = lin(keys[3], D_MODEL, (L_ENC, D_MODEL, D_EMB))
    p["enc_ln1"] = jnp.tile(ln[None], (L_ENC, 1, 1))
    p["enc_ln2"] = jnp.tile(ln[None], (L_ENC, 1, 1))
    p["enc_ffw1"] = lin(keys[4], D_EMB, (L_ENC, D_EMB, D_FF))
    p["enc_ffb1"] = jnp.zeros((L_ENC, 1, D_FF), jnp.float32)
    p["enc_ffw2"] = lin(keys[5], D_FF, (L_ENC, D_FF, D_EMB))
    p["enc_ffb2"] = jnp.zeros((L_ENC, 1, D_EMB), jnp.float32)
    p["enc_norm"] = ln
    p["dec_wq"] = lin(keys[6], D_EMB, (D_EMB, D_MODEL))
    p["dec_wkv"] = lin(keys[7], D_EMB, (D_EMB, D_MODEL))
    p["dec_wo"] = lin(keys[8], D_MODEL, (D_MODEL, D_EMB))
    p["dec_ln2"] = ln
    p["dec_ln3"] = ln
    p["dec_ffw1"] = lin(keys[9], D_EMB, (D_EMB, D_FF))
    p["dec_ffb1"] = jnp.zeros((1, D_FF), jnp.float32)
    p["dec_ffw2"] = lin(keys[10], D_FF, (D_FF, D_EMB))
    p["dec_ffb2"] = jnp.zeros((1, D_EMB), jnp.float32)
    p["dec_norm"] = ln
    p["gen_wq"] = lin(keys[11], D_EMB, (D_EMB, D_MODEL))
    p["gen_wk"] = lin(keys[12], D_EMB, (D_EMB, D_MODEL))
    return p


def prepare_kernel_params(p):
    """Collapse the per-module weights into 7 slabs: bf16 matmul mats, f32 LN / biases.

    Attention scale 1/sqrt(d_k) is folded into each q_fc weight and 1/sqrt(d_model) into
    the generator q_fc weight, so the kernel performs no score scaling.
    """
    inv_dk = 1.0 / math.sqrt(DK)
    inv_dm = 1.0 / math.sqrt(D_MODEL)

    proj = []
    for l in range(L_ENC):
        proj += [p["enc_wq"][l] * inv_dk, p["enc_wkv"][l], p["enc_wo"][l]]
    proj += [p["dec_wq"] * inv_dk, p["dec_wkv"], p["dec_wo"],
             p["gen_wq"] * inv_dm, p["gen_wk"]]
    proj = jnp.stack(proj).astype(jnp.bfloat16)                                   # (3L+5,128,128)

    ffw1 = jnp.concatenate([p["enc_ffw1"], p["dec_ffw1"][None]], 0).astype(jnp.bfloat16)
    ffw2 = jnp.concatenate([p["enc_ffw2"], p["dec_ffw2"][None]], 0).astype(jnp.bfloat16)

    lnl = []
    for l in range(L_ENC):
        lnl += [p["enc_ln1"][l], p["enc_ln2"][l]]
    lnl += [p["enc_norm"], p["dec_ln2"], p["dec_ln3"], p["dec_norm"]]
    lnp = jnp.stack(lnl)                                                          # (2L+4,2,128)

    b128 = jnp.concatenate([p["emb_b"][None], p["enc_ffb2"], p["dec_ffb2"][None]], 0)  # (L+2,1,128)
    b256 = jnp.concatenate([p["enc_ffb1"], p["dec_ffb1"][None]], 0)                    # (L+1,1,256)

    return {"emb_w": p["emb_w"].astype(jnp.bfloat16), "proj": proj,
            "ffw1": ffw1, "ffw2": ffw2, "lnp": lnp, "b128": b128, "b256": b256}


if __name__ == "__main__":
    key = jax.random.PRNGKey(0)
    pkey, dkey = jax.random.split(key)
    params = init_params(pkey)
    kparams = prepare_kernel_params(params)
    kparams = jax.tree_util.tree_map(jax.block_until_ready, kparams)

    # pad_tokens: 1 => padded agent (its embedding must be 0), 0 => real agent
    pad_tokens = jnp.array(
        [[0, 0, 0, 0, 0, 0, 1, 1],
         [0, 0, 0, 0, 0, 1, 1, 1]], dtype=jnp.float32)                      # (B, N)
    agent_embeddings = jax.random.normal(dkey, (B, N, D_SUB), dtype=jnp.float32)
    agent_embeddings = agent_embeddings * (pad_tokens == 0)[:, :, None]     # zero padded rows
    obs = {"agent_embeddings": agent_embeddings, "pad_tokens": pad_tokens,
           "net_topology": jnp.zeros((B, N, N), jnp.float32)}               # unused by forward

    x, values = wrapper_forward(kparams, obs)
    jax.block_until_ready((x, values))

    assert x.shape == (B, 2 * N), x.shape
    assert values.shape == (B, D_EMB), values.shape
    assert bool(jnp.all(jnp.isfinite(x))) and bool(jnp.all(jnp.isfinite(values)))
    print("KERNEL_OK")
</pallas_src>

<mosaic_0001>
module attributes {stable_mosaic.version = 11 : i64} {
  func.func @policy_kernel(%arg0: i32, %arg1: memref<1x16x4xf32, #tpu.memory_space<vmem>>, %arg2: memref<1x16x16xf32, #tpu.memory_space<vmem>>, %arg3: memref<1x16x16xf32, #tpu.memory_space<vmem>>, %arg4: memref<1x2x16xf32, #tpu.memory_space<vmem>>, %arg5: memref<1x2x16xf32, #tpu.memory_space<vmem>>, %arg6: memref<1x2x16xf32, #tpu.memory_space<vmem>>, %arg7: memref<4x128xbf16, #tpu.memory_space<vmem>>, %arg8: memref<11x128x128xbf16, #tpu.memory_space<vmem>>, %arg9: memref<3x128x256xbf16, #tpu.memory_space<vmem>>, %arg10: memref<3x256x128xbf16, #tpu.memory_space<vmem>>, %arg11: memref<8x2x128xf32, #tpu.memory_space<vmem>>, %arg12: memref<4x1x128xf32, #tpu.memory_space<vmem>>, %arg13: memref<3x1x256xf32, #tpu.memory_space<vmem>>, %arg14: memref<1x2x128xf32, #tpu.memory_space<vmem>>, %arg15: memref<1x2x128xf32, #tpu.memory_space<vmem>>) attributes {dimension_semantics = [#tpu.dimension_semantics<parallel>], iteration_bounds = array<i64: 1>, scalar_prefetch = 0 : i64, scratch_operands = 0 : i64, tpu.core_type = #tpu.core_type<tc>, window_params = [{transform_indices = @transform_0, window_bounds = array<i64: 1, 16, 4>}, {transform_indices = @transform_1, window_bounds = array<i64: 1, 16, 16>}, {transform_indices = @transform_2, window_bounds = array<i64: 1, 16, 16>}, {transform_indices = @transform_3, window_bounds = array<i64: 1, 2, 16>}, {transform_indices = @transform_4, window_bounds = array<i64: 1, 2, 16>}, {transform_indices = @transform_5, window_bounds = array<i64: 1, 2, 16>}, {pipeline_mode = #tpu.pipeline_mode<synchronous>, transform_indices = @transform_6, window_bounds = array<i64: 4, 128>}, {pipeline_mode = #tpu.pipeline_mode<synchronous>, transform_indices = @transform_7, window_bounds = array<i64: 11, 128, 128>}, {pipeline_mode = #tpu.pipeline_mode<synchronous>, transform_indices = @transform_8, window_bounds = array<i64: 3, 128, 256>}, {pipeline_mode = #tpu.pipeline_mode<synchronous>, transform_indices = @transform_9, window_bounds = array<i64: 3, 256, 128>}, {pipeline_mode = #tpu.pipeline_mode<synchronous>, transform_indices = @transform_10, window_bounds = array<i64: 8, 2, 128>}, {pipeline_mode = #tpu.pipeline_mode<synchronous>, transform_indices = @transform_11, window_bounds = array<i64: 4, 1, 128>}, {pipeline_mode = #tpu.pipeline_mode<synchronous>, transform_indices = @transform_12, window_bounds = array<i64: 3, 1, 256>}, {transform_indices = @transform_13, window_bounds = array<i64: 1, 2, 128>}, {transform_indices = @transform_14, window_bounds = array<i64: 1, 2, 128>}]} {
    %c0 = arith.constant 0 : index
    %c0_0 = arith.constant 0 : index
    %c0_1 = arith.constant 0 : index
    %0 = vector.load %arg1[%c0, %c0_0, %c0_1] : memref<1x16x4xf32, #tpu.memory_space<vmem>>, vector<1x16x4xf32>
    %1 = vector.shape_cast %0 : vector<1x16x4xf32> to vector<16x4xf32>
    %c0_2 = arith.constant 0 : index
    %c0_3 = arith.constant 0 : index
    %c0_4 = arith.constant 0 : index
    %2 = vector.load %arg2[%c0_2, %c0_3, %c0_4] : memref<1x16x16xf32, #tpu.memory_space<vmem>>, vector<1x16x16xf32>
    %3 = vector.shape_cast %2 : vector<1x16x16xf32> to vector<16x16xf32>
    %c0_5 = arith.constant 0 : index
    %c0_6 = arith.constant 0 : index
    %c0_7 = arith.constant 0 : index
    %4 = vector.load %arg3[%c0_5, %c0_6, %c0_7] : memref<1x16x16xf32, #tpu.memory_space<vmem>>, vector<1x16x16xf32>
    %5 = vector.shape_cast %4 : vector<1x16x16xf32> to vector<16x16xf32>
    %c0_8 = arith.constant 0 : index
    %c0_9 = arith.constant 0 : index
    %c0_10 = arith.constant 0 : index
    %6 = vector.load %arg4[%c0_8, %c0_9, %c0_10] : memref<1x2x16xf32, #tpu.memory_space<vmem>>, vector<1x2x16xf32>
    %7 = vector.shape_cast %6 : vector<1x2x16xf32> to vector<2x16xf32>
    %c0_11 = arith.constant 0 : index
    %c0_12 = arith.constant 0 : index
    %c0_13 = arith.constant 0 : index
    %8 = vector.load %arg5[%c0_11, %c0_12, %c0_13] : memref<1x2x16xf32, #tpu.memory_space<vmem>>, vector<1x2x16xf32>
    %9 = vector.shape_cast %8 : vector<1x2x16xf32> to vector<2x16xf32>
    %c0_14 = arith.constant 0 : index
    %c0_15 = arith.constant 0 : index
    %c0_16 = arith.constant 0 : index
    %10 = vector.load %arg6[%c0_14, %c0_15, %c0_16] : memref<1x2x16xf32, #tpu.memory_space<vmem>>, vector<1x2x16xf32>
    %11 = vector.shape_cast %10 : vector<1x2x16xf32> to vector<2x16xf32>
    %12 = arith.truncf %1 : vector<16x4xf32> to vector<16x4xbf16>
    %c0_17 = arith.constant 0 : index
    %c0_18 = arith.constant 0 : index
    %13 = vector.load %arg7[%c0_17, %c0_18] : memref<4x128xbf16, #tpu.memory_space<vmem>>, vector<4x128xbf16>
    %cst = arith.constant dense<0.000000e+00> : vector<16x128xf32>
    %14 = tpu.matmul %12, %13, %cst {dimension_numbers = #tpu.dot_dimension_numbers<[1], [0], [0], [1], [0, 0, 1, 1], [], []>} : vector<16x4xbf16>, vector<4x128xbf16>, vector<16x128xf32> -> vector<16x128xf32>
    %c0_19 = arith.constant 0 : index
    %c0_20 = arith.constant 0 : index
    %c0_21 = arith.constant 0 : index
    %15 = vector.load %arg12[%c0_19, %c0_20, %c0_21] : memref<4x1x128xf32, #tpu.memory_space<vmem>>, vector<1x1x128xf32>
    %16 = vector.shape_cast %15 : vector<1x1x128xf32> to vector<1x128xf32>
    %17 = vector.broadcast %16 : vector<1x128xf32> to vector<16x128xf32>
    %18 = arith.addf %14, %17 : vector<16x128xf32>
    %c0_22 = arith.constant 0 : index
    %c0_23 = arith.constant 0 : index
    %c0_24 = arith.constant 0 : index
    %19 = vector.load %arg11[%c0_22, %c0_23, %c0_24] : memref<8x2x128xf32, #tpu.memory_space<vmem>>, vector<1x2x128xf32>
    %20 = vector.shape_cast %19 : vector<1x2x128xf32> to vector<2x128xf32>
    %cst_25 = arith.constant dense<0.000000e+00> : vector<16xf32>
    %21 = vector.multi_reduction <add>, %18, %cst_25 [1] : vector<16x128xf32> to vector<16xf32>
    %22 = vector.shape_cast %21 : vector<16xf32> to vector<16x1xf32>
    %cst_26 = arith.constant 1.280000e+02 : f32
    %23 = vector.broadcast %cst_26 : f32 to vector<16x1xf32>
    %24 = arith.divf %22, %23 : vector<16x1xf32>
    %25 = vector.broadcast %24 : vector<16x1xf32> to vector<16x128xf32>
    %26 = arith.subf %18, %25 : vector<16x128xf32>
    %27 = arith.mulf %26, %26 : vector<16x128xf32>
    %cst_27 = arith.constant dense<0.000000e+00> : vector<16xf32>
    %28 = vector.multi_reduction <add>, %27, %cst_27 [1] : vector<16x128xf32> to vector<16xf32>
    %29 = vector.shape_cast %28 : vector<16xf32> to vector<16x1xf32>
    %cst_28 = arith.constant 1.280000e+02 : f32
    %30 = vector.broadcast %cst_28 : f32 to vector<16x1xf32>
    %31 = arith.divf %29, %30 : vector<16x1xf32>
    %32 = vector.broadcast %24 : vector<16x1xf32> to vector<16x128xf32>
    %33 = arith.subf %18, %32 : vector<16x128xf32>
    %cst_29 = arith.constant 9.99999974E-6 : f32
    %34 = vector.broadcast %cst_29 : f32 to vector<16x1xf32>
    %35 = arith.addf %31, %34 : vector<16x1xf32>
    %36 = math.rsqrt %35 : vector<16x1xf32>
    %37 = vector.broadcast %36 : vector<16x1xf32> to vector<16x128xf32>
    %38 = arith.mulf %33, %37 : vector<16x128xf32>
    %39 = vector.extract_strided_slice %20 {offsets = [0, 0], sizes = [1, 128], strides = [1, 1]} : vector<2x128xf32> to vector<1x128xf32>
    %40 = vector.broadcast %39 : vector<1x128xf32> to vector<16x128xf32>
    %41 = arith.mulf %38, %40 : vector<16x128xf32>
    %42 = vector.extract_strided_slice %20 {offsets = [1, 0], sizes = [1, 128], strides = [1, 1]} : vector<2x128xf32> to vector<1x128xf32>
    %43 = vector.broadcast %42 : vector<1x128xf32> to vector<16x128xf32>
    %44 = arith.addf %41, %43 : vector<16x128xf32>
    %c0_30 = arith.constant 0 : index
    %c0_31 = arith.constant 0 : index
    %c0_32 = arith.constant 0 : index
    %45 = vector.load %arg8[%c0_30, %c0_31, %c0_32] : memref<11x128x128xbf16, #tpu.memory_space<vmem>>, vector<1x128x128xbf16>
    %46 = vector.shape_cast %45 : vector<1x128x128xbf16> to vector<128x128xbf16>
    %c1 = arith.constant 1 : index
    %c0_33 = arith.constant 0 : index
    %c0_34 = arith.constant 0 : index
    %47 = vector.load %arg8[%c1, %c0_33, %c0_34] : memref<11x128x128xbf16, #tpu.memory_space<vmem>>, vector<1x128x128xbf16>
    %48 = vector.shape_cast %47 : vector<1x128x128xbf16> to vector<128x128xbf16>
    %c2 = arith.constant 2 : index
    %c0_35 = arith.constant 0 : index
    %c0_36 = arith.constant 0 : index
    %49 = vector.load %arg8[%c2, %c0_35, %c0_36] : memref<11x128x128xbf16, #tpu.memory_space<vmem>>, vector<1x128x128xbf16>
    %50 = vector.shape_cast %49 : vector<1x128x128xbf16> to vector<128x128xbf16>
    %51 = arith.truncf %44 : vector<16x128xf32> to vector<16x128xbf16>
    %cst_37 = arith.constant dense<0.000000e+00> : vector<16x128xf32>
    %52 = tpu.matmul %51, %46, %cst_37 {dimension_numbers = #tpu.dot_dimension_numbers<[1], [0], [0], [1], [0, 0, 1, 1], [], []>} : vector<16x128xbf16>, vector<128x128xbf16>, vector<16x128xf32> -> vector<16x128xf32>
    %53 = arith.truncf %44 : vector<16x128xf32> to vector<16x128xbf16>
    %cst_38 = arith.constant dense<0.000000e+00> : vector<16x128xf32>
    %54 = tpu.matmul %53, %48, %cst_38 {dimension_numbers = #tpu.dot_dimension_numbers<[1], [0], [0], [1], [0, 0, 1, 1], [], []>} : vector<16x128xbf16>, vector<128x128xbf16>, vector<16x128xf32> -> vector<16x128xf32>
    %55 = vector.extract_strided_slice %52 {offsets = [0, 0], sizes = [16, 16], strides = [1, 1]} : vector<16x128xf32> to vector<16x16xf32>
    %56 = vector.extract_strided_slice %52 {offsets = [0, 16], sizes = [16, 16], strides = [1, 1]} : vector<16x128xf32> to vector<16x16xf32>
    %57 = vector.extract_strided_slice %52 {offsets = [0, 32], sizes = [16, 16], strides = [1, 1]} : vector<16x128xf32> to vector<16x16xf32>
    %58 = vector.extract_strided_slice %52 {offsets = [0, 48], sizes = [16, 16], strides = [1, 1]} : vector<16x128xf32> to vector<16x16xf32>
    %59 = vector.extract_strided_slice %52 {offsets = [0, 64], sizes = [16, 16], strides = [1, 1]} : vector<16x128xf32> to vector<16x16xf32>
    %60 = vector.extract_strided_slice %52 {offsets = [0, 80], sizes = [16, 16], strides = [1, 1]} : vector<16x128xf32> to vector<16x16xf32>
    %61 = vector.extract_strided_slice %52 {offsets = [0, 96], sizes = [16, 16], strides = [1, 1]} : vector<16x128xf32> to vector<16x16xf32>
    %62 = vector.extract_strided_slice %52 {offsets = [0, 112], sizes = [16, 16], strides = [1, 1]} : vector<16x128xf32> to vector<16x16xf32>
    %63 = vector.shape_cast %55 : vector<16x16xf32> to vector<1x16x16xf32>
    %64 = vector.shape_cast %56 : vector<16x16xf32> to vector<1x16x16xf32>
    %65 = vector.shape_cast %57 : vector<16x16xf32> to vector<1x16x16xf32>
    %66 = vector.shape_cast %58 : vector<16x16xf32> to vector<1x16x16xf32>
    %67 = vector.shape_cast %59 : vector<16x16xf32> to vector<1x16x16xf32>
    %68 = vector.shape_cast %60 : vector<16x16xf32> to vector<1x16x16xf32>
    %69 = vector.shape_cast %61 : vector<16x16xf32> to vector<1x16x16xf32>
    %70 = vector.shape_cast %62 : vector<16x16xf32> to vector<1x16x16xf32>
    %71 = tpu.concatenate %63, %64, %65, %66, %67, %68, %69, %70 in 0 : vector<1x16x16xf32>, vector<1x16x16xf32>, vector<1x16x16xf32>, vector<1x16x16xf32>, vector<1x16x16xf32>, vector<1x16x16xf32>, vector<1x16x16xf32>, vector<1x16x16xf32> -> vector<8x16x16xf32>
    %72 = vector.extract_strided_slice %54 {offsets = [0, 0], sizes = [16, 16], strides = [1, 1]} : vector<16x128xf32> to vector<16x16xf32>
    %73 = vector.extract_strided_slice %54 {offsets = [0, 16], sizes = [16, 16], strides = [1, 1]} : vector<16x128xf32> to vector<16x16xf32>
    %74 = vector.extract_strided_slice %54 {offsets = [0, 32], sizes = [16, 16], strides = [1, 1]} : vector<16x128xf32> to vector<16x16xf32>
    %75 = vector.extract_strided_slice %54 {offsets = [0, 48], sizes = [16, 16], strides = [1, 1]} : vector<16x128xf32> to vector<16x16xf32>
    %76 = vector.extract_strided_slice %54 {offsets = [0, 64], sizes = [16, 16], strides = [1, 1]} : vector<16x128xf32> to vector<16x16xf32>
    %77 = vector.extract_strided_slice %54 {offsets = [0, 80], sizes = [16, 16], strides = [1, 1]} : vector<16x128xf32> to vector<16x16xf32>
    %78 = vector.extract_strided_slice %54 {offsets = [0, 96], sizes = [16, 16], strides = [1, 1]} : vector<16x128xf32> to vector<16x16xf32>
    %79 = vector.extract_strided_slice %54 {offsets = [0, 112], sizes = [16, 16], strides = [1, 1]} : vector<16x128xf32> to vector<16x16xf32>
    %80 = vector.shape_cast %72 : vector<16x16xf32> to vector<1x16x16xf32>
    %81 = vector.shape_cast %73 : vector<16x16xf32> to vector<1x16x16xf32>
    %82 = vector.shape_cast %74 : vector<16x16xf32> to vector<1x16x16xf32>
    %83 = vector.shape_cast %75 : vector<16x16xf32> to vector<1x16x16xf32>
    %84 = vector.shape_cast %76 : vector<16x16xf32> to vector<1x16x16xf32>
    %85 = vector.shape_cast %77 : vector<16x16xf32> to vector<1x16x16xf32>
    %86 = vector.shape_cast %78 : vector<16x16xf32> to vector<1x16x16xf32>
    %87 = vector.shape_cast %79 : vector<16x16xf32> to vector<1x16x16xf32>
    %88 = tpu.concatenate %80, %81, %82, %83, %84, %85, %86, %87 in 0 : vector<1x16x16xf32>, vector<1x16x16xf32>, vector<1x16x16xf32>, vector<1x16x16xf32>, vector<1x16x16xf32>, vector<1x16x16xf32>, vector<1x16x16xf32>, vector<1x16x16xf32> -> vector<8x16x16xf32>
    "tpu.trace_start"() <{level = 10 : i32, message = "hqc,hkc->hqk"}> : () -> ()
    %cst_39 = arith.constant dense<0.000000e+00> : vector<8x16x16xf32>
    %89 = tpu.matmul %71, %88, %cst_39 {dimension_numbers = #tpu.dot_dimension_numbers<[2], [2], [1], [1], [0, 0, 0, 1, 1, 1], [0], [0]>} : vector<8x16x16xf32>, vector<8x16x16xf32>, vector<8x16x16xf32> -> vector<8x16x16xf32>
    "tpu.trace_stop"() : () -> ()
    %90 = vector.shape_cast %3 : vector<16x16xf32> to vector<1x16x16xf32>
    %91 = vector.broadcast %90 : vector<1x16x16xf32> to vector<8x16x16xf32>
    %92 = arith.mulf %89, %91 : vector<8x16x16xf32>
    %93 = vector.shape_cast %5 : vector<16x16xf32> to vector<1x16x16xf32>
    %94 = vector.broadcast %93 : vector<1x16x16xf32> to vector<8x16x16xf32>
    %95 = arith.addf %92, %94 : vector<8x16x16xf32>
    %cst_40 = arith.constant dense<0xFF800000> : vector<8x16xf32>
    %96 = vector.multi_reduction <maximumf>, %95, %cst_40 [2] : vector<8x16x16xf32> to vector<8x16xf32>
    %97 = vector.shape_cast %96 : vector<8x16xf32> to vector<8x16x1xf32>
    %98 = vector.broadcast %97 : vector<8x16x1xf32> to vector<8x16x16xf32>
    %99 = arith.subf %95, %98 : vector<8x16x16xf32>
    %100 = math.exp %99 : vector<8x16x16xf32>
    %cst_41 = arith.constant dense<0.000000e+00> : vector<8x16xf32>
    %101 = vector.multi_reduction <add>, %100, %cst_41 [2] : vector<8x16x16xf32> to vector<8x16xf32>
    %102 = vector.shape_cast %101 : vector<8x16xf32> to vector<8x16x1xf32>
    %103 = tpu.reciprocal %102 {approx = true} : vector<8x16x1xf32> -> vector<8x16x1xf32>
    %104 = vector.broadcast %103 : vector<8x16x1xf32> to vector<8x16x16xf32>
    %105 = arith.mulf %100, %104 : vector<8x16x16xf32>
    "tpu.trace_start"() <{level = 10 : i32, message = "hqk,hkc->hqc"}> : () -> ()
    %cst_42 = arith.constant dense<0.000000e+00> : vector<8x16x16xf32>
    %106 = tpu.matmul %105, %88, %cst_42 {dimension_numbers = #tpu.dot_dimension_numbers<[2], [1], [1], [2], [0, 0, 0, 1, 1, 2], [0], [0]>} : vector<8x16x16xf32>, vector<8x16x16xf32>, vector<8x16x16xf32> -> vector<8x16x16xf32>
    "tpu.trace_stop"() : () -> ()
    %107 = vector.extract_strided_slice %106 {offsets = [0, 0, 0], sizes = [1, 16, 16], strides = [1, 1, 1]} : vector<8x16x16xf32> to vector<1x16x16xf32>
    %108 = vector.shape_cast %107 : vector<1x16x16xf32> to vector<16x16xf32>
    %109 = vector.extract_strided_slice %106 {offsets = [1, 0, 0], sizes = [1, 16, 16], strides = [1, 1, 1]} : vector<8x16x16xf32> to vector<1x16x16xf32>
    %110 = vector.shape_cast %109 : vector<1x16x16xf32> to vector<16x16xf32>
    %111 = vector.extract_strided_slice %106 {offsets = [2, 0, 0], sizes = [1, 16, 16], strides = [1, 1, 1]} : vector<8x16x16xf32> to vector<1x16x16xf32>
    %112 = vector.shape_cast %111 : vector<1x16x16xf32> to vector<16x16xf32>
    %113 = vector.extract_strided_slice %106 {offsets = [3, 0, 0], sizes = [1, 16, 16], strides = [1, 1, 1]} : vector<8x16x16xf32> to vector<1x16x16xf32>
    %114 = vector.shape_cast %113 : vector<1x16x16xf32> to vector<16x16xf32>
    %115 = vector.extract_strided_slice %106 {offsets = [4, 0, 0], sizes = [1, 16, 16], strides = [1, 1, 1]} : vector<8x16x16xf32> to vector<1x16x16xf32>
    %116 = vector.shape_cast %115 : vector<1x16x16xf32> to vector<16x16xf32>
    %117 = vector.extract_strided_slice %106 {offsets = [5, 0, 0], sizes = [1, 16, 16], strides = [1, 1, 1]} : vector<8x16x16xf32> to vector<1x16x16xf32>
    %118 = vector.shape_cast %117 : vector<1x16x16xf32> to vector<16x16xf32>
    %119 = vector.extract_strided_slice %106 {offsets = [6, 0, 0], sizes = [1, 16, 16], strides = [1, 1, 1]} : vector<8x16x16xf32> to vector<1x16x16xf32>
    %120 = vector.shape_cast %119 : vector<1x16x16xf32> to vector<16x16xf32>
    %121 = vector.extract_strided_slice %106 {offsets = [7, 0, 0], sizes = [1, 16, 16], strides = [1, 1, 1]} : vector<8x16x16xf32> to vector<1x16x16xf32>
    %122 = vector.shape_cast %121 : vector<1x16x16xf32> to vector<16x16xf32>
    %123 = tpu.concatenate %108, %110, %112, %114, %116, %118, %120, %122 in 1 : vector<16x16xf32>, vector<16x16xf32>, vector<16x16xf32>, vector<16x16xf32>, vector<16x16xf32>, vector<16x16xf32>, vector<16x16xf32>, vector<16x16xf32> -> vector<16x128xf32>
    %124 = arith.truncf %123 : vector<16x128xf32> to vector<16x128xbf16>
    %cst_43 = arith.constant dense<0.000000e+00> : vector<16x128xf32>
    %125 = tpu.matmul %124, %50, %cst_43 {dimension_numbers = #tpu.dot_dimension_numbers<[1], [0], [0], [1], [0, 0, 1, 1], [], []>} : vector<16x128xbf16>, vector<128x128xbf16>, vector<16x128xf32> -> vector<16x128xf32>
    %126 = arith.addf %18, %125 : vector<16x128xf32>
    %c1_44 = arith.constant 1 : index
    %c0_45 = arith.constant 0 : index
    %c0_46 = arith.constant 0 : index
    %127 = vector.load %arg11[%c1_44, %c0_45, %c0_46] : memref<8x2x128xf32, #tpu.memory_space<vmem>>, vector<1x2x128xf32>
    %128 = vector.shape_cast %127 : vector<1x2x128xf32> to vector<2x128xf32>
    %cst_47 = arith.constant dense<0.000000e+00> : vector<16xf32>
    %129 = vector.multi_reduction <add>, %126, %cst_47 [1] : vector<16x128xf32> to vector<16xf32>
    %130 = vector.shape_cast %129 : vector<16xf32> to vector<16x1xf32>
    %cst_48 = arith.constant 1.280000e+02 : f32
    %131 = vector.broadcast %cst_48 : f32 to vector<16x1xf32>
    %132 = arith.divf %130, %131 : vector<16x1xf32>
    %133 = vector.broadcast %132 : vector<16x1xf32> to vector<16x128xf32>
    %134 = arith.subf %126, %133 : vector<16x128xf32>
    %135 = arith.mulf %134, %134 : vector<16x128xf32>
    %cst_49 = arith.constant dense<0.000000e+00> : vector<16xf32>
    %136 = vector.multi_reduction <add>, %135, %cst_49 [1] : vector<16x128xf32> to vector<16xf32>
    %137 = vector.shape_cast %136 : vector<16xf32> to vector<16x1xf32>
    %cst_50 = arith.constant 1.280000e+02 : f32
    %138 = vector.broadcast %cst_50 : f32 to vector<16x1xf32>
    %139 = arith.divf %137, %138 : vector<16x1xf32>
    %140 = vector.broadcast %132 : vector<16x1xf32> to vector<16x128xf32>
    %141 = arith.subf %126, %140 : vector<16x128xf32>
    %cst_51 = arith.constant 9.99999974E-6 : f32
    %142 = vector.broadcast %cst_51 : f32 to vector<16x1xf32>
    %143 = arith.addf %139, %142 : vector<16x1xf32>
    %144 = math.rsqrt %143 : vector<16x1xf32>
    %145 = vector.broadcast %144 : vector<16x1xf32> to vector<16x128xf32>
    %146 = arith.mulf %141, %145 : vector<16x128xf32>
    %147 = vector.extract_strided_slice %128 {offsets = [0, 0], sizes = [1, 128], strides = [1, 1]} : vector<2x128xf32> to vector<1x128xf32>
    %148 = vector.broadcast %147 : vector<1x128xf32> to vector<16x128xf32>
    %149 = arith.mulf %146, %148 : vector<16x128xf32>
    %150 = vector.extract_strided_slice %128 {offsets = [1, 0], sizes = [1, 128], strides = [1, 1]} : vector<2x128xf32> to vector<1x128xf32>
    %151 = vector.broadcast %150 : vector<1x128xf32> to vector<16x128xf32>
    %152 = arith.addf %149, %151 : vector<16x128xf32>
    %153 = arith.truncf %152 : vector<16x128xf32> to vector<16x128xbf16>
    %c0_52 = arith.constant 0 : index
    %c0_53 = arith.constant 0 : index
    %c0_54 = arith.constant 0 : index
    %154 = vector.load %arg9[%c0_52, %c0_53, %c0_54] : memref<3x128x256xbf16, #tpu.memory_space<vmem>>, vector<1x128x256xbf16>
    %155 = vector.shape_cast %154 : vector<1x128x256xbf16> to vector<128x256xbf16>
    %cst_55 = arith.constant dense<0.000000e+00> : vector<16x256xf32>
    %156 = tpu.matmul %153, %155, %cst_55 {dimension_numbers = #tpu.dot_dimension_numbers<[1], [0], [0], [1], [0, 0, 1, 1], [], []>} : vector<16x128xbf16>, vector<128x256xbf16>, vector<16x256xf32> -> vector<16x256xf32>
    %c0_56 = arith.constant 0 : index
    %c0_57 = arith.constant 0 : index
    %c0_58 = arith.constant 0 : index
    %157 = vector.load %arg13[%c0_56, %c0_57, %c0_58] : memref<3x1x256xf32, #tpu.memory_space<vmem>>, vector<1x1x256xf32>
    %158 = vector.shape_cast %157 : vector<1x1x256xf32> to vector<1x256xf32>
    %159 = vector.broadcast %158 : vector<1x256xf32> to vector<16x256xf32>
    %160 = arith.addf %156, %159 : vector<16x256xf32>
    %cst_59 = arith.constant 0.000000e+00 : f32
    %161 = vector.broadcast %cst_59 : f32 to vector<16x256xf32>
    %162 = arith.maximumf %160, %161 : vector<16x256xf32>
    %163 = arith.truncf %162 : vector<16x256xf32> to vector<16x256xbf16>
    %c0_60 = arith.constant 0 : index
    %c0_61 = arith.constant 0 : index
    %c0_62 = arith.constant 0 : index
    %164 = vector.load %arg10[%c0_60, %c0_61, %c0_62] : memref<3x256x128xbf16, #tpu.memory_space<vmem>>, vector<1x256x128xbf16>
    %165 = vector.shape_cast %164 : vector<1x256x128xbf16> to vector<256x128xbf16>
    %cst_63 = arith.constant dense<0.000000e+00> : vector<16x128xf32>
    %166 = tpu.matmul %163, %165, %cst_63 {dimension_numbers = #tpu.dot_dimension_numbers<[1], [0], [0], [1], [0, 0, 1, 1], [], []>} : vector<16x256xbf16>, vector<256x128xbf16>, vector<16x128xf32> -> vector<16x128xf32>
    %167 = arith.addf %126, %166 : vector<16x128xf32>
    %c1_64 = arith.constant 1 : index
    %c0_65 = arith.constant 0 : index
    %c0_66 = arith.constant 0 : index
    %168 = vector.load %arg12[%c1_64, %c0_65, %c0_66] : memref<4x1x128xf32, #tpu.memory_space<vmem>>, vector<1x1x128xf32>
    %169 = vector.shape_cast %168 : vector<1x1x128xf32> to vector<1x128xf32>
    %170 = vector.broadcast %169 : vector<1x128xf32> to vector<16x128xf32>
    %171 = arith.addf %167, %170 : vector<16x128xf32>
    %c2_67 = arith.constant 2 : index
    %c0_68 = arith.constant 0 : index
    %c0_69 = arith.constant 0 : index
    %172 = vector.load %arg11[%c2_67, %c0_68, %c0_69] : memref<8x2x128xf32, #tpu.memory_space<vmem>>, vector<1x2x128xf32>
    %173 = vector.shape_cast %172 : vector<1x2x128xf32> to vector<2x128xf32>
    %cst_70 = arith.constant dense<0.000000e+00> : vector<16xf32>
    %174 = vector.multi_reduction <add>, %171, %cst_70 [1] : vector<16x128xf32> to vector<16xf32>
    %175 = vector.shape_cast %174 : vector<16xf32> to vector<16x1xf32>
    %cst_71 = arith.constant 1.280000e+02 : f32
    %176 = vector.broadcast %cst_71 : f32 to vector<16x1xf32>
    %177 = arith.divf %175, %176 : vector<16x1xf32>
    %178 = vector.broadcast %177 : vector<16x1xf32> to vector<16x128xf32>
    %179 = arith.subf %171, %178 : vector<16x128xf32>
    %180 = arith.mulf %179, %179 : vector<16x128xf32>
    %cst_72 = arith.constant dense<0.000000e+00> : vector<16xf32>
    %181 = vector.multi_reduction <add>, %180, %cst_72 [1] : vector<16x128xf32> to vector<16xf32>
    %182 = vector.shape_cast %181 : vector<16xf32> to vector<16x1xf32>
    %cst_73 = arith.constant 1.280000e+02 : f32
    %183 = vector.broadcast %cst_73 : f32 to vector<16x1xf32>
    %184 = arith.divf %182, %183 : vector<16x1xf32>
    %185 = vector.broadcast %177 : vector<16x1xf32> to vector<16x128xf32>
    %186 = arith.subf %171, %185 : vector<16x128xf32>
    %cst_74 = arith.constant 9.99999974E-6 : f32
    %187 = vector.broadcast %cst_74 : f32 to vector<16x1xf32>
    %188 = arith.addf %184, %187 : vector<16x1xf32>
    %189 = math.rsqrt %188 : vector<16x1xf32>
    %190 = vector.broadcast %189 : vector<16x1xf32> to vector<16x128xf32>
    %191 = arith.mulf %186, %190 : vector<16x128xf32>
    %192 = vector.extract_strided_slice %173 {offsets = [0, 0], sizes = [1, 128], strides = [1, 1]} : vector<2x128xf32> to vector<1x128xf32>
    %193 = vector.broadcast %192 : vector<1x128xf32> to vector<16x128xf32>
    %194 = arith.mulf %191, %193 : vector<16x128xf32>
    %195 = vector.extract_strided_slice %173 {offsets = [1, 0], sizes = [1, 128], strides = [1, 1]} : vector<2x128xf32> to vector<1x128xf32>
    %196 = vector.broadcast %195 : vector<1x128xf32> to vector<16x128xf32>
    %197 = arith.addf %194, %196 : vector<16x128xf32>
    %c3 = arith.constant 3 : index
    %c0_75 = arith.constant 0 : index
    %c0_76 = arith.constant 0 : index
    %198 = vector.load %arg8[%c3, %c0_75, %c0_76] : memref<11x128x128xbf16, #tpu.memory_space<vmem>>, vector<1x128x128xbf16>
    %199 = vector.shape_cast %198 : vector<1x128x128xbf16> to vector<128x128xbf16>
    %c4 = arith.constant 4 : index
    %c0_77 = arith.constant 0 : index
    %c0_78 = arith.constant 0 : index
    %200 = vector.load %arg8[%c4, %c0_77, %c0_78] : memref<11x128x128xbf16, #tpu.memory_space<vmem>>, vector<1x128x128xbf16>
    %201 = vector.shape_cast %200 : vector<1x128x128xbf16> to vector<128x128xbf16>
    %c5 = arith.constant 5 : index
    %c0_79 = arith.constant 0 : index
    %c0_80 = arith.constant 0 : index
    %202 = vector.load %arg8[%c5, %c0_79, %c0_80] : memref<11x128x128xbf16, #tpu.memory_space<vmem>>, vector<1x128x128xbf16>
    %203 = vector.shape_cast %202 : vector<1x128x128xbf16> to vector<128x128xbf16>
    %204 = arith.truncf %197 : vector<16x128xf32> to vector<16x128xbf16>
    %cst_81 = arith.constant dense<0.000000e+00> : vector<16x128xf32>
    %205 = tpu.matmul %204, %199, %cst_81 {dimension_numbers = #tpu.dot_dimension_numbers<[1], [0], [0], [1], [0, 0, 1, 1], [], []>} : vector<16x128xbf16>, vector<128x128xbf16>, vector<16x128xf32> -> vector<16x128xf32>
    %206 = arith.truncf %197 : vector<16x128xf32> to vector<16x128xbf16>
    %cst_82 = arith.constant dense<0.000000e+00> : vector<16x128xf32>
    %207 = tpu.matmul %206, %201, %cst_82 {dimension_numbers = #tpu.dot_dimension_numbers<[1], [0], [0], [1], [0, 0, 1, 1], [], []>} : vector<16x128xbf16>, vector<128x128xbf16>, vector<16x128xf32> -> vector<16x128xf32>
    %208 = vector.extract_strided_slice %205 {offsets = [0, 0], sizes = [16, 16], strides = [1, 1]} : vector<16x128xf32> to vector<16x16xf32>
    %209 = vector.extract_strided_slice %205 {offsets = [0, 16], sizes = [16, 16], strides = [1, 1]} : vector<16x128xf32> to vector<16x16xf32>
    %210 = vector.extract_strided_slice %205 {offsets = [0, 32], sizes = [16, 16], strides = [1, 1]} : vector<16x128xf32> to vector<16x16xf32>
    %211 = vector.extract_strided_slice %205 {offsets = [0, 48], sizes = [16, 16], strides = [1, 1]} : vector<16x128xf32> to vector<16x16xf32>
    %212 = vector.extract_strided_slice %205 {offsets = [0, 64], sizes = [16, 16], strides = [1, 1]} : vector<16x128xf32> to vector<16x16xf32>
    %213 = vector.extract_strided_slice %205 {offsets = [0, 80], sizes = [16, 16], strides = [1, 1]} : vector<16x128xf32> to vector<16x16xf32>
    %214 = vector.extract_strided_slice %205 {offsets = [0, 96], sizes = [16, 16], strides = [1, 1]} : vector<16x128xf32> to vector<16x16xf32>
    %215 = vector.extract_strided_slice %205 {offsets = [0, 112], sizes = [16, 16], strides = [1, 1]} : vector<16x128xf32> to vector<16x16xf32>
    %216 = vector.shape_cast %208 : vector<16x16xf32> to vector<1x16x16xf32>
    %217 = vector.shape_cast %209 : vector<16x16xf32> to vector<1x16x16xf32>
    %218 = vector.shape_cast %210 : vector<16x16xf32> to vector<1x16x16xf32>
    %219 = vector.shape_cast %211 : vector<16x16xf32> to vector<1x16x16xf32>
    %220 = vector.shape_cast %212 : vector<16x16xf32> to vector<1x16x16xf32>
    %221 = vector.shape_cast %213 : vector<16x16xf32> to vector<1x16x16xf32>
    %222 = vector.shape_cast %214 : vector<16x16xf32> to vector<1x16x16xf32>
    %223 = vector.shape_cast %215 : vector<16x16xf32> to vector<1x16x16xf32>
    %224 = tpu.concatenate %216, %217, %218, %219, %220, %221, %222, %223 in 0 : vector<1x16x16xf32>, vector<1x16x16xf32>, vector<1x16x16xf32>, vector<1x16x16xf32>, vector<1x16x16xf32>, vector<1x16x16xf32>, vector<1x16x16xf32>, vector<1x16x16xf32> -> vector<8x16x16xf32>
    %225 = vector.extract_strided_slice %207 {offsets = [0, 0], sizes = [16, 16], strides = [1, 1]} : vector<16x128xf32> to vector<16x16xf32>
    %226 = vector.extract_strided_slice %207 {offsets = [0, 16], sizes = [16, 16], strides = [1, 1]} : vector<16x128xf32> to vector<16x16xf32>
    %227 = vector.extract_strided_slice %207 {offsets = [0, 32], sizes = [16, 16], strides = [1, 1]} : vector<16x128xf32> to vector<16x16xf32>
    %228 = vector.extract_strided_slice %207 {offsets = [0, 48], sizes = [16, 16], strides = [1, 1]} : vector<16x128xf32> to vector<16x16xf32>
    %229 = vector.extract_strided_slice %207 {offsets = [0, 64], sizes = [16, 16], strides = [1, 1]} : vector<16x128xf32> to vector<16x16xf32>
    %230 = vector.extract_strided_slice %207 {offsets = [0, 80], sizes = [16, 16], strides = [1, 1]} : vector<16x128xf32> to vector<16x16xf32>
    %231 = vector.extract_strided_slice %207 {offsets = [0, 96], sizes = [16, 16], strides = [1, 1]} : vector<16x128xf32> to vector<16x16xf32>
    %232 = vector.extract_strided_slice %207 {offsets = [0, 112], sizes = [16, 16], strides = [1, 1]} : vector<16x128xf32> to vector<16x16xf32>
    %233 = vector.shape_cast %225 : vector<16x16xf32> to vector<1x16x16xf32>
    %234 = vector.shape_cast %226 : vector<16x16xf32> to vector<1x16x16xf32>
    %235 = vector.shape_cast %227 : vector<16x16xf32> to vector<1x16x16xf32>
    %236 = vector.shape_cast %228 : vector<16x16xf32> to vector<1x16x16xf32>
    %237 = vector.shape_cast %229 : vector<16x16xf32> to vector<1x16x16xf32>
    %238 = vector.shape_cast %230 : vector<16x16xf32> to vector<1x16x16xf32>
    %239 = vector.shape_cast %231 : vector<16x16xf32> to vector<1x16x16xf32>
    %240 = vector.shape_cast %232 : vector<16x16xf32> to vector<1x16x16xf32>
    %241 = tpu.concatenate %233, %234, %235, %236, %237, %238, %239, %240 in 0 : vector<1x16x16xf32>, vector<1x16x16xf32>, vector<1x16x16xf32>, vector<1x16x16xf32>, vector<1x16x16xf32>, vector<1x16x16xf32>, vector<1x16x16xf32>, vector<1x16x16xf32> -> vector<8x16x16xf32>
    "tpu.trace_start"() <{level = 10 : i32, message = "hqc,hkc->hqk"}> : () -> ()
    %cst_83 = arith.constant dense<0.000000e+00> : vector<8x16x16xf32>
    %242 = tpu.matmul %224, %241, %cst_83 {dimension_numbers = #tpu.dot_dimension_numbers<[2], [2], [1], [1], [0, 0, 0, 1, 1, 1], [0], [0]>} : vector<8x16x16xf32>, vector<8x16x16xf32>, vector<8x16x16xf32> -> vector<8x16x16xf32>
    "tpu.trace_stop"() : () -> ()
    %243 = vector.shape_cast %3 : vector<16x16xf32> to vector<1x16x16xf32>
    %244 = vector.broadcast %243 : vector<1x16x16xf32> to vector<8x16x16xf32>
    %245 = arith.mulf %242, %244 : vector<8x16x16xf32>
    %246 = vector.shape_cast %5 : vector<16x16xf32> to vector<1x16x16xf32>
    %247 = vector.broadcast %246 : vector<1x16x16xf32> to vector<8x16x16xf32>
    %248 = arith.addf %245, %247 : vector<8x16x16xf32>
    %cst_84 = arith.constant dense<0xFF800000> : vector<8x16xf32>
    %249 = vector.multi_reduction <maximumf>, %248, %cst_84 [2] : vector<8x16x16xf32> to vector<8x16xf32>
    %250 = vector.shape_cast %249 : vector<8x16xf32> to vector<8x16x1xf32>
    %251 = vector.broadcast %250 : vector<8x16x1xf32> to vector<8x16x16xf32>
    %252 = arith.subf %248, %251 : vector<8x16x16xf32>
    %253 = math.exp %252 : vector<8x16x16xf32>
    %cst_85 = arith.constant dense<0.000000e+00> : vector<8x16xf32>
    %254 = vector.multi_reduction <add>, %253, %cst_85 [2] : vector<8x16x16xf32> to vector<8x16xf32>
    %255 = vector.shape_cast %254 : vector<8x16xf32> to vector<8x16x1xf32>
    %256 = tpu.reciprocal %255 {approx = true} : vector<8x16x1xf32> -> vector<8x16x1xf32>
    %257 = vector.broadcast %256 : vector<8x16x1xf32> to vector<8x16x16xf32>
    %258 = arith.mulf %253, %257 : vector<8x16x16xf32>
    "tpu.trace_start"() <{level = 10 : i32, message = "hqk,hkc->hqc"}> : () -> ()
    %cst_86 = arith.constant dense<0.000000e+00> : vector<8x16x16xf32>
    %259 = tpu.matmul %258, %241, %cst_86 {dimension_numbers = #tpu.dot_dimension_numbers<[2], [1], [1], [2], [0, 0, 0, 1, 1, 2], [0], [0]>} : vector<8x16x16xf32>, vector<8x16x16xf32>, vector<8x16x16xf32> -> vector<8x16x16xf32>
    "tpu.trace_stop"() : () -> ()
    %260 = vector.extract_strided_slice %259 {offsets = [0, 0, 0], sizes = [1, 16, 16], strides = [1, 1, 1]} : vector<8x16x16xf32> to vector<1x16x16xf32>
    %261 = vector.shape_cast %260 : vector<1x16x16xf32> to vector<16x16xf32>
    %262 = vector.extract_strided_slice %259 {offsets = [1, 0, 0], sizes = [1, 16, 16], strides = [1, 1, 1]} : vector<8x16x16xf32> to vector<1x16x16xf32>
    %263 = vector.shape_cast %262 : vector<1x16x16xf32> to vector<16x16xf32>
    %264 = vector.extract_strided_slice %259 {offsets = [2, 0, 0], sizes = [1, 16, 16], strides = [1, 1, 1]} : vector<8x16x16xf32> to vector<1x16x16xf32>
    %265 = vector.shape_cast %264 : vector<1x16x16xf32> to vector<16x16xf32>
    %266 = vector.extract_strided_slice %259 {offsets = [3, 0, 0], sizes = [1, 16, 16], strides = [1, 1, 1]} : vector<8x16x16xf32> to vector<1x16x16xf32>
    %267 = vector.shape_cast %266 : vector<1x16x16xf32> to vector<16x16xf32>
    %268 = vector.extract_strided_slice %259 {offsets = [4, 0, 0], sizes = [1, 16, 16], strides = [1, 1, 1]} : vector<8x16x16xf32> to vector<1x16x16xf32>
    %269 = vector.shape_cast %268 : vector<1x16x16xf32> to vector<16x16xf32>
    %270 = vector.extract_strided_slice %259 {offsets = [5, 0, 0], sizes = [1, 16, 16], strides = [1, 1, 1]} : vector<8x16x16xf32> to vector<1x16x16xf32>
    %271 = vector.shape_cast %270 : vector<1x16x16xf32> to vector<16x16xf32>
    %272 = vector.extract_strided_slice %259 {offsets = [6, 0, 0], sizes = [1, 16, 16], strides = [1, 1, 1]} : vector<8x16x16xf32> to vector<1x16x16xf32>
    %273 = vector.shape_cast %272 : vector<1x16x16xf32> to vector<16x16xf32>
    %274 = vector.extract_strided_slice %259 {offsets = [7, 0, 0], sizes = [1, 16, 16], strides = [1, 1, 1]} : vector<8x16x16xf32> to vector<1x16x16xf32>
    %275 = vector.shape_cast %274 : vector<1x16x16xf32> to vector<16x16xf32>
    %276 = tpu.concatenate %261, %263, %265, %267, %269, %271, %273, %275 in 1 : vector<16x16xf32>, vector<16x16xf32>, vector<16x16xf32>, vector<16x16xf32>, vector<16x16xf32>, vector<16x16xf32>, vector<16x16xf32>, vector<16x16xf32> -> vector<16x128xf32>
    %277 = arith.truncf %276 : vector<16x128xf32> to vector<16x128xbf16>
    %cst_87 = arith.constant dense<0.000000e+00> : vector<16x128xf32>
    %278 = tpu.matmul %277, %203, %cst_87 {dimension_numbers = #tpu.dot_dimension_numbers<[1], [0], [0], [1], [0, 0, 1, 1], [], []>} : vector<16x128xbf16>, vector<128x128xbf16>, vector<16x128xf32> -> vector<16x128xf32>
    %279 = arith.addf %171, %278 : vector<16x128xf32>
    %c3_88 = arith.constant 3 : index
    %c0_89 = arith.constant 0 : index
    %c0_90 = arith.constant 0 : index
    %280 = vector.load %arg11[%c3_88, %c0_89, %c0_90] : memref<8x2x128xf32, #tpu.memory_space<vmem>>, vector<1x2x128xf32>
    %281 = vector.shape_cast %280 : vector<1x2x128xf32> to vector<2x128xf32>
    %cst_91 = arith.constant dense<0.000000e+00> : vector<16xf32>
    %282 = vector.multi_reduction <add>, %279, %cst_91 [1] : vector<16x128xf32> to vector<16xf32>
    %283 = vector.shape_cast %282 : vector<16xf32> to vector<16x1xf32>
    %cst_92 = arith.constant 1.280000e+02 : f32
    %284 = vector.broadcast %cst_92 : f32 to vector<16x1xf32>
    %285 = arith.divf %283, %284 : vector<16x1xf32>
    %286 = vector.broadcast %285 : vector<16x1xf32> to vector<16x128xf32>
    %287 = arith.subf %279, %286 : vector<16x128xf32>
    %288 = arith.mulf %287, %287 : vector<16x128xf32>
    %cst_93 = arith.constant dense<0.000000e+00> : vector<16xf32>
    %289 = vector.multi_reduction <add>, %288, %cst_93 [1] : vector<16x128xf32> to vector<16xf32>
    %290 = vector.shape_cast %289 : vector<16xf32> to vector<16x1xf32>
    %cst_94 = arith.constant 1.280000e+02 : f32
    %291 = vector.broadcast %cst_94 : f32 to vector<16x1xf32>
    %292 = arith.divf %290, %291 : vector<16x1xf32>
    %293 = vector.broadcast %285 : vector<16x1xf32> to vector<16x128xf32>
    %294 = arith.subf %279, %293 : vector<16x128xf32>
    %cst_95 = arith.constant 9.99999974E-6 : f32
    %295 = vector.broadcast %cst_95 : f32 to vector<16x1xf32>
    %296 = arith.addf %292, %295 : vector<16x1xf32>
    %297 = math.rsqrt %296 : vector<16x1xf32>
    %298 = vector.broadcast %297 : vector<16x1xf32> to vector<16x128xf32>
    %299 = arith.mulf %294, %298 : vector<16x128xf32>
    %300 = vector.extract_strided_slice %281 {offsets = [0, 0], sizes = [1, 128], strides = [1, 1]} : vector<2x128xf32> to vector<1x128xf32>
    %301 = vector.broadcast %300 : vector<1x128xf32> to vector<16x128xf32>
    %302 = arith.mulf %299, %301 : vector<16x128xf32>
    %303 = vector.extract_strided_slice %281 {offsets = [1, 0], sizes = [1, 128], strides = [1, 1]} : vector<2x128xf32> to vector<1x128xf32>
    %304 = vector.broadcast %303 : vector<1x128xf32> to vector<16x128xf32>
    %305 = arith.addf %302, %304 : vector<16x128xf32>
    %306 = arith.truncf %305 : vector<16x128xf32> to vector<16x128xbf16>
    %c1_96 = arith.constant 1 : index
    %c0_97 = arith.constant 0 : index
    %c0_98 = arith.constant 0 : index
    %307 = vector.load %arg9[%c1_96, %c0_97, %c0_98] : memref<3x128x256xbf16, #tpu.memory_space<vmem>>, vector<1x128x256xbf16>
    %308 = vector.shape_cast %307 : vector<1x128x256xbf16> to vector<128x256xbf16>
    %cst_99 = arith.constant dense<0.000000e+00> : vector<16x256xf32>
    %309 = tpu.matmul %306, %308, %cst_99 {dimension_numbers = #tpu.dot_dimension_numbers<[1], [0], [0], [1], [0, 0, 1, 1], [], []>} : vector<16x128xbf16>, vector<128x256xbf16>, vector<16x256xf32> -> vector<16x256xf32>
    %c1_100 = arith.constant 1 : index
    %c0_101 = arith.constant 0 : index
    %c0_102 = arith.constant 0 : index
    %310 = vector.load %arg13[%c1_100, %c0_101, %c0_102] : memref<3x1x256xf32, #tpu.memory_space<vmem>>, vector<1x1x256xf32>
    %311 = vector.shape_cast %310 : vector<1x1x256xf32> to vector<1x256xf32>
    %312 = vector.broadcast %311 : vector<1x256xf32> to vector<16x256xf32>
    %313 = arith.addf %309, %312 : vector<16x256xf32>
    %cst_103 = arith.constant 0.000000e+00 : f32
    %314 = vector.broadcast %cst_103 : f32 to vector<16x256xf32>
    %315 = arith.maximumf %313, %314 : vector<16x256xf32>
    %316 = arith.truncf %315 : vector<16x256xf32> to vector<16x256xbf16>
    %c1_104 = arith.constant 1 : index
    %c0_105 = arith.constant 0 : index
    %c0_106 = arith.constant 0 : index
    %317 = vector.load %arg10[%c1_104, %c0_105, %c0_106] : memref<3x256x128xbf16, #tpu.memory_space<vmem>>, vector<1x256x128xbf16>
    %318 = vector.shape_cast %317 : vector<1x256x128xbf16> to vector<256x128xbf16>
    %cst_107 = arith.constant dense<0.000000e+00> : vector<16x128xf32>
    %319 = tpu.matmul %316, %318, %cst_107 {dimension_numbers = #tpu.dot_dimension_numbers<[1], [0], [0], [1], [0, 0, 1, 1], [], []>} : vector<16x256xbf16>, vector<256x128xbf16>, vector<16x128xf32> -> vector<16x128xf32>
    %320 = arith.addf %279, %319 : vector<16x128xf32>
    %c2_108 = arith.constant 2 : index
    %c0_109 = arith.constant 0 : index
    %c0_110 = arith.constant 0 : index
    %321 = vector.load %arg12[%c2_108, %c0_109, %c0_110] : memref<4x1x128xf32, #tpu.memory_space<vmem>>, vector<1x1x128xf32>
    %322 = vector.shape_cast %321 : vector<1x1x128xf32> to vector<1x128xf32>
    %323 = vector.broadcast %322 : vector<1x128xf32> to vector<16x128xf32>
    %324 = arith.addf %320, %323 : vector<16x128xf32>
    %c4_111 = arith.constant 4 : index
    %c0_112 = arith.constant 0 : index
    %c0_113 = arith.constant 0 : index
    %325 = vector.load %arg11[%c4_111, %c0_112, %c0_113] : memref<8x2x128xf32, #tpu.memory_space<vmem>>, vector<1x2x128xf32>
    %326 = vector.shape_cast %325 : vector<1x2x128xf32> to vector<2x128xf32>
    %cst_114 = arith.constant dense<0.000000e+00> : vector<16xf32>
    %327 = vector.multi_reduction <add>, %324, %cst_114 [1] : vector<16x128xf32> to vector<16xf32>
    %328 = vector.shape_cast %327 : vector<16xf32> to vector<16x1xf32>
    %cst_115 = arith.constant 1.280000e+02 : f32
    %329 = vector.broadcast %cst_115 : f32 to vector<16x1xf32>
    %330 = arith.divf %328, %329 : vector<16x1xf32>
    %331 = vector.broadcast %330 : vector<16x1xf32> to vector<16x128xf32>
    %332 = arith.subf %324, %331 : vector<16x128xf32>
    %333 = arith.mulf %332, %332 : vector<16x128xf32>
    %cst_116 = arith.constant dense<0.000000e+00> : vector<16xf32>
    %334 = vector.multi_reduction <add>, %333, %cst_116 [1] : vector<16x128xf32> to vector<16xf32>
    %335 = vector.shape_cast %334 : vector<16xf32> to vector<16x1xf32>
    %cst_117 = arith.constant 1.280000e+02 : f32
    %336 = vector.broadcast %cst_117 : f32 to vector<16x1xf32>
    %337 = arith.divf %335, %336 : vector<16x1xf32>
    %338 = vector.broadcast %330 : vector<16x1xf32> to vector<16x128xf32>
    %339 = arith.subf %324, %338 : vector<16x128xf32>
    %cst_118 = arith.constant 9.99999974E-6 : f32
    %340 = vector.broadcast %cst_118 : f32 to vector<16x1xf32>
    %341 = arith.addf %337, %340 : vector<16x1xf32>
    %342 = math.rsqrt %341 : vector<16x1xf32>
    %343 = vector.broadcast %342 : vector<16x1xf32> to vector<16x128xf32>
    %344 = arith.mulf %339, %343 : vector<16x128xf32>
    %345 = vector.extract_strided_slice %326 {offsets = [0, 0], sizes = [1, 128], strides = [1, 1]} : vector<2x128xf32> to vector<1x128xf32>
    %346 = vector.broadcast %345 : vector<1x128xf32> to vector<16x128xf32>
    %347 = arith.mulf %344, %346 : vector<16x128xf32>
    %348 = vector.extract_strided_slice %326 {offsets = [1, 0], sizes = [1, 128], strides = [1, 1]} : vector<2x128xf32> to vector<1x128xf32>
    %349 = vector.broadcast %348 : vector<1x128xf32> to vector<16x128xf32>
    %350 = arith.addf %347, %349 : vector<16x128xf32>
    %cst_119 = arith.constant dense<0.000000e+00> : vector<2x128xf32>
    %351 = tpu.matmul %11, %350, %cst_119 {dimension_numbers = #tpu.dot_dimension_numbers<[1], [0], [0], [1], [0, 0, 1, 1], [], []>} : vector<2x16xf32>, vector<16x128xf32>, vector<2x128xf32> -> vector<2x128xf32>
    %c5_120 = arith.constant 5 : index
    %c0_121 = arith.constant 0 : index
    %c0_122 = arith.constant 0 : index
    %352 = vector.load %arg11[%c5_120, %c0_121, %c0_122] : memref<8x2x128xf32, #tpu.memory_space<vmem>>, vector<1x2x128xf32>
    %353 = vector.shape_cast %352 : vector<1x2x128xf32> to vector<2x128xf32>
    %cst_123 = arith.constant dense<0.000000e+00> : vector<2xf32>
    %354 = vector.multi_reduction <add>, %351, %cst_123 [1] : vector<2x128xf32> to vector<2xf32>
    %355 = vector.shape_cast %354 : vector<2xf32> to vector<2x1xf32>
    %cst_124 = arith.constant 1.280000e+02 : f32
    %356 = vector.broadcast %cst_124 : f32 to vector<2x1xf32>
    %357 = arith.divf %355, %356 : vector<2x1xf32>
    %358 = vector.broadcast %357 : vector<2x1xf32> to vector<2x128xf32>
    %359 = arith.subf %351, %358 : vector<2x128xf32>
    %360 = arith.mulf %359, %359 : vector<2x128xf32>
    %cst_125 = arith.constant dense<0.000000e+00> : vector<2xf32>
    %361 = vector.multi_reduction <add>, %360, %cst_125 [1] : vector<2x128xf32> to vector<2xf32>
    %362 = vector.shape_cast %361 : vector<2xf32> to vector<2x1xf32>
    %cst_126 = arith.constant 1.280000e+02 : f32
    %363 = vector.broadcast %cst_126 : f32 to vector<2x1xf32>
    %364 = arith.divf %362, %363 : vector<2x1xf32>
    %365 = vector.broadcast %357 : vector<2x1xf32> to vector<2x128xf32>
    %366 = arith.subf %351, %365 : vector<2x128xf32>
    %cst_127 = arith.constant 9.99999974E-6 : f32
    %367 = vector.broadcast %cst_127 : f32 to vector<2x1xf32>
    %368 = arith.addf %364, %367 : vector<2x1xf32>
    %369 = math.rsqrt %368 : vector<2x1xf32>
    %370 = vector.broadcast %369 : vector<2x1xf32> to vector<2x128xf32>
    %371 = arith.mulf %366, %370 : vector<2x128xf32>
    %372 = vector.extract_strided_slice %353 {offsets = [0, 0], sizes = [1, 128], strides = [1, 1]} : vector<2x128xf32> to vector<1x128xf32>
    %373 = vector.broadcast %372 : vector<1x128xf32> to vector<2x128xf32>
    %374 = arith.mulf %371, %373 : vector<2x128xf32>
    %375 = vector.extract_strided_slice %353 {offsets = [1, 0], sizes = [1, 128], strides = [1, 1]} : vector<2x128xf32> to vector<1x128xf32>
    %376 = vector.broadcast %375 : vector<1x128xf32> to vector<2x128xf32>
    %377 = arith.addf %374, %376 : vector<2x128xf32>
    %c6 = arith.constant 6 : index
    %c0_128 = arith.constant 0 : index
    %c0_129 = arith.constant 0 : index
    %378 = vector.load %arg8[%c6, %c0_128, %c0_129] : memref<11x128x128xbf16, #tpu.memory_space<vmem>>, vector<1x128x128xbf16>
    %379 = vector.shape_cast %378 : vector<1x128x128xbf16> to vector<128x128xbf16>
    %c7 = arith.constant 7 : index
    %c0_130 = arith.constant 0 : index
    %c0_131 = arith.constant 0 : index
    %380 = vector.load %arg8[%c7, %c0_130, %c0_131] : memref<11x128x128xbf16, #tpu.memory_space<vmem>>, vector<1x128x128xbf16>
    %381 = vector.shape_cast %380 : vector<1x128x128xbf16> to vector<128x128xbf16>
    %c8 = arith.constant 8 : index
    %c0_132 = arith.constant 0 : index
    %c0_133 = arith.constant 0 : index
    %382 = vector.load %arg8[%c8, %c0_132, %c0_133] : memref<11x128x128xbf16, #tpu.memory_space<vmem>>, vector<1x128x128xbf16>
    %383 = vector.shape_cast %382 : vector<1x128x128xbf16> to vector<128x128xbf16>
    %384 = arith.truncf %377 : vector<2x128xf32> to vector<2x128xbf16>
    %cst_134 = arith.constant dense<0.000000e+00> : vector<2x128xf32>
    %385 = tpu.matmul %384, %379, %cst_134 {dimension_numbers = #tpu.dot_dimension_numbers<[1], [0], [0], [1], [0, 0, 1, 1], [], []>} : vector<2x128xbf16>, vector<128x128xbf16>, vector<2x128xf32> -> vector<2x128xf32>
    %386 = arith.truncf %350 : vector<16x128xf32> to vector<16x128xbf16>
    %cst_135 = arith.constant dense<0.000000e+00> : vector<16x128xf32>
    %387 = tpu.matmul %386, %381, %cst_135 {dimension_numbers = #tpu.dot_dimension_numbers<[1], [0], [0], [1], [0, 0, 1, 1], [], []>} : vector<16x128xbf16>, vector<128x128xbf16>, vector<16x128xf32> -> vector<16x128xf32>
    %388 = vector.extract_strided_slice %385 {offsets = [0, 0], sizes = [2, 16], strides = [1, 1]} : vector<2x128xf32> to vector<2x16xf32>
    %389 = vector.extract_strided_slice %385 {offsets = [0, 16], sizes = [2, 16], strides = [1, 1]} : vector<2x128xf32> to vector<2x16xf32>
    %390 = vector.extract_strided_slice %385 {offsets = [0, 32], sizes = [2, 16], strides = [1, 1]} : vector<2x128xf32> to vector<2x16xf32>
    %391 = vector.extract_strided_slice %385 {offsets = [0, 48], sizes = [2, 16], strides = [1, 1]} : vector<2x128xf32> to vector<2x16xf32>
    %392 = vector.extract_strided_slice %385 {offsets = [0, 64], sizes = [2, 16], strides = [1, 1]} : vector<2x128xf32> to vector<2x16xf32>
    %393 = vector.extract_strided_slice %385 {offsets = [0, 80], sizes = [2, 16], strides = [1, 1]} : vector<2x128xf32> to vector<2x16xf32>
    %394 = vector.extract_strided_slice %385 {offsets = [0, 96], sizes = [2, 16], strides = [1, 1]} : vector<2x128xf32> to vector<2x16xf32>
    %395 = vector.extract_strided_slice %385 {offsets = [0, 112], sizes = [2, 16], strides = [1, 1]} : vector<2x128xf32> to vector<2x16xf32>
    %396 = vector.shape_cast %388 : vector<2x16xf32> to vector<1x2x16xf32>
    %397 = vector.shape_cast %389 : vector<2x16xf32> to vector<1x2x16xf32>
    %398 = vector.shape_cast %390 : vector<2x16xf32> to vector<1x2x16xf32>
    %399 = vector.shape_cast %391 : vector<2x16xf32> to vector<1x2x16xf32>
    %400 = vector.shape_cast %392 : vector<2x16xf32> to vector<1x2x16xf32>
    %401 = vector.shape_cast %393 : vector<2x16xf32> to vector<1x2x16xf32>
    %402 = vector.shape_cast %394 : vector<2x16xf32> to vector<1x2x16xf32>
    %403 = vector.shape_cast %395 : vector<2x16xf32> to vector<1x2x16xf32>
    %404 = tpu.concatenate %396, %397, %398, %399, %400, %401, %402, %403 in 0 : vector<1x2x16xf32>, vector<1x2x16xf32>, vector<1x2x16xf32>, vector<1x2x16xf32>, vector<1x2x16xf32>, vector<1x2x16xf32>, vector<1x2x16xf32>, vector<1x2x16xf32> -> vector<8x2x16xf32>
    %405 = vector.extract_strided_slice %387 {offsets = [0, 0], sizes = [16, 16], strides = [1, 1]} : vector<16x128xf32> to vector<16x16xf32>
    %406 = vector.extract_strided_slice %387 {offsets = [0, 16], sizes = [16, 16], strides = [1, 1]} : vector<16x128xf32> to vector<16x16xf32>
    %407 = vector.extract_strided_slice %387 {offsets = [0, 32], sizes = [16, 16], strides = [1, 1]} : vector<16x128xf32> to vector<16x16xf32>
    %408 = vector.extract_strided_slice %387 {offsets = [0, 48], sizes = [16, 16], strides = [1, 1]} : vector<16x128xf32> to vector<16x16xf32>
    %409 = vector.extract_strided_slice %387 {offsets = [0, 64], sizes = [16, 16], strides = [1, 1]} : vector<16x128xf32> to vector<16x16xf32>
    %410 = vector.extract_strided_slice %387 {offsets = [0, 80], sizes = [16, 16], strides = [1, 1]} : vector<16x128xf32> to vector<16x16xf32>
    %411 = vector.extract_strided_slice %387 {offsets = [0, 96], sizes = [16, 16], strides = [1, 1]} : vector<16x128xf32> to vector<16x16xf32>
    %412 = vector.extract_strided_slice %387 {offsets = [0, 112], sizes = [16, 16], strides = [1, 1]} : vector<16x128xf32> to vector<16x16xf32>
    %413 = vector.shape_cast %405 : vector<16x16xf32> to vector<1x16x16xf32>
    %414 = vector.shape_cast %406 : vector<16x16xf32> to vector<1x16x16xf32>
    %415 = vector.shape_cast %407 : vector<16x16xf32> to vector<1x16x16xf32>
    %416 = vector.shape_cast %408 : vector<16x16xf32> to vector<1x16x16xf32>
    %417 = vector.shape_cast %409 : vector<16x16xf32> to vector<1x16x16xf32>
    %418 = vector.shape_cast %410 : vector<16x16xf32> to vector<1x16x16xf32>
    %419 = vector.shape_cast %411 : vector<16x16xf32> to vector<1x16x16xf32>
    %420 = vector.shape_cast %412 : vector<16x16xf32> to vector<1x16x16xf32>
    %421 = tpu.concatenate %413, %414, %415, %416, %417, %418, %419, %420 in 0 : vector<1x16x16xf32>, vector<1x16x16xf32>, vector<1x16x16xf32>, vector<1x16x16xf32>, vector<1x16x16xf32>, vector<1x16x16xf32>, vector<1x16x16xf32>, vector<1x16x16xf32> -> vector<8x16x16xf32>
    "tpu.trace_start"() <{level = 10 : i32, message = "hqc,hkc->hqk"}> : () -> ()
    %cst_136 = arith.constant dense<0.000000e+00> : vector<8x2x16xf32>
    %422 = tpu.matmul %404, %421, %cst_136 {dimension_numbers = #tpu.dot_dimension_numbers<[2], [2], [1], [1], [0, 0, 0, 1, 1, 1], [0], [0]>} : vector<8x2x16xf32>, vector<8x16x16xf32>, vector<8x2x16xf32> -> vector<8x2x16xf32>
    "tpu.trace_stop"() : () -> ()
    %423 = vector.shape_cast %7 : vector<2x16xf32> to vector<1x2x16xf32>
    %424 = vector.broadcast %423 : vector<1x2x16xf32> to vector<8x2x16xf32>
    %425 = arith.mulf %422, %424 : vector<8x2x16xf32>
    %426 = vector.shape_cast %9 : vector<2x16xf32> to vector<1x2x16xf32>
    %427 = vector.broadcast %426 : vector<1x2x16xf32> to vector<8x2x16xf32>
    %428 = arith.addf %425, %427 : vector<8x2x16xf32>
    %cst_137 = arith.constant dense<0xFF800000> : vector<8x2xf32>
    %429 = vector.multi_reduction <maximumf>, %428, %cst_137 [2] : vector<8x2x16xf32> to vector<8x2xf32>
    %430 = vector.shape_cast %429 : vector<8x2xf32> to vector<8x2x1xf32>
    %431 = vector.broadcast %430 : vector<8x2x1xf32> to vector<8x2x16xf32>
    %432 = arith.subf %428, %431 : vector<8x2x16xf32>
    %433 = math.exp %432 : vector<8x2x16xf32>
    %cst_138 = arith.constant dense<0.000000e+00> : vector<8x2xf32>
    %434 = vector.multi_reduction <add>, %433, %cst_138 [2] : vector<8x2x16xf32> to vector<8x2xf32>
    %435 = vector.shape_cast %434 : vector<8x2xf32> to vector<8x2x1xf32>
    %436 = tpu.reciprocal %435 {approx = true} : vector<8x2x1xf32> -> vector<8x2x1xf32>
    %437 = vector.broadcast %436 : vector<8x2x1xf32> to vector<8x2x16xf32>
    %438 = arith.mulf %433, %437 : vector<8x2x16xf32>
    "tpu.trace_start"() <{level = 10 : i32, message = "hqk,hkc->hqc"}> : () -> ()
    %cst_139 = arith.constant dense<0.000000e+00> : vector<8x2x16xf32>
    %439 = tpu.matmul %438, %421, %cst_139 {dimension_numbers = #tpu.dot_dimension_numbers<[2], [1], [1], [2], [0, 0, 0, 1, 1, 2], [0], [0]>} : vector<8x2x16xf32>, vector<8x16x16xf32>, vector<8x2x16xf32> -> vector<8x2x16xf32>
    "tpu.trace_stop"() : () -> ()
    %440 = vector.extract_strided_slice %439 {offsets = [0, 0, 0], sizes = [1, 2, 16], strides = [1, 1, 1]} : vector<8x2x16xf32> to vector<1x2x16xf32>
    %441 = vector.shape_cast %440 : vector<1x2x16xf32> to vector<2x16xf32>
    %442 = vector.extract_strided_slice %439 {offsets = [1, 0, 0], sizes = [1, 2, 16], strides = [1, 1, 1]} : vector<8x2x16xf32> to vector<1x2x16xf32>
    %443 = vector.shape_cast %442 : vector<1x2x16xf32> to vector<2x16xf32>
    %444 = vector.extract_strided_slice %439 {offsets = [2, 0, 0], sizes = [1, 2, 16], strides = [1, 1, 1]} : vector<8x2x16xf32> to vector<1x2x16xf32>
    %445 = vector.shape_cast %444 : vector<1x2x16xf32> to vector<2x16xf32>
    %446 = vector.extract_strided_slice %439 {offsets = [3, 0, 0], sizes = [1, 2, 16], strides = [1, 1, 1]} : vector<8x2x16xf32> to vector<1x2x16xf32>
    %447 = vector.shape_cast %446 : vector<1x2x16xf32> to vector<2x16xf32>
    %448 = vector.extract_strided_slice %439 {offsets = [4, 0, 0], sizes = [1, 2, 16], strides = [1, 1, 1]} : vector<8x2x16xf32> to vector<1x2x16xf32>
    %449 = vector.shape_cast %448 : vector<1x2x16xf32> to vector<2x16xf32>
    %450 = vector.extract_strided_slice %439 {offsets = [5, 0, 0], sizes = [1, 2, 16], strides = [1, 1, 1]} : vector<8x2x16xf32> to vector<1x2x16xf32>
    %451 = vector.shape_cast %450 : vector<1x2x16xf32> to vector<2x16xf32>
    %452 = vector.extract_strided_slice %439 {offsets = [6, 0, 0], sizes = [1, 2, 16], strides = [1, 1, 1]} : vector<8x2x16xf32> to vector<1x2x16xf32>
    %453 = vector.shape_cast %452 : vector<1x2x16xf32> to vector<2x16xf32>
    %454 = vector.extract_strided_slice %439 {offsets = [7, 0, 0], sizes = [1, 2, 16], strides = [1, 1, 1]} : vector<8x2x16xf32> to vector<1x2x16xf32>
    %455 = vector.shape_cast %454 : vector<1x2x16xf32> to vector<2x16xf32>
    %456 = tpu.concatenate %441, %443, %445, %447, %449, %451, %453, %455 in 1 : vector<2x16xf32>, vector<2x16xf32>, vector<2x16xf32>, vector<2x16xf32>, vector<2x16xf32>, vector<2x16xf32>, vector<2x16xf32>, vector<2x16xf32> -> vector<2x128xf32>
    %457 = arith.truncf %456 : vector<2x128xf32> to vector<2x128xbf16>
    %cst_140 = arith.constant dense<0.000000e+00> : vector<2x128xf32>
    %458 = tpu.matmul %457, %383, %cst_140 {dimension_numbers = #tpu.dot_dimension_numbers<[1], [0], [0], [1], [0, 0, 1, 1], [], []>} : vector<2x128xbf16>, vector<128x128xbf16>, vector<2x128xf32> -> vector<2x128xf32>
    %459 = arith.addf %351, %458 : vector<2x128xf32>
    %c6_141 = arith.constant 6 : index
    %c0_142 = arith.constant 0 : index
    %c0_143 = arith.constant 0 : index
    %460 = vector.load %arg11[%c6_141, %c0_142, %c0_143] : memref<8x2x128xf32, #tpu.memory_space<vmem>>, vector<1x2x128xf32>
    %461 = vector.shape_cast %460 : vector<1x2x128xf32> to vector<2x128xf32>
    %cst_144 = arith.constant dense<0.000000e+00> : vector<2xf32>
    %462 = vector.multi_reduction <add>, %459, %cst_144 [1] : vector<2x128xf32> to vector<2xf32>
    %463 = vector.shape_cast %462 : vector<2xf32> to vector<2x1xf32>
    %cst_145 = arith.constant 1.280000e+02 : f32
    %464 = vector.broadcast %cst_145 : f32 to vector<2x1xf32>
    %465 = arith.divf %463, %464 : vector<2x1xf32>
    %466 = vector.broadcast %465 : vector<2x1xf32> to vector<2x128xf32>
    %467 = arith.subf %459, %466 : vector<2x128xf32>
    %468 = arith.mulf %467, %467 : vector<2x128xf32>
    %cst_146 = arith.constant dense<0.000000e+00> : vector<2xf32>
    %469 = vector.multi_reduction <add>, %468, %cst_146 [1] : vector<2x128xf32> to vector<2xf32>
    %470 = vector.shape_cast %469 : vector<2xf32> to vector<2x1xf32>
    %cst_147 = arith.constant 1.280000e+02 : f32
    %471 = vector.broadcast %cst_147 : f32 to vector<2x1xf32>
    %472 = arith.divf %470, %471 : vector<2x1xf32>
    %473 = vector.broadcast %465 : vector<2x1xf32> to vector<2x128xf32>
    %474 = arith.subf %459, %473 : vector<2x128xf32>
    %cst_148 = arith.constant 9.99999974E-6 : f32
    %475 = vector.broadcast %cst_148 : f32 to vector<2x1xf32>
    %476 = arith.addf %472, %475 : vector<2x1xf32>
    %477 = math.rsqrt %476 : vector<2x1xf32>
    %478 = vector.broadcast %477 : vector<2x1xf32> to vector<2x128xf32>
    %479 = arith.mulf %474, %478 : vector<2x128xf32>
    %480 = vector.extract_strided_slice %461 {offsets = [0, 0], sizes = [1, 128], strides = [1, 1]} : vector<2x128xf32> to vector<1x128xf32>
    %481 = vector.broadcast %480 : vector<1x128xf32> to vector<2x128xf32>
    %482 = arith.mulf %479, %481 : vector<2x128xf32>
    %483 = vector.extract_strided_slice %461 {offsets = [1, 0], sizes = [1, 128], strides = [1, 1]} : vector<2x128xf32> to vector<1x128xf32>
    %484 = vector.broadcast %483 : vector<1x128xf32> to vector<2x128xf32>
    %485 = arith.addf %482, %484 : vector<2x128xf32>
    %486 = arith.truncf %485 : vector<2x128xf32> to vector<2x128xbf16>
    %c2_149 = arith.constant 2 : index
    %c0_150 = arith.constant 0 : index
    %c0_151 = arith.constant 0 : index
    %487 = vector.load %arg9[%c2_149, %c0_150, %c0_151] : memref<3x128x256xbf16, #tpu.memory_space<vmem>>, vector<1x128x256xbf16>
    %488 = vector.shape_cast %487 : vector<1x128x256xbf16> to vector<128x256xbf16>
    %cst_152 = arith.constant dense<0.000000e+00> : vector<2x256xf32>
    %489 = tpu.matmul %486, %488, %cst_152 {dimension_numbers = #tpu.dot_dimension_numbers<[1], [0], [0], [1], [0, 0, 1, 1], [], []>} : vector<2x128xbf16>, vector<128x256xbf16>, vector<2x256xf32> -> vector<2x256xf32>
    %c2_153 = arith.constant 2 : index
    %c0_154 = arith.constant 0 : index
    %c0_155 = arith.constant 0 : index
    %490 = vector.load %arg13[%c2_153, %c0_154, %c0_155] : memref<3x1x256xf32, #tpu.memory_space<vmem>>, vector<1x1x256xf32>
    %491 = vector.shape_cast %490 : vector<1x1x256xf32> to vector<1x256xf32>
    %492 = vector.broadcast %491 : vector<1x256xf32> to vector<2x256xf32>
    %493 = arith.addf %489, %492 : vector<2x256xf32>
    %cst_156 = arith.constant 0.000000e+00 : f32
    %494 = vector.broadcast %cst_156 : f32 to vector<2x256xf32>
    %495 = arith.maximumf %493, %494 : vector<2x256xf32>
    %496 = arith.truncf %495 : vector<2x256xf32> to vector<2x256xbf16>
    %c2_157 = arith.constant 2 : index
    %c0_158 = arith.constant 0 : index
    %c0_159 = arith.constant 0 : index
    %497 = vector.load %arg10[%c2_157, %c0_158, %c0_159] : memref<3x256x128xbf16, #tpu.memory_space<vmem>>, vector<1x256x128xbf16>
    %498 = vector.shape_cast %497 : vector<1x256x128xbf16> to vector<256x128xbf16>
    %cst_160 = arith.constant dense<0.000000e+00> : vector<2x128xf32>
    %499 = tpu.matmul %496, %498, %cst_160 {dimension_numbers = #tpu.dot_dimension_numbers<[1], [0], [0], [1], [0, 0, 1, 1], [], []>} : vector<2x256xbf16>, vector<256x128xbf16>, vector<2x128xf32> -> vector<2x128xf32>
    %500 = arith.addf %459, %499 : vector<2x128xf32>
    %c3_161 = arith.constant 3 : index
    %c0_162 = arith.constant 0 : index
    %c0_163 = arith.constant 0 : index
    %501 = vector.load %arg12[%c3_161, %c0_162, %c0_163] : memref<4x1x128xf32, #tpu.memory_space<vmem>>, vector<1x1x128xf32>
    %502 = vector.shape_cast %501 : vector<1x1x128xf32> to vector<1x128xf32>
    %503 = vector.broadcast %502 : vector<1x128xf32> to vector<2x128xf32>
    %504 = arith.addf %500, %503 : vector<2x128xf32>
    %c7_164 = arith.constant 7 : index
    %c0_165 = arith.constant 0 : index
    %c0_166 = arith.constant 0 : index
    %505 = vector.load %arg11[%c7_164, %c0_165, %c0_166] : memref<8x2x128xf32, #tpu.memory_space<vmem>>, vector<1x2x128xf32>
    %506 = vector.shape_cast %505 : vector<1x2x128xf32> to vector<2x128xf32>
    %cst_167 = arith.constant dense<0.000000e+00> : vector<2xf32>
    %507 = vector.multi_reduction <add>, %504, %cst_167 [1] : vector<2x128xf32> to vector<2xf32>
    %508 = vector.shape_cast %507 : vector<2xf32> to vector<2x1xf32>
    %cst_168 = arith.constant 1.280000e+02 : f32
    %509 = vector.broadcast %cst_168 : f32 to vector<2x1xf32>
    %510 = arith.divf %508, %509 : vector<2x1xf32>
    %511 = vector.broadcast %510 : vector<2x1xf32> to vector<2x128xf32>
    %512 = arith.subf %504, %511 : vector<2x128xf32>
    %513 = arith.mulf %512, %512 : vector<2x128xf32>
    %cst_169 = arith.constant dense<0.000000e+00> : vector<2xf32>
    %514 = vector.multi_reduction <add>, %513, %cst_169 [1] : vector<2x128xf32> to vector<2xf32>
    %515 = vector.shape_cast %514 : vector<2xf32> to vector<2x1xf32>
    %cst_170 = arith.constant 1.280000e+02 : f32
    %516 = vector.broadcast %cst_170 : f32 to vector<2x1xf32>
    %517 = arith.divf %515, %516 : vector<2x1xf32>
    %518 = vector.broadcast %510 : vector<2x1xf32> to vector<2x128xf32>
    %519 = arith.subf %504, %518 : vector<2x128xf32>
    %cst_171 = arith.constant 9.99999974E-6 : f32
    %520 = vector.broadcast %cst_171 : f32 to vector<2x1xf32>
    %521 = arith.addf %517, %520 : vector<2x1xf32>
    %522 = math.rsqrt %521 : vector<2x1xf32>
    %523 = vector.broadcast %522 : vector<2x1xf32> to vector<2x128xf32>
    %524 = arith.mulf %519, %523 : vector<2x128xf32>
    %525 = vector.extract_strided_slice %506 {offsets = [0, 0], sizes = [1, 128], strides = [1, 1]} : vector<2x128xf32> to vector<1x128xf32>
    %526 = vector.broadcast %525 : vector<1x128xf32> to vector<2x128xf32>
    %527 = arith.mulf %524, %526 : vector<2x128xf32>
    %528 = vector.extract_strided_slice %506 {offsets = [1, 0], sizes = [1, 128], strides = [1, 1]} : vector<2x128xf32> to vector<1x128xf32>
    %529 = vector.broadcast %528 : vector<1x128xf32> to vector<2x128xf32>
    %530 = arith.addf %527, %529 : vector<2x128xf32>
    %531 = arith.truncf %530 : vector<2x128xf32> to vector<2x128xbf16>
    %c9 = arith.constant 9 : index
    %c0_172 = arith.constant 0 : index
    %c0_173 = arith.constant 0 : index
    %532 = vector.load %arg8[%c9, %c0_172, %c0_173] : memref<11x128x128xbf16, #tpu.memory_space<vmem>>, vector<1x128x128xbf16>
    %533 = vector.shape_cast %532 : vector<1x128x128xbf16> to vector<128x128xbf16>
    %cst_174 = arith.constant dense<0.000000e+00> : vector<2x128xf32>
    %534 = tpu.matmul %531, %533, %cst_174 {dimension_numbers = #tpu.dot_dimension_numbers<[1], [0], [0], [1], [0, 0, 1, 1], [], []>} : vector<2x128xbf16>, vector<128x128xbf16>, vector<2x128xf32> -> vector<2x128xf32>
    %535 = arith.truncf %350 : vector<16x128xf32> to vector<16x128xbf16>
    %c10 = arith.constant 10 : index
    %c0_175 = arith.constant 0 : index
    %c0_176 = arith.constant 0 : index
    %536 = vector.load %arg8[%c10, %c0_175, %c0_176] : memref<11x128x128xbf16, #tpu.memory_space<vmem>>, vector<1x128x128xbf16>
    %537 = vector.shape_cast %536 : vector<1x128x128xbf16> to vector<128x128xbf16>
    %cst_177 = arith.constant dense<0.000000e+00> : vector<16x128xf32>
    %538 = tpu.matmul %535, %537, %cst_177 {dimension_numbers = #tpu.dot_dimension_numbers<[1], [0], [0], [1], [0, 0, 1, 1], [], []>} : vector<16x128xbf16>, vector<128x128xbf16>, vector<16x128xf32> -> vector<16x128xf32>
    %cst_178 = arith.constant dense<0.000000e+00> : vector<2x16xf32>
    %539 = tpu.matmul %534, %538, %cst_178 {dimension_numbers = #tpu.dot_dimension_numbers<[1], [1], [0], [0], [0, 0, 1, 0], [], []>} : vector<2x128xf32>, vector<16x128xf32>, vector<2x16xf32> -> vector<2x16xf32>
    %540 = math.tanh %539 : vector<2x16xf32>
    %cst_179 = arith.constant 0.533333361 : f32
    %541 = vector.broadcast %cst_179 : f32 to vector<2x16xf32>
    %542 = arith.mulf %541, %540 : vector<2x16xf32>
    %543 = arith.mulf %542, %7 : vector<2x16xf32>
    %cst_180 = arith.constant -1.000000e+01 : f32
    %cst_181 = arith.constant -2.000000e+00 : f32
    %544 = vector.broadcast %cst_180 : f32 to vector<2x16xf32>
    %545 = arith.maximumf %544, %539 : vector<2x16xf32>
    %546 = vector.broadcast %cst_181 : f32 to vector<2x16xf32>
    %547 = arith.minimumf %546, %545 : vector<2x16xf32>
    %548 = math.exp %547 : vector<2x16xf32>
    %cst_182 = arith.constant 0.000000e+00 : f32
    %549 = vector.broadcast %cst_182 : f32 to vector<2x96xf32>
    %550 = tpu.concatenate %543, %548, %549 in 1 : vector<2x16xf32>, vector<2x16xf32>, vector<2x96xf32> -> vector<2x128xf32>
    %c0_183 = arith.constant 0 : index
    %c0_184 = arith.constant 0 : index
    %c0_185 = arith.constant 0 : index
    %551 = vector.load %arg14[%c0_183, %c0_184, %c0_185] : memref<1x2x128xf32, #tpu.memory_space<vmem>>, vector<1x2x128xf32>
    %552 = vector.shape_cast %551 : vector<1x2x128xf32> to vector<2x128xf32>
    %553 = vector.shape_cast %550 : vector<2x128xf32> to vector<1x2x128xf32>
    tpu.vector_store %arg14[%c0_183, %c0_184, %c0_185], %553 {strides = array<i32>} : memref<1x2x128xf32, #tpu.memory_space<vmem>>, vector<1x2x128xf32>,
    %c0_186 = arith.constant 0 : index
    %c0_187 = arith.constant 0 : index
    %c0_188 = arith.constant 0 : index
    %554 = vector.load %arg15[%c0_186, %c0_187, %c0_188] : memref<1x2x128xf32, #tpu.memory_space<vmem>>, vector<1x2x128xf32>
    %555 = vector.shape_cast %554 : vector<1x2x128xf32> to vector<2x128xf32>
    %556 = vector.shape_cast %351 : vector<2x128xf32> to vector<1x2x128xf32>
    tpu.vector_store %arg15[%c0_186, %c0_187, %c0_188], %556 {strides = array<i32>} : memref<1x2x128xf32, #tpu.memory_space<vmem>>, vector<1x2x128xf32>,
    return
  }
  func.func @transform_0(%arg0: i32) -> (i32, i32, i32) {
    %c0_i32 = arith.constant 0 : i32
    %c0_i32_0 = arith.constant 0 : i32
    %c0_i32_1 = arith.constant 0 : i32
    return %arg0, %c0_i32, %c0_i32_0 : i32, i32, i32
  }
  func.func @transform_1(%arg0: i32) -> (i32, i32, i32) {
    %c0_i32 = arith.constant 0 : i32
    %c0_i32_0 = arith.constant 0 : i32
    %c0_i32_1 = arith.constant 0 : i32
    return %arg0, %c0_i32, %c0_i32_0 : i32, i32, i32
  }
  func.func @transform_2(%arg0: i32) -> (i32, i32, i32) {
    %c0_i32 = arith.constant 0 : i32
    %c0_i32_0 = arith.constant 0 : i32
    %c0_i32_1 = arith.constant 0 : i32
    return %arg0, %c0_i32, %c0_i32_0 : i32, i32, i32
  }
  func.func @transform_3(%arg0: i32) -> (i32, i32, i32) {
    %c0_i32 = arith.constant 0 : i32
    %c0_i32_0 = arith.constant 0 : i32
    %c0_i32_1 = arith.constant 0 : i32
    return %arg0, %c0_i32, %c0_i32_0 : i32, i32, i32
  }
  func.func @transform_4(%arg0: i32) -> (i32, i32, i32) {
    %c0_i32 = arith.constant 0 : i32
    %c0_i32_0 = arith.constant 0 : i32
    %c0_i32_1 = arith.constant 0 : i32
    return %arg0, %c0_i32, %c0_i32_0 : i32, i32, i32
  }
  func.func @transform_5(%arg0: i32) -> (i32, i32, i32) {
    %c0_i32 = arith.constant 0 : i32
    %c0_i32_0 = arith.constant 0 : i32
    %c0_i32_1 = arith.constant 0 : i32
    return %arg0, %c0_i32, %c0_i32_0 : i32, i32, i32
  }
  func.func @transform_6(%arg0: i32) -> (i32, i32) {
    %c0_i32 = arith.constant 0 : i32
    %c0_i32_0 = arith.constant 0 : i32
    %c0_i32_1 = arith.constant 0 : i32
    return %c0_i32, %c0_i32_0 : i32, i32
  }
  func.func @transform_7(%arg0: i32) -> (i32, i32, i32) {
    %c0_i32 = arith.constant 0 : i32
    %c0_i32_0 = arith.constant 0 : i32
    %c0_i32_1 = arith.constant 0 : i32
    %c0_i32_2 = arith.constant 0 : i32
    return %c0_i32, %c0_i32_0, %c0_i32_1 : i32, i32, i32
  }
  func.func @transform_8(%arg0: i32) -> (i32, i32, i32) {
    %c0_i32 = arith.constant 0 : i32
    %c0_i32_0 = arith.constant 0 : i32
    %c0_i32_1 = arith.constant 0 : i32
    %c0_i32_2 = arith.constant 0 : i32
    return %c0_i32, %c0_i32_0, %c0_i32_1 : i32, i32, i32
  }
  func.func @transform_9(%arg0: i32) -> (i32, i32, i32) {
    %c0_i32 = arith.constant 0 : i32
    %c0_i32_0 = arith.constant 0 : i32
    %c0_i32_1 = arith.constant 0 : i32
    %c0_i32_2 = arith.constant 0 : i32
    return %c0_i32, %c0_i32_0, %c0_i32_1 : i32, i32, i32
  }
  func.func @transform_10(%arg0: i32) -> (i32, i32, i32) {
    %c0_i32 = arith.constant 0 : i32
    %c0_i32_0 = arith.constant 0 : i32
    %c0_i32_1 = arith.constant 0 : i32
    %c0_i32_2 = arith.constant 0 : i32
    return %c0_i32, %c0_i32_0, %c0_i32_1 : i32, i32, i32
  }
  func.func @transform_11(%arg0: i32) -> (i32, i32, i32) {
    %c0_i32 = arith.constant 0 : i32
    %c0_i32_0 = arith.constant 0 : i32
    %c0_i32_1 = arith.constant 0 : i32
    %c0_i32_2 = arith.constant 0 : i32
    return %c0_i32, %c0_i32_0, %c0_i32_1 : i32, i32, i32
  }
  func.func @transform_12(%arg0: i32) -> (i32, i32, i32) {
    %c0_i32 = arith.constant 0 : i32
    %c0_i32_0 = arith.constant 0 : i32
    %c0_i32_1 = arith.constant 0 : i32
    %c0_i32_2 = arith.constant 0 : i32
    return %c0_i32, %c0_i32_0, %c0_i32_1 : i32, i32, i32
  }
  func.func @transform_13(%arg0: i32) -> (i32, i32, i32) {
    %c0_i32 = arith.constant 0 : i32
    %c0_i32_0 = arith.constant 0 : i32
    %c0_i32_1 = arith.constant 0 : i32
    return %arg0, %c0_i32, %c0_i32_0 : i32, i32, i32
  }
  func.func @transform_14(%arg0: i32) -> (i32, i32, i32) {
    %c0_i32 = arith.constant 0 : i32
    %c0_i32_0 = arith.constant 0 : i32
    %c0_i32_1 = arith.constant 0 : i32
    return %arg0, %c0_i32, %c0_i32_0 : i32, i32, i32
  }
}

</mosaic_0001>

<llo_original>
// kernel: tpu_custom_call.1
$region0: #{tpu_custom_call.1}
  #allocation0 [shape = 'u32[]', space=smem, size = 0x4, offset = 0x4, fixed_abs, tag = 'smem constant byte address 0x4 - core index']
  #allocation1 [shape = 'u32[144,128]{1,0:T(1,128)}', space=vmem, size = 0x12000, scoped, tag = 'internal scratch']
  %s0 = inlined_call_operand.vmem [shape: f32[1,16,4], index: 0, kind: input, shape index: {}]
  %s1 = inlined_call_operand.vmem [shape: f32[1,16,16], index: 1, kind: input, shape index: {}]
  %s2 = inlined_call_operand.hbm [shape: f32[1,16,16], index: 2, kind: input, shape index: {}]
  %s3 = inlined_call_operand.hbm [shape: f32[1,2,16], index: 3, kind: input, shape index: {}]
  %s4 = inlined_call_operand.hbm [shape: f32[1,2,16], index: 4, kind: input, shape index: {}]
  %s5 = inlined_call_operand.hbm [shape: f32[1,2,16], index: 5, kind: input, shape index: {}]
  %s6 = inlined_call_operand.hbm [shape: bf16[4,128], index: 6, kind: input, shape index: {}]
  %s7 = inlined_call_operand.hbm [shape: bf16[11,128,128], index: 7, kind: input, shape index: {}]
  %s8 = inlined_call_operand.hbm [shape: bf16[3,128,256], index: 8, kind: input, shape index: {}]
  %s9 = inlined_call_operand.hbm [shape: bf16[3,256,128], index: 9, kind: input, shape index: {}]
  %s10 = inlined_call_operand.vmem [shape: f32[8,2,128], index: 10, kind: input, shape index: {}]
  %s11 = inlined_call_operand.hbm [shape: f32[4,1,128], index: 11, kind: input, shape index: {}]
  %s12 = inlined_call_operand.vmem [shape: f32[3,1,256], index: 12, kind: input, shape index: {}]
  %s13 = inlined_call_operand.hbm [shape: f32[1,2,128], index: 13, kind: output, shape index: {0}]
  %s14 = inlined_call_operand.hbm [shape: f32[1,2,128], index: 14, kind: output, shape index: {1}]
  %15 = xla_tuple %s13, %s14
  %s16 = sld [smem:[#allocation0]]
  $region106: #{tpu_custom_call.1} parent=0
    _
  %s18 = ssub.s32 1, %s16
  %s19 = scalar_select 0, %s18, %s16
  $region1: #{tpu_custom_call.1} parent=0
    #allocation2 [shape = 'u8[8192]{0}', space=vmem, size = 0x2000, scoped, tag = 'input window, operand 2, single buffered']
    #allocation3 [shape = 's32[1]{0}', space=sflag, size = 0x4, scoped, tag = 'scoped memory for tpu_custom_call.1']
    #allocation4 [shape = 's32[1]{0}', space=sflag, size = 0x4, scoped, tag = 'scoped memory for tpu_custom_call.1']
    #allocation5 [shape = 'u8[1024]{0}', space=vmem, size = 0x400, scoped, tag = 'input window, operand 3, single buffered']
    #allocation6 [shape = 's32[1]{0}', space=sflag, size = 0x4, scoped, tag = 'scoped memory for tpu_custom_call.1']
    #allocation7 [shape = 'u8[1024]{0}', space=vmem, size = 0x400, scoped, tag = 'input window, operand 4, single buffered']
    #allocation8 [shape = 'u8[1024]{0}', space=vmem, size = 0x400, scoped, tag = 'input window, operand 5, single buffered']
    #allocation9 [shape = 's32[1]{0}', space=sflag, size = 0x4, scoped, tag = 'scoped memory for tpu_custom_call.1']
    #allocation10 [shape = 'u8[1024]{0}', space=vmem, size = 0x400, scoped, tag = 'input window, operand 6, single buffered']
    #allocation11 [shape = 'u8[360448]{0}', space=vmem, size = 0x58000, scoped, tag = 'input window, operand 7, single buffered']
    #allocation12 [shape = 's32[1]{0}', space=sflag, size = 0x4, scoped, tag = 'scoped memory for tpu_custom_call.1']
    #allocation13 [shape = 'u8[196608]{0}', space=vmem, size = 0x30000, scoped, tag = 'input window, operand 8, single buffered']
    #allocation14 [shape = 'u8[196608]{0}', space=vmem, size = 0x30000, scoped, tag = 'input window, operand 9, single buffered']
    #allocation15 [shape = 's32[1]{0}', space=sflag, size = 0x4, scoped, tag = 'scoped memory for tpu_custom_call.1']
    #allocation16 [shape = 'u8[2048]{0}', space=vmem, size = 0x800, scoped, tag = 'input window, operand 11, single buffered']
    #allocation17 [shape = 'u8[1024]{0}', space=vmem, size = 0x400, scoped, tag = 'output window, operand 0, single buffered']
    #allocation18 [shape = 'u8[1024]{0}', space=vmem, size = 0x400, scoped, tag = 'output window, operand 1, single buffered']
    #allocation19 [shape = 's32[1]{0}', space=sflag, size = 0x4, scoped, tag = 'scoped memory for tpu_custom_call.1']
    %20 = vsyncpa [#allocation3], 0
    %21 = vsyncpa [#allocation6], 0
    %22 = vsyncpa [#allocation9], 0
    %23 = vsyncpa [#allocation12], 0
    %24 = vsyncpa [#allocation15], 0
    %25 = vsyncpa [#allocation4], 0
    %26 = vsyncpa [#allocation19], 0
    // Predicated region
    $region2: #{tpu_custom_call.1} parent=1 // pred_check
      _
    $region3: #{tpu_custom_call.1} parent=1 // pred_check_branch
      %28 = sbr.rel (0) target = $region5
    $region4: #{tpu_custom_call.1} parent=1 // pred_region
      _
    $region5: #{tpu_custom_call.1} parent=1 // pred_fallthru
      _
    // Predicated region
    $region6: #{tpu_custom_call.1} parent=1 // pred_check
      _
    $region7: #{tpu_custom_call.1} parent=1 // pred_check_branch
      %30 = sbr.rel (0) target = $region9
    $region8: #{tpu_custom_call.1} parent=1 // pred_region
      _
    $region9: #{tpu_custom_call.1} parent=1 // pred_fallthru
      _
    // Predicated region
    $region10: #{tpu_custom_call.1} parent=1 // pred_check
      _
    $region11: #{tpu_custom_call.1} parent=1 // pred_check_branch
      %32 = sbr.rel (0) target = $region13
    $region12: #{tpu_custom_call.1} parent=1 // pred_region
      %s34 = ssub.s32 256, 256
      %35 = vsyncadd [#allocation3], %s34
      %s36 = sshll.u32 [#allocation2], 4
      %s37 = int_to_ptr.vmem [resolvable:$true] %s36
      %42 = dma.hbm_to_vmem [thread:$0]  %s2, 256, %s37, [#allocation3], 128, 128, 8
    $region13: #{tpu_custom_call.1} parent=1 // pred_fallthru
      _
    // Predicated region
    $region14: #{tpu_custom_call.1} parent=1 // pred_check
      _
    $region15: #{tpu_custom_call.1} parent=1 // pred_check_branch
      %44 = sbr.rel (0) target = $region17
    $region16: #{tpu_custom_call.1} parent=1 // pred_region
      %s46 = ssub.s32 32, 32
      %47 = vsyncadd [#allocation6], %s46
      %s49 = sshll.u32 [#allocation5], 4
      %s50 = int_to_ptr.vmem [resolvable:$true] %s49
      %52 = dma.hbm_to_vmem [thread:$0]  %s3, 32, %s50, [#allocation6]
    $region17: #{tpu_custom_call.1} parent=1 // pred_fallthru
      _
    // Predicated region
    $region18: #{tpu_custom_call.1} parent=1 // pred_check
      _
    $region19: #{tpu_custom_call.1} parent=1 // pred_check_branch
      %54 = sbr.rel (0) target = $region21
    $region20: #{tpu_custom_call.1} parent=1 // pred_region
      %s56 = ssub.s32 32, 32
      %57 = vsyncadd [#allocation6], %s56
      %s59 = sshll.u32 [#allocation7], 4
      %s60 = int_to_ptr.vmem [resolvable:$true] %s59
      %62 = dma.hbm_to_vmem [thread:$0]  %s4, 32, %s60, [#allocation6]
    $region21: #{tpu_custom_call.1} parent=1 // pred_fallthru
      _
    // Predicated region
    $region22: #{tpu_custom_call.1} parent=1 // pred_check
      _
    $region23: #{tpu_custom_call.1} parent=1 // pred_check_branch
      %64 = sbr.rel (0) target = $region25
    $region24: #{tpu_custom_call.1} parent=1 // pred_region
      %s66 = ssub.s32 32, 32
      %67 = vsyncadd [#allocation9], %s66
      %s69 = sshll.u32 [#allocation8], 4
      %s70 = int_to_ptr.vmem [resolvable:$true] %s69
      %72 = dma.hbm_to_vmem [thread:$0]  %s5, 32, %s70, [#allocation9]
    $region25: #{tpu_custom_call.1} parent=1 // pred_fallthru
      _
    // Predicated region
    $region26: #{tpu_custom_call.1} parent=1 // pred_check
      _
    $region27: #{tpu_custom_call.1} parent=1 // pred_check_branch
      %74 = sbr.rel (0) target = $region29
    $region28: #{tpu_custom_call.1} parent=1 // pred_region
      %s76 = ssub.s32 32, 32
      %77 = vsyncadd [#allocation9], %s76
      %s79 = sshll.u32 [#allocation10], 4
      %s80 = int_to_ptr.vmem [resolvable:$true] %s79
      %82 = dma.hbm_to_vmem [thread:$0]  %s6, 32, %s80, [#allocation9]
    $region29: #{tpu_custom_call.1} parent=1 // pred_fallthru
      _
    // Predicated region
    $region30: #{tpu_custom_call.1} parent=1 // pred_check
      _
    $region31: #{tpu_custom_call.1} parent=1 // pred_check_branch
      %84 = sbr.rel (0) target = $region33
    $region32: #{tpu_custom_call.1} parent=1 // pred_region
      %s86 = ssub.s32 11264, 11264
      %87 = vsyncadd [#allocation12], %s86
      %s88 = sshll.u32 [#allocation11], 4
      %s89 = int_to_ptr.vmem [resolvable:$true] %s88
      %94 = dma.hbm_to_vmem [thread:$0]  %s7, 11264, %s89, [#allocation12], 64, 64, 4
    $region33: #{tpu_custom_call.1} parent=1 // pred_fallthru
      _
    // Predicated region
    $region34: #{tpu_custom_call.1} parent=1 // pred_check
      _
    $region35: #{tpu_custom_call.1} parent=1 // pred_check_branch
      %96 = sbr.rel (0) target = $region37
    $region36: #{tpu_custom_call.1} parent=1 // pred_region
      %s98 = ssub.s32 6144, 6144
      %99 = vsyncadd [#allocation12], %s98
      %s100 = sshll.u32 [#allocation13], 4
      %s101 = int_to_ptr.vmem [resolvable:$true] %s100
      %106 = dma.hbm_to_vmem [thread:$0]  %s8, 6144, %s101, [#allocation12], 128, 128, 8
    $region37: #{tpu_custom_call.1} parent=1 // pred_fallthru
      _
    // Predicated region
    $region38: #{tpu_custom_call.1} parent=1 // pred_check
      _
    $region39: #{tpu_custom_call.1} parent=1 // pred_check_branch
      %108 = sbr.rel (0) target = $region41
    $region40: #{tpu_custom_call.1} parent=1 // pred_region
      %s110 = ssub.s32 6144, 6144
      %111 = vsyncadd [#allocation15], %s110
      %s112 = sshll.u32 [#allocation14], 4
      %s113 = int_to_ptr.vmem [resolvable:$true] %s112
      %118 = dma.hbm_to_vmem [thread:$0]  %s9, 6144, %s113, [#allocation15], 64, 64, 4
    $region41: #{tpu_custom_call.1} parent=1 // pred_fallthru
      _
    // Predicated region
    $region42: #{tpu_custom_call.1} parent=1 // pred_check
      _
    $region43: #{tpu_custom_call.1} parent=1 // pred_check_branch
      %120 = sbr.rel (0) target = $region45
    $region44: #{tpu_custom_call.1} parent=1 // pred_region
      _
    $region45: #{tpu_custom_call.1} parent=1 // pred_fallthru
      _
    // Predicated region
    $region46: #{tpu_custom_call.1} parent=1 // pred_check
      _
    $region47: #{tpu_custom_call.1} parent=1 // pred_check_branch
      %122 = sbr.rel (0) target = $region49
    $region48: #{tpu_custom_call.1} parent=1 // pred_region
      %s124 = ssub.s32 64, 64
      %125 = vsyncadd [#allocation15], %s124
      %s126 = sshll.u32 [#allocation16], 4
      %s127 = int_to_ptr.vmem [resolvable:$true] %s126
      %132 = dma.hbm_to_vmem [thread:$0]  %s11, 64, %s127, [#allocation15], 16, 16, 1
    $region49: #{tpu_custom_call.1} parent=1 // pred_fallthru
      _
    // Predicated region
    $region50: #{tpu_custom_call.1} parent=1 // pred_check
      _
    $region51: #{tpu_custom_call.1} parent=1 // pred_check_branch
      %134 = sbr.rel (0) target = $region53
    $region52: #{tpu_custom_call.1} parent=1 // pred_region
      _
    $region53: #{tpu_custom_call.1} parent=1 // pred_fallthru
      _
    // Predicated region
    $region54: #{tpu_custom_call.1} parent=1 // pred_check
      _
    $region55: #{tpu_custom_call.1} parent=1 // pred_check_branch
      %136 = sbr.rel (0) target = $region57
    $region56: #{tpu_custom_call.1} parent=1 // pred_region
      %137 = dma.done [#allocation3], 256
    $region57: #{tpu_custom_call.1} parent=1 // pred_fallthru
      _
    // Predicated region
    $region58: #{tpu_custom_call.1} parent=1 // pred_check
      _
    $region59: #{tpu_custom_call.1} parent=1 // pred_check_branch
      %139 = sbr.rel (0) target = $region61
    $region60: #{tpu_custom_call.1} parent=1 // pred_region
      %140 = dma.done [#allocation6], 32
    $region61: #{tpu_custom_call.1} parent=1 // pred_fallthru
      _
    // Predicated region
    $region62: #{tpu_custom_call.1} parent=1 // pred_check
      _
    $region63: #{tpu_custom_call.1} parent=1 // pred_check_branch
      %142 = sbr.rel (0) target = $region65
    $region64: #{tpu_custom_call.1} parent=1 // pred_region
      %143 = dma.done [#allocation6], 32
    $region65: #{tpu_custom_call.1} parent=1 // pred_fallthru
      _
    // Predicated region
    $region66: #{tpu_custom_call.1} parent=1 // pred_check
      _
    $region67: #{tpu_custom_call.1} parent=1 // pred_check_branch
      %145 = sbr.rel (0) target = $region69
    $region68: #{tpu_custom_call.1} parent=1 // pred_region
      %146 = dma.done [#allocation9], 32
    $region69: #{tpu_custom_call.1} parent=1 // pred_fallthru
      _
    // Predicated region
    $region70: #{tpu_custom_call.1} parent=1 // pred_check
      _
    $region71: #{tpu_custom_call.1} parent=1 // pred_check_branch
      %148 = sbr.rel (0) target = $region73
    $region72: #{tpu_custom_call.1} parent=1 // pred_region
      %149 = dma.done [#allocation9], 32
    $region73: #{tpu_custom_call.1} parent=1 // pred_fallthru
      _
    // Predicated region
    $region74: #{tpu_custom_call.1} parent=1 // pred_check
      _
    $region75: #{tpu_custom_call.1} parent=1 // pred_check_branch
      %151 = sbr.rel (0) target = $region77
    $region76: #{tpu_custom_call.1} parent=1 // pred_region
      %152 = dma.done [#allocation12], 11264
    $region77: #{tpu_custom_call.1} parent=1 // pred_fallthru
      _
    // Predicated region
    $region78: #{tpu_custom_call.1} parent=1 // pred_check
      _
    $region79: #{tpu_custom_call.1} parent=1 // pred_check_branch
      %154 = sbr.rel (0) target = $region81
    $region80: #{tpu_custom_call.1} parent=1 // pred_region
      %155 = dma.done [#allocation12], 6144
    $region81: #{tpu_custom_call.1} parent=1 // pred_fallthru
      _
    // Predicated region
    $region82: #{tpu_custom_call.1} parent=1 // pred_check
      _
    $region83: #{tpu_custom_call.1} parent=1 // pred_check_branch
      %157 = sbr.rel (0) target = $region85
    $region84: #{tpu_custom_call.1} parent=1 // pred_region
      %158 = dma.done [#allocation15], 6144
    $region85: #{tpu_custom_call.1} parent=1 // pred_fallthru
      _
    // Predicated region
    $region86: #{tpu_custom_call.1} parent=1 // pred_check
      _
    $region87: #{tpu_custom_call.1} parent=1 // pred_check_branch
      %160 = sbr.rel (0) target = $region89
    $region88: #{tpu_custom_call.1} parent=1 // pred_region
      %161 = dma.done [#allocation15], 64
    $region89: #{tpu_custom_call.1} parent=1 // pred_fallthru
      _
    %v163 = vld [vmem:[%s0] sm:$0xff]
    %v164 = vld [vmem:[%s0 + $0x8] sm:$0xff]
    %v165 = vld [vmem:[%s1] sm:$0xff]
    %v166 = vld [vmem:[%s1 + $0x8] sm:$0xff]
    %v167 = vld [vmem:[#allocation2] sm:$0xff]
    %v168 = vld [vmem:[#allocation2 + $0x8] sm:$0xff]
    %v169 = vld [vmem:[#allocation5] sm:$0x3]
    %v170 = vld [vmem:[#allocation7] sm:$0x3]
    %v171 = vld [vmem:[#allocation8] sm:$0x3]
    %v172 = vpack.c.bf16 %v164, %v163
    %v173 = vld [vmem:[#allocation10] sm:$0x3]
    %v174 = vld [vmem:[#allocation16] sm:$0x1]
    %v176 = vlaneseq
    %v177 = vshrl.u32 %v176, 7
    %v178 = vsub.s32 0, %v177
    %v179 = vrot.slane %v174, %v178
    %vm181 = vcmask 31744
    %v183 = vsel %vm181, %v172, 0
    %vm185 = vcmask 1041408
    %v187 = vsel %vm185, %v173, 0
    %189 = vmatprep.subr.bf16.mxu0 0
    %190 = vmatpush1.bf16.msra.mxu0 0
    %191 = vmatprep.subr.bf16.mxu0 0
    %192 = vmatpush1.bf16.msra.mxu0 0
    %193 = vmatprep.subr.bf16.mxu0 0
    %194 = vmatpush1.bf16.msra.mxu0 0
    %195 = vmatprep.subr.bf16.mxu0 0
    %196 = vmatpush1.bf16.msra.mxu0 0
    %197 = vmatprep.subr.bf16.mxu0 0
    %198 = vmatpush1.bf16.msra.mxu0 0
    %199 = vmatprep.subr.bf16.mxu0 0
    %200 = vmatpush1.bf16.msra.mxu0 0
    %201 = vmatprep.subr.bf16.mxu0 0
    %202 = vmatpush1.bf16.msra.mxu0 0
    %203 = vmatprep.subr.bf16.mxu0 0
    %204 = vmatpush1.bf16.msra.mxu0 %v187
    %205 = vmatprep.subr.bf16.mxu0 0
    %206 = vmatpush2.bf16.msra.mxu0 0
    %207 = vmatprep.subr.bf16.mxu0 0
    %208 = vmatpush2.bf16.msra.mxu0 0
    %209 = vmatprep.subr.bf16.mxu0 0
    %210 = vmatpush2.bf16.msra.mxu0 0
    %211 = vmatprep.subr.bf16.mxu0 0
    %212 = vmatpush2.bf16.msra.mxu0 0
    %213 = vmatprep.subr.bf16.mxu0 0
    %214 = vmatpush2.bf16.msra.mxu0 0
    %215 = vmatprep.subr.bf16.mxu0 0
    %216 = vmatpush2.bf16.msra.mxu0 0
    %217 = vmatprep.subr.bf16.mxu0 0
    %218 = vmatpush2.bf16.msra.mxu0 0
    %219 = vmatprep.subr.bf16.mxu0 0
    %220 = vmatpush2.bf16.msra.mxu0 0
    %221 = vmatprep.mubr.bf16.mxu0 0
    %222 = vmatmul.mubr.bf16.gmra.mxu0 %v183
    %v223 = vpop.f32.mrf.mxu0
    %v224 = vadd.f32 %v179, %v223
    %v225 = vpop.f32.mrf.mxu0
    %v226 = vpop.f32.mrf.mxu0
    %v227 = vadd.f32 %v179, %v226
    %v228 = vpop.f32.mrf.mxu0
    %229 = vdwg.mxu0
    %v230 = vld [vmem:[%s10] sm:$0x3]
    %231 = vadd.xlane.f32.xlu0 %v224
    %v232 = vpop.xlane.xlu0 %231
    %233 = vadd.xlane.f32.xlu0 %v227
    %v234 = vpop.xlane.xlu0 %233
    %v235 = vrcp.pop 128.0
    %v236 = vmul.f32 %v232, %v235
    %v237 = vmul.f32 %v234, %v235
    %v238 = vsub.f32 %v224, %v236
    %v239 = vsub.f32 %v227, %v237
    %v240 = vmul.f32 %v238, %v238
    %v241 = vmul.f32 %v239, %v239
    %242 = vadd.xlane.f32.xlu0 %v240
    %v243 = vpop.xlane.xlu0 %242
    %244 = vadd.xlane.f32.xlu0 %v241
    %v245 = vpop.xlane.xlu0 %244
    %v246 = vmul.f32 %v243, %v235
    %v247 = vmul.f32 %v245, %v235
    %v248 = vadd.f32 %v246, 1e-05
    %v249 = vadd.f32 %v247, 1e-05
    %v250 = vrsqrt.pop %v248
    %v251 = vrsqrt.pop %v249
    %v252 = vmul.f32 %v238, %v250
    %v253 = vmul.f32 %v239, %v251
    %v254 = vlaneseq
    %v255 = vshrl.u32 %v254, 7
    %v256 = vsub.s32 0, %v255
    %v257 = vrot.slane %v230, %v256
    %v258 = vmul.f32 %v252, %v257
    %v259 = vmul.f32 %v253, %v257
    %v260 = vlaneseq
    %v261 = vshrl.u32 %v260, 7
    %v262 = vsub.s32 1, %v261
    %v263 = vrot.slane %v230, %v262
    %v264 = vadd.f32 %v258, %v263
    %v265 = vadd.f32 %v259, %v263
    %v266 = vld [vmem:[#allocation11] sm:$0xf]
    %v267 = vld [vmem:[#allocation11 + $0x4] sm:$0xf]
    %v268 = vld [vmem:[#allocation11 + $0x8] sm:$0xf]
    %v269 = vld [vmem:[#allocation11 + $0xc] sm:$0xf]
    %v270 = vld [vmem:[#allocation11 + $0x10] sm:$0xf]
    %v271 = vld [vmem:[#allocation11 + $0x14] sm:$0xf]
    %v272 = vld [vmem:[#allocation11 + $0x18] sm:$0xf]
    %v273 = vld [vmem:[#allocation11 + $0x1c] sm:$0xf]
    %v274 = vld [vmem:[#allocation11 + $0x20] sm:$0xf]
    %v275 = vld [vmem:[#allocation11 + $0x24] sm:$0xf]
    %v276 = vld [vmem:[#allocation11 + $0x28] sm:$0xf]
    %v277 = vld [vmem:[#allocation11 + $0x2c] sm:$0xf]
    %v278 = vld [vmem:[#allocation11 + $0x30] sm:$0xf]
    %v279 = vld [vmem:[#allocation11 + $0x34] sm:$0xf]
    %v280 = vld [vmem:[#allocation11 + $0x38] sm:$0xf]
    %v281 = vld [vmem:[#allocation11 + $0x3c] sm:$0xf]
    %s282 = scalar_lea.vmem [#allocation11], 64
    %v283 = vld [vmem:[%s282] sm:$0xf]
    %v284 = vld [vmem:[%s282 + $0x4] sm:$0xf]
    %v285 = vld [vmem:[%s282 + $0x8] sm:$0xf]
    %v286 = vld [vmem:[%s282 + $0xc] sm:$0xf]
    %v287 = vld [vmem:[%s282 + $0x10] sm:$0xf]
    %v288 = vld [vmem:[%s282 + $0x14] sm:$0xf]
    %v289 = vld [vmem:[%s282 + $0x18] sm:$0xf]
    %v290 = vld [vmem:[%s282 + $0x1c] sm:$0xf]
    %v291 = vld [vmem:[%s282 + $0x20] sm:$0xf]
    %v292 = vld [vmem:[%s282 + $0x24] sm:$0xf]
    %v293 = vld [vmem:[%s282 + $0x28] sm:$0xf]
    %v294 = vld [vmem:[%s282 + $0x2c] sm:$0xf]
    %v295 = vld [vmem:[%s282 + $0x30] sm:$0xf]
    %v296 = vld [vmem:[%s282 + $0x34] sm:$0xf]
    %v297 = vld [vmem:[%s282 + $0x38] sm:$0xf]
    %v298 = vld [vmem:[%s282 + $0x3c] sm:$0xf]
    %s299 = scalar_lea.vmem [#allocation11], 128
    %v300 = vld [vmem:[%s299] sm:$0xf]
    %v301 = vld [vmem:[%s299 + $0x4] sm:$0xf]
    %v302 = vld [vmem:[%s299 + $0x8] sm:$0xf]
    %v303 = vld [vmem:[%s299 + $0xc] sm:$0xf]
    %v304 = vld [vmem:[%s299 + $0x10] sm:$0xf]
    %v305 = vld [vmem:[%s299 + $0x14] sm:$0xf]
    %v306 = vld [vmem:[%s299 + $0x18] sm:$0xf]
    %v307 = vld [vmem:[%s299 + $0x1c] sm:$0xf]
    %v308 = vld [vmem:[%s299 + $0x20] sm:$0xf]
    %v309 = vld [vmem:[%s299 + $0x24] sm:$0xf]
    %v310 = vld [vmem:[%s299 + $0x28] sm:$0xf]
    %v311 = vld [vmem:[%s299 + $0x2c] sm:$0xf]
    %v312 = vld [vmem:[%s299 + $0x30] sm:$0xf]
    %v313 = vld [vmem:[%s299 + $0x34] sm:$0xf]
    %v314 = vld [vmem:[%s299 + $0x38] sm:$0xf]
    %v315 = vld [vmem:[%s299 + $0x3c] sm:$0xf]
    %v316 = vpack.c.bf16 %v265, %v264
    %v333 = vunpack.c.l.b16 %v266
    %v334 = vunpack.c.l.b16 %v267
    %v335 = vunpack.c.l.b16 %v268
    %v336 = vunpack.c.l.b16 %v269
    %v337 = vunpack.c.l.b16 %v270
    %v338 = vunpack.c.l.b16 %v271
    %v339 = vunpack.c.l.b16 %v272
    %v340 = vunpack.c.l.b16 %v273
    %v341 = vunpack.c.l.b16 %v274
    %v342 = vunpack.c.l.b16 %v275
    %v343 = vunpack.c.l.b16 %v276
    %v344 = vunpack.c.l.b16 %v277
    %v345 = vunpack.c.l.b16 %v278
    %v346 = vunpack.c.l.b16 %v279
    %v347 = vunpack.c.l.b16 %v280
    %v348 = vunpack.c.l.b16 %v281
    %v349 = vpack.c.b16 %v334, %v333
    %v350 = vpack.c.b16 %v336, %v335
    %v351 = vpack.c.b16 %v338, %v337
    %v352 = vpack.c.b16 %v340, %v339
    %v353 = vpack.c.b16 %v342, %v341
    %v354 = vpack.c.b16 %v344, %v343
    %v355 = vpack.c.b16 %v346, %v345
    %v356 = vpack.c.b16 %v348, %v347
    %365 = vmatprep.subr.bf16.mxu0 0
    %366 = vmatpush1.bf16.msra.mxu0 %v356
    %367 = vmatprep.subr.bf16.mxu0 0
    %368 = vmatpush1.bf16.msra.mxu0 %v355
    %369 = vmatprep.subr.bf16.mxu0 0
    %370 = vmatpush1.bf16.msra.mxu0 %v354
    %371 = vmatprep.subr.bf16.mxu0 0
    %372 = vmatpush1.bf16.msra.mxu0 %v353
    %373 = vmatprep.subr.bf16.mxu0 0
    %374 = vmatpush1.bf16.msra.mxu0 %v352
    %375 = vmatprep.subr.bf16.mxu0 0
    %376 = vmatpush1.bf16.msra.mxu0 %v351
    %377 = vmatprep.subr.bf16.mxu0 0
    %378 = vmatpush1.bf16.msra.mxu0 %v350
    %379 = vmatprep.subr.bf16.mxu0 0
    %380 = vmatpush1.bf16.msra.mxu0 %v349
    %381 = vmatprep.subr.bf16.mxu0 0
    %382 = vmatpush2.bf16.msra.mxu0 0
    %383 = vmatprep.subr.bf16.mxu0 0
    %384 = vmatpush2.bf16.msra.mxu0 0
    %385 = vmatprep.subr.bf16.mxu0 0
    %386 = vmatpush2.bf16.msra.mxu0 0
    %387 = vmatprep.subr.bf16.mxu0 0
    %388 = vmatpush2.bf16.msra.mxu0 0
    %389 = vmatprep.subr.bf16.mxu0 0
    %390 = vmatpush2.bf16.msra.mxu0 0
    %391 = vmatprep.subr.bf16.mxu0 0
    %392 = vmatpush2.bf16.msra.mxu0 0
    %393 = vmatprep.subr.bf16.mxu0 0
    %394 = vmatpush2.bf16.msra.mxu0 0
    %395 = vmatprep.subr.bf16.mxu0 0
    %396 = vmatpush2.bf16.msra.mxu0 0
    %397 = vmatprep.mubr.bf16.mxu0 0
    %398 = vmatmul.mubr.bf16.gmra.mxu0 %v316
    %v399 = vpop.f32.mrf.mxu0
    %v400 = vadd.f32 0.0, %v399
    %v401 = vpop.f32.mrf.mxu0
    %v402 = vpop.f32.mrf.mxu0
    %v403 = vadd.f32 0.0, %v402
    %v404 = vpop.f32.mrf.mxu0
    %405 = vdwg.mxu0
    %v422 = vunpack.c.l.b16 %v283
    %v423 = vunpack.c.l.b16 %v284
    %v424 = vunpack.c.l.b16 %v285
    %v425 = vunpack.c.l.b16 %v286
    %v426 = vunpack.c.l.b16 %v287
    %v427 = vunpack.c.l.b16 %v288
    %v428 = vunpack.c.l.b16 %v289
    %v429 = vunpack.c.l.b16 %v290
    %v430 = vunpack.c.l.b16 %v291
    %v431 = vunpack.c.l.b16 %v292
    %v432 = vunpack.c.l.b16 %v293
    %v433 = vunpack.c.l.b16 %v294
    %v434 = vunpack.c.l.b16 %v295
    %v435 = vunpack.c.l.b16 %v296
    %v436 = vunpack.c.l.b16 %v297
    %v437 = vunpack.c.l.b16 %v298
    %v438 = vpack.c.b16 %v423, %v422
    %v439 = vpack.c.b16 %v425, %v424
    %v440 = vpack.c.b16 %v427, %v426
    %v441 = vpack.c.b16 %v429, %v428
    %v442 = vpack.c.b16 %v431, %v430
    %v443 = vpack.c.b16 %v433, %v432
    %v444 = vpack.c.b16 %v435, %v434
    %v445 = vpack.c.b16 %v437, %v436
    %454 = vmatprep.subr.bf16.mxu0 0
    %455 = vmatpush1.bf16.msra.mxu0 %v445
    %456 = vmatprep.subr.bf16.mxu0 0
    %457 = vmatpush1.bf16.msra.mxu0 %v444
    %458 = vmatprep.subr.bf16.mxu0 0
    %459 = vmatpush1.bf16.msra.mxu0 %v443
    %460 = vmatprep.subr.bf16.mxu0 0
    %461 = vmatpush1.bf16.msra.mxu0 %v442
    %462 = vmatprep.subr.bf16.mxu0 0
    %463 = vmatpush1.bf16.msra.mxu0 %v441
    %464 = vmatprep.subr.bf16.mxu0 0
    %465 = vmatpush1.bf16.msra.mxu0 %v440
    %466 = vmatprep.subr.bf16.mxu0 0
    %467 = vmatpush1.bf16.msra.mxu0 %v439
    %468 = vmatprep.subr.bf16.mxu0 0
    %469 = vmatpush1.bf16.msra.mxu0 %v438
    %470 = vmatprep.subr.bf16.mxu0 0
    %471 = vmatpush2.bf16.msra.mxu0 0
    %472 = vmatprep.subr.bf16.mxu0 0
    %473 = vmatpush2.bf16.msra.mxu0 0
    %474 = vmatprep.subr.bf16.mxu0 0
    %475 = vmatpush2.bf16.msra.mxu0 0
    %476 = vmatprep.subr.bf16.mxu0 0
    %477 = vmatpush2.bf16.msra.mxu0 0
    %478 = vmatprep.subr.bf16.mxu0 0
    %479 = vmatpush2.bf16.msra.mxu0 0
    %480 = vmatprep.subr.bf16.mxu0 0
    %481 = vmatpush2.bf16.msra.mxu0 0
    %482 = vmatprep.subr.bf16.mxu0 0
    %483 = vmatpush2.bf16.msra.mxu0 0
    %484 = vmatprep.subr.bf16.mxu0 0
    %485 = vmatpush2.bf16.msra.mxu0 0
    %486 = vmatprep.mubr.bf16.mxu0 0
    %487 = vmatmul.mubr.bf16.gmra.mxu0 %v316
    %v488 = vpop.f32.mrf.mxu0
    %v489 = vadd.f32 0.0, %v488
    %v490 = vpop.f32.mrf.mxu0
    %v491 = vpop.f32.mrf.mxu0
    %v492 = vadd.f32 0.0, %v491
    %v493 = vpop.f32.mrf.mxu0
    %494 = vdwg.mxu0
    %497 = vrot.lane.b32.xlu0 %v400, 112
    %v498 = vpop.permute.xlu0 %497
    %499 = vrot.lane.b32.xlu0 %v403, 112
    %v500 = vpop.permute.xlu0 %499
    %501 = vrot.lane.b32.xlu0 %v400, 96
    %v502 = vpop.permute.xlu0 %501
    %503 = vrot.lane.b32.xlu0 %v403, 96
    %v504 = vpop.permute.xlu0 %503
    %505 = vrot.lane.b32.xlu0 %v400, 80
    %v506 = vpop.permute.xlu0 %505
    %507 = vrot.lane.b32.xlu0 %v403, 80
    %v508 = vpop.permute.xlu0 %507
    %509 = vrot.lane.b32.xlu0 %v400, 64
    %v510 = vpop.permute.xlu0 %509
    %511 = vrot.lane.b32.xlu0 %v403, 64
    %v512 = vpop.permute.xlu0 %511
    %513 = vrot.lane.b32.xlu0 %v400, 48
    %v514 = vpop.permute.xlu0 %513
    %515 = vrot.lane.b32.xlu0 %v403, 48
    %v516 = vpop.permute.xlu0 %515
    %517 = vrot.lane.b32.xlu0 %v400, 32
    %v518 = vpop.permute.xlu0 %517
    %519 = vrot.lane.b32.xlu0 %v403, 32
    %v520 = vpop.permute.xlu0 %519
    %521 = vrot.lane.b32.xlu0 %v400, 16
    %v522 = vpop.permute.xlu0 %521
    %523 = vrot.lane.b32.xlu0 %v403, 16
    %v524 = vpop.permute.xlu0 %523
    %527 = vrot.lane.b32.xlu0 %v489, 112
    %v528 = vpop.permute.xlu0 %527
    %529 = vrot.lane.b32.xlu0 %v492, 112
    %v530 = vpop.permute.xlu0 %529
    %533 = vrot.lane.b32.xlu0 %v489, 96
    %v534 = vpop.permute.xlu0 %533
    %535 = vrot.lane.b32.xlu0 %v492, 96
    %v536 = vpop.permute.xlu0 %535
    %539 = vrot.lane.b32.xlu0 %v489, 80
    %v540 = vpop.permute.xlu0 %539
    %541 = vrot.lane.b32.xlu0 %v492, 80
    %v542 = vpop.permute.xlu0 %541
    %545 = vrot.lane.b32.xlu0 %v489, 64
    %v546 = vpop.permute.xlu0 %545
    %547 = vrot.lane.b32.xlu0 %v492, 64
    %v548 = vpop.permute.xlu0 %547
    %551 = vrot.lane.b32.xlu0 %v489, 48
    %v552 = vpop.permute.xlu0 %551
    %553 = vrot.lane.b32.xlu0 %v492, 48
    %v554 = vpop.permute.xlu0 %553
    %557 = vrot.lane.b32.xlu0 %v489, 32
    %v558 = vpop.permute.xlu0 %557
    %559 = vrot.lane.b32.xlu0 %v492, 32
    %v560 = vpop.permute.xlu0 %559
    %563 = vrot.lane.b32.xlu0 %v489, 16
    %v564 = vpop.permute.xlu0 %563
    %565 = vrot.lane.b32.xlu0 %v492, 16
    %v566 = vpop.permute.xlu0 %565
    %vm569 = vcmask 130048
    %v570 = vsel %vm569, %v400, 0
    %v572 = vsel %vm569, %v403, 0
    %v574 = vsel %vm569, %v489, 0
    %v576 = vsel %vm569, %v492, 0
    %578 = vmatprep.subr.mxu0 0.0
    %579 = vmatpush1.xpose.msra.mxu0 0.0
    %580 = vmatprep.subr.mxu0 0.0
    %581 = vmatpush1.xpose.msra.mxu0 0.0
    %582 = vmatprep.subr.mxu0 0.0
    %583 = vmatpush1.xpose.msra.mxu0 0.0
    %584 = vmatprep.subr.mxu0 0.0
    %585 = vmatpush1.xpose.msra.mxu0 0.0
    %586 = vmatprep.subr.mxu0 0.0
    %587 = vmatpush1.xpose.msra.mxu0 0.0
    %588 = vmatprep.subr.mxu0 0.0
    %589 = vmatpush1.xpose.msra.mxu0 0.0
    %590 = vmatprep.subr.mxu0 0.0
    %591 = vmatpush1.xpose.msra.mxu0 0.0
    %592 = vmatprep.subr.mxu0 0.0
    %593 = vmatpush1.xpose.msra.mxu0 0.0
    %594 = vmatprep.subr.mxu0 0.0
    %595 = vmatpush1.xpose.msra.mxu0 0.0
    %596 = vmatprep.subr.mxu0 0.0
    %597 = vmatpush1.xpose.msra.mxu0 0.0
    %598 = vmatprep.subr.mxu0 0.0
    %599 = vmatpush1.xpose.msra.mxu0 0.0
    %600 = vmatprep.subr.mxu0 0.0
    %601 = vmatpush1.xpose.msra.mxu0 0.0
    %602 = vmatprep.subr.mxu0 0.0
    %603 = vmatpush1.xpose.msra.mxu0 0.0
    %604 = vmatprep.subr.mxu0 0.0
    %605 = vmatpush1.xpose.msra.mxu0 0.0
    %606 = vmatprep.subr.mxu0 0.0
    %607 = vmatpush1.xpose.msra.mxu0 %v576
    %608 = vmatprep.subr.mxu0 0.0
    %609 = vmatpush1.xpose.msra.mxu0 %v574
    %610 = vmatprep.subr.mxu0 0.0
    %611 = vmatpush2.xpose.msra.mxu0 0.0
    %612 = vmatprep.subr.mxu0 0.0
    %613 = vmatpush2.xpose.msra.mxu0 0.0
    %614 = vmatprep.subr.mxu0 0.0
    %615 = vmatpush2.xpose.msra.mxu0 0.0
    %616 = vmatprep.subr.mxu0 0.0
    %617 = vmatpush2.xpose.msra.mxu0 0.0
    %618 = vmatprep.subr.mxu0 0.0
    %619 = vmatpush2.xpose.msra.mxu0 0.0
    %620 = vmatprep.subr.mxu0 0.0
    %621 = vmatpush2.xpose.msra.mxu0 0.0
    %622 = vmatprep.subr.mxu0 0.0
    %623 = vmatpush2.xpose.msra.mxu0 0.0
    %624 = vmatprep.subr.mxu0 0.0
    %625 = vmatpush2.xpose.msra.mxu0 0.0
    %626 = vmatprep.subr.mxu0 0.0
    %627 = vmatpush2.xpose.msra.mxu0 0.0
    %628 = vmatprep.subr.mxu0 0.0
    %629 = vmatpush2.xpose.msra.mxu0 0.0
    %630 = vmatprep.subr.mxu0 0.0
    %631 = vmatpush2.xpose.msra.mxu0 0.0
    %632 = vmatprep.subr.mxu0 0.0
    %633 = vmatpush2.xpose.msra.mxu0 0.0
    %634 = vmatprep.subr.mxu0 0.0
    %635 = vmatpush2.xpose.msra.mxu0 0.0
    %636 = vmatprep.subr.mxu0 0.0
    %637 = vmatpush2.xpose.msra.mxu0 0.0
    %638 = vmatprep.subr.mxu0 0.0
    %639 = vmatpush2.xpose.msra.mxu0 0.0
    %640 = vmatprep.subr.mxu0 0.0
    %641 = vmatpush2.xpose.msra.mxu0 0.0
    %642 = vmatprep.mubr.f32.mxu0 0.0
    %643 = vmatmul.mubr.f32.gmra.mxu0 %v570
    %v644 = vpop.f32.mrf.mxu0
    %v645 = vadd.f32 0.0, %v644
    %v646 = vpop.f32.mrf.mxu0
    %647 = vmatprep.mubr.f32.mxu0 0.0
    %648 = vmatmul.mubr.f32.gmra.mxu0 %v572
    %v649 = vpop.f32.mrf.mxu0
    %v650 = vadd.f32 0.0, %v649
    %v651 = vpop.f32.mrf.mxu0
    %652 = vdwg.mxu0
    %v653 = vsel %vm569, %v498, 0
    %v655 = vsel %vm569, %v500, 0
    %v657 = vsel %vm569, %v528, 0
    %v659 = vsel %vm569, %v530, 0
    %661 = vmatprep.subr.mxu0 0.0
    %662 = vmatpush1.xpose.msra.mxu0 0.0
    %663 = vmatprep.subr.mxu0 0.0
    %664 = vmatpush1.xpose.msra.mxu0 0.0
    %665 = vmatprep.subr.mxu0 0.0
    %666 = vmatpush1.xpose.msra.mxu0 0.0
    %667 = vmatprep.subr.mxu0 0.0
    %668 = vmatpush1.xpose.msra.mxu0 0.0
    %669 = vmatprep.subr.mxu0 0.0
    %670 = vmatpush1.xpose.msra.mxu0 0.0
    %671 = vmatprep.subr.mxu0 0.0
    %672 = vmatpush1.xpose.msra.mxu0 0.0
    %673 = vmatprep.subr.mxu0 0.0
    %674 = vmatpush1.xpose.msra.mxu0 0.0
    %675 = vmatprep.subr.mxu0 0.0
    %676 = vmatpush1.xpose.msra.mxu0 0.0
    %677 = vmatprep.subr.mxu0 0.0
    %678 = vmatpush1.xpose.msra.mxu0 0.0
    %679 = vmatprep.subr.mxu0 0.0
    %680 = vmatpush1.xpose.msra.mxu0 0.0
    %681 = vmatprep.subr.mxu0 0.0
    %682 = vmatpush1.xpose.msra.mxu0 0.0
    %683 = vmatprep.subr.mxu0 0.0
    %684 = vmatpush1.xpose.msra.mxu0 0.0
    %685 = vmatprep.subr.mxu0 0.0
    %686 = vmatpush1.xpose.msra.mxu0 0.0
    %687 = vmatprep.subr.mxu0 0.0
    %688 = vmatpush1.xpose.msra.mxu0 0.0
    %689 = vmatprep.subr.mxu0 0.0
    %690 = vmatpush1.xpose.msra.mxu0 %v659
    %691 = vmatprep.subr.mxu0 0.0
    %692 = vmatpush1.xpose.msra.mxu0 %v657
    %693 = vmatprep.subr.mxu0 0.0
    %694 = vmatpush2.xpose.msra.mxu0 0.0
    %695 = vmatprep.subr.mxu0 0.0
    %696 = vmatpush2.xpose.msra.mxu0 0.0
    %697 = vmatprep.subr.mxu0 0.0
    %698 = vmatpush2.xpose.msra.mxu0 0.0
    %699 = vmatprep.subr.mxu0 0.0
    %700 = vmatpush2.xpose.msra.mxu0 0.0
    %701 = vmatprep.subr.mxu0 0.0
    %702 = vmatpush2.xpose.msra.mxu0 0.0
    %703 = vmatprep.subr.mxu0 0.0
    %704 = vmatpush2.xpose.msra.mxu0 0.0
    %705 = vmatprep.subr.mxu0 0.0
    %706 = vmatpush2.xpose.msra.mxu0 0.0
    %707 = vmatprep.subr.mxu0 0.0
    %708 = vmatpush2.xpose.msra.mxu0 0.0
    %709 = vmatprep.subr.mxu0 0.0
    %710 = vmatpush2.xpose.msra.mxu0 0.0
    %711 = vmatprep.subr.mxu0 0.0
    %712 = vmatpush2.xpose.msra.mxu0 0.0
    %713 = vmatprep.subr.mxu0 0.0
    %714 = vmatpush2.xpose.msra.mxu0 0.0
    %715 = vmatprep.subr.mxu0 0.0
    %716 = vmatpush2.xpose.msra.mxu0 0.0
    %717 = vmatprep.subr.mxu0 0.0
    %718 = vmatpush2.xpose.msra.mxu0 0.0
    %719 = vmatprep.subr.mxu0 0.0
    %720 = vmatpush2.xpose.msra.mxu0 0.0
    %721 = vmatprep.subr.mxu0 0.0
    %722 = vmatpush2.xpose.msra.mxu0 0.0
    %723 = vmatprep.subr.mxu0 0.0
    %724 = vmatpush2.xpose.msra.mxu0 0.0
    %725 = vmatprep.mubr.f32.mxu0 0.0
    %726 = vmatmul.mubr.f32.gmra.mxu0 %v653
    %v727 = vpop.f32.mrf.mxu0
    %v728 = vadd.f32 0.0, %v727
    %v729 = vpop.f32.mrf.mxu0
    %730 = vmatprep.mubr.f32.mxu0 0.0
    %731 = vmatmul.mubr.f32.gmra.mxu0 %v655
    %v732 = vpop.f32.mrf.mxu0
    %v733 = vadd.f32 0.0, %v732
    %v734 = vpop.f32.mrf.mxu0
    %735 = vdwg.mxu0
    %v736 = vsel %vm569, %v502, 0
    %v738 = vsel %vm569, %v504, 0
    %v740 = vsel %vm569, %v534, 0
    %v742 = vsel %vm569, %v536, 0
    %744 = vmatprep.subr.mxu0 0.0
    %745 = vmatpush1.xpose.msra.mxu0 0.0
    %746 = vmatprep.subr.mxu0 0.0
    %747 = vmatpush1.xpose.msra.mxu0 0.0
    %748 = vmatprep.subr.mxu0 0.0
    %749 = vmatpush1.xpose.msra.mxu0 0.0
    %750 = vmatprep.subr.mxu0 0.0
    %751 = vmatpush1.xpose.msra.mxu0 0.0
    %752 = vmatprep.subr.mxu0 0.0
    %753 = vmatpush1.xpose.msra.mxu0 0.0
    %754 = vmatprep.subr.mxu0 0.0
    %755 = vmatpush1.xpose.msra.mxu0 0.0
    %756 = vmatprep.subr.mxu0 0.0
    %757 = vmatpush1.xpose.msra.mxu0 0.0
    %758 = vmatprep.subr.mxu0 0.0
    %759 = vmatpush1.xpose.msra.mxu0 0.0
    %760 = vmatprep.subr.mxu0 0.0
    %761 = vmatpush1.xpose.msra.mxu0 0.0
    %762 = vmatprep.subr.mxu0 0.0
    %763 = vmatpush1.xpose.msra.mxu0 0.0
    %764 = vmatprep.subr.mxu0 0.0
    %765 = vmatpush1.xpose.msra.mxu0 0.0
    %766 = vmatprep.subr.mxu0 0.0
    %767 = vmatpush1.xpose.msra.mxu0 0.0
    %768 = vmatprep.subr.mxu0 0.0
    %769 = vmatpush1.xpose.msra.mxu0 0.0
    %770 = vmatprep.subr.mxu0 0.0
    %771 = vmatpush1.xpose.msra.mxu0 0.0
    %772 = vmatprep.subr.mxu0 0.0
    %773 = vmatpush1.xpose.msra.mxu0 %v742
    %774 = vmatprep.subr.mxu0 0.0
    %775 = vmatpush1.xpose.msra.mxu0 %v740
    %776 = vmatprep.subr.mxu0 0.0
    %777 = vmatpush2.xpose.msra.mxu0 0.0
    %778 = vmatprep.subr.mxu0 0.0
    %779 = vmatpush2.xpose.msra.mxu0 0.0
    %780 = vmatprep.subr.mxu0 0.0
    %781 = vmatpush2.xpose.msra.mxu0 0.0
    %782 = vmatprep.subr.mxu0 0.0
    %783 = vmatpush2.xpose.msra.mxu0 0.0
    %784 = vmatprep.subr.mxu0 0.0
    %785 = vmatpush2.xpose.msra.mxu0 0.0
    %786 = vmatprep.subr.mxu0 0.0
    %787 = vmatpush2.xpose.msra.mxu0 0.0
    %788 = vmatprep.subr.mxu0 0.0
    %789 = vmatpush2.xpose.msra.mxu0 0.0
    %790 = vmatprep.subr.mxu0 0.0
    %791 = vmatpush2.xpose.msra.mxu0 0.0
    %792 = vmatprep.subr.mxu0 0.0
    %793 = vmatpush2.xpose.msra.mxu0 0.0
    %794 = vmatprep.subr.mxu0 0.0
    %795 = vmatpush2.xpose.msra.mxu0 0.0
    %796 = vmatprep.subr.mxu0 0.0
    %797 = vmatpush2.xpose.msra.mxu0 0.0
    %798 = vmatprep.subr.mxu0 0.0
    %799 = vmatpush2.xpose.msra.mxu0 0.0
    %800 = vmatprep.subr.mxu0 0.0
    %801 = vmatpush2.xpose.msra.mxu0 0.0
    %802 = vmatprep.subr.mxu0 0.0
    %803 = vmatpush2.xpose.msra.mxu0 0.0
    %804 = vmatprep.subr.mxu0 0.0
    %805 = vmatpush2.xpose.msra.mxu0 0.0
    %806 = vmatprep.subr.mxu0 0.0
    %807 = vmatpush2.xpose.msra.mxu0 0.0
    %808 = vmatprep.mubr.f32.mxu0 0.0
    %809 = vmatmul.mubr.f32.gmra.mxu0 %v736
    %v810 = vpop.f32.mrf.mxu0
    %v811 = vadd.f32 0.0, %v810
    %v812 = vpop.f32.mrf.mxu0
    %813 = vmatprep.mubr.f32.mxu0 0.0
    %814 = vmatmul.mubr.f32.gmra.mxu0 %v738
    %v815 = vpop.f32.mrf.mxu0
    %v816 = vadd.f32 0.0, %v815
    %v817 = vpop.f32.mrf.mxu0
    %818 = vdwg.mxu0
    %v819 = vsel %vm569, %v506, 0
    %v821 = vsel %vm569, %v508, 0
    %v823 = vsel %vm569, %v540, 0
    %v825 = vsel %vm569, %v542, 0
    %827 = vmatprep.subr.mxu0 0.0
    %828 = vmatpush1.xpose.msra.mxu0 0.0
    %829 = vmatprep.subr.mxu0 0.0
    %830 = vmatpush1.xpose.msra.mxu0 0.0
    %831 = vmatprep.subr.mxu0 0.0
    %832 = vmatpush1.xpose.msra.mxu0 0.0
    %833 = vmatprep.subr.mxu0 0.0
    %834 = vmatpush1.xpose.msra.mxu0 0.0
    %835 = vmatprep.subr.mxu0 0.0
    %836 = vmatpush1.xpose.msra.mxu0 0.0
    %837 = vmatprep.subr.mxu0 0.0
    %838 = vmatpush1.xpose.msra.mxu0 0.0
    %839 = vmatprep.subr.mxu0 0.0
    %840 = vmatpush1.xpose.msra.mxu0 0.0
    %841 = vmatprep.subr.mxu0 0.0
    %842 = vmatpush1.xpose.msra.mxu0 0.0
    %843 = vmatprep.subr.mxu0 0.0
    %844 = vmatpush1.xpose.msra.mxu0 0.0
    %845 = vmatprep.subr.mxu0 0.0
    %846 = vmatpush1.xpose.msra.mxu0 0.0
    %847 = vmatprep.subr.mxu0 0.0
    %848 = vmatpush1.xpose.msra.mxu0 0.0
    %849 = vmatprep.subr.mxu0 0.0
    %850 = vmatpush1.xpose.msra.mxu0 0.0
    %851 = vmatprep.subr.mxu0 0.0
    %852 = vmatpush1.xpose.msra.mxu0 0.0
    %853 = vmatprep.subr.mxu0 0.0
    %854 = vmatpush1.xpose.msra.mxu0 0.0
    %855 = vmatprep.subr.mxu0 0.0
    %856 = vmatpush1.xpose.msra.mxu0 %v825
    %857 = vmatprep.subr.mxu0 0.0
    %858 = vmatpush1.xpose.msra.mxu0 %v823
    %859 = vmatprep.subr.mxu0 0.0
    %860 = vmatpush2.xpose.msra.mxu0 0.0
    %861 = vmatprep.subr.mxu0 0.0
    %862 = vmatpush2.xpose.msra.mxu0 0.0
    %863 = vmatprep.subr.mxu0 0.0
    %864 = vmatpush2.xpose.msra.mxu0 0.0
    %865 = vmatprep.subr.mxu0 0.0
    %866 = vmatpush2.xpose.msra.mxu0 0.0
    %867 = vmatprep.subr.mxu0 0.0
    %868 = vmatpush2.xpose.msra.mxu0 0.0
    %869 = vmatprep.subr.mxu0 0.0
    %870 = vmatpush2.xpose.msra.mxu0 0.0
    %871 = vmatprep.subr.mxu0 0.0
    %872 = vmatpush2.xpose.msra.mxu0 0.0
    %873 = vmatprep.subr.mxu0 0.0
    %874 = vmatpush2.xpose.msra.mxu0 0.0
    %875 = vmatprep.subr.mxu0 0.0
    %876 = vmatpush2.xpose.msra.mxu0 0.0
    %877 = vmatprep.subr.mxu0 0.0
    %878 = vmatpush2.xpose.msra.mxu0 0.0
    %879 = vmatprep.subr.mxu0 0.0
    %880 = vmatpush2.xpose.msra.mxu0 0.0
    %881 = vmatprep.subr.mxu0 0.0
    %882 = vmatpush2.xpose.msra.mxu0 0.0
    %883 = vmatprep.subr.mxu0 0.0
    %884 = vmatpush2.xpose.msra.mxu0 0.0
    %885 = vmatprep.subr.mxu0 0.0
    %886 = vmatpush2.xpose.msra.mxu0 0.0
    %887 = vmatprep.subr.mxu0 0.0
    %888 = vmatpush2.xpose.msra.mxu0 0.0
    %889 = vmatprep.subr.mxu0 0.0
    %890 = vmatpush2.xpose.msra.mxu0 0.0
    %891 = vmatprep.mubr.f32.mxu0 0.0
    %892 = vmatmul.mubr.f32.gmra.mxu0 %v819
    %v893 = vpop.f32.mrf.mxu0
    %v894 = vadd.f32 0.0, %v893
    %v895 = vpop.f32.mrf.mxu0
    %896 = vmatprep.mubr.f32.mxu0 0.0
    %897 = vmatmul.mubr.f32.gmra.mxu0 %v821
    %v898 = vpop.f32.mrf.mxu0
    %v899 = vadd.f32 0.0, %v898
    %v900 = vpop.f32.mrf.mxu0
    %901 = vdwg.mxu0
    %v902 = vsel %vm569, %v510, 0
    %v904 = vsel %vm569, %v512, 0
    %v906 = vsel %vm569, %v546, 0
    %v908 = vsel %vm569, %v548, 0
    %910 = vmatprep.subr.mxu0 0.0
    %911 = vmatpush1.xpose.msra.mxu0 0.0
    %912 = vmatprep.subr.mxu0 0.0
    %913 = vmatpush1.xpose.msra.mxu0 0.0
    %914 = vmatprep.subr.mxu0 0.0
    %915 = vmatpush1.xpose.msra.mxu0 0.0
    %916 = vmatprep.subr.mxu0 0.0
    %917 = vmatpush1.xpose.msra.mxu0 0.0
    %918 = vmatprep.subr.mxu0 0.0
    %919 = vmatpush1.xpose.msra.mxu0 0.0
    %920 = vmatprep.subr.mxu0 0.0
    %921 = vmatpush1.xpose.msra.mxu0 0.0
    %922 = vmatprep.subr.mxu0 0.0
    %923 = vmatpush1.xpose.msra.mxu0 0.0
    %924 = vmatprep.subr.mxu0 0.0
    %925 = vmatpush1.xpose.msra.mxu0 0.0
    %926 = vmatprep.subr.mxu0 0.0
    %927 = vmatpush1.xpose.msra.mxu0 0.0
    %928 = vmatprep.subr.mxu0 0.0
    %929 = vmatpush1.xpose.msra.mxu0 0.0
    %930 = vmatprep.subr.mxu0 0.0
    %931 = vmatpush1.xpose.msra.mxu0 0.0
    %932 = vmatprep.subr.mxu0 0.0
    %933 = vmatpush1.xpose.msra.mxu0 0.0
    %934 = vmatprep.subr.mxu0 0.0
    %935 = vmatpush1.xpose.msra.mxu0 0.0
    %936 = vmatprep.subr.mxu0 0.0
    %937 = vmatpush1.xpose.msra.mxu0 0.0
    %938 = vmatprep.subr.mxu0 0.0
    %939 = vmatpush1.xpose.msra.mxu0 %v908
    %940 = vmatprep.subr.mxu0 0.0
    %941 = vmatpush1.xpose.msra.mxu0 %v906
    %942 = vmatprep.subr.mxu0 0.0
    %943 = vmatpush2.xpose.msra.mxu0 0.0
    %944 = vmatprep.subr.mxu0 0.0
    %945 = vmatpush2.xpose.msra.mxu0 0.0
    %946 = vmatprep.subr.mxu0 0.0
    %947 = vmatpush2.xpose.msra.mxu0 0.0
    %948 = vmatprep.subr.mxu0 0.0
    %949 = vmatpush2.xpose.msra.mxu0 0.0
    %950 = vmatprep.subr.mxu0 0.0
    %951 = vmatpush2.xpose.msra.mxu0 0.0
    %952 = vmatprep.subr.mxu0 0.0
    %953 = vmatpush2.xpose.msra.mxu0 0.0
    %954 = vmatprep.subr.mxu0 0.0
    %955 = vmatpush2.xpose.msra.mxu0 0.0
    %956 = vmatprep.subr.mxu0 0.0
    %957 = vmatpush2.xpose.msra.mxu0 0.0
    %958 = vmatprep.subr.mxu0 0.0
    %959 = vmatpush2.xpose.msra.mxu0 0.0
    %960 = vmatprep.subr.mxu0 0.0
    %961 = vmatpush2.xpose.msra.mxu0 0.0
    %962 = vmatprep.subr.mxu0 0.0
    %963 = vmatpush2.xpose.msra.mxu0 0.0
    %964 = vmatprep.subr.mxu0 0.0
    %965 = vmatpush2.xpose.msra.mxu0 0.0
    %966 = vmatprep.subr.mxu0 0.0
    %967 = vmatpush2.xpose.msra.mxu0 0.0
    %968 = vmatprep.subr.mxu0 0.0
    %969 = vmatpush2.xpose.msra.mxu0 0.0
    %970 = vmatprep.subr.mxu0 0.0
    %971 = vmatpush2.xpose.msra.mxu0 0.0
    %972 = vmatprep.subr.mxu0 0.0
    %973 = vmatpush2.xpose.msra.mxu0 0.0
    %974 = vmatprep.mubr.f32.mxu0 0.0
    %975 = vmatmul.mubr.f32.gmra.mxu0 %v902
    %v976 = vpop.f32.mrf.mxu0
    %v977 = vadd.f32 0.0, %v976
    %v978 = vpop.f32.mrf.mxu0
    %979 = vmatprep.mubr.f32.mxu0 0.0
    %980 = vmatmul.mubr.f32.gmra.mxu0 %v904
    %v981 = vpop.f32.mrf.mxu0
    %v982 = vadd.f32 0.0, %v981
    %v983 = vpop.f32.mrf.mxu0
    %984 = vdwg.mxu0
    %v985 = vsel %vm569, %v514, 0
    %v987 = vsel %vm569, %v516, 0
    %v989 = vsel %vm569, %v552, 0
    %v991 = vsel %vm569, %v554, 0
    %993 = vmatprep.subr.mxu0 0.0
    %994 = vmatpush1.xpose.msra.mxu0 0.0
    %995 = vmatprep.subr.mxu0 0.0
    %996 = vmatpush1.xpose.msra.mxu0 0.0
    %997 = vmatprep.subr.mxu0 0.0
    %998 = vmatpush1.xpose.msra.mxu0 0.0
    %999 = vmatprep.subr.mxu0 0.0
    %1000 = vmatpush1.xpose.msra.mxu0 0.0
    %1001 = vmatprep.subr.mxu0 0.0
    %1002 = vmatpush1.xpose.msra.mxu0 0.0
    %1003 = vmatprep.subr.mxu0 0.0
    %1004 = vmatpush1.xpose.msra.mxu0 0.0
    %1005 = vmatprep.subr.mxu0 0.0
    %1006 = vmatpush1.xpose.msra.mxu0 0.0
    %1007 = vmatprep.subr.mxu0 0.0
    %1008 = vmatpush1.xpose.msra.mxu0 0.0
    %1009 = vmatprep.subr.mxu0 0.0
    %1010 = vmatpush1.xpose.msra.mxu0 0.0
    %1011 = vmatprep.subr.mxu0 0.0
    %1012 = vmatpush1.xpose.msra.mxu0 0.0
    %1013 = vmatprep.subr.mxu0 0.0
    %1014 = vmatpush1.xpose.msra.mxu0 0.0
    %1015 = vmatprep.subr.mxu0 0.0
    %1016 = vmatpush1.xpose.msra.mxu0 0.0
    %1017 = vmatprep.subr.mxu0 0.0
    %1018 = vmatpush1.xpose.msra.mxu0 0.0
    %1019 = vmatprep.subr.mxu0 0.0
    %1020 = vmatpush1.xpose.msra.mxu0 0.0
    %1021 = vmatprep.subr.mxu0 0.0
    %1022 = vmatpush1.xpose.msra.mxu0 %v991
    %1023 = vmatprep.subr.mxu0 0.0
    %1024 = vmatpush1.xpose.msra.mxu0 %v989
    %1025 = vmatprep.subr.mxu0 0.0
    %1026 = vmatpush2.xpose.msra.mxu0 0.0
    %1027 = vmatprep.subr.mxu0 0.0
    %1028 = vmatpush2.xpose.msra.mxu0 0.0
    %1029 = vmatprep.subr.mxu0 0.0
    %1030 = vmatpush2.xpose.msra.mxu0 0.0
    %1031 = vmatprep.subr.mxu0 0.0
    %1032 = vmatpush2.xpose.msra.mxu0 0.0
    %1033 = vmatprep.subr.mxu0 0.0
    %1034 = vmatpush2.xpose.msra.mxu0 0.0
    %1035 = vmatprep.subr.mxu0 0.0
    %1036 = vmatpush2.xpose.msra.mxu0 0.0
    %1037 = vmatprep.subr.mxu0 0.0
    %1038 = vmatpush2.xpose.msra.mxu0 0.0
    %1039 = vmatprep.subr.mxu0 0.0
    %1040 = vmatpush2.xpose.msra.mxu0 0.0
    %1041 = vmatprep.subr.mxu0 0.0
    %1042 = vmatpush2.xpose.msra.mxu0 0.0
    %1043 = vmatprep.subr.mxu0 0.0
    %1044 = vmatpush2.xpose.msra.mxu0 0.0
    %1045 = vmatprep.subr.mxu0 0.0
    %1046 = vmatpush2.xpose.msra.mxu0 0.0
    %1047 = vmatprep.subr.mxu0 0.0
    %1048 = vmatpush2.xpose.msra.mxu0 0.0
    %1049 = vmatprep.subr.mxu0 0.0
    %1050 = vmatpush2.xpose.msra.mxu0 0.0
    %1051 = vmatprep.subr.mxu0 0.0
    %1052 = vmatpush2.xpose.msra.mxu0 0.0
    %1053 = vmatprep.subr.mxu0 0.0
    %1054 = vmatpush2.xpose.msra.mxu0 0.0
    %1055 = vmatprep.subr.mxu0 0.0
    %1056 = vmatpush2.xpose.msra.mxu0 0.0
    %1057 = vmatprep.mubr.f32.mxu0 0.0
    %1058 = vmatmul.mubr.f32.gmra.mxu0 %v985
    %v1059 = vpop.f32.mrf.mxu0
    %v1060 = vadd.f32 0.0, %v1059
    %v1061 = vpop.f32.mrf.mxu0
    %1062 = vmatprep.mubr.f32.mxu0 0.0
    %1063 = vmatmul.mubr.f32.gmra.mxu0 %v987
    %v1064 = vpop.f32.mrf.mxu0
    %v1065 = vadd.f32 0.0, %v1064
    %v1066 = vpop.f32.mrf.mxu0
    %1067 = vdwg.mxu0
    %v1068 = vsel %vm569, %v518, 0
    %v1070 = vsel %vm569, %v520, 0
    %v1072 = vsel %vm569, %v558, 0
    %v1074 = vsel %vm569, %v560, 0
    %1076 = vmatprep.subr.mxu0 0.0
    %1077 = vmatpush1.xpose.msra.mxu0 0.0
    %1078 = vmatprep.subr.mxu0 0.0
    %1079 = vmatpush1.xpose.msra.mxu0 0.0
    %1080 = vmatprep.subr.mxu0 0.0
    %1081 = vmatpush1.xpose.msra.mxu0 0.0
    %1082 = vmatprep.subr.mxu0 0.0
    %1083 = vmatpush1.xpose.msra.mxu0 0.0
    %1084 = vmatprep.subr.mxu0 0.0
    %1085 = vmatpush1.xpose.msra.mxu0 0.0
    %1086 = vmatprep.subr.mxu0 0.0
    %1087 = vmatpush1.xpose.msra.mxu0 0.0
    %1088 = vmatprep.subr.mxu0 0.0
    %1089 = vmatpush1.xpose.msra.mxu0 0.0
    %1090 = vmatprep.subr.mxu0 0.0
    %1091 = vmatpush1.xpose.msra.mxu0 0.0
    %1092 = vmatprep.subr.mxu0 0.0
    %1093 = vmatpush1.xpose.msra.mxu0 0.0
    %1094 = vmatprep.subr.mxu0 0.0
    %1095 = vmatpush1.xpose.msra.mxu0 0.0
    %1096 = vmatprep.subr.mxu0 0.0
    %1097 = vmatpush1.xpose.msra.mxu0 0.0
    %1098 = vmatprep.subr.mxu0 0.0
    %1099 = vmatpush1.xpose.msra.mxu0 0.0
    %1100 = vmatprep.subr.mxu0 0.0
    %1101 = vmatpush1.xpose.msra.mxu0 0.0
    %1102 = vmatprep.subr.mxu0 0.0
    %1103 = vmatpush1.xpose.msra.mxu0 0.0
    %1104 = vmatprep.subr.mxu0 0.0
    %1105 = vmatpush1.xpose.msra.mxu0 %v1074
    %1106 = vmatprep.subr.mxu0 0.0
    %1107 = vmatpush1.xpose.msra.mxu0 %v1072
    %1108 = vmatprep.subr.mxu0 0.0
    %1109 = vmatpush2.xpose.msra.mxu0 0.0
    %1110 = vmatprep.subr.mxu0 0.0
    %1111 = vmatpush2.xpose.msra.mxu0 0.0
    %1112 = vmatprep.subr.mxu0 0.0
    %1113 = vmatpush2.xpose.msra.mxu0 0.0
    %1114 = vmatprep.subr.mxu0 0.0
    %1115 = vmatpush2.xpose.msra.mxu0 0.0
    %1116 = vmatprep.subr.mxu0 0.0
    %1117 = vmatpush2.xpose.msra.mxu0 0.0
    %1118 = vmatprep.subr.mxu0 0.0
    %1119 = vmatpush2.xpose.msra.mxu0 0.0
    %1120 = vmatprep.subr.mxu0 0.0
    %1121 = vmatpush2.xpose.msra.mxu0 0.0
    %1122 = vmatprep.subr.mxu0 0.0
    %1123 = vmatpush2.xpose.msra.mxu0 0.0
    %1124 = vmatprep.subr.mxu0 0.0
    %1125 = vmatpush2.xpose.msra.mxu0 0.0
    %1126 = vmatprep.subr.mxu0 0.0
    %1127 = vmatpush2.xpose.msra.mxu0 0.0
    %1128 = vmatprep.subr.mxu0 0.0
    %1129 = vmatpush2.xpose.msra.mxu0 0.0
    %1130 = vmatprep.subr.mxu0 0.0
    %1131 = vmatpush2.xpose.msra.mxu0 0.0
    %1132 = vmatprep.subr.mxu0 0.0
    %1133 = vmatpush2.xpose.msra.mxu0 0.0
    %1134 = vmatprep.subr.mxu0 0.0
    %1135 = vmatpush2.xpose.msra.mxu0 0.0
    %1136 = vmatprep.subr.mxu0 0.0
    %1137 = vmatpush2.xpose.msra.mxu0 0.0
    %1138 = vmatprep.subr.mxu0 0.0
    %1139 = vmatpush2.xpose.msra.mxu0 0.0
    %1140 = vmatprep.mubr.f32.mxu0 0.0
    %1141 = vmatmul.mubr.f32.gmra.mxu0 %v1068
    %v1142 = vpop.f32.mrf.mxu0
    %v1143 = vadd.f32 0.0, %v1142
    %v1144 = vpop.f32.mrf.mxu0
    %1145 = vmatprep.mubr.f32.mxu0 0.0
    %1146 = vmatmul.mubr.f32.gmra.mxu0 %v1070
    %v1147 = vpop.f32.mrf.mxu0
    %v1148 = vadd.f32 0.0, %v1147
    %v1149 = vpop.f32.mrf.mxu0
    %1150 = vdwg.mxu0
    %v1151 = vsel %vm569, %v522, 0
    %v1153 = vsel %vm569, %v524, 0
    %v1155 = vsel %vm569, %v564, 0
    %v1157 = vsel %vm569, %v566, 0
    %1159 = vmatprep.subr.mxu0 0.0
    %1160 = vmatpush1.xpose.msra.mxu0 0.0
    %1161 = vmatprep.subr.mxu0 0.0
    %1162 = vmatpush1.xpose.msra.mxu0 0.0
    %1163 = vmatprep.subr.mxu0 0.0
    %1164 = vmatpush1.xpose.msra.mxu0 0.0
    %1165 = vmatprep.subr.mxu0 0.0
    %1166 = vmatpush1.xpose.msra.mxu0 0.0
    %1167 = vmatprep.subr.mxu0 0.0
    %1168 = vmatpush1.xpose.msra.mxu0 0.0
    %1169 = vmatprep.subr.mxu0 0.0
    %1170 = vmatpush1.xpose.msra.mxu0 0.0
    %1171 = vmatprep.subr.mxu0 0.0
    %1172 = vmatpush1.xpose.msra.mxu0 0.0
    %1173 = vmatprep.subr.mxu0 0.0
    %1174 = vmatpush1.xpose.msra.mxu0 0.0
    %1175 = vmatprep.subr.mxu0 0.0
    %1176 = vmatpush1.xpose.msra.mxu0 0.0
    %1177 = vmatprep.subr.mxu0 0.0
    %1178 = vmatpush1.xpose.msra.mxu0 0.0
    %1179 = vmatprep.subr.mxu0 0.0
    %1180 = vmatpush1.xpose.msra.mxu0 0.0
    %1181 = vmatprep.subr.mxu0 0.0
    %1182 = vmatpush1.xpose.msra.mxu0 0.0
    %1183 = vmatprep.subr.mxu0 0.0
    %1184 = vmatpush1.xpose.msra.mxu0 0.0
    %1185 = vmatprep.subr.mxu0 0.0
    %1186 = vmatpush1.xpose.msra.mxu0 0.0
    %1187 = vmatprep.subr.mxu0 0.0
    %1188 = vmatpush1.xpose.msra.mxu0 %v1157
    %1189 = vmatprep.subr.mxu0 0.0
    %1190 = vmatpush1.xpose.msra.mxu0 %v1155
    %1191 = vmatprep.subr.mxu0 0.0
    %1192 = vmatpush2.xpose.msra.mxu0 0.0
    %1193 = vmatprep.subr.mxu0 0.0
    %1194 = vmatpush2.xpose.msra.mxu0 0.0
    %1195 = vmatprep.subr.mxu0 0.0
    %1196 = vmatpush2.xpose.msra.mxu0 0.0
    %1197 = vmatprep.subr.mxu0 0.0
    %1198 = vmatpush2.xpose.msra.mxu0 0.0
    %1199 = vmatprep.subr.mxu0 0.0
    %1200 = vmatpush2.xpose.msra.mxu0 0.0
    %1201 = vmatprep.subr.mxu0 0.0
    %1202 = vmatpush2.xpose.msra.mxu0 0.0
    %1203 = vmatprep.subr.mxu0 0.0
    %1204 = vmatpush2.xpose.msra.mxu0 0.0
    %1205 = vmatprep.subr.mxu0 0.0
    %1206 = vmatpush2.xpose.msra.mxu0 0.0
    %1207 = vmatprep.subr.mxu0 0.0
    %1208 = vmatpush2.xpose.msra.mxu0 0.0
    %1209 = vmatprep.subr.mxu0 0.0
    %1210 = vmatpush2.xpose.msra.mxu0 0.0
    %1211 = vmatprep.subr.mxu0 0.0
    %1212 = vmatpush2.xpose.msra.mxu0 0.0
    %1213 = vmatprep.subr.mxu0 0.0
    %1214 = vmatpush2.xpose.msra.mxu0 0.0
    %1215 = vmatprep.subr.mxu0 0.0
    %1216 = vmatpush2.xpose.msra.mxu0 0.0
    %1217 = vmatprep.subr.mxu0 0.0
    %1218 = vmatpush2.xpose.msra.mxu0 0.0
    %1219 = vmatprep.subr.mxu0 0.0
    %1220 = vmatpush2.xpose.msra.mxu0 0.0
    %1221 = vmatprep.subr.mxu0 0.0
    %1222 = vmatpush2.xpose.msra.mxu0 0.0
    %1223 = vmatprep.mubr.f32.mxu0 0.0
    %1224 = vmatmul.mubr.f32.gmra.mxu0 %v1151
    %v1225 = vpop.f32.mrf.mxu0
    %v1226 = vadd.f32 0.0, %v1225
    %v1227 = vpop.f32.mrf.mxu0
    %1228 = vmatprep.mubr.f32.mxu0 0.0
    %1229 = vmatmul.mubr.f32.gmra.mxu0 %v1153
    %v1230 = vpop.f32.mrf.mxu0
    %v1231 = vadd.f32 0.0, %v1230
    %v1232 = vpop.f32.mrf.mxu0
    %1233 = vdwg.mxu0
    %v1234 = vmul.f32 %v645, %v165
    %v1235 = vmul.f32 %v650, %v166
    %v1236 = vmul.f32 %v728, %v165
    %v1237 = vmul.f32 %v733, %v166
    %v1238 = vmul.f32 %v811, %v165
    %v1239 = vmul.f32 %v816, %v166
    %v1240 = vmul.f32 %v894, %v165
    %v1241 = vmul.f32 %v899, %v166
    %v1242 = vmul.f32 %v977, %v165
    %v1243 = vmul.f32 %v982, %v166
    %v1244 = vmul.f32 %v1060, %v165
    %v1245 = vmul.f32 %v1065, %v166
    %v1246 = vmul.f32 %v1143, %v165
    %v1247 = vmul.f32 %v1148, %v166
    %v1248 = vmul.f32 %v1226, %v165
    %v1249 = vmul.f32 %v1231, %v166
    %v1250 = vadd.f32 %v1234, %v167
    %v1251 = vadd.f32 %v1235, %v168
    %v1252 = vadd.f32 %v1236, %v167
    %v1253 = vadd.f32 %v1237, %v168
    %v1254 = vadd.f32 %v1238, %v167
    %v1255 = vadd.f32 %v1239, %v168
    %v1256 = vadd.f32 %v1240, %v167
    %v1257 = vadd.f32 %v1241, %v168
    %v1258 = vadd.f32 %v1242, %v167
    %v1259 = vadd.f32 %v1243, %v168
    %v1260 = vadd.f32 %v1244, %v167
    %v1261 = vadd.f32 %v1245, %v168
    %v1262 = vadd.f32 %v1246, %v167
    %v1263 = vadd.f32 %v1247, %v168
    %v1264 = vadd.f32 %v1248, %v167
    %v1265 = vadd.f32 %v1249, %v168
    %v1266 = vsel %vm569, %v1250, -inf
    %1267 = vmax.xlane.f32.xlu0 %v1266
    %v1268 = vpop.xlane.xlu0 %1267
    %v1269 = vsel %vm569, %v1251, -inf
    %1270 = vmax.xlane.f32.xlu0 %v1269
    %v1271 = vpop.xlane.xlu0 %1270
    %v1272 = vsel %vm569, %v1252, -inf
    %1273 = vmax.xlane.f32.xlu0 %v1272
    %v1274 = vpop.xlane.xlu0 %1273
    %v1275 = vsel %vm569, %v1253, -inf
    %1276 = vmax.xlane.f32.xlu0 %v1275
    %v1277 = vpop.xlane.xlu0 %1276
    %v1278 = vsel %vm569, %v1254, -inf
    %1279 = vmax.xlane.f32.xlu0 %v1278
    %v1280 = vpop.xlane.xlu0 %1279
    %v1281 = vsel %vm569, %v1255, -inf
    %1282 = vmax.xlane.f32.xlu0 %v1281
    %v1283 = vpop.xlane.xlu0 %1282
    %v1284 = vsel %vm569, %v1256, -inf
    %1285 = vmax.xlane.f32.xlu0 %v1284
    %v1286 = vpop.xlane.xlu0 %1285
    %v1287 = vsel %vm569, %v1257, -inf
    %1288 = vmax.xlane.f32.xlu0 %v1287
    %v1289 = vpop.xlane.xlu0 %1288
    %v1290 = vsel %vm569, %v1258, -inf
    %1291 = vmax.xlane.f32.xlu0 %v1290
    %v1292 = vpop.xlane.xlu0 %1291
    %v1293 = vsel %vm569, %v1259, -inf
    %1294 = vmax.xlane.f32.xlu0 %v1293
    %v1295 = vpop.xlane.xlu0 %1294
    %v1296 = vsel %vm569, %v1260, -inf
    %1297 = vmax.xlane.f32.xlu0 %v1296
    %v1298 = vpop.xlane.xlu0 %1297
    %v1299 = vsel %vm569, %v1261, -inf
    %1300 = vmax.xlane.f32.xlu0 %v1299
    %v1301 = vpop.xlane.xlu0 %1300
    %v1302 = vsel %vm569, %v1262, -inf
    %1303 = vmax.xlane.f32.xlu0 %v1302
    %v1304 = vpop.xlane.xlu0 %1303
    %v1305 = vsel %vm569, %v1263, -inf
    %1306 = vmax.xlane.f32.xlu0 %v1305
    %v1307 = vpop.xlane.xlu0 %1306
    %v1308 = vsel %vm569, %v1264, -inf
    %1309 = vmax.xlane.f32.xlu0 %v1308
    %v1310 = vpop.xlane.xlu0 %1309
    %v1311 = vsel %vm569, %v1265, -inf
    %1312 = vmax.xlane.f32.xlu0 %v1311
    %v1313 = vpop.xlane.xlu0 %1312
    %v1314 = vsub.f32 %v1250, %v1268
    %v1315 = vsub.f32 %v1251, %v1271
    %v1316 = vsub.f32 %v1252, %v1274
    %v1317 = vsub.f32 %v1253, %v1277
    %v1318 = vsub.f32 %v1254, %v1280
    %v1319 = vsub.f32 %v1255, %v1283
    %v1320 = vsub.f32 %v1256, %v1286
    %v1321 = vsub.f32 %v1257, %v1289
    %v1322 = vsub.f32 %v1258, %v1292
    %v1323 = vsub.f32 %v1259, %v1295
    %v1324 = vsub.f32 %v1260, %v1298
    %v1325 = vsub.f32 %v1261, %v1301
    %v1326 = vsub.f32 %v1262, %v1304
    %v1327 = vsub.f32 %v1263, %v1307
    %v1328 = vsub.f32 %v1264, %v1310
    %v1329 = vsub.f32 %v1265, %v1313
    %v1330 = vmul.f32 %v1314, 1.442695
    %v1331 = vpow.pop %v1330
    %v1332 = vmul.f32 %v1315, 1.442695
    %v1333 = vpow.pop %v1332
    %v1334 = vmul.f32 %v1316, 1.442695
    %v1335 = vpow.pop %v1334
    %v1336 = vmul.f32 %v1317, 1.442695
    %v1337 = vpow.pop %v1336
    %v1338 = vmul.f32 %v1318, 1.442695
    %v1339 = vpow.pop %v1338
    %v1340 = vmul.f32 %v1319, 1.442695
    %v1341 = vpow.pop %v1340
    %v1342 = vmul.f32 %v1320, 1.442695
    %v1343 = vpow.pop %v1342
    %v1344 = vmul.f32 %v1321, 1.442695
    %v1345 = vpow.pop %v1344
    %v1346 = vmul.f32 %v1322, 1.442695
    %v1347 = vpow.pop %v1346
    %v1348 = vmul.f32 %v1323, 1.442695
    %v1349 = vpow.pop %v1348
    %v1350 = vmul.f32 %v1324, 1.442695
    %v1351 = vpow.pop %v1350
    %v1352 = vmul.f32 %v1325, 1.442695
    %v1353 = vpow.pop %v1352
    %v1354 = vmul.f32 %v1326, 1.442695
    %v1355 = vpow.pop %v1354
    %v1356 = vmul.f32 %v1327, 1.442695
    %v1357 = vpow.pop %v1356
    %v1358 = vmul.f32 %v1328, 1.442695
    %v1359 = vpow.pop %v1358
    %v1360 = vmul.f32 %v1329, 1.442695
    %v1361 = vpow.pop %v1360
    %v1362 = vsel %vm569, %v1331, 0.0
    %1363 = vadd.xlane.f32.xlu0 %v1362
    %v1364 = vpop.xlane.xlu0 %1363
    %v1365 = vsel %vm569, %v1333, 0.0
    %1366 = vadd.xlane.f32.xlu0 %v1365
    %v1367 = vpop.xlane.xlu0 %1366
    %v1368 = vsel %vm569, %v1335, 0.0
    %1369 = vadd.xlane.f32.xlu0 %v1368
    %v1370 = vpop.xlane.xlu0 %1369
    %v1371 = vsel %vm569, %v1337, 0.0
    %1372 = vadd.xlane.f32.xlu0 %v1371
    %v1373 = vpop.xlane.xlu0 %1372
    %v1374 = vsel %vm569, %v1339, 0.0
    %1375 = vadd.xlane.f32.xlu0 %v1374
    %v1376 = vpop.xlane.xlu0 %1375
    %v1377 = vsel %vm569, %v1341, 0.0
    %1378 = vadd.xlane.f32.xlu0 %v1377
    %v1379 = vpop.xlane.xlu0 %1378
    %v1380 = vsel %vm569, %v1343, 0.0
    %1381 = vadd.xlane.f32.xlu0 %v1380
    %v1382 = vpop.xlane.xlu0 %1381
    %v1383 = vsel %vm569, %v1345, 0.0
    %1384 = vadd.xlane.f32.xlu0 %v1383
    %v1385 = vpop.xlane.xlu0 %1384
    %v1386 = vsel %vm569, %v1347, 0.0
    %1387 = vadd.xlane.f32.xlu0 %v1386
    %v1388 = vpop.xlane.xlu0 %1387
    %v1389 = vsel %vm569, %v1349, 0.0
    %1390 = vadd.xlane.f32.xlu0 %v1389
    %v1391 = vpop.xlane.xlu0 %1390
    %v1392 = vsel %vm569, %v1351, 0.0
    %1393 = vadd.xlane.f32.xlu0 %v1392
    %v1394 = vpop.xlane.xlu0 %1393
    %v1395 = vsel %vm569, %v1353, 0.0
    %1396 = vadd.xlane.f32.xlu0 %v1395
    %v1397 = vpop.xlane.xlu0 %1396
    %v1398 = vsel %vm569, %v1355, 0.0
    %1399 = vadd.xlane.f32.xlu0 %v1398
    %v1400 = vpop.xlane.xlu0 %1399
    %v1401 = vsel %vm569, %v1357, 0.0
    %1402 = vadd.xlane.f32.xlu0 %v1401
    %v1403 = vpop.xlane.xlu0 %1402
    %v1404 = vsel %vm569, %v1359, 0.0
    %1405 = vadd.xlane.f32.xlu0 %v1404
    %v1406 = vpop.xlane.xlu0 %1405
    %v1407 = vsel %vm569, %v1361, 0.0
    %1408 = vadd.xlane.f32.xlu0 %v1407
    %v1409 = vpop.xlane.xlu0 %1408
    %v1410 = vrcp.pop %v1364
    %v1411 = vrcp.pop %v1367
    %v1412 = vrcp.pop %v1370
    %v1413 = vrcp.pop %v1373
    %v1414 = vrcp.pop %v1376
    %v1415 = vrcp.pop %v1379
    %v1416 = vrcp.pop %v1382
    %v1417 = vrcp.pop %v1385
    %v1418 = vrcp.pop %v1388
    %v1419 = vrcp.pop %v1391
    %v1420 = vrcp.pop %v1394
    %v1421 = vrcp.pop %v1397
    %v1422 = vrcp.pop %v1400
    %v1423 = vrcp.pop %v1403
    %v1424 = vrcp.pop %v1406
    %v1425 = vrcp.pop %v1409
    %v1426 = vmul.f32 %v1331, %v1410
    %v1427 = vmul.f32 %v1333, %v1411
    %v1428 = vmul.f32 %v1335, %v1412
    %v1429 = vmul.f32 %v1337, %v1413
    %v1430 = vmul.f32 %v1339, %v1414
    %v1431 = vmul.f32 %v1341, %v1415
    %v1432 = vmul.f32 %v1343, %v1416
    %v1433 = vmul.f32 %v1345, %v1417
    %v1434 = vmul.f32 %v1347, %v1418
    %v1435 = vmul.f32 %v1349, %v1419
    %v1436 = vmul.f32 %v1351, %v1420
    %v1437 = vmul.f32 %v1353, %v1421
    %v1438 = vmul.f32 %v1355, %v1422
    %v1439 = vmul.f32 %v1357, %v1423
    %v1440 = vmul.f32 %v1359, %v1424
    %v1441 = vmul.f32 %v1361, %v1425
    %v1443 = vsel %vm569, %v1426, 0
    %v1446 = vsel %vm569, %v1427, 0
    %1448 = vmatprep.subr.mxu0 0.0
    %1449 = vmatpush1.msra.mxu0 0.0
    %1450 = vmatprep.subr.mxu0 0.0
    %1451 = vmatpush1.msra.mxu0 0.0
    %1452 = vmatprep.subr.mxu0 0.0
    %1453 = vmatpush1.msra.mxu0 0.0
    %1454 = vmatprep.subr.mxu0 0.0
    %1455 = vmatpush1.msra.mxu0 0.0
    %1456 = vmatprep.subr.mxu0 0.0
    %1457 = vmatpush1.msra.mxu0 0.0
    %1458 = vmatprep.subr.mxu0 0.0
    %1459 = vmatpush1.msra.mxu0 0.0
    %1460 = vmatprep.subr.mxu0 0.0
    %1461 = vmatpush1.msra.mxu0 0.0
    %1462 = vmatprep.subr.mxu0 0.0
    %1463 = vmatpush1.msra.mxu0 0.0
    %1464 = vmatprep.subr.mxu0 0.0
    %1465 = vmatpush1.msra.mxu0 0.0
    %1466 = vmatprep.subr.mxu0 0.0
    %1467 = vmatpush1.msra.mxu0 0.0
    %1468 = vmatprep.subr.mxu0 0.0
    %1469 = vmatpush1.msra.mxu0 0.0
    %1470 = vmatprep.subr.mxu0 0.0
    %1471 = vmatpush1.msra.mxu0 0.0
    %1472 = vmatprep.subr.mxu0 0.0
    %1473 = vmatpush1.msra.mxu0 0.0
    %1474 = vmatprep.subr.mxu0 0.0
    %1475 = vmatpush1.msra.mxu0 0.0
    %1476 = vmatprep.subr.mxu0 0.0
    %1477 = vmatpush1.msra.mxu0 %v492
    %1478 = vmatprep.subr.mxu0 0.0
    %1479 = vmatpush1.msra.mxu0 %v489
    %1480 = vmatprep.subr.mxu0 0.0
    %1481 = vmatpush2.msra.mxu0 0.0
    %1482 = vmatprep.subr.mxu0 0.0
    %1483 = vmatpush2.msra.mxu0 0.0
    %1484 = vmatprep.subr.mxu0 0.0
    %1485 = vmatpush2.msra.mxu0 0.0
    %1486 = vmatprep.subr.mxu0 0.0
    %1487 = vmatpush2.msra.mxu0 0.0
    %1488 = vmatprep.subr.mxu0 0.0
    %1489 = vmatpush2.msra.mxu0 0.0
    %1490 = vmatprep.subr.mxu0 0.0
    %1491 = vmatpush2.msra.mxu0 0.0
    %1492 = vmatprep.subr.mxu0 0.0
    %1493 = vmatpush2.msra.mxu0 0.0
    %1494 = vmatprep.subr.mxu0 0.0
    %1495 = vmatpush2.msra.mxu0 0.0
    %1496 = vmatprep.subr.mxu0 0.0
    %1497 = vmatpush2.msra.mxu0 0.0
    %1498 = vmatprep.subr.mxu0 0.0
    %1499 = vmatpush2.msra.mxu0 0.0
    %1500 = vmatprep.subr.mxu0 0.0
    %1501 = vmatpush2.msra.mxu0 0.0
    %1502 = vmatprep.subr.mxu0 0.0
    %1503 = vmatpush2.msra.mxu0 0.0
    %1504 = vmatprep.subr.mxu0 0.0
    %1505 = vmatpush2.msra.mxu0 0.0
    %1506 = vmatprep.subr.mxu0 0.0
    %1507 = vmatpush2.msra.mxu0 0.0
    %1508 = vmatprep.subr.mxu0 0.0
    %1509 = vmatpush2.msra.mxu0 0.0
    %1510 = vmatprep.subr.mxu0 0.0
    %1511 = vmatpush2.msra.mxu0 0.0
    %1512 = vmatprep.mubr.f32.mxu0 0.0
    %1513 = vmatmul.mubr.f32.gmra.mxu0 %v1443
    %v1514 = vpop.f32.mrf.mxu0
    %v1515 = vadd.f32 0.0, %v1514
    %v1516 = vpop.f32.mrf.mxu0
    %1517 = vmatprep.mubr.f32.mxu0 0.0
    %1518 = vmatmul.mubr.f32.gmra.mxu0 %v1446
    %v1519 = vpop.f32.mrf.mxu0
    %v1520 = vadd.f32 0.0, %v1519
    %v1521 = vpop.f32.mrf.mxu0
    %1522 = vdwg.mxu0
    %v1524 = vsel %vm569, %v1428, 0
    %v1527 = vsel %vm569, %v1429, 0
    %1529 = vmatprep.subr.mxu0 0.0
    %1530 = vmatpush1.msra.mxu0 0.0
    %1531 = vmatprep.subr.mxu0 0.0
    %1532 = vmatpush1.msra.mxu0 0.0
    %1533 = vmatprep.subr.mxu0 0.0
    %1534 = vmatpush1.msra.mxu0 0.0
    %1535 = vmatprep.subr.mxu0 0.0
    %1536 = vmatpush1.msra.mxu0 0.0
    %1537 = vmatprep.subr.mxu0 0.0
    %1538 = vmatpush1.msra.mxu0 0.0
    %1539 = vmatprep.subr.mxu0 0.0
    %1540 = vmatpush1.msra.mxu0 0.0
    %1541 = vmatprep.subr.mxu0 0.0
    %1542 = vmatpush1.msra.mxu0 0.0
    %1543 = vmatprep.subr.mxu0 0.0
    %1544 = vmatpush1.msra.mxu0 0.0
    %1545 = vmatprep.subr.mxu0 0.0
    %1546 = vmatpush1.msra.mxu0 0.0
    %1547 = vmatprep.subr.mxu0 0.0
    %1548 = vmatpush1.msra.mxu0 0.0
    %1549 = vmatprep.subr.mxu0 0.0
    %1550 = vmatpush1.msra.mxu0 0.0
    %1551 = vmatprep.subr.mxu0 0.0
    %1552 = vmatpush1.msra.mxu0 0.0
    %1553 = vmatprep.subr.mxu0 0.0
    %1554 = vmatpush1.msra.mxu0 0.0
    %1555 = vmatprep.subr.mxu0 0.0
    %1556 = vmatpush1.msra.mxu0 0.0
    %1557 = vmatprep.subr.mxu0 0.0
    %1558 = vmatpush1.msra.mxu0 %v530
    %1559 = vmatprep.subr.mxu0 0.0
    %1560 = vmatpush1.msra.mxu0 %v528
    %1561 = vmatprep.subr.mxu0 0.0
    %1562 = vmatpush2.msra.mxu0 0.0
    %1563 = vmatprep.subr.mxu0 0.0
    %1564 = vmatpush2.msra.mxu0 0.0
    %1565 = vmatprep.subr.mxu0 0.0
    %1566 = vmatpush2.msra.mxu0 0.0
    %1567 = vmatprep.subr.mxu0 0.0
    %1568 = vmatpush2.msra.mxu0 0.0
    %1569 = vmatprep.subr.mxu0 0.0
    %1570 = vmatpush2.msra.mxu0 0.0
    %1571 = vmatprep.subr.mxu0 0.0
    %1572 = vmatpush2.msra.mxu0 0.0
    %1573 = vmatprep.subr.mxu0 0.0
    %1574 = vmatpush2.msra.mxu0 0.0
    %1575 = vmatprep.subr.mxu0 0.0
    %1576 = vmatpush2.msra.mxu0 0.0
    %1577 = vmatprep.subr.mxu0 0.0
    %1578 = vmatpush2.msra.mxu0 0.0
    %1579 = vmatprep.subr.mxu0 0.0
    %1580 = vmatpush2.msra.mxu0 0.0
    %1581 = vmatprep.subr.mxu0 0.0
    %1582 = vmatpush2.msra.mxu0 0.0
    %1583 = vmatprep.subr.mxu0 0.0
    %1584 = vmatpush2.msra.mxu0 0.0
    %1585 = vmatprep.subr.mxu0 0.0
    %1586 = vmatpush2.msra.mxu0 0.0
    %1587 = vmatprep.subr.mxu0 0.0
    %1588 = vmatpush2.msra.mxu0 0.0
    %1589 = vmatprep.subr.mxu0 0.0
    %1590 = vmatpush2.msra.mxu0 0.0
    %1591 = vmatprep.subr.mxu0 0.0
    %1592 = vmatpush2.msra.mxu0 0.0
    %1593 = vmatprep.mubr.f32.mxu0 0.0
    %1594 = vmatmul.mubr.f32.gmra.mxu0 %v1524
    %v1595 = vpop.f32.mrf.mxu0
    %v1596 = vadd.f32 0.0, %v1595
    %v1597 = vpop.f32.mrf.mxu0
    %1598 = vmatprep.mubr.f32.mxu0 0.0
    %1599 = vmatmul.mubr.f32.gmra.mxu0 %v1527
    %v1600 = vpop.f32.mrf.mxu0
    %v1601 = vadd.f32 0.0, %v1600
    %v1602 = vpop.f32.mrf.mxu0
    %1603 = vdwg.mxu0
    %v1605 = vsel %vm569, %v1430, 0
    %v1608 = vsel %vm569, %v1431, 0
    %1610 = vmatprep.subr.mxu0 0.0
    %1611 = vmatpush1.msra.mxu0 0.0
    %1612 = vmatprep.subr.mxu0 0.0
    %1613 = vmatpush1.msra.mxu0 0.0
    %1614 = vmatprep.subr.mxu0 0.0
    %1615 = vmatpush1.msra.mxu0 0.0
    %1616 = vmatprep.subr.mxu0 0.0
    %1617 = vmatpush1.msra.mxu0 0.0
    %1618 = vmatprep.subr.mxu0 0.0
    %1619 = vmatpush1.msra.mxu0 0.0
    %1620 = vmatprep.subr.mxu0 0.0
    %1621 = vmatpush1.msra.mxu0 0.0
    %1622 = vmatprep.subr.mxu0 0.0
    %1623 = vmatpush1.msra.mxu0 0.0
    %1624 = vmatprep.subr.mxu0 0.0
    %1625 = vmatpush1.msra.mxu0 0.0
    %1626 = vmatprep.subr.mxu0 0.0
    %1627 = vmatpush1.msra.mxu0 0.0
    %1628 = vmatprep.subr.mxu0 0.0
    %1629 = vmatpush1.msra.mxu0 0.0
    %1630 = vmatprep.subr.mxu0 0.0
    %1631 = vmatpush1.msra.mxu0 0.0
    %1632 = vmatprep.subr.mxu0 0.0
    %1633 = vmatpush1.msra.mxu0 0.0
    %1634 = vmatprep.subr.mxu0 0.0
    %1635 = vmatpush1.msra.mxu0 0.0
    %1636 = vmatprep.subr.mxu0 0.0
    %1637 = vmatpush1.msra.mxu0 0.0
    %1638 = vmatprep.subr.mxu0 0.0
    %1639 = vmatpush1.msra.mxu0 %v536
    %1640 = vmatprep.subr.mxu0 0.0
    %1641 = vmatpush1.msra.mxu0 %v534
    %1642 = vmatprep.subr.mxu0 0.0
    %1643 = vmatpush2.msra.mxu0 0.0
    %1644 = vmatprep.subr.mxu0 0.0
    %1645 = vmatpush2.msra.mxu0 0.0
    %1646 = vmatprep.subr.mxu0 0.0
    %1647 = vmatpush2.msra.mxu0 0.0
    %1648 = vmatprep.subr.mxu0 0.0
    %1649 = vmatpush2.msra.mxu0 0.0
    %1650 = vmatprep.subr.mxu0 0.0
    %1651 = vmatpush2.msra.mxu0 0.0
    %1652 = vmatprep.subr.mxu0 0.0
    %1653 = vmatpush2.msra.mxu0 0.0
    %1654 = vmatprep.subr.mxu0 0.0
    %1655 = vmatpush2.msra.mxu0 0.0
    %1656 = vmatprep.subr.mxu0 0.0
    %1657 = vmatpush2.msra.mxu0 0.0
    %1658 = vmatprep.subr.mxu0 0.0
    %1659 = vmatpush2.msra.mxu0 0.0
    %1660 = vmatprep.subr.mxu0 0.0
    %1661 = vmatpush2.msra.mxu0 0.0
    %1662 = vmatprep.subr.mxu0 0.0
    %1663 = vmatpush2.msra.mxu0 0.0
    %1664 = vmatprep.subr.mxu0 0.0
    %1665 = vmatpush2.msra.mxu0 0.0
    %1666 = vmatprep.subr.mxu0 0.0
    %1667 = vmatpush2.msra.mxu0 0.0
    %1668 = vmatprep.subr.mxu0 0.0
    %1669 = vmatpush2.msra.mxu0 0.0
    %1670 = vmatprep.subr.mxu0 0.0
    %1671 = vmatpush2.msra.mxu0 0.0
    %1672 = vmatprep.subr.mxu0 0.0
    %1673 = vmatpush2.msra.mxu0 0.0
    %1674 = vmatprep.mubr.f32.mxu0 0.0
    %1675 = vmatmul.mubr.f32.gmra.mxu0 %v1605
    %v1676 = vpop.f32.mrf.mxu0
    %v1677 = vadd.f32 0.0, %v1676
    %v1678 = vpop.f32.mrf.mxu0
    %1679 = vmatprep.mubr.f32.mxu0 0.0
    %1680 = vmatmul.mubr.f32.gmra.mxu0 %v1608
    %v1681 = vpop.f32.mrf.mxu0
    %v1682 = vadd.f32 0.0, %v1681
    %v1683 = vpop.f32.mrf.mxu0
    %1684 = vdwg.mxu0
    %v1686 = vsel %vm569, %v1432, 0
    %v1689 = vsel %vm569, %v1433, 0
    %1691 = vmatprep.subr.mxu0 0.0
    %1692 = vmatpush1.msra.mxu0 0.0
    %1693 = vmatprep.subr.mxu0 0.0
    %1694 = vmatpush1.msra.mxu0 0.0
    %1695 = vmatprep.subr.mxu0 0.0
    %1696 = vmatpush1.msra.mxu0 0.0
    %1697 = vmatprep.subr.mxu0 0.0
    %1698 = vmatpush1.msra.mxu0 0.0
    %1699 = vmatprep.subr.mxu0 0.0
    %1700 = vmatpush1.msra.mxu0 0.0
    %1701 = vmatprep.subr.mxu0 0.0
    %1702 = vmatpush1.msra.mxu0 0.0
    %1703 = vmatprep.subr.mxu0 0.0
    %1704 = vmatpush1.msra.mxu0 0.0
    %1705 = vmatprep.subr.mxu0 0.0
    %1706 = vmatpush1.msra.mxu0 0.0
    %1707 = vmatprep.subr.mxu0 0.0
    %1708 = vmatpush1.msra.mxu0 0.0
    %1709 = vmatprep.subr.mxu0 0.0
    %1710 = vmatpush1.msra.mxu0 0.0
    %1711 = vmatprep.subr.mxu0 0.0
    %1712 = vmatpush1.msra.mxu0 0.0
    %1713 = vmatprep.subr.mxu0 0.0
    %1714 = vmatpush1.msra.mxu0 0.0
    %1715 = vmatprep.subr.mxu0 0.0
    %1716 = vmatpush1.msra.mxu0 0.0
    %1717 = vmatprep.subr.mxu0 0.0
    %1718 = vmatpush1.msra.mxu0 0.0
    %1719 = vmatprep.subr.mxu0 0.0
    %1720 = vmatpush1.msra.mxu0 %v542
    %1721 = vmatprep.subr.mxu0 0.0
    %1722 = vmatpush1.msra.mxu0 %v540
    %1723 = vmatprep.subr.mxu0 0.0
    %1724 = vmatpush2.msra.mxu0 0.0
    %1725 = vmatprep.subr.mxu0 0.0
    %1726 = vmatpush2.msra.mxu0 0.0
    %1727 = vmatprep.subr.mxu0 0.0
    %1728 = vmatpush2.msra.mxu0 0.0
    %1729 = vmatprep.subr.mxu0 0.0
    %1730 = vmatpush2.msra.mxu0 0.0
    %1731 = vmatprep.subr.mxu0 0.0
    %1732 = vmatpush2.msra.mxu0 0.0
    %1733 = vmatprep.subr.mxu0 0.0
    %1734 = vmatpush2.msra.mxu0 0.0
    %1735 = vmatprep.subr.mxu0 0.0
    %1736 = vmatpush2.msra.mxu0 0.0
    %1737 = vmatprep.subr.mxu0 0.0
    %1738 = vmatpush2.msra.mxu0 0.0
    %1739 = vmatprep.subr.mxu0 0.0
    %1740 = vmatpush2.msra.mxu0 0.0
    %1741 = vmatprep.subr.mxu0 0.0
    %1742 = vmatpush2.msra.mxu0 0.0
    %1743 = vmatprep.subr.mxu0 0.0
    %1744 = vmatpush2.msra.mxu0 0.0
    %1745 = vmatprep.subr.mxu0 0.0
    %1746 = vmatpush2.msra.mxu0 0.0
    %1747 = vmatprep.subr.mxu0 0.0
    %1748 = vmatpush2.msra.mxu0 0.0
    %1749 = vmatprep.subr.mxu0 0.0
    %1750 = vmatpush2.msra.mxu0 0.0
    %1751 = vmatprep.subr.mxu0 0.0
    %1752 = vmatpush2.msra.mxu0 0.0
    %1753 = vmatprep.subr.mxu0 0.0
    %1754 = vmatpush2.msra.mxu0 0.0
    %1755 = vmatprep.mubr.f32.mxu0 0.0
    %1756 = vmatmul.mubr.f32.gmra.mxu0 %v1686
    %v1757 = vpop.f32.mrf.mxu0
    %v1758 = vadd.f32 0.0, %v1757
    %v1759 = vpop.f32.mrf.mxu0
    %1760 = vmatprep.mubr.f32.mxu0 0.0
    %1761 = vmatmul.mubr.f32.gmra.mxu0 %v1689
    %v1762 = vpop.f32.mrf.mxu0
    %v1763 = vadd.f32 0.0, %v1762
    %v1764 = vpop.f32.mrf.mxu0
    %1765 = vdwg.mxu0
    %v1767 = vsel %vm569, %v1434, 0
    %v1770 = vsel %vm569, %v1435, 0
    %1772 = vmatprep.subr.mxu0 0.0
    %1773 = vmatpush1.msra.mxu0 0.0
    %1774 = vmatprep.subr.mxu0 0.0
    %1775 = vmatpush1.msra.mxu0 0.0
    %1776 = vmatprep.subr.mxu0 0.0
    %1777 = vmatpush1.msra.mxu0 0.0
    %1778 = vmatprep.subr.mxu0 0.0
    %1779 = vmatpush1.msra.mxu0 0.0
    %1780 = vmatprep.subr.mxu0 0.0
    %1781 = vmatpush1.msra.mxu0 0.0
    %1782 = vmatprep.subr.mxu0 0.0
    %1783 = vmatpush1.msra.mxu0 0.0
    %1784 = vmatprep.subr.mxu0 0.0
    %1785 = vmatpush1.msra.mxu0 0.0
    %1786 = vmatprep.subr.mxu0 0.0
    %1787 = vmatpush1.msra.mxu0 0.0
    %1788 = vmatprep.subr.mxu0 0.0
    %1789 = vmatpush1.msra.mxu0 0.0
    %1790 = vmatprep.subr.mxu0 0.0
    %1791 = vmatpush1.msra.mxu0 0.0
    %1792 = vmatprep.subr.mxu0 0.0
    %1793 = vmatpush1.msra.mxu0 0.0
    %1794 = vmatprep.subr.mxu0 0.0
    %1795 = vmatpush1.msra.mxu0 0.0
    %1796 = vmatprep.subr.mxu0 0.0
    %1797 = vmatpush1.msra.mxu0 0.0
    %1798 = vmatprep.subr.mxu0 0.0
    %1799 = vmatpush1.msra.mxu0 0.0
    %1800 = vmatprep.subr.mxu0 0.0
    %1801 = vmatpush1.msra.mxu0 %v548
    %1802 = vmatprep.subr.mxu0 0.0
    %1803 = vmatpush1.msra.mxu0 %v546
    %1804 = vmatprep.subr.mxu0 0.0
    %1805 = vmatpush2.msra.mxu0 0.0
    %1806 = vmatprep.subr.mxu0 0.0
    %1807 = vmatpush2.msra.mxu0 0.0
    %1808 = vmatprep.subr.mxu0 0.0
    %1809 = vmatpush2.msra.mxu0 0.0
    %1810 = vmatprep.subr.mxu0 0.0
    %1811 = vmatpush2.msra.mxu0 0.0
    %1812 = vmatprep.subr.mxu0 0.0
    %1813 = vmatpush2.msra.mxu0 0.0
    %1814 = vmatprep.subr.mxu0 0.0
    %1815 = vmatpush2.msra.mxu0 0.0
    %1816 = vmatprep.subr.mxu0 0.0
    %1817 = vmatpush2.msra.mxu0 0.0
    %1818 = vmatprep.subr.mxu0 0.0
    %1819 = vmatpush2.msra.mxu0 0.0
    %1820 = vmatprep.subr.mxu0 0.0
    %1821 = vmatpush2.msra.mxu0 0.0
    %1822 = vmatprep.subr.mxu0 0.0
    %1823 = vmatpush2.msra.mxu0 0.0
    %1824 = vmatprep.subr.mxu0 0.0
    %1825 = vmatpush2.msra.mxu0 0.0
    %1826 = vmatprep.subr.mxu0 0.0
    %1827 = vmatpush2.msra.mxu0 0.0
    %1828 = vmatprep.subr.mxu0 0.0
    %1829 = vmatpush2.msra.mxu0 0.0
    %1830 = vmatprep.subr.mxu0 0.0
    %1831 = vmatpush2.msra.mxu0 0.0
    %1832 = vmatprep.subr.mxu0 0.0
    %1833 = vmatpush2.msra.mxu0 0.0
    %1834 = vmatprep.subr.mxu0 0.0
    %1835 = vmatpush2.msra.mxu0 0.0
    %1836 = vmatprep.mubr.f32.mxu0 0.0
    %1837 = vmatmul.mubr.f32.gmra.mxu0 %v1767
    %v1838 = vpop.f32.mrf.mxu0
    %v1839 = vadd.f32 0.0, %v1838
    %v1840 = vpop.f32.mrf.mxu0
    %1841 = vmatprep.mubr.f32.mxu0 0.0
    %1842 = vmatmul.mubr.f32.gmra.mxu0 %v1770
    %v1843 = vpop.f32.mrf.mxu0
    %v1844 = vadd.f32 0.0, %v1843
    %v1845 = vpop.f32.mrf.mxu0
    %1846 = vdwg.mxu0
    %v1848 = vsel %vm569, %v1436, 0
    %v1851 = vsel %vm569, %v1437, 0
    %1853 = vmatprep.subr.mxu0 0.0
    %1854 = vmatpush1.msra.mxu0 0.0
    %1855 = vmatprep.subr.mxu0 0.0
    %1856 = vmatpush1.msra.mxu0 0.0
    %1857 = vmatprep.subr.mxu0 0.0
    %1858 = vmatpush1.msra.mxu0 0.0
    %1859 = vmatprep.subr.mxu0 0.0
    %1860 = vmatpush1.msra.mxu0 0.0
    %1861 = vmatprep.subr.mxu0 0.0
    %1862 = vmatpush1.msra.mxu0 0.0
    %1863 = vmatprep.subr.mxu0 0.0
    %1864 = vmatpush1.msra.mxu0 0.0
    %1865 = vmatprep.subr.mxu0 0.0
    %1866 = vmatpush1.msra.mxu0 0.0
    %1867 = vmatprep.subr.mxu0 0.0
    %1868 = vmatpush1.msra.mxu0 0.0
    %1869 = vmatprep.subr.mxu0 0.0
    %1870 = vmatpush1.msra.mxu0 0.0
    %1871 = vmatprep.subr.mxu0 0.0
    %1872 = vmatpush1.msra.mxu0 0.0
    %1873 = vmatprep.subr.mxu0 0.0
    %1874 = vmatpush1.msra.mxu0 0.0
    %1875 = vmatprep.subr.mxu0 0.0
    %1876 = vmatpush1.msra.mxu0 0.0
    %1877 = vmatprep.subr.mxu0 0.0
    %1878 = vmatpush1.msra.mxu0 0.0
    %1879 = vmatprep.subr.mxu0 0.0
    %1880 = vmatpush1.msra.mxu0 0.0
    %1881 = vmatprep.subr.mxu0 0.0
    %1882 = vmatpush1.msra.mxu0 %v554
    %1883 = vmatprep.subr.mxu0 0.0
    %1884 = vmatpush1.msra.mxu0 %v552
    %1885 = vmatprep.subr.mxu0 0.0
    %1886 = vmatpush2.msra.mxu0 0.0
    %1887 = vmatprep.subr.mxu0 0.0
    %1888 = vmatpush2.msra.mxu0 0.0
    %1889 = vmatprep.subr.mxu0 0.0
    %1890 = vmatpush2.msra.mxu0 0.0
    %1891 = vmatprep.subr.mxu0 0.0
    %1892 = vmatpush2.msra.mxu0 0.0
    %1893 = vmatprep.subr.mxu0 0.0
    %1894 = vmatpush2.msra.mxu0 0.0
    %1895 = vmatprep.subr.mxu0 0.0
    %1896 = vmatpush2.msra.mxu0 0.0
    %1897 = vmatprep.subr.mxu0 0.0
    %1898 = vmatpush2.msra.mxu0 0.0
    %1899 = vmatprep.subr.mxu0 0.0
    %1900 = vmatpush2.msra.mxu0 0.0
    %1901 = vmatprep.subr.mxu0 0.0
    %1902 = vmatpush2.msra.mxu0 0.0
    %1903 = vmatprep.subr.mxu0 0.0
    %1904 = vmatpush2.msra.mxu0 0.0
    %1905 = vmatprep.subr.mxu0 0.0
    %1906 = vmatpush2.msra.mxu0 0.0
    %1907 = vmatprep.subr.mxu0 0.0
    %1908 = vmatpush2.msra.mxu0 0.0
    %1909 = vmatprep.subr.mxu0 0.0
    %1910 = vmatpush2.msra.mxu0 0.0
    %1911 = vmatprep.subr.mxu0 0.0
    %1912 = vmatpush2.msra.mxu0 0.0
    %1913 = vmatprep.subr.mxu0 0.0
    %1914 = vmatpush2.msra.mxu0 0.0
    %1915 = vmatprep.subr.mxu0 0.0
    %1916 = vmatpush2.msra.mxu0 0.0
    %1917 = vmatprep.mubr.f32.mxu0 0.0
    %1918 = vmatmul.mubr.f32.gmra.mxu0 %v1848
    %v1919 = vpop.f32.mrf.mxu0
    %v1920 = vadd.f32 0.0, %v1919
    %v1921 = vpop.f32.mrf.mxu0
    %1922 = vmatprep.mubr.f32.mxu0 0.0
    %1923 = vmatmul.mubr.f32.gmra.mxu0 %v1851
    %v1924 = vpop.f32.mrf.mxu0
    %v1925 = vadd.f32 0.0, %v1924
    %v1926 = vpop.f32.mrf.mxu0
    %1927 = vdwg.mxu0
    %v1929 = vsel %vm569, %v1438, 0
    %v1932 = vsel %vm569, %v1439, 0
    %1934 = vmatprep.subr.mxu0 0.0
    %1935 = vmatpush1.msra.mxu0 0.0
    %1936 = vmatprep.subr.mxu0 0.0
    %1937 = vmatpush1.msra.mxu0 0.0
    %1938 = vmatprep.subr.mxu0 0.0
    %1939 = vmatpush1.msra.mxu0 0.0
    %1940 = vmatprep.subr.mxu0 0.0
    %1941 = vmatpush1.msra.mxu0 0.0
    %1942 = vmatprep.subr.mxu0 0.0
    %1943 = vmatpush1.msra.mxu0 0.0
    %1944 = vmatprep.subr.mxu0 0.0
    %1945 = vmatpush1.msra.mxu0 0.0
    %1946 = vmatprep.subr.mxu0 0.0
    %1947 = vmatpush1.msra.mxu0 0.0
    %1948 = vmatprep.subr.mxu0 0.0
    %1949 = vmatpush1.msra.mxu0 0.0
    %1950 = vmatprep.subr.mxu0 0.0
    %1951 = vmatpush1.msra.mxu0 0.0
    %1952 = vmatprep.subr.mxu0 0.0
    %1953 = vmatpush1.msra.mxu0 0.0
    %1954 = vmatprep.subr.mxu0 0.0
    %1955 = vmatpush1.msra.mxu0 0.0
    %1956 = vmatprep.subr.mxu0 0.0
    %1957 = vmatpush1.msra.mxu0 0.0
    %1958 = vmatprep.subr.mxu0 0.0
    %1959 = vmatpush1.msra.mxu0 0.0
    %1960 = vmatprep.subr.mxu0 0.0
    %1961 = vmatpush1.msra.mxu0 0.0
    %1962 = vmatprep.subr.mxu0 0.0
    %1963 = vmatpush1.msra.mxu0 %v560
    %1964 = vmatprep.subr.mxu0 0.0
    %1965 = vmatpush1.msra.mxu0 %v558
    %1966 = vmatprep.subr.mxu0 0.0
    %1967 = vmatpush2.msra.mxu0 0.0
    %1968 = vmatprep.subr.mxu0 0.0
    %1969 = vmatpush2.msra.mxu0 0.0
    %1970 = vmatprep.subr.mxu0 0.0
    %1971 = vmatpush2.msra.mxu0 0.0
    %1972 = vmatprep.subr.mxu0 0.0
    %1973 = vmatpush2.msra.mxu0 0.0
    %1974 = vmatprep.subr.mxu0 0.0
    %1975 = vmatpush2.msra.mxu0 0.0
    %1976 = vmatprep.subr.mxu0 0.0
    %1977 = vmatpush2.msra.mxu0 0.0
    %1978 = vmatprep.subr.mxu0 0.0
    %1979 = vmatpush2.msra.mxu0 0.0
    %1980 = vmatprep.subr.mxu0 0.0
    %1981 = vmatpush2.msra.mxu0 0.0
    %1982 = vmatprep.subr.mxu0 0.0
    %1983 = vmatpush2.msra.mxu0 0.0
    %1984 = vmatprep.subr.mxu0 0.0
    %1985 = vmatpush2.msra.mxu0 0.0
    %1986 = vmatprep.subr.mxu0 0.0
    %1987 = vmatpush2.msra.mxu0 0.0
    %1988 = vmatprep.subr.mxu0 0.0
    %1989 = vmatpush2.msra.mxu0 0.0
    %1990 = vmatprep.subr.mxu0 0.0
    %1991 = vmatpush2.msra.mxu0 0.0
    %1992 = vmatprep.subr.mxu0 0.0
    %1993 = vmatpush2.msra.mxu0 0.0
    %1994 = vmatprep.subr.mxu0 0.0
    %1995 = vmatpush2.msra.mxu0 0.0
    %1996 = vmatprep.subr.mxu0 0.0
    %1997 = vmatpush2.msra.mxu0 0.0
    %1998 = vmatprep.mubr.f32.mxu0 0.0
    %1999 = vmatmul.mubr.f32.gmra.mxu0 %v1929
    %v2000 = vpop.f32.mrf.mxu0
    %v2001 = vadd.f32 0.0, %v2000
    %v2002 = vpop.f32.mrf.mxu0
    %2003 = vmatprep.mubr.f32.mxu0 0.0
    %2004 = vmatmul.mubr.f32.gmra.mxu0 %v1932
    %v2005 = vpop.f32.mrf.mxu0
    %v2006 = vadd.f32 0.0, %v2005
    %v2007 = vpop.f32.mrf.mxu0
    %2008 = vdwg.mxu0
    %v2010 = vsel %vm569, %v1440, 0
    %v2013 = vsel %vm569, %v1441, 0
    %2015 = vmatprep.subr.mxu0 0.0
    %2016 = vmatpush1.msra.mxu0 0.0
    %2017 = vmatprep.subr.mxu0 0.0
    %2018 = vmatpush1.msra.mxu0 0.0
    %2019 = vmatprep.subr.mxu0 0.0
    %2020 = vmatpush1.msra.mxu0 0.0
    %2021 = vmatprep.subr.mxu0 0.0
    %2022 = vmatpush1.msra.mxu0 0.0
    %2023 = vmatprep.subr.mxu0 0.0
    %2024 = vmatpush1.msra.mxu0 0.0
    %2025 = vmatprep.subr.mxu0 0.0
    %2026 = vmatpush1.msra.mxu0 0.0
    %2027 = vmatprep.subr.mxu0 0.0
    %2028 = vmatpush1.msra.mxu0 0.0
    %2029 = vmatprep.subr.mxu0 0.0
    %2030 = vmatpush1.msra.mxu0 0.0
    %2031 = vmatprep.subr.mxu0 0.0
    %2032 = vmatpush1.msra.mxu0 0.0
    %2033 = vmatprep.subr.mxu0 0.0
    %2034 = vmatpush1.msra.mxu0 0.0
    %2035 = vmatprep.subr.mxu0 0.0
    %2036 = vmatpush1.msra.mxu0 0.0
    %2037 = vmatprep.subr.mxu0 0.0
    %2038 = vmatpush1.msra.mxu0 0.0
    %2039 = vmatprep.subr.mxu0 0.0
    %2040 = vmatpush1.msra.mxu0 0.0
    %2041 = vmatprep.subr.mxu0 0.0
    %2042 = vmatpush1.msra.mxu0 0.0
    %2043 = vmatprep.subr.mxu0 0.0
    %2044 = vmatpush1.msra.mxu0 %v566
    %2045 = vmatprep.subr.mxu0 0.0
    %2046 = vmatpush1.msra.mxu0 %v564
    %2047 = vmatprep.subr.mxu0 0.0
    %2048 = vmatpush2.msra.mxu0 0.0
    %2049 = vmatprep.subr.mxu0 0.0
    %2050 = vmatpush2.msra.mxu0 0.0
    %2051 = vmatprep.subr.mxu0 0.0
    %2052 = vmatpush2.msra.mxu0 0.0
    %2053 = vmatprep.subr.mxu0 0.0
    %2054 = vmatpush2.msra.mxu0 0.0
    %2055 = vmatprep.subr.mxu0 0.0
    %2056 = vmatpush2.msra.mxu0 0.0
    %2057 = vmatprep.subr.mxu0 0.0
    %2058 = vmatpush2.msra.mxu0 0.0
    %2059 = vmatprep.subr.mxu0 0.0
    %2060 = vmatpush2.msra.mxu0 0.0
    %2061 = vmatprep.subr.mxu0 0.0
    %2062 = vmatpush2.msra.mxu0 0.0
    %2063 = vmatprep.subr.mxu0 0.0
    %2064 = vmatpush2.msra.mxu0 0.0
    %2065 = vmatprep.subr.mxu0 0.0
    %2066 = vmatpush2.msra.mxu0 0.0
    %2067 = vmatprep.subr.mxu0 0.0
    %2068 = vmatpush2.msra.mxu0 0.0
    %2069 = vmatprep.subr.mxu0 0.0
    %2070 = vmatpush2.msra.mxu0 0.0
    %2071 = vmatprep.subr.mxu0 0.0
    %2072 = vmatpush2.msra.mxu0 0.0
    %2073 = vmatprep.subr.mxu0 0.0
    %2074 = vmatpush2.msra.mxu0 0.0
    %2075 = vmatprep.subr.mxu0 0.0
    %2076 = vmatpush2.msra.mxu0 0.0
    %2077 = vmatprep.subr.mxu0 0.0
    %2078 = vmatpush2.msra.mxu0 0.0
    %2079 = vmatprep.mubr.f32.mxu0 0.0
    %2080 = vmatmul.mubr.f32.gmra.mxu0 %v2010
    %v2081 = vpop.f32.mrf.mxu0
    %v2082 = vadd.f32 0.0, %v2081
    %v2083 = vpop.f32.mrf.mxu0
    %2084 = vmatprep.mubr.f32.mxu0 0.0
    %2085 = vmatmul.mubr.f32.gmra.mxu0 %v2013
    %v2086 = vpop.f32.mrf.mxu0
    %v2087 = vadd.f32 0.0, %v2086
    %v2088 = vpop.f32.mrf.mxu0
    %2089 = vdwg.mxu0
    %2092 = vrot.lane.b32.xlu0 %v1596, 16
    %v2093 = vpop.permute.xlu0 %2092
    %2094 = vrot.lane.b32.xlu0 %v1601, 16
    %v2095 = vpop.permute.xlu0 %2094
    %2100 = vrot.lane.b32.xlu0 %v1677, 32
    %v2101 = vpop.permute.xlu0 %2100
    %2102 = vrot.lane.b32.xlu0 %v1682, 32
    %v2103 = vpop.permute.xlu0 %2102
    %2108 = vrot.lane.b32.xlu0 %v1758, 48
    %v2109 = vpop.permute.xlu0 %2108
    %2110 = vrot.lane.b32.xlu0 %v1763, 48
    %v2111 = vpop.permute.xlu0 %2110
    %2116 = vrot.lane.b32.xlu0 %v1839, 64
    %v2117 = vpop.permute.xlu0 %2116
    %2118 = vrot.lane.b32.xlu0 %v1844, 64
    %v2119 = vpop.permute.xlu0 %2118
    %2124 = vrot.lane.b32.xlu0 %v1920, 80
    %v2125 = vpop.permute.xlu0 %2124
    %2126 = vrot.lane.b32.xlu0 %v1925, 80
    %v2127 = vpop.permute.xlu0 %2126
    %2132 = vrot.lane.b32.xlu0 %v2001, 96
    %v2133 = vpop.permute.xlu0 %2132
    %2134 = vrot.lane.b32.xlu0 %v2006, 96
    %v2135 = vpop.permute.xlu0 %2134
    %2140 = vrot.lane.b32.xlu0 %v2082, 112
    %v2141 = vpop.permute.xlu0 %2140
    %2142 = vrot.lane.b32.xlu0 %v2087, 112
    %v2143 = vpop.permute.xlu0 %2142
    %v2146 = vsel %vm569, %v1515, %v2093
    %v2147 = vsel %vm569, %v1520, %v2095
    %vm2148 = vcmask 261120
    %v2149 = vsel %vm2148, %v2146, %v2101
    %v2150 = vsel %vm2148, %v2147, %v2103
    %vm2151 = vcmask 392192
    %v2152 = vsel %vm2151, %v2149, %v2109
    %v2153 = vsel %vm2151, %v2150, %v2111
    %vm2154 = vcmask 523264
    %v2155 = vsel %vm2154, %v2152, %v2117
    %v2156 = vsel %vm2154, %v2153, %v2119
    %vm2157 = vcmask 654336
    %v2158 = vsel %vm2157, %v2155, %v2125
    %v2159 = vsel %vm2157, %v2156, %v2127
    %vm2160 = vcmask 785408
    %v2161 = vsel %vm2160, %v2158, %v2133
    %v2162 = vsel %vm2160, %v2159, %v2135
    %vm2163 = vcmask 916480
    %v2164 = vsel %vm2163, %v2161, %v2141
    %v2165 = vsel %vm2163, %v2162, %v2143
    %v2166 = vpack.c.bf16 %v2165, %v2164
    %v2183 = vunpack.c.l.b16 %v300
    %v2184 = vunpack.c.l.b16 %v301
    %v2185 = vunpack.c.l.b16 %v302
    %v2186 = vunpack.c.l.b16 %v303
    %v2187 = vunpack.c.l.b16 %v304
    %v2188 = vunpack.c.l.b16 %v305
    %v2189 = vunpack.c.l.b16 %v306
    %v2190 = vunpack.c.l.b16 %v307
    %v2191 = vunpack.c.l.b16 %v308
    %v2192 = vunpack.c.l.b16 %v309
    %v2193 = vunpack.c.l.b16 %v310
    %v2194 = vunpack.c.l.b16 %v311
    %v2195 = vunpack.c.l.b16 %v312
    %v2196 = vunpack.c.l.b16 %v313
    %v2197 = vunpack.c.l.b16 %v314
    %v2198 = vunpack.c.l.b16 %v315
    %v2199 = vpack.c.b16 %v2184, %v2183
    %v2200 = vpack.c.b16 %v2186, %v2185
    %v2201 = vpack.c.b16 %v2188, %v2187
    %v2202 = vpack.c.b16 %v2190, %v2189
    %v2203 = vpack.c.b16 %v2192, %v2191
    %v2204 = vpack.c.b16 %v2194, %v2193
    %v2205 = vpack.c.b16 %v2196, %v2195
    %v2206 = vpack.c.b16 %v2198, %v2197
    %2215 = vmatprep.subr.bf16.mxu0 0
    %2216 = vmatpush1.bf16.msra.mxu0 %v2206
    %2217 = vmatprep.subr.bf16.mxu0 0
    %2218 = vmatpush1.bf16.msra.mxu0 %v2205
    %2219 = vmatprep.subr.bf16.mxu0 0
    %2220 = vmatpush1.bf16.msra.mxu0 %v2204
    %2221 = vmatprep.subr.bf16.mxu0 0
    %2222 = vmatpush1.bf16.msra.mxu0 %v2203
    %2223 = vmatprep.subr.bf16.mxu0 0
    %2224 = vmatpush1.bf16.msra.mxu0 %v2202
    %2225 = vmatprep.subr.bf16.mxu0 0
    %2226 = vmatpush1.bf16.msra.mxu0 %v2201
    %2227 = vmatprep.subr.bf16.mxu0 0
    %2228 = vmatpush1.bf16.msra.mxu0 %v2200
    %2229 = vmatprep.subr.bf16.mxu0 0
    %2230 = vmatpush1.bf16.msra.mxu0 %v2199
    %2231 = vmatprep.subr.bf16.mxu0 0
    %2232 = vmatpush2.bf16.msra.mxu0 0
    %2233 = vmatprep.subr.bf16.mxu0 0
    %2234 = vmatpush2.bf16.msra.mxu0 0
    %2235 = vmatprep.subr.bf16.mxu0 0
    %2236 = vmatpush2.bf16.msra.mxu0 0
    %2237 = vmatprep.subr.bf16.mxu0 0
    %2238 = vmatpush2.bf16.msra.mxu0 0
    %2239 = vmatprep.subr.bf16.mxu0 0
    %2240 = vmatpush2.bf16.msra.mxu0 0
    %2241 = vmatprep.subr.bf16.mxu0 0
    %2242 = vmatpush2.bf16.msra.mxu0 0
    %2243 = vmatprep.subr.bf16.mxu0 0
    %2244 = vmatpush2.bf16.msra.mxu0 0
    %2245 = vmatprep.subr.bf16.mxu0 0
    %2246 = vmatpush2.bf16.msra.mxu0 0
    %2247 = vmatprep.mubr.bf16.mxu0 0
    %2248 = vmatmul.mubr.bf16.gmra.mxu0 %v2166
    %v2249 = vpop.f32.mrf.mxu0
    %v2250 = vadd.f32 0.0, %v2249
    %v2251 = vpop.f32.mrf.mxu0
    %v2252 = vpop.f32.mrf.mxu0
    %v2253 = vadd.f32 0.0, %v2252
    %v2254 = vpop.f32.mrf.mxu0
    %2255 = vdwg.mxu0
    %v2256 = vadd.f32 %v224, %v2250
    %v2257 = vadd.f32 %v227, %v2253
    %s2258 = scalar_lea.vmem %s10, 2
    %v2259 = vld [vmem:[%s2258] sm:$0x3]
    %2260 = vadd.xlane.f32.xlu0 %v2256
    %v2261 = vpop.xlane.xlu0 %2260
    %2262 = vadd.xlane.f32.xlu0 %v2257
    %v2263 = vpop.xlane.xlu0 %2262
    %v2264 = vmul.f32 %v2261, %v235
    %v2265 = vmul.f32 %v2263, %v235
    %v2266 = vsub.f32 %v2256, %v2264
    %v2267 = vsub.f32 %v2257, %v2265
    %v2268 = vmul.f32 %v2266, %v2266
    %v2269 = vmul.f32 %v2267, %v2267
    %2270 = vadd.xlane.f32.xlu0 %v2268
    %v2271 = vpop.xlane.xlu0 %2270
    %2272 = vadd.xlane.f32.xlu0 %v2269
    %v2273 = vpop.xlane.xlu0 %2272
    %v2274 = vmul.f32 %v2271, %v235
    %v2275 = vmul.f32 %v2273, %v235
    %v2276 = vadd.f32 %v2274, 1e-05
    %v2277 = vadd.f32 %v2275, 1e-05
    %v2278 = vrsqrt.pop %v2276
    %v2279 = vrsqrt.pop %v2277
    %v2280 = vmul.f32 %v2266, %v2278
    %v2281 = vmul.f32 %v2267, %v2279
    %v2282 = vlaneseq
    %v2283 = vshrl.u32 %v2282, 7
    %v2284 = vsub.s32 0, %v2283
    %v2285 = vrot.slane %v2259, %v2284
    %v2286 = vmul.f32 %v2280, %v2285
    %v2287 = vmul.f32 %v2281, %v2285
    %v2288 = vlaneseq
    %v2289 = vshrl.u32 %v2288, 7
    %v2290 = vsub.s32 1, %v2289
    %v2291 = vrot.slane %v2259, %v2290
    %v2292 = vadd.f32 %v2286, %v2291
    %v2293 = vadd.f32 %v2287, %v2291
    %v2294 = vpack.c.bf16 %v2293, %v2292
    %v2295 = vld [vmem:[#allocation13] sm:$0xff]
    %v2296 = vld [vmem:[#allocation13 + $0x8] sm:$0xff]
    %v2297 = vld [vmem:[#allocation13 + $0x10] sm:$0xff]
    %v2298 = vld [vmem:[#allocation13 + $0x18] sm:$0xff]
    %v2299 = vld [vmem:[#allocation13 + $0x20] sm:$0xff]
    %v2300 = vld [vmem:[#allocation13 + $0x28] sm:$0xff]
    %v2301 = vld [vmem:[#allocation13 + $0x30] sm:$0xff]
    %v2302 = vld [vmem:[#allocation13 + $0x38] sm:$0xff]
    %v2303 = vld [vmem:[#allocation13 + $0x40] sm:$0xff]
    %v2304 = vld [vmem:[#allocation13 + $0x48] sm:$0xff]
    %v2305 = vld [vmem:[#allocation13 + $0x50] sm:$0xff]
    %v2306 = vld [vmem:[#allocation13 + $0x58] sm:$0xff]
    %v2307 = vld [vmem:[#allocation13 + $0x60] sm:$0xff]
    %v2308 = vld [vmem:[#allocation13 + $0x68] sm:$0xff]
    %v2309 = vld [vmem:[#allocation13 + $0x70] sm:$0xff]
    %v2310 = vld [vmem:[#allocation13 + $0x78] sm:$0xff]
    %v2311 = vld [vmem:[%s12] sm:$0x3]
    %v2313 = vlaneseq
    %v2314 = vshrl.u32 %v2313, 7
    %v2315 = vsub.s32 0, %v2314
    %v2316 = vrot.slane %v2311, %v2315
    %v2317 = vlaneseq
    %v2318 = vshrl.u32 %v2317, 7
    %v2319 = vsub.s32 1, %v2318
    %v2320 = vrot.slane %v2311, %v2319
    %v2339 = vunpack.c.l.b16 %v2295
    %v2340 = vunpack.c.h.b16 %v2295
    %v2341 = vunpack.c.l.b16 %v2296
    %v2342 = vunpack.c.h.b16 %v2296
    %v2343 = vunpack.c.l.b16 %v2297
    %v2344 = vunpack.c.h.b16 %v2297
    %v2345 = vunpack.c.l.b16 %v2298
    %v2346 = vunpack.c.h.b16 %v2298
    %v2347 = vunpack.c.l.b16 %v2299
    %v2348 = vunpack.c.h.b16 %v2299
    %v2349 = vunpack.c.l.b16 %v2300
    %v2350 = vunpack.c.h.b16 %v2300
    %v2351 = vunpack.c.l.b16 %v2301
    %v2352 = vunpack.c.h.b16 %v2301
    %v2353 = vunpack.c.l.b16 %v2302
    %v2354 = vunpack.c.h.b16 %v2302
    %v2355 = vunpack.c.l.b16 %v2303
    %v2356 = vunpack.c.h.b16 %v2303
    %v2357 = vunpack.c.l.b16 %v2304
    %v2358 = vunpack.c.h.b16 %v2304
    %v2359 = vunpack.c.l.b16 %v2305
    %v2360 = vunpack.c.h.b16 %v2305
    %v2361 = vunpack.c.l.b16 %v2306
    %v2362 = vunpack.c.h.b16 %v2306
    %v2363 = vunpack.c.l.b16 %v2307
    %v2364 = vunpack.c.h.b16 %v2307
    %v2365 = vunpack.c.l.b16 %v2308
    %v2366 = vunpack.c.h.b16 %v2308
    %v2367 = vunpack.c.l.b16 %v2309
    %v2368 = vunpack.c.h.b16 %v2309
    %v2369 = vunpack.c.l.b16 %v2310
    %v2370 = vunpack.c.h.b16 %v2310
    %v2371 = vpack.c.b16 %v2341, %v2339
    %v2372 = vpack.c.b16 %v2342, %v2340
    %v2373 = vpack.c.b16 %v2345, %v2343
    %v2374 = vpack.c.b16 %v2346, %v2344
    %v2375 = vpack.c.b16 %v2349, %v2347
    %v2376 = vpack.c.b16 %v2350, %v2348
    %v2377 = vpack.c.b16 %v2353, %v2351
    %v2378 = vpack.c.b16 %v2354, %v2352
    %v2379 = vpack.c.b16 %v2357, %v2355
    %v2380 = vpack.c.b16 %v2358, %v2356
    %v2381 = vpack.c.b16 %v2361, %v2359
    %v2382 = vpack.c.b16 %v2362, %v2360
    %v2383 = vpack.c.b16 %v2365, %v2363
    %v2384 = vpack.c.b16 %v2366, %v2364
    %v2385 = vpack.c.b16 %v2369, %v2367
    %v2386 = vpack.c.b16 %v2370, %v2368
    %2403 = vmatprep.subr.bf16.mxu0 %v2386
    %2404 = vmatpush1.bf16.msra.mxu0 %v2385
    %2405 = vmatprep.subr.bf16.mxu0 %v2384
    %2406 = vmatpush1.bf16.msra.mxu0 %v2383
    %2407 = vmatprep.subr.bf16.mxu0 %v2382
    %2408 = vmatpush1.bf16.msra.mxu0 %v2381
    %2409 = vmatprep.subr.bf16.mxu0 %v2380
    %2410 = vmatpush1.bf16.msra.mxu0 %v2379
    %2411 = vmatprep.subr.bf16.mxu0 %v2378
    %2412 = vmatpush1.bf16.msra.mxu0 %v2377
    %2413 = vmatprep.subr.bf16.mxu0 %v2376
    %2414 = vmatpush1.bf16.msra.mxu0 %v2375
    %2415 = vmatprep.subr.bf16.mxu0 %v2374
    %2416 = vmatpush1.bf16.msra.mxu0 %v2373
    %2417 = vmatprep.subr.bf16.mxu0 %v2372
    %2418 = vmatpush1.bf16.msra.mxu0 %v2371
    %2419 = vmatprep.subr.bf16.mxu0 0
    %2420 = vmatpush2.bf16.msra.mxu0 0
    %2421 = vmatprep.subr.bf16.mxu0 0
    %2422 = vmatpush2.bf16.msra.mxu0 0
    %2423 = vmatprep.subr.bf16.mxu0 0
    %2424 = vmatpush2.bf16.msra.mxu0 0
    %2425 = vmatprep.subr.bf16.mxu0 0
    %2426 = vmatpush2.bf16.msra.mxu0 0
    %2427 = vmatprep.subr.bf16.mxu0 0
    %2428 = vmatpush2.bf16.msra.mxu0 0
    %2429 = vmatprep.subr.bf16.mxu0 0
    %2430 = vmatpush2.bf16.msra.mxu0 0
    %2431 = vmatprep.subr.bf16.mxu0 0
    %2432 = vmatpush2.bf16.msra.mxu0 0
    %2433 = vmatprep.subr.bf16.mxu0 0
    %2434 = vmatpush2.bf16.msra.mxu0 0
    %2435 = vmatprep.mubr.bf16.mxu0 0
    %2436 = vmatmul.mubr.bf16.gmra.mxu0 %v2294
    %v2437 = vpop.f32.mrf.mxu0
    %v2438 = vadd.f32 %v2316, %v2437
    %v2439 = vpop.f32.mrf.mxu0
    %v2440 = vadd.f32 %v2320, %v2439
    %v2441 = vpop.f32.mrf.mxu0
    %v2442 = vadd.f32 %v2316, %v2441
    %v2443 = vpop.f32.mrf.mxu0
    %v2444 = vadd.f32 %v2320, %v2443
    %2445 = vdwg.mxu0
    %v2446 = vmax.f32 %v2438, 0.0
    %v2447 = vmax.f32 %v2440, 0.0
    %v2448 = vmax.f32 %v2442, 0.0
    %v2449 = vmax.f32 %v2444, 0.0
    %v2450 = vpack.c.bf16 %v2448, %v2446
    %v2451 = vpack.c.bf16 %v2449, %v2447
    %v2452 = vld [vmem:[#allocation14] sm:$0xf]
    %v2453 = vld [vmem:[#allocation14 + $0x4] sm:$0xf]
    %v2454 = vld [vmem:[#allocation14 + $0x8] sm:$0xf]
    %v2455 = vld [vmem:[#allocation14 + $0xc] sm:$0xf]
    %v2456 = vld [vmem:[#allocation14 + $0x10] sm:$0xf]
    %v2457 = vld [vmem:[#allocation14 + $0x14] sm:$0xf]
    %v2458 = vld [vmem:[#allocation14 + $0x18] sm:$0xf]
    %v2459 = vld [vmem:[#allocation14 + $0x1c] sm:$0xf]
    %v2460 = vld [vmem:[#allocation14 + $0x20] sm:$0xf]
    %v2461 = vld [vmem:[#allocation14 + $0x24] sm:$0xf]
    %v2462 = vld [vmem:[#allocation14 + $0x28] sm:$0xf]
    %v2463 = vld [vmem:[#allocation14 + $0x2c] sm:$0xf]
    %v2464 = vld [vmem:[#allocation14 + $0x30] sm:$0xf]
    %v2465 = vld [vmem:[#allocation14 + $0x34] sm:$0xf]
    %v2466 = vld [vmem:[#allocation14 + $0x38] sm:$0xf]
    %v2467 = vld [vmem:[#allocation14 + $0x3c] sm:$0xf]
    %v2468 = vld [vmem:[#allocation14 + $0x40] sm:$0xf]
    %v2469 = vld [vmem:[#allocation14 + $0x44] sm:$0xf]
    %v2470 = vld [vmem:[#allocation14 + $0x48] sm:$0xf]
    %v2471 = vld [vmem:[#allocation14 + $0x4c] sm:$0xf]
    %v2472 = vld [vmem:[#allocation14 + $0x50] sm:$0xf]
    %v2473 = vld [vmem:[#allocation14 + $0x54] sm:$0xf]
    %v2474 = vld [vmem:[#allocation14 + $0x58] sm:$0xf]
    %v2475 = vld [vmem:[#allocation14 + $0x5c] sm:$0xf]
    %v2476 = vld [vmem:[#allocation14 + $0x60] sm:$0xf]
    %v2477 = vld [vmem:[#allocation14 + $0x64] sm:$0xf]
    %v2478 = vld [vmem:[#allocation14 + $0x68] sm:$0xf]
    %v2479 = vld [vmem:[#allocation14 + $0x6c] sm:$0xf]
    %v2480 = vld [vmem:[#allocation14 + $0x70] sm:$0xf]
    %v2481 = vld [vmem:[#allocation14 + $0x74] sm:$0xf]
    %v2482 = vld [vmem:[#allocation14 + $0x78] sm:$0xf]
    %v2483 = vld [vmem:[#allocation14 + $0x7c] sm:$0xf]
    %v2516 = vunpack.c.l.b16 %v2452
    %v2517 = vunpack.c.l.b16 %v2453
    %v2518 = vunpack.c.l.b16 %v2454
    %v2519 = vunpack.c.l.b16 %v2455
    %v2520 = vunpack.c.l.b16 %v2456
    %v2521 = vunpack.c.l.b16 %v2457
    %v2522 = vunpack.c.l.b16 %v2458
    %v2523 = vunpack.c.l.b16 %v2459
    %v2524 = vunpack.c.l.b16 %v2460
    %v2525 = vunpack.c.l.b16 %v2461
    %v2526 = vunpack.c.l.b16 %v2462
    %v2527 = vunpack.c.l.b16 %v2463
    %v2528 = vunpack.c.l.b16 %v2464
    %v2529 = vunpack.c.l.b16 %v2465
    %v2530 = vunpack.c.l.b16 %v2466
    %v2531 = vunpack.c.l.b16 %v2467
    %v2532 = vunpack.c.l.b16 %v2468
    %v2533 = vunpack.c.l.b16 %v2469
    %v2534 = vunpack.c.l.b16 %v2470
    %v2535 = vunpack.c.l.b16 %v2471
    %v2536 = vunpack.c.l.b16 %v2472
    %v2537 = vunpack.c.l.b16 %v2473
    %v2538 = vunpack.c.l.b16 %v2474
    %v2539 = vunpack.c.l.b16 %v2475
    %v2540 = vunpack.c.l.b16 %v2476
    %v2541 = vunpack.c.l.b16 %v2477
    %v2542 = vunpack.c.l.b16 %v2478
    %v2543 = vunpack.c.l.b16 %v2479
    %v2544 = vunpack.c.l.b16 %v2480
    %v2545 = vunpack.c.l.b16 %v2481
    %v2546 = vunpack.c.l.b16 %v2482
    %v2547 = vunpack.c.l.b16 %v2483
    %v2548 = vpack.c.b16 %v2517, %v2516
    %v2549 = vpack.c.b16 %v2519, %v2518
    %v2550 = vpack.c.b16 %v2521, %v2520
    %v2551 = vpack.c.b16 %v2523, %v2522
    %v2552 = vpack.c.b16 %v2525, %v2524
    %v2553 = vpack.c.b16 %v2527, %v2526
    %v2554 = vpack.c.b16 %v2529, %v2528
    %v2555 = vpack.c.b16 %v2531, %v2530
    %v2556 = vpack.c.b16 %v2533, %v2532
    %v2557 = vpack.c.b16 %v2535, %v2534
    %v2558 = vpack.c.b16 %v2537, %v2536
    %v2559 = vpack.c.b16 %v2539, %v2538
    %v2560 = vpack.c.b16 %v2541, %v2540
    %v2561 = vpack.c.b16 %v2543, %v2542
    %v2562 = vpack.c.b16 %v2545, %v2544
    %v2563 = vpack.c.b16 %v2547, %v2546
    %2580 = vmatprep.subr.bf16.mxu0 0
    %2581 = vmatpush1.bf16.msra.mxu0 %v2555
    %2582 = vmatprep.subr.bf16.mxu0 0
    %2583 = vmatpush1.bf16.msra.mxu0 %v2554
    %2584 = vmatprep.subr.bf16.mxu0 0
    %2585 = vmatpush1.bf16.msra.mxu0 %v2553
    %2586 = vmatprep.subr.bf16.mxu0 0
    %2587 = vmatpush1.bf16.msra.mxu0 %v2552
    %2588 = vmatprep.subr.bf16.mxu0 0
    %2589 = vmatpush1.bf16.msra.mxu0 %v2551
    %2590 = vmatprep.subr.bf16.mxu0 0
    %2591 = vmatpush1.bf16.msra.mxu0 %v2550
    %2592 = vmatprep.subr.bf16.mxu0 0
    %2593 = vmatpush1.bf16.msra.mxu0 %v2549
    %2594 = vmatprep.subr.bf16.mxu0 0
    %2595 = vmatpush1.bf16.msra.mxu0 %v2548
    %2596 = vmatprep.subr.bf16.mxu0 0
    %2597 = vmatpush2.bf16.msra.mxu0 %v2563
    %2598 = vmatprep.subr.bf16.mxu0 0
    %2599 = vmatpush2.bf16.msra.mxu0 %v2562
    %2600 = vmatprep.subr.bf16.mxu0 0
    %2601 = vmatpush2.bf16.msra.mxu0 %v2561
    %2602 = vmatprep.subr.bf16.mxu0 0
    %2603 = vmatpush2.bf16.msra.mxu0 %v2560
    %2604 = vmatprep.subr.bf16.mxu0 0
    %2605 = vmatpush2.bf16.msra.mxu0 %v2559
    %2606 = vmatprep.subr.bf16.mxu0 0
    %2607 = vmatpush2.bf16.msra.mxu0 %v2558
    %2608 = vmatprep.subr.bf16.mxu0 0
    %2609 = vmatpush2.bf16.msra.mxu0 %v2557
    %2610 = vmatprep.subr.bf16.mxu0 0
    %2611 = vmatpush2.bf16.msra.mxu0 %v2556
    %2612 = vmatprep.mubr.bf16.mxu0 %v2451
    %2613 = vmatmul.mubr.bf16.gmra.mxu0 %v2450
    %v2614 = vpop.f32.mrf.mxu0
    %v2615 = vadd.f32 0.0, %v2614
    %v2616 = vpop.f32.mrf.mxu0
    %v2617 = vpop.f32.mrf.mxu0
    %v2618 = vadd.f32 0.0, %v2617
    %v2619 = vpop.f32.mrf.mxu0
    %2620 = vdwg.mxu0
    %v2621 = vadd.f32 %v2256, %v2615
    %v2622 = vadd.f32 %v2257, %v2618
    %s2623 = scalar_lea.vmem [#allocation16], 1
    %v2624 = vld [vmem:[%s2623] sm:$0x1]
    %v2626 = vlaneseq
    %v2627 = vshrl.u32 %v2626, 7
    %v2628 = vsub.s32 0, %v2627
    %v2629 = vrot.slane %v2624, %v2628
    %v2631 = vadd.f32 %v2621, %v2629
    %v2632 = vadd.f32 %v2622, %v2629
    %s2633 = scalar_lea.vmem %s10, 4
    %v2634 = vld [vmem:[%s2633] sm:$0x3]
    %2635 = vadd.xlane.f32.xlu0 %v2631
    %v2636 = vpop.xlane.xlu0 %2635
    %2637 = vadd.xlane.f32.xlu0 %v2632
    %v2638 = vpop.xlane.xlu0 %2637
    %v2639 = vmul.f32 %v2636, %v235
    %v2640 = vmul.f32 %v2638, %v235
    %v2641 = vsub.f32 %v2631, %v2639
    %v2642 = vsub.f32 %v2632, %v2640
    %v2643 = vmul.f32 %v2641, %v2641
    %v2644 = vmul.f32 %v2642, %v2642
    %2645 = vadd.xlane.f32.xlu0 %v2643
    %v2646 = vpop.xlane.xlu0 %2645
    %2647 = vadd.xlane.f32.xlu0 %v2644
    %v2648 = vpop.xlane.xlu0 %2647
    %v2649 = vmul.f32 %v2646, %v235
    %v2650 = vmul.f32 %v2648, %v235
    %v2651 = vadd.f32 %v2649, 1e-05
    %v2652 = vadd.f32 %v2650, 1e-05
    %v2653 = vrsqrt.pop %v2651
    %v2654 = vrsqrt.pop %v2652
    %v2655 = vmul.f32 %v2641, %v2653
    %v2656 = vmul.f32 %v2642, %v2654
    %v2657 = vlaneseq
    %v2658 = vshrl.u32 %v2657, 7
    %v2659 = vsub.s32 0, %v2658
    %v2660 = vrot.slane %v2634, %v2659
    %v2661 = vmul.f32 %v2655, %v2660
    %v2662 = vmul.f32 %v2656, %v2660
    %v2663 = vlaneseq
    %v2664 = vshrl.u32 %v2663, 7
    %v2665 = vsub.s32 1, %v2664
    %v2666 = vrot.slane %v2634, %v2665
    %v2667 = vadd.f32 %v2661, %v2666
    %v2668 = vadd.f32 %v2662, %v2666
    %s2669 = scalar_lea.vmem [#allocation11], 192
    %v2670 = vld [vmem:[%s2669] sm:$0xf]
    %v2671 = vld [vmem:[%s2669 + $0x4] sm:$0xf]
    %v2672 = vld [vmem:[%s2669 + $0x8] sm:$0xf]
    %v2673 = vld [vmem:[%s2669 + $0xc] sm:$0xf]
    %v2674 = vld [vmem:[%s2669 + $0x10] sm:$0xf]
    %v2675 = vld [vmem:[%s2669 + $0x14] sm:$0xf]
    %v2676 = vld [vmem:[%s2669 + $0x18] sm:$0xf]
    %v2677 = vld [vmem:[%s2669 + $0x1c] sm:$0xf]
    %v2678 = vld [vmem:[%s2669 + $0x20] sm:$0xf]
    %v2679 = vld [vmem:[%s2669 + $0x24] sm:$0xf]
    %v2680 = vld [vmem:[%s2669 + $0x28] sm:$0xf]
    %v2681 = vld [vmem:[%s2669 + $0x2c] sm:$0xf]
    %v2682 = vld [vmem:[%s2669 + $0x30] sm:$0xf]
    %v2683 = vld [vmem:[%s2669 + $0x34] sm:$0xf]
    %v2684 = vld [vmem:[%s2669 + $0x38] sm:$0xf]
    %v2685 = vld [vmem:[%s2669 + $0x3c] sm:$0xf]
    %s2686 = scalar_lea.vmem [#allocation11], 256
    %v2687 = vld [vmem:[%s2686] sm:$0xf]
    %v2688 = vld [vmem:[%s2686 + $0x4] sm:$0xf]
    %v2689 = vld [vmem:[%s2686 + $0x8] sm:$0xf]
    %v2690 = vld [vmem:[%s2686 + $0xc] sm:$0xf]
    %v2691 = vld [vmem:[%s2686 + $0x10] sm:$0xf]
    %v2692 = vld [vmem:[%s2686 + $0x14] sm:$0xf]
    %v2693 = vld [vmem:[%s2686 + $0x18] sm:$0xf]
    %v2694 = vld [vmem:[%s2686 + $0x1c] sm:$0xf]
    %v2695 = vld [vmem:[%s2686 + $0x20] sm:$0xf]
    %v2696 = vld [vmem:[%s2686 + $0x24] sm:$0xf]
    %v2697 = vld [vmem:[%s2686 + $0x28] sm:$0xf]
    %v2698 = vld [vmem:[%s2686 + $0x2c] sm:$0xf]
    %v2699 = vld [vmem:[%s2686 + $0x30] sm:$0xf]
    %v2700 = vld [vmem:[%s2686 + $0x34] sm:$0xf]
    %v2701 = vld [vmem:[%s2686 + $0x38] sm:$0xf]
    %v2702 = vld [vmem:[%s2686 + $0x3c] sm:$0xf]
    %s2703 = scalar_lea.vmem [#allocation11], 320
    %v2704 = vld [vmem:[%s2703] sm:$0xf]
    %v2705 = vld [vmem:[%s2703 + $0x4] sm:$0xf]
    %v2706 = vld [vmem:[%s2703 + $0x8] sm:$0xf]
    %v2707 = vld [vmem:[%s2703 + $0xc] sm:$0xf]
    %v2708 = vld [vmem:[%s2703 + $0x10] sm:$0xf]
    %v2709 = vld [vmem:[%s2703 + $0x14] sm:$0xf]
    %v2710 = vld [vmem:[%s2703 + $0x18] sm:$0xf]
    %v2711 = vld [vmem:[%s2703 + $0x1c] sm:$0xf]
    %v2712 = vld [vmem:[%s2703 + $0x20] sm:$0xf]
    %v2713 = vld [vmem:[%s2703 + $0x24] sm:$0xf]
    %v2714 = vld [vmem:[%s2703 + $0x28] sm:$0xf]
    %v2715 = vld [vmem:[%s2703 + $0x2c] sm:$0xf]
    %v2716 = vld [vmem:[%s2703 + $0x30] sm:$0xf]
    %v2717 = vld [vmem:[%s2703 + $0x34] sm:$0xf]
    %v2718 = vld [vmem:[%s2703 + $0x38] sm:$0xf]
    %v2719 = vld [vmem:[%s2703 + $0x3c] sm:$0xf]
    %v2720 = vpack.c.bf16 %v2668, %v2667
    %v2737 = vunpack.c.l.b16 %v2670
    %v2738 = vunpack.c.l.b16 %v2671
    %v2739 = vunpack.c.l.b16 %v2672
    %v2740 = vunpack.c.l.b16 %v2673
    %v2741 = vunpack.c.l.b16 %v2674
    %v2742 = vunpack.c.l.b16 %v2675
    %v2743 = vunpack.c.l.b16 %v2676
    %v2744 = vunpack.c.l.b16 %v2677
    %v2745 = vunpack.c.l.b16 %v2678
    %v2746 = vunpack.c.l.b16 %v2679
    %v2747 = vunpack.c.l.b16 %v2680
    %v2748 = vunpack.c.l.b16 %v2681
    %v2749 = vunpack.c.l.b16 %v2682
    %v2750 = vunpack.c.l.b16 %v2683
    %v2751 = vunpack.c.l.b16 %v2684
    %v2752 = vunpack.c.l.b16 %v2685
    %v2753 = vpack.c.b16 %v2738, %v2737
    %v2754 = vpack.c.b16 %v2740, %v2739
    %v2755 = vpack.c.b16 %v2742, %v2741
    %v2756 = vpack.c.b16 %v2744, %v2743
    %v2757 = vpack.c.b16 %v2746, %v2745
    %v2758 = vpack.c.b16 %v2748, %v2747
    %v2759 = vpack.c.b16 %v2750, %v2749
    %v2760 = vpack.c.b16 %v2752, %v2751
    %2769 = vmatprep.subr.bf16.mxu0 0
    %2770 = vmatpush1.bf16.msra.mxu0 %v2760
    %2771 = vmatprep.subr.bf16.mxu0 0
    %2772 = vmatpush1.bf16.msra.mxu0 %v2759
    %2773 = vmatprep.subr.bf16.mxu0 0
    %2774 = vmatpush1.bf16.msra.mxu0 %v2758
    %2775 = vmatprep.subr.bf16.mxu0 0
    %2776 = vmatpush1.bf16.msra.mxu0 %v2757
    %2777 = vmatprep.subr.bf16.mxu0 0
    %2778 = vmatpush1.bf16.msra.mxu0 %v2756
    %2779 = vmatprep.subr.bf16.mxu0 0
    %2780 = vmatpush1.bf16.msra.mxu0 %v2755
    %2781 = vmatprep.subr.bf16.mxu0 0
    %2782 = vmatpush1.bf16.msra.mxu0 %v2754
    %2783 = vmatprep.subr.bf16.mxu0 0
    %2784 = vmatpush1.bf16.msra.mxu0 %v2753
    %2785 = vmatprep.subr.bf16.mxu0 0
    %2786 = vmatpush2.bf16.msra.mxu0 0
    %2787 = vmatprep.subr.bf16.mxu0 0
    %2788 = vmatpush2.bf16.msra.mxu0 0
    %2789 = vmatprep.subr.bf16.mxu0 0
    %2790 = vmatpush2.bf16.msra.mxu0 0
    %2791 = vmatprep.subr.bf16.mxu0 0
    %2792 = vmatpush2.bf16.msra.mxu0 0
    %2793 = vmatprep.subr.bf16.mxu0 0
    %2794 = vmatpush2.bf16.msra.mxu0 0
    %2795 = vmatprep.subr.bf16.mxu0 0
    %2796 = vmatpush2.bf16.msra.mxu0 0
    %2797 = vmatprep.subr.bf16.mxu0 0
    %2798 = vmatpush2.bf16.msra.mxu0 0
    %2799 = vmatprep.subr.bf16.mxu0 0
    %2800 = vmatpush2.bf16.msra.mxu0 0
    %2801 = vmatprep.mubr.bf16.mxu0 0
    %2802 = vmatmul.mubr.bf16.gmra.mxu0 %v2720
    %v2803 = vpop.f32.mrf.mxu0
    %v2804 = vadd.f32 0.0, %v2803
    %v2805 = vpop.f32.mrf.mxu0
    %v2806 = vpop.f32.mrf.mxu0
    %v2807 = vadd.f32 0.0, %v2806
    %v2808 = vpop.f32.mrf.mxu0
    %2809 = vdwg.mxu0
    %v2826 = vunpack.c.l.b16 %v2687
    %v2827 = vunpack.c.l.b16 %v2688
    %v2828 = vunpack.c.l.b16 %v2689
    %v2829 = vunpack.c.l.b16 %v2690
    %v2830 = vunpack.c.l.b16 %v2691
    %v2831 = vunpack.c.l.b16 %v2692
    %v2832 = vunpack.c.l.b16 %v2693
    %v2833 = vunpack.c.l.b16 %v2694
    %v2834 = vunpack.c.l.b16 %v2695
    %v2835 = vunpack.c.l.b16 %v2696
    %v2836 = vunpack.c.l.b16 %v2697
    %v2837 = vunpack.c.l.b16 %v2698
    %v2838 = vunpack.c.l.b16 %v2699
    %v2839 = vunpack.c.l.b16 %v2700
    %v2840 = vunpack.c.l.b16 %v2701
    %v2841 = vunpack.c.l.b16 %v2702
    %v2842 = vpack.c.b16 %v2827, %v2826
    %v2843 = vpack.c.b16 %v2829, %v2828
    %v2844 = vpack.c.b16 %v2831, %v2830
    %v2845 = vpack.c.b16 %v2833, %v2832
    %v2846 = vpack.c.b16 %v2835, %v2834
    %v2847 = vpack.c.b16 %v2837, %v2836
    %v2848 = vpack.c.b16 %v2839, %v2838
    %v2849 = vpack.c.b16 %v2841, %v2840
    %2858 = vmatprep.subr.bf16.mxu0 0
    %2859 = vmatpush1.bf16.msra.mxu0 %v2849
    %2860 = vmatprep.subr.bf16.mxu0 0
    %2861 = vmatpush1.bf16.msra.mxu0 %v2848
    %2862 = vmatprep.subr.bf16.mxu0 0
    %2863 = vmatpush1.bf16.msra.mxu0 %v2847
    %2864 = vmatprep.subr.bf16.mxu0 0
    %2865 = vmatpush1.bf16.msra.mxu0 %v2846
    %2866 = vmatprep.subr.bf16.mxu0 0
    %2867 = vmatpush1.bf16.msra.mxu0 %v2845
    %2868 = vmatprep.subr.bf16.mxu0 0
    %2869 = vmatpush1.bf16.msra.mxu0 %v2844
    %2870 = vmatprep.subr.bf16.mxu0 0
    %2871 = vmatpush1.bf16.msra.mxu0 %v2843
    %2872 = vmatprep.subr.bf16.mxu0 0
    %2873 = vmatpush1.bf16.msra.mxu0 %v2842
    %2874 = vmatprep.subr.bf16.mxu0 0
    %2875 = vmatpush2.bf16.msra.mxu0 0
    %2876 = vmatprep.subr.bf16.mxu0 0
    %2877 = vmatpush2.bf16.msra.mxu0 0
    %2878 = vmatprep.subr.bf16.mxu0 0
    %2879 = vmatpush2.bf16.msra.mxu0 0
    %2880 = vmatprep.subr.bf16.mxu0 0
    %2881 = vmatpush2.bf16.msra.mxu0 0
    %2882 = vmatprep.subr.bf16.mxu0 0
    %2883 = vmatpush2.bf16.msra.mxu0 0
    %2884 = vmatprep.subr.bf16.mxu0 0
    %2885 = vmatpush2.bf16.msra.mxu0 0
    %2886 = vmatprep.subr.bf16.mxu0 0
    %2887 = vmatpush2.bf16.msra.mxu0 0
    %2888 = vmatprep.subr.bf16.mxu0 0
    %2889 = vmatpush2.bf16.msra.mxu0 0
    %2890 = vmatprep.mubr.bf16.mxu0 0
    %2891 = vmatmul.mubr.bf16.gmra.mxu0 %v2720
    %v2892 = vpop.f32.mrf.mxu0
    %v2893 = vadd.f32 0.0, %v2892
    %v2894 = vpop.f32.mrf.mxu0
    %v2895 = vpop.f32.mrf.mxu0
    %v2896 = vadd.f32 0.0, %v2895
    %v2897 = vpop.f32.mrf.mxu0
    %2898 = vdwg.mxu0
    %2901 = vrot.lane.b32.xlu0 %v2804, 112
    %v2902 = vpop.permute.xlu0 %2901
    %2903 = vrot.lane.b32.xlu0 %v2807, 112
    %v2904 = vpop.permute.xlu0 %2903
    %2905 = vrot.lane.b32.xlu0 %v2804, 96
    %v2906 = vpop.permute.xlu0 %2905
    %2907 = vrot.lane.b32.xlu0 %v2807, 96
    %v2908 = vpop.permute.xlu0 %2907
    %2909 = vrot.lane.b32.xlu0 %v2804, 80
    %v2910 = vpop.permute.xlu0 %2909
    %2911 = vrot.lane.b32.xlu0 %v2807, 80
    %v2912 = vpop.permute.xlu0 %2911
    %2913 = vrot.lane.b32.xlu0 %v2804, 64
    %v2914 = vpop.permute.xlu0 %2913
    %2915 = vrot.lane.b32.xlu0 %v2807, 64
    %v2916 = vpop.permute.xlu0 %2915
    %2917 = vrot.lane.b32.xlu0 %v2804, 48
    %v2918 = vpop.permute.xlu0 %2917
    %2919 = vrot.lane.b32.xlu0 %v2807, 48
    %v2920 = vpop.permute.xlu0 %2919
    %2921 = vrot.lane.b32.xlu0 %v2804, 32
    %v2922 = vpop.permute.xlu0 %2921
    %2923 = vrot.lane.b32.xlu0 %v2807, 32
    %v2924 = vpop.permute.xlu0 %2923
    %2925 = vrot.lane.b32.xlu0 %v2804, 16
    %v2926 = vpop.permute.xlu0 %2925
    %2927 = vrot.lane.b32.xlu0 %v2807, 16
    %v2928 = vpop.permute.xlu0 %2927
    %2931 = vrot.lane.b32.xlu0 %v2893, 112
    %v2932 = vpop.permute.xlu0 %2931
    %2933 = vrot.lane.b32.xlu0 %v2896, 112
    %v2934 = vpop.permute.xlu0 %2933
    %2937 = vrot.lane.b32.xlu0 %v2893, 96
    %v2938 = vpop.permute.xlu0 %2937
    %2939 = vrot.lane.b32.xlu0 %v2896, 96
    %v2940 = vpop.permute.xlu0 %2939
    %2943 = vrot.lane.b32.xlu0 %v2893, 80
    %v2944 = vpop.permute.xlu0 %2943
    %2945 = vrot.lane.b32.xlu0 %v2896, 80
    %v2946 = vpop.permute.xlu0 %2945
    %2949 = vrot.lane.b32.xlu0 %v2893, 64
    %v2950 = vpop.permute.xlu0 %2949
    %2951 = vrot.lane.b32.xlu0 %v2896, 64
    %v2952 = vpop.permute.xlu0 %2951
    %2955 = vrot.lane.b32.xlu0 %v2893, 48
    %v2956 = vpop.permute.xlu0 %2955
    %2957 = vrot.lane.b32.xlu0 %v2896, 48
    %v2958 = vpop.permute.xlu0 %2957
    %2961 = vrot.lane.b32.xlu0 %v2893, 32
    %v2962 = vpop.permute.xlu0 %2961
    %2963 = vrot.lane.b32.xlu0 %v2896, 32
    %v2964 = vpop.permute.xlu0 %2963
    %2967 = vrot.lane.b32.xlu0 %v2893, 16
    %v2968 = vpop.permute.xlu0 %2967
    %2969 = vrot.lane.b32.xlu0 %v2896, 16
    %v2970 = vpop.permute.xlu0 %2969
    %v2973 = vsel %vm569, %v2804, 0
    %v2975 = vsel %vm569, %v2807, 0
    %v2977 = vsel %vm569, %v2893, 0
    %v2979 = vsel %vm569, %v2896, 0
    %2981 = vmatprep.subr.mxu0 0.0
    %2982 = vmatpush1.xpose.msra.mxu0 0.0
    %2983 = vmatprep.subr.mxu0 0.0
    %2984 = vmatpush1.xpose.msra.mxu0 0.0
    %2985 = vmatprep.subr.mxu0 0.0
    %2986 = vmatpush1.xpose.msra.mxu0 0.0
    %2987 = vmatprep.subr.mxu0 0.0
    %2988 = vmatpush1.xpose.msra.mxu0 0.0
    %2989 = vmatprep.subr.mxu0 0.0
    %2990 = vmatpush1.xpose.msra.mxu0 0.0
    %2991 = vmatprep.subr.mxu0 0.0
    %2992 = vmatpush1.xpose.msra.mxu0 0.0
    %2993 = vmatprep.subr.mxu0 0.0
    %2994 = vmatpush1.xpose.msra.mxu0 0.0
    %2995 = vmatprep.subr.mxu0 0.0
    %2996 = vmatpush1.xpose.msra.mxu0 0.0
    %2997 = vmatprep.subr.mxu0 0.0
    %2998 = vmatpush1.xpose.msra.mxu0 0.0
    %2999 = vmatprep.subr.mxu0 0.0
    %3000 = vmatpush1.xpose.msra.mxu0 0.0
    %3001 = vmatprep.subr.mxu0 0.0
    %3002 = vmatpush1.xpose.msra.mxu0 0.0
    %3003 = vmatprep.subr.mxu0 0.0
    %3004 = vmatpush1.xpose.msra.mxu0 0.0
    %3005 = vmatprep.subr.mxu0 0.0
    %3006 = vmatpush1.xpose.msra.mxu0 0.0
    %3007 = vmatprep.subr.mxu0 0.0
    %3008 = vmatpush1.xpose.msra.mxu0 0.0
    %3009 = vmatprep.subr.mxu0 0.0
    %3010 = vmatpush1.xpose.msra.mxu0 %v2979
    %3011 = vmatprep.subr.mxu0 0.0
    %3012 = vmatpush1.xpose.msra.mxu0 %v2977
    %3013 = vmatprep.subr.mxu0 0.0
    %3014 = vmatpush2.xpose.msra.mxu0 0.0
    %3015 = vmatprep.subr.mxu0 0.0
    %3016 = vmatpush2.xpose.msra.mxu0 0.0
    %3017 = vmatprep.subr.mxu0 0.0
    %3018 = vmatpush2.xpose.msra.mxu0 0.0
    %3019 = vmatprep.subr.mxu0 0.0
    %3020 = vmatpush2.xpose.msra.mxu0 0.0
    %3021 = vmatprep.subr.mxu0 0.0
    %3022 = vmatpush2.xpose.msra.mxu0 0.0
    %3023 = vmatprep.subr.mxu0 0.0
    %3024 = vmatpush2.xpose.msra.mxu0 0.0
    %3025 = vmatprep.subr.mxu0 0.0
    %3026 = vmatpush2.xpose.msra.mxu0 0.0
    %3027 = vmatprep.subr.mxu0 0.0
    %3028 = vmatpush2.xpose.msra.mxu0 0.0
    %3029 = vmatprep.subr.mxu0 0.0
    %3030 = vmatpush2.xpose.msra.mxu0 0.0
    %3031 = vmatprep.subr.mxu0 0.0
    %3032 = vmatpush2.xpose.msra.mxu0 0.0
    %3033 = vmatprep.subr.mxu0 0.0
    %3034 = vmatpush2.xpose.msra.mxu0 0.0
    %3035 = vmatprep.subr.mxu0 0.0
    %3036 = vmatpush2.xpose.msra.mxu0 0.0
    %3037 = vmatprep.subr.mxu0 0.0
    %3038 = vmatpush2.xpose.msra.mxu0 0.0
    %3039 = vmatprep.subr.mxu0 0.0
    %3040 = vmatpush2.xpose.msra.mxu0 0.0
    %3041 = vmatprep.subr.mxu0 0.0
    %3042 = vmatpush2.xpose.msra.mxu0 0.0
    %3043 = vmatprep.subr.mxu0 0.0
    %3044 = vmatpush2.xpose.msra.mxu0 0.0
    %3045 = vmatprep.mubr.f32.mxu0 0.0
    %3046 = vmatmul.mubr.f32.gmra.mxu0 %v2973
    %v3047 = vpop.f32.mrf.mxu0
    %v3048 = vadd.f32 0.0, %v3047
    %v3049 = vpop.f32.mrf.mxu0
    %3050 = vmatprep.mubr.f32.mxu0 0.0
    %3051 = vmatmul.mubr.f32.gmra.mxu0 %v2975
    %v3052 = vpop.f32.mrf.mxu0
    %v3053 = vadd.f32 0.0, %v3052
    %v3054 = vpop.f32.mrf.mxu0
    %3055 = vdwg.mxu0
    %v3056 = vsel %vm569, %v2902, 0
    %v3058 = vsel %vm569, %v2904, 0
    %v3060 = vsel %vm569, %v2932, 0
    %v3062 = vsel %vm569, %v2934, 0
    %3064 = vmatprep.subr.mxu0 0.0
    %3065 = vmatpush1.xpose.msra.mxu0 0.0
    %3066 = vmatprep.subr.mxu0 0.0
    %3067 = vmatpush1.xpose.msra.mxu0 0.0
    %3068 = vmatprep.subr.mxu0 0.0
    %3069 = vmatpush1.xpose.msra.mxu0 0.0
    %3070 = vmatprep.subr.mxu0 0.0
    %3071 = vmatpush1.xpose.msra.mxu0 0.0
    %3072 = vmatprep.subr.mxu0 0.0
    %3073 = vmatpush1.xpose.msra.mxu0 0.0
    %3074 = vmatprep.subr.mxu0 0.0
    %3075 = vmatpush1.xpose.msra.mxu0 0.0
    %3076 = vmatprep.subr.mxu0 0.0
    %3077 = vmatpush1.xpose.msra.mxu0 0.0
    %3078 = vmatprep.subr.mxu0 0.0
    %3079 = vmatpush1.xpose.msra.mxu0 0.0
    %3080 = vmatprep.subr.mxu0 0.0
    %3081 = vmatpush1.xpose.msra.mxu0 0.0
    %3082 = vmatprep.subr.mxu0 0.0
    %3083 = vmatpush1.xpose.msra.mxu0 0.0
    %3084 = vmatprep.subr.mxu0 0.0
    %3085 = vmatpush1.xpose.msra.mxu0 0.0
    %3086 = vmatprep.subr.mxu0 0.0
    %3087 = vmatpush1.xpose.msra.mxu0 0.0
    %3088 = vmatprep.subr.mxu0 0.0
    %3089 = vmatpush1.xpose.msra.mxu0 0.0
    %3090 = vmatprep.subr.mxu0 0.0
    %3091 = vmatpush1.xpose.msra.mxu0 0.0
    %3092 = vmatprep.subr.mxu0 0.0
    %3093 = vmatpush1.xpose.msra.mxu0 %v3062
    %3094 = vmatprep.subr.mxu0 0.0
    %3095 = vmatpush1.xpose.msra.mxu0 %v3060
    %3096 = vmatprep.subr.mxu0 0.0
    %3097 = vmatpush2.xpose.msra.mxu0 0.0
    %3098 = vmatprep.subr.mxu0 0.0
    %3099 = vmatpush2.xpose.msra.mxu0 0.0
    %3100 = vmatprep.subr.mxu0 0.0
    %3101 = vmatpush2.xpose.msra.mxu0 0.0
    %3102 = vmatprep.subr.mxu0 0.0
    %3103 = vmatpush2.xpose.msra.mxu0 0.0
    %3104 = vmatprep.subr.mxu0 0.0
    %3105 = vmatpush2.xpose.msra.mxu0 0.0
    %3106 = vmatprep.subr.mxu0 0.0
    %3107 = vmatpush2.xpose.msra.mxu0 0.0
    %3108 = vmatprep.subr.mxu0 0.0
    %3109 = vmatpush2.xpose.msra.mxu0 0.0
    %3110 = vmatprep.subr.mxu0 0.0
    %3111 = vmatpush2.xpose.msra.mxu0 0.0
    %3112 = vmatprep.subr.mxu0 0.0
    %3113 = vmatpush2.xpose.msra.mxu0 0.0
    %3114 = vmatprep.subr.mxu0 0.0
    %3115 = vmatpush2.xpose.msra.mxu0 0.0
    %3116 = vmatprep.subr.mxu0 0.0
    %3117 = vmatpush2.xpose.msra.mxu0 0.0
    %3118 = vmatprep.subr.mxu0 0.0
    %3119 = vmatpush2.xpose.msra.mxu0 0.0
    %3120 = vmatprep.subr.mxu0 0.0
    %3121 = vmatpush2.xpose.msra.mxu0 0.0
    %3122 = vmatprep.subr.mxu0 0.0
    %3123 = vmatpush2.xpose.msra.mxu0 0.0
    %3124 = vmatprep.subr.mxu0 0.0
    %3125 = vmatpush2.xpose.msra.mxu0 0.0
    %3126 = vmatprep.subr.mxu0 0.0
    %3127 = vmatpush2.xpose.msra.mxu0 0.0
    %3128 = vmatprep.mubr.f32.mxu0 0.0
    %3129 = vmatmul.mubr.f32.gmra.mxu0 %v3056
    %v3130 = vpop.f32.mrf.mxu0
    %v3131 = vadd.f32 0.0, %v3130
    %v3132 = vpop.f32.mrf.mxu0
    %3133 = vmatprep.mubr.f32.mxu0 0.0
    %3134 = vmatmul.mubr.f32.gmra.mxu0 %v3058
    %v3135 = vpop.f32.mrf.mxu0
    %v3136 = vadd.f32 0.0, %v3135
    %v3137 = vpop.f32.mrf.mxu0
    %3138 = vdwg.mxu0
    %v3139 = vsel %vm569, %v2906, 0
    %v3141 = vsel %vm569, %v2908, 0
    %v3143 = vsel %vm569, %v2938, 0
    %v3145 = vsel %vm569, %v2940, 0
    %3147 = vmatprep.subr.mxu0 0.0
    %3148 = vmatpush1.xpose.msra.mxu0 0.0
    %3149 = vmatprep.subr.mxu0 0.0
    %3150 = vmatpush1.xpose.msra.mxu0 0.0
    %3151 = vmatprep.subr.mxu0 0.0
    %3152 = vmatpush1.xpose.msra.mxu0 0.0
    %3153 = vmatprep.subr.mxu0 0.0
    %3154 = vmatpush1.xpose.msra.mxu0 0.0
    %3155 = vmatprep.subr.mxu0 0.0
    %3156 = vmatpush1.xpose.msra.mxu0 0.0
    %3157 = vmatprep.subr.mxu0 0.0
    %3158 = vmatpush1.xpose.msra.mxu0 0.0
    %3159 = vmatprep.subr.mxu0 0.0
    %3160 = vmatpush1.xpose.msra.mxu0 0.0
    %3161 = vmatprep.subr.mxu0 0.0
    %3162 = vmatpush1.xpose.msra.mxu0 0.0
    %3163 = vmatprep.subr.mxu0 0.0
    %3164 = vmatpush1.xpose.msra.mxu0 0.0
    %3165 = vmatprep.subr.mxu0 0.0
    %3166 = vmatpush1.xpose.msra.mxu0 0.0
    %3167 = vmatprep.subr.mxu0 0.0
    %3168 = vmatpush1.xpose.msra.mxu0 0.0
    %3169 = vmatprep.subr.mxu0 0.0
    %3170 = vmatpush1.xpose.msra.mxu0 0.0
    %3171 = vmatprep.subr.mxu0 0.0
    %3172 = vmatpush1.xpose.msra.mxu0 0.0
    %3173 = vmatprep.subr.mxu0 0.0
    %3174 = vmatpush1.xpose.msra.mxu0 0.0
    %3175 = vmatprep.subr.mxu0 0.0
    %3176 = vmatpush1.xpose.msra.mxu0 %v3145
    %3177 = vmatprep.subr.mxu0 0.0
    %3178 = vmatpush1.xpose.msra.mxu0 %v3143
    %3179 = vmatprep.subr.mxu0 0.0
    %3180 = vmatpush2.xpose.msra.mxu0 0.0
    %3181 = vmatprep.subr.mxu0 0.0
    %3182 = vmatpush2.xpose.msra.mxu0 0.0
    %3183 = vmatprep.subr.mxu0 0.0
    %3184 = vmatpush2.xpose.msra.mxu0 0.0
    %3185 = vmatprep.subr.mxu0 0.0
    %3186 = vmatpush2.xpose.msra.mxu0 0.0
    %3187 = vmatprep.subr.mxu0 0.0
    %3188 = vmatpush2.xpose.msra.mxu0 0.0
    %3189 = vmatprep.subr.mxu0 0.0
    %3190 = vmatpush2.xpose.msra.mxu0 0.0
    %3191 = vmatprep.subr.mxu0 0.0
    %3192 = vmatpush2.xpose.msra.mxu0 0.0
    %3193 = vmatprep.subr.mxu0 0.0
    %3194 = vmatpush2.xpose.msra.mxu0 0.0
    %3195 = vmatprep.subr.mxu0 0.0
    %3196 = vmatpush2.xpose.msra.mxu0 0.0
    %3197 = vmatprep.subr.mxu0 0.0
    %3198 = vmatpush2.xpose.msra.mxu0 0.0
    %3199 = vmatprep.subr.mxu0 0.0
    %3200 = vmatpush2.xpose.msra.mxu0 0.0
    %3201 = vmatprep.subr.mxu0 0.0
    %3202 = vmatpush2.xpose.msra.mxu0 0.0
    %3203 = vmatprep.subr.mxu0 0.0
    %3204 = vmatpush2.xpose.msra.mxu0 0.0
    %3205 = vmatprep.subr.mxu0 0.0
    %3206 = vmatpush2.xpose.msra.mxu0 0.0
    %3207 = vmatprep.subr.mxu0 0.0
    %3208 = vmatpush2.xpose.msra.mxu0 0.0
    %3209 = vmatprep.subr.mxu0 0.0
    %3210 = vmatpush2.xpose.msra.mxu0 0.0
    %3211 = vmatprep.mubr.f32.mxu0 0.0
    %3212 = vmatmul.mubr.f32.gmra.mxu0 %v3139
    %v3213 = vpop.f32.mrf.mxu0
    %v3214 = vadd.f32 0.0, %v3213
    %v3215 = vpop.f32.mrf.mxu0
    %3216 = vmatprep.mubr.f32.mxu0 0.0
    %3217 = vmatmul.mubr.f32.gmra.mxu0 %v3141
    %v3218 = vpop.f32.mrf.mxu0
    %v3219 = vadd.f32 0.0, %v3218
    %v3220 = vpop.f32.mrf.mxu0
    %3221 = vdwg.mxu0
    %v3222 = vsel %vm569, %v2910, 0
    %v3224 = vsel %vm569, %v2912, 0
    %v3226 = vsel %vm569, %v2944, 0
    %v3228 = vsel %vm569, %v2946, 0
    %3230 = vmatprep.subr.mxu0 0.0
    %3231 = vmatpush1.xpose.msra.mxu0 0.0
    %3232 = vmatprep.subr.mxu0 0.0
    %3233 = vmatpush1.xpose.msra.mxu0 0.0
    %3234 = vmatprep.subr.mxu0 0.0
    %3235 = vmatpush1.xpose.msra.mxu0 0.0
    %3236 = vmatprep.subr.mxu0 0.0
    %3237 = vmatpush1.xpose.msra.mxu0 0.0
    %3238 = vmatprep.subr.mxu0 0.0
    %3239 = vmatpush1.xpose.msra.mxu0 0.0
    %3240 = vmatprep.subr.mxu0 0.0
    %3241 = vmatpush1.xpose.msra.mxu0 0.0
    %3242 = vmatprep.subr.mxu0 0.0
    %3243 = vmatpush1.xpose.msra.mxu0 0.0
    %3244 = vmatprep.subr.mxu0 0.0
    %3245 = vmatpush1.xpose.msra.mxu0 0.0
    %3246 = vmatprep.subr.mxu0 0.0
    %3247 = vmatpush1.xpose.msra.mxu0 0.0
    %3248 = vmatprep.subr.mxu0 0.0
    %3249 = vmatpush1.xpose.msra.mxu0 0.0
    %3250 = vmatprep.subr.mxu0 0.0
    %3251 = vmatpush1.xpose.msra.mxu0 0.0
    %3252 = vmatprep.subr.mxu0 0.0
    %3253 = vmatpush1.xpose.msra.mxu0 0.0
    %3254 = vmatprep.subr.mxu0 0.0
    %3255 = vmatpush1.xpose.msra.mxu0 0.0
    %3256 = vmatprep.subr.mxu0 0.0
    %3257 = vmatpush1.xpose.msra.mxu0 0.0
    %3258 = vmatprep.subr.mxu0 0.0
    %3259 = vmatpush1.xpose.msra.mxu0 %v3228
    %3260 = vmatprep.subr.mxu0 0.0
    %3261 = vmatpush1.xpose.msra.mxu0 %v3226
    %3262 = vmatprep.subr.mxu0 0.0
    %3263 = vmatpush2.xpose.msra.mxu0 0.0
    %3264 = vmatprep.subr.mxu0 0.0
    %3265 = vmatpush2.xpose.msra.mxu0 0.0
    %3266 = vmatprep.subr.mxu0 0.0
    %3267 = vmatpush2.xpose.msra.mxu0 0.0
    %3268 = vmatprep.subr.mxu0 0.0
    %3269 = vmatpush2.xpose.msra.mxu0 0.0
    %3270 = vmatprep.subr.mxu0 0.0
    %3271 = vmatpush2.xpose.msra.mxu0 0.0
    %3272 = vmatprep.subr.mxu0 0.0
    %3273 = vmatpush2.xpose.msra.mxu0 0.0
    %3274 = vmatprep.subr.mxu0 0.0
    %3275 = vmatpush2.xpose.msra.mxu0 0.0
    %3276 = vmatprep.subr.mxu0 0.0
    %3277 = vmatpush2.xpose.msra.mxu0 0.0
    %3278 = vmatprep.subr.mxu0 0.0
    %3279 = vmatpush2.xpose.msra.mxu0 0.0
    %3280 = vmatprep.subr.mxu0 0.0
    %3281 = vmatpush2.xpose.msra.mxu0 0.0
    %3282 = vmatprep.subr.mxu0 0.0
    %3283 = vmatpush2.xpose.msra.mxu0 0.0
    %3284 = vmatprep.subr.mxu0 0.0
    %3285 = vmatpush2.xpose.msra.mxu0 0.0
    %3286 = vmatprep.subr.mxu0 0.0
    %3287 = vmatpush2.xpose.msra.mxu0 0.0
    %3288 = vmatprep.subr.mxu0 0.0
    %3289 = vmatpush2.xpose.msra.mxu0 0.0
    %3290 = vmatprep.subr.mxu0 0.0
    %3291 = vmatpush2.xpose.msra.mxu0 0.0
    %3292 = vmatprep.subr.mxu0 0.0
    %3293 = vmatpush2.xpose.msra.mxu0 0.0
    %3294 = vmatprep.mubr.f32.mxu0 0.0
    %3295 = vmatmul.mubr.f32.gmra.mxu0 %v3222
    %v3296 = vpop.f32.mrf.mxu0
    %v3297 = vadd.f32 0.0, %v3296
    %v3298 = vpop.f32.mrf.mxu0
    %3299 = vmatprep.mubr.f32.mxu0 0.0
    %3300 = vmatmul.mubr.f32.gmra.mxu0 %v3224
    %v3301 = vpop.f32.mrf.mxu0
    %v3302 = vadd.f32 0.0, %v3301
    %v3303 = vpop.f32.mrf.mxu0
    %3304 = vdwg.mxu0
    %v3305 = vsel %vm569, %v2914, 0
    %v3307 = vsel %vm569, %v2916, 0
    %v3309 = vsel %vm569, %v2950, 0
    %v3311 = vsel %vm569, %v2952, 0
    %3313 = vmatprep.subr.mxu0 0.0
    %3314 = vmatpush1.xpose.msra.mxu0 0.0
    %3315 = vmatprep.subr.mxu0 0.0
    %3316 = vmatpush1.xpose.msra.mxu0 0.0
    %3317 = vmatprep.subr.mxu0 0.0
    %3318 = vmatpush1.xpose.msra.mxu0 0.0
    %3319 = vmatprep.subr.mxu0 0.0
    %3320 = vmatpush1.xpose.msra.mxu0 0.0
    %3321 = vmatprep.subr.mxu0 0.0
    %3322 = vmatpush1.xpose.msra.mxu0 0.0
    %3323 = vmatprep.subr.mxu0 0.0
    %3324 = vmatpush1.xpose.msra.mxu0 0.0
    %3325 = vmatprep.subr.mxu0 0.0
    %3326 = vmatpush1.xpose.msra.mxu0 0.0
    %3327 = vmatprep.subr.mxu0 0.0
    %3328 = vmatpush1.xpose.msra.mxu0 0.0
    %3329 = vmatprep.subr.mxu0 0.0
    %3330 = vmatpush1.xpose.msra.mxu0 0.0
    %3331 = vmatprep.subr.mxu0 0.0
    %3332 = vmatpush1.xpose.msra.mxu0 0.0
    %3333 = vmatprep.subr.mxu0 0.0
    %3334 = vmatpush1.xpose.msra.mxu0 0.0
    %3335 = vmatprep.subr.mxu0 0.0
    %3336 = vmatpush1.xpose.msra.mxu0 0.0
    %3337 = vmatprep.subr.mxu0 0.0
    %3338 = vmatpush1.xpose.msra.mxu0 0.0
    %3339 = vmatprep.subr.mxu0 0.0
    %3340 = vmatpush1.xpose.msra.mxu0 0.0
    %3341 = vmatprep.subr.mxu0 0.0
    %3342 = vmatpush1.xpose.msra.mxu0 %v3311
    %3343 = vmatprep.subr.mxu0 0.0
    %3344 = vmatpush1.xpose.msra.mxu0 %v3309
    %3345 = vmatprep.subr.mxu0 0.0
    %3346 = vmatpush2.xpose.msra.mxu0 0.0
    %3347 = vmatprep.subr.mxu0 0.0
    %3348 = vmatpush2.xpose.msra.mxu0 0.0
    %3349 = vmatprep.subr.mxu0 0.0
    %3350 = vmatpush2.xpose.msra.mxu0 0.0
    %3351 = vmatprep.subr.mxu0 0.0
    %3352 = vmatpush2.xpose.msra.mxu0 0.0
    %3353 = vmatprep.subr.mxu0 0.0
    %3354 = vmatpush2.xpose.msra.mxu0 0.0
    %3355 = vmatprep.subr.mxu0 0.0
    %3356 = vmatpush2.xpose.msra.mxu0 0.0
    %3357 = vmatprep.subr.mxu0 0.0
    %3358 = vmatpush2.xpose.msra.mxu0 0.0
    %3359 = vmatprep.subr.mxu0 0.0
    %3360 = vmatpush2.xpose.msra.mxu0 0.0
    %3361 = vmatprep.subr.mxu0 0.0
    %3362 = vmatpush2.xpose.msra.mxu0 0.0
    %3363 = vmatprep.subr.mxu0 0.0
    %3364 = vmatpush2.xpose.msra.mxu0 0.0
    %3365 = vmatprep.subr.mxu0 0.0
    %3366 = vmatpush2.xpose.msra.mxu0 0.0
    %3367 = vmatprep.subr.mxu0 0.0
    %3368 = vmatpush2.xpose.msra.mxu0 0.0
    %3369 = vmatprep.subr.mxu0 0.0
    %3370 = vmatpush2.xpose.msra.mxu0 0.0
    %3371 = vmatprep.subr.mxu0 0.0
    %3372 = vmatpush2.xpose.msra.mxu0 0.0
    %3373 = vmatprep.subr.mxu0 0.0
    %3374 = vmatpush2.xpose.msra.mxu0 0.0
    %3375 = vmatprep.subr.mxu0 0.0
    %3376 = vmatpush2.xpose.msra.mxu0 0.0
    %3377 = vmatprep.mubr.f32.mxu0 0.0
    %3378 = vmatmul.mubr.f32.gmra.mxu0 %v3305
    %v3379 = vpop.f32.mrf.mxu0
    %v3380 = vadd.f32 0.0, %v3379
    %v3381 = vpop.f32.mrf.mxu0
    %3382 = vmatprep.mubr.f32.mxu0 0.0
    %3383 = vmatmul.mubr.f32.gmra.mxu0 %v3307
    %v3384 = vpop.f32.mrf.mxu0
    %v3385 = vadd.f32 0.0, %v3384
    %v3386 = vpop.f32.mrf.mxu0
    %3387 = vdwg.mxu0
    %v3388 = vsel %vm569, %v2918, 0
    %v3390 = vsel %vm569, %v2920, 0
    %v3392 = vsel %vm569, %v2956, 0
    %v3394 = vsel %vm569, %v2958, 0
    %3396 = vmatprep.subr.mxu0 0.0
    %3397 = vmatpush1.xpose.msra.mxu0 0.0
    %3398 = vmatprep.subr.mxu0 0.0
    %3399 = vmatpush1.xpose.msra.mxu0 0.0
    %3400 = vmatprep.subr.mxu0 0.0
    %3401 = vmatpush1.xpose.msra.mxu0 0.0
    %3402 = vmatprep.subr.mxu0 0.0
    %3403 = vmatpush1.xpose.msra.mxu0 0.0
    %3404 = vmatprep.subr.mxu0 0.0
    %3405 = vmatpush1.xpose.msra.mxu0 0.0
    %3406 = vmatprep.subr.mxu0 0.0
    %3407 = vmatpush1.xpose.msra.mxu0 0.0
    %3408 = vmatprep.subr.mxu0 0.0
    %3409 = vmatpush1.xpose.msra.mxu0 0.0
    %3410 = vmatprep.subr.mxu0 0.0
    %3411 = vmatpush1.xpose.msra.mxu0 0.0
    %3412 = vmatprep.subr.mxu0 0.0
    %3413 = vmatpush1.xpose.msra.mxu0 0.0
    %3414 = vmatprep.subr.mxu0 0.0
    %3415 = vmatpush1.xpose.msra.mxu0 0.0
    %3416 = vmatprep.subr.mxu0 0.0
    %3417 = vmatpush1.xpose.msra.mxu0 0.0
    %3418 = vmatprep.subr.mxu0 0.0
    %3419 = vmatpush1.xpose.msra.mxu0 0.0
    %3420 = vmatprep.subr.mxu0 0.0
    %3421 = vmatpush1.xpose.msra.mxu0 0.0
    %3422 = vmatprep.subr.mxu0 0.0
    %3423 = vmatpush1.xpose.msra.mxu0 0.0
    %3424 = vmatprep.subr.mxu0 0.0
    %3425 = vmatpush1.xpose.msra.mxu0 %v3394
    %3426 = vmatprep.subr.mxu0 0.0
    %3427 = vmatpush1.xpose.msra.mxu0 %v3392
    %3428 = vmatprep.subr.mxu0 0.0
    %3429 = vmatpush2.xpose.msra.mxu0 0.0
    %3430 = vmatprep.subr.mxu0 0.0
    %3431 = vmatpush2.xpose.msra.mxu0 0.0
    %3432 = vmatprep.subr.mxu0 0.0
    %3433 = vmatpush2.xpose.msra.mxu0 0.0
    %3434 = vmatprep.subr.mxu0 0.0
    %3435 = vmatpush2.xpose.msra.mxu0 0.0
    %3436 = vmatprep.subr.mxu0 0.0
    %3437 = vmatpush2.xpose.msra.mxu0 0.0
    %3438 = vmatprep.subr.mxu0 0.0
    %3439 = vmatpush2.xpose.msra.mxu0 0.0
    %3440 = vmatprep.subr.mxu0 0.0
    %3441 = vmatpush2.xpose.msra.mxu0 0.0
    %3442 = vmatprep.subr.mxu0 0.0
    %3443 = vmatpush2.xpose.msra.mxu0 0.0
    %3444 = vmatprep.subr.mxu0 0.0
    %3445 = vmatpush2.xpose.msra.mxu0 0.0
    %3446 = vmatprep.subr.mxu0 0.0
    %3447 = vmatpush2.xpose.msra.mxu0 0.0
    %3448 = vmatprep.subr.mxu0 0.0
    %3449 = vmatpush2.xpose.msra.mxu0 0.0
    %3450 = vmatprep.subr.mxu0 0.0
    %3451 = vmatpush2.xpose.msra.mxu0 0.0
    %3452 = vmatprep.subr.mxu0 0.0
    %3453 = vmatpush2.xpose.msra.mxu0 0.0
    %3454 = vmatprep.subr.mxu0 0.0
    %3455 = vmatpush2.xpose.msra.mxu0 0.0
    %3456 = vmatprep.subr.mxu0 0.0
    %3457 = vmatpush2.xpose.msra.mxu0 0.0
    %3458 = vmatprep.subr.mxu0 0.0
    %3459 = vmatpush2.xpose.msra.mxu0 0.0
    %3460 = vmatprep.mubr.f32.mxu0 0.0
    %3461 = vmatmul.mubr.f32.gmra.mxu0 %v3388
    %v3462 = vpop.f32.mrf.mxu0
    %v3463 = vadd.f32 0.0, %v3462
    %v3464 = vpop.f32.mrf.mxu0
    %3465 = vmatprep.mubr.f32.mxu0 0.0
    %3466 = vmatmul.mubr.f32.gmra.mxu0 %v3390
    %v3467 = vpop.f32.mrf.mxu0
    %v3468 = vadd.f32 0.0, %v3467
    %v3469 = vpop.f32.mrf.mxu0
    %3470 = vdwg.mxu0
    %v3471 = vsel %vm569, %v2922, 0
    %v3473 = vsel %vm569, %v2924, 0
    %v3475 = vsel %vm569, %v2962, 0
    %v3477 = vsel %vm569, %v2964, 0
    %3479 = vmatprep.subr.mxu0 0.0
    %3480 = vmatpush1.xpose.msra.mxu0 0.0
    %3481 = vmatprep.subr.mxu0 0.0
    %3482 = vmatpush1.xpose.msra.mxu0 0.0
    %3483 = vmatprep.subr.mxu0 0.0
    %3484 = vmatpush1.xpose.msra.mxu0 0.0
    %3485 = vmatprep.subr.mxu0 0.0
    %3486 = vmatpush1.xpose.msra.mxu0 0.0
    %3487 = vmatprep.subr.mxu0 0.0
    %3488 = vmatpush1.xpose.msra.mxu0 0.0
    %3489 = vmatprep.subr.mxu0 0.0
    %3490 = vmatpush1.xpose.msra.mxu0 0.0
    %3491 = vmatprep.subr.mxu0 0.0
    %3492 = vmatpush1.xpose.msra.mxu0 0.0
    %3493 = vmatprep.subr.mxu0 0.0
    %3494 = vmatpush1.xpose.msra.mxu0 0.0
    %3495 = vmatprep.subr.mxu0 0.0
    %3496 = vmatpush1.xpose.msra.mxu0 0.0
    %3497 = vmatprep.subr.mxu0 0.0
    %3498 = vmatpush1.xpose.msra.mxu0 0.0
    %3499 = vmatprep.subr.mxu0 0.0
    %3500 = vmatpush1.xpose.msra.mxu0 0.0
    %3501 = vmatprep.subr.mxu0 0.0
    %3502 = vmatpush1.xpose.msra.mxu0 0.0
    %3503 = vmatprep.subr.mxu0 0.0
    %3504 = vmatpush1.xpose.msra.mxu0 0.0
    %3505 = vmatprep.subr.mxu0 0.0
    %3506 = vmatpush1.xpose.msra.mxu0 0.0
    %3507 = vmatprep.subr.mxu0 0.0
    %3508 = vmatpush1.xpose.msra.mxu0 %v3477
    %3509 = vmatprep.subr.mxu0 0.0
    %3510 = vmatpush1.xpose.msra.mxu0 %v3475
    %3511 = vmatprep.subr.mxu0 0.0
    %3512 = vmatpush2.xpose.msra.mxu0 0.0
    %3513 = vmatprep.subr.mxu0 0.0
    %3514 = vmatpush2.xpose.msra.mxu0 0.0
    %3515 = vmatprep.subr.mxu0 0.0
    %3516 = vmatpush2.xpose.msra.mxu0 0.0
    %3517 = vmatprep.subr.mxu0 0.0
    %3518 = vmatpush2.xpose.msra.mxu0 0.0
    %3519 = vmatprep.subr.mxu0 0.0
    %3520 = vmatpush2.xpose.msra.mxu0 0.0
    %3521 = vmatprep.subr.mxu0 0.0
    %3522 = vmatpush2.xpose.msra.mxu0 0.0
    %3523 = vmatprep.subr.mxu0 0.0
    %3524 = vmatpush2.xpose.msra.mxu0 0.0
    %3525 = vmatprep.subr.mxu0 0.0
    %3526 = vmatpush2.xpose.msra.mxu0 0.0
    %3527 = vmatprep.subr.mxu0 0.0
    %3528 = vmatpush2.xpose.msra.mxu0 0.0
    %3529 = vmatprep.subr.mxu0 0.0
    %3530 = vmatpush2.xpose.msra.mxu0 0.0
    %3531 = vmatprep.subr.mxu0 0.0
    %3532 = vmatpush2.xpose.msra.mxu0 0.0
    %3533 = vmatprep.subr.mxu0 0.0
    %3534 = vmatpush2.xpose.msra.mxu0 0.0
    %3535 = vmatprep.subr.mxu0 0.0
    %3536 = vmatpush2.xpose.msra.mxu0 0.0
    %3537 = vmatprep.subr.mxu0 0.0
    %3538 = vmatpush2.xpose.msra.mxu0 0.0
    %3539 = vmatprep.subr.mxu0 0.0
    %3540 = vmatpush2.xpose.msra.mxu0 0.0
    %3541 = vmatprep.subr.mxu0 0.0
    %3542 = vmatpush2.xpose.msra.mxu0 0.0
    %3543 = vmatprep.mubr.f32.mxu0 0.0
    %3544 = vmatmul.mubr.f32.gmra.mxu0 %v3471
    %v3545 = vpop.f32.mrf.mxu0
    %v3546 = vadd.f32 0.0, %v3545
    %v3547 = vpop.f32.mrf.mxu0
    %3548 = vmatprep.mubr.f32.mxu0 0.0
    %3549 = vmatmul.mubr.f32.gmra.mxu0 %v3473
    %v3550 = vpop.f32.mrf.mxu0
    %v3551 = vadd.f32 0.0, %v3550
    %v3552 = vpop.f32.mrf.mxu0
    %3553 = vdwg.mxu0
    %v3554 = vsel %vm569, %v2926, 0
    %v3556 = vsel %vm569, %v2928, 0
    %v3558 = vsel %vm569, %v2968, 0
    %v3560 = vsel %vm569, %v2970, 0
    %3562 = vmatprep.subr.mxu0 0.0
    %3563 = vmatpush1.xpose.msra.mxu0 0.0
    %3564 = vmatprep.subr.mxu0 0.0
    %3565 = vmatpush1.xpose.msra.mxu0 0.0
    %3566 = vmatprep.subr.mxu0 0.0
    %3567 = vmatpush1.xpose.msra.mxu0 0.0
    %3568 = vmatprep.subr.mxu0 0.0
    %3569 = vmatpush1.xpose.msra.mxu0 0.0
    %3570 = vmatprep.subr.mxu0 0.0
    %3571 = vmatpush1.xpose.msra.mxu0 0.0
    %3572 = vmatprep.subr.mxu0 0.0
    %3573 = vmatpush1.xpose.msra.mxu0 0.0
    %3574 = vmatprep.subr.mxu0 0.0
    %3575 = vmatpush1.xpose.msra.mxu0 0.0
    %3576 = vmatprep.subr.mxu0 0.0
    %3577 = vmatpush1.xpose.msra.mxu0 0.0
    %3578 = vmatprep.subr.mxu0 0.0
    %3579 = vmatpush1.xpose.msra.mxu0 0.0
    %3580 = vmatprep.subr.mxu0 0.0
    %3581 = vmatpush1.xpose.msra.mxu0 0.0
    %3582 = vmatprep.subr.mxu0 0.0
    %3583 = vmatpush1.xpose.msra.mxu0 0.0
    %3584 = vmatprep.subr.mxu0 0.0
    %3585 = vmatpush1.xpose.msra.mxu0 0.0
    %3586 = vmatprep.subr.mxu0 0.0
    %3587 = vmatpush1.xpose.msra.mxu0 0.0
    %3588 = vmatprep.subr.mxu0 0.0
    %3589 = vmatpush1.xpose.msra.mxu0 0.0
    %3590 = vmatprep.subr.mxu0 0.0
    %3591 = vmatpush1.xpose.msra.mxu0 %v3560
    %3592 = vmatprep.subr.mxu0 0.0
    %3593 = vmatpush1.xpose.msra.mxu0 %v3558
    %3594 = vmatprep.subr.mxu0 0.0
    %3595 = vmatpush2.xpose.msra.mxu0 0.0
    %3596 = vmatprep.subr.mxu0 0.0
    %3597 = vmatpush2.xpose.msra.mxu0 0.0
    %3598 = vmatprep.subr.mxu0 0.0
    %3599 = vmatpush2.xpose.msra.mxu0 0.0
    %3600 = vmatprep.subr.mxu0 0.0
    %3601 = vmatpush2.xpose.msra.mxu0 0.0
    %3602 = vmatprep.subr.mxu0 0.0
    %3603 = vmatpush2.xpose.msra.mxu0 0.0
    %3604 = vmatprep.subr.mxu0 0.0
    %3605 = vmatpush2.xpose.msra.mxu0 0.0
    %3606 = vmatprep.subr.mxu0 0.0
    %3607 = vmatpush2.xpose.msra.mxu0 0.0
    %3608 = vmatprep.subr.mxu0 0.0
    %3609 = vmatpush2.xpose.msra.mxu0 0.0
    %3610 = vmatprep.subr.mxu0 0.0
    %3611 = vmatpush2.xpose.msra.mxu0 0.0
    %3612 = vmatprep.subr.mxu0 0.0
    %3613 = vmatpush2.xpose.msra.mxu0 0.0
    %3614 = vmatprep.subr.mxu0 0.0
    %3615 = vmatpush2.xpose.msra.mxu0 0.0
    %3616 = vmatprep.subr.mxu0 0.0
    %3617 = vmatpush2.xpose.msra.mxu0 0.0
    %3618 = vmatprep.subr.mxu0 0.0
    %3619 = vmatpush2.xpose.msra.mxu0 0.0
    %3620 = vmatprep.subr.mxu0 0.0
    %3621 = vmatpush2.xpose.msra.mxu0 0.0
    %3622 = vmatprep.subr.mxu0 0.0
    %3623 = vmatpush2.xpose.msra.mxu0 0.0
    %3624 = vmatprep.subr.mxu0 0.0
    %3625 = vmatpush2.xpose.msra.mxu0 0.0
    %3626 = vmatprep.mubr.f32.mxu0 0.0
    %3627 = vmatmul.mubr.f32.gmra.mxu0 %v3554
    %v3628 = vpop.f32.mrf.mxu0
    %v3629 = vadd.f32 0.0, %v3628
    %v3630 = vpop.f32.mrf.mxu0
    %3631 = vmatprep.mubr.f32.mxu0 0.0
    %3632 = vmatmul.mubr.f32.gmra.mxu0 %v3556
    %v3633 = vpop.f32.mrf.mxu0
    %v3634 = vadd.f32 0.0, %v3633
    %v3635 = vpop.f32.mrf.mxu0
    %3636 = vdwg.mxu0
    %v3637 = vmul.f32 %v3048, %v165
    %v3638 = vmul.f32 %v3053, %v166
    %v3639 = vmul.f32 %v3131, %v165
    %v3640 = vmul.f32 %v3136, %v166
    %v3641 = vmul.f32 %v3214, %v165
    %v3642 = vmul.f32 %v3219, %v166
    %v3643 = vmul.f32 %v3297, %v165
    %v3644 = vmul.f32 %v3302, %v166
    %v3645 = vmul.f32 %v3380, %v165
    %v3646 = vmul.f32 %v3385, %v166
    %v3647 = vmul.f32 %v3463, %v165
    %v3648 = vmul.f32 %v3468, %v166
    %v3649 = vmul.f32 %v3546, %v165
    %v3650 = vmul.f32 %v3551, %v166
    %v3651 = vmul.f32 %v3629, %v165
    %v3652 = vmul.f32 %v3634, %v166
    %v3653 = vadd.f32 %v3637, %v167
    %v3654 = vadd.f32 %v3638, %v168
    %v3655 = vadd.f32 %v3639, %v167
    %v3656 = vadd.f32 %v3640, %v168
    %v3657 = vadd.f32 %v3641, %v167
    %v3658 = vadd.f32 %v3642, %v168
    %v3659 = vadd.f32 %v3643, %v167
    %v3660 = vadd.f32 %v3644, %v168
    %v3661 = vadd.f32 %v3645, %v167
    %v3662 = vadd.f32 %v3646, %v168
    %v3663 = vadd.f32 %v3647, %v167
    %v3664 = vadd.f32 %v3648, %v168
    %v3665 = vadd.f32 %v3649, %v167
    %v3666 = vadd.f32 %v3650, %v168
    %v3667 = vadd.f32 %v3651, %v167
    %v3668 = vadd.f32 %v3652, %v168
    %v3669 = vsel %vm569, %v3653, -inf
    %3670 = vmax.xlane.f32.xlu0 %v3669
    %v3671 = vpop.xlane.xlu0 %3670
    %v3672 = vsel %vm569, %v3654, -inf
    %3673 = vmax.xlane.f32.xlu0 %v3672
    %v3674 = vpop.xlane.xlu0 %3673
    %v3675 = vsel %vm569, %v3655, -inf
    %3676 = vmax.xlane.f32.xlu0 %v3675
    %v3677 = vpop.xlane.xlu0 %3676
    %v3678 = vsel %vm569, %v3656, -inf
    %3679 = vmax.xlane.f32.xlu0 %v3678
    %v3680 = vpop.xlane.xlu0 %3679
    %v3681 = vsel %vm569, %v3657, -inf
    %3682 = vmax.xlane.f32.xlu0 %v3681
    %v3683 = vpop.xlane.xlu0 %3682
    %v3684 = vsel %vm569, %v3658, -inf
    %3685 = vmax.xlane.f32.xlu0 %v3684
    %v3686 = vpop.xlane.xlu0 %3685
    %v3687 = vsel %vm569, %v3659, -inf
    %3688 = vmax.xlane.f32.xlu0 %v3687
    %v3689 = vpop.xlane.xlu0 %3688
    %v3690 = vsel %vm569, %v3660, -inf
    %3691 = vmax.xlane.f32.xlu0 %v3690
    %v3692 = vpop.xlane.xlu0 %3691
    %v3693 = vsel %vm569, %v3661, -inf
    %3694 = vmax.xlane.f32.xlu0 %v3693
    %v3695 = vpop.xlane.xlu0 %3694
    %v3696 = vsel %vm569, %v3662, -inf
    %3697 = vmax.xlane.f32.xlu0 %v3696
    %v3698 = vpop.xlane.xlu0 %3697
    %v3699 = vsel %vm569, %v3663, -inf
    %3700 = vmax.xlane.f32.xlu0 %v3699
    %v3701 = vpop.xlane.xlu0 %3700
    %v3702 = vsel %vm569, %v3664, -inf
    %3703 = vmax.xlane.f32.xlu0 %v3702
    %v3704 = vpop.xlane.xlu0 %3703
    %v3705 = vsel %vm569, %v3665, -inf
    %3706 = vmax.xlane.f32.xlu0 %v3705
    %v3707 = vpop.xlane.xlu0 %3706
    %v3708 = vsel %vm569, %v3666, -inf
    %3709 = vmax.xlane.f32.xlu0 %v3708
    %v3710 = vpop.xlane.xlu0 %3709
    %v3711 = vsel %vm569, %v3667, -inf
    %3712 = vmax.xlane.f32.xlu0 %v3711
    %v3713 = vpop.xlane.xlu0 %3712
    %v3714 = vsel %vm569, %v3668, -inf
    %3715 = vmax.xlane.f32.xlu0 %v3714
    %v3716 = vpop.xlane.xlu0 %3715
    %v3717 = vsub.f32 %v3653, %v3671
    %v3718 = vsub.f32 %v3654, %v3674
    %v3719 = vsub.f32 %v3655, %v3677
    %v3720 = vsub.f32 %v3656, %v3680
    %v3721 = vsub.f32 %v3657, %v3683
    %v3722 = vsub.f32 %v3658, %v3686
    %v3723 = vsub.f32 %v3659, %v3689
    %v3724 = vsub.f32 %v3660, %v3692
    %v3725 = vsub.f32 %v3661, %v3695
    %v3726 = vsub.f32 %v3662, %v3698
    %v3727 = vsub.f32 %v3663, %v3701
    %v3728 = vsub.f32 %v3664, %v3704
    %v3729 = vsub.f32 %v3665, %v3707
    %v3730 = vsub.f32 %v3666, %v3710
    %v3731 = vsub.f32 %v3667, %v3713
    %v3732 = vsub.f32 %v3668, %v3716
    %v3733 = vmul.f32 %v3717, 1.442695
    %v3734 = vpow.pop %v3733
    %v3735 = vmul.f32 %v3718, 1.442695
    %v3736 = vpow.pop %v3735
    %v3737 = vmul.f32 %v3719, 1.442695
    %v3738 = vpow.pop %v3737
    %v3739 = vmul.f32 %v3720, 1.442695
    %v3740 = vpow.pop %v3739
    %v3741 = vmul.f32 %v3721, 1.442695
    %v3742 = vpow.pop %v3741
    %v3743 = vmul.f32 %v3722, 1.442695
    %v3744 = vpow.pop %v3743
    %v3745 = vmul.f32 %v3723, 1.442695
    %v3746 = vpow.pop %v3745
    %v3747 = vmul.f32 %v3724, 1.442695
    %v3748 = vpow.pop %v3747
    %v3749 = vmul.f32 %v3725, 1.442695
    %v3750 = vpow.pop %v3749
    %v3751 = vmul.f32 %v3726, 1.442695
    %v3752 = vpow.pop %v3751
    %v3753 = vmul.f32 %v3727, 1.442695
    %v3754 = vpow.pop %v3753
    %v3755 = vmul.f32 %v3728, 1.442695
    %v3756 = vpow.pop %v3755
    %v3757 = vmul.f32 %v3729, 1.442695
    %v3758 = vpow.pop %v3757
    %v3759 = vmul.f32 %v3730, 1.442695
    %v3760 = vpow.pop %v3759
    %v3761 = vmul.f32 %v3731, 1.442695
    %v3762 = vpow.pop %v3761
    %v3763 = vmul.f32 %v3732, 1.442695
    %v3764 = vpow.pop %v3763
    %v3765 = vsel %vm569, %v3734, 0.0
    %3766 = vadd.xlane.f32.xlu0 %v3765
    %v3767 = vpop.xlane.xlu0 %3766
    %v3768 = vsel %vm569, %v3736, 0.0
    %3769 = vadd.xlane.f32.xlu0 %v3768
    %v3770 = vpop.xlane.xlu0 %3769
    %v3771 = vsel %vm569, %v3738, 0.0
    %3772 = vadd.xlane.f32.xlu0 %v3771
    %v3773 = vpop.xlane.xlu0 %3772
    %v3774 = vsel %vm569, %v3740, 0.0
    %3775 = vadd.xlane.f32.xlu0 %v3774
    %v3776 = vpop.xlane.xlu0 %3775
    %v3777 = vsel %vm569, %v3742, 0.0
    %3778 = vadd.xlane.f32.xlu0 %v3777
    %v3779 = vpop.xlane.xlu0 %3778
    %v3780 = vsel %vm569, %v3744, 0.0
    %3781 = vadd.xlane.f32.xlu0 %v3780
    %v3782 = vpop.xlane.xlu0 %3781
    %v3783 = vsel %vm569, %v3746, 0.0
    %3784 = vadd.xlane.f32.xlu0 %v3783
    %v3785 = vpop.xlane.xlu0 %3784
    %v3786 = vsel %vm569, %v3748, 0.0
    %3787 = vadd.xlane.f32.xlu0 %v3786
    %v3788 = vpop.xlane.xlu0 %3787
    %v3789 = vsel %vm569, %v3750, 0.0
    %3790 = vadd.xlane.f32.xlu0 %v3789
    %v3791 = vpop.xlane.xlu0 %3790
    %v3792 = vsel %vm569, %v3752, 0.0
    %3793 = vadd.xlane.f32.xlu0 %v3792
    %v3794 = vpop.xlane.xlu0 %3793
    %v3795 = vsel %vm569, %v3754, 0.0
    %3796 = vadd.xlane.f32.xlu0 %v3795
    %v3797 = vpop.xlane.xlu0 %3796
    %v3798 = vsel %vm569, %v3756, 0.0
    %3799 = vadd.xlane.f32.xlu0 %v3798
    %v3800 = vpop.xlane.xlu0 %3799
    %v3801 = vsel %vm569, %v3758, 0.0
    %3802 = vadd.xlane.f32.xlu0 %v3801
    %v3803 = vpop.xlane.xlu0 %3802
    %v3804 = vsel %vm569, %v3760, 0.0
    %3805 = vadd.xlane.f32.xlu0 %v3804
    %v3806 = vpop.xlane.xlu0 %3805
    %v3807 = vsel %vm569, %v3762, 0.0
    %3808 = vadd.xlane.f32.xlu0 %v3807
    %v3809 = vpop.xlane.xlu0 %3808
    %v3810 = vsel %vm569, %v3764, 0.0
    %3811 = vadd.xlane.f32.xlu0 %v3810
    %v3812 = vpop.xlane.xlu0 %3811
    %v3813 = vrcp.pop %v3767
    %v3814 = vrcp.pop %v3770
    %v3815 = vrcp.pop %v3773
    %v3816 = vrcp.pop %v3776
    %v3817 = vrcp.pop %v3779
    %v3818 = vrcp.pop %v3782
    %v3819 = vrcp.pop %v3785
    %v3820 = vrcp.pop %v3788
    %v3821 = vrcp.pop %v3791
    %v3822 = vrcp.pop %v3794
    %v3823 = vrcp.pop %v3797
    %v3824 = vrcp.pop %v3800
    %v3825 = vrcp.pop %v3803
    %v3826 = vrcp.pop %v3806
    %v3827 = vrcp.pop %v3809
    %v3828 = vrcp.pop %v3812
    %v3829 = vmul.f32 %v3734, %v3813
    %v3830 = vmul.f32 %v3736, %v3814
    %v3831 = vmul.f32 %v3738, %v3815
    %v3832 = vmul.f32 %v3740, %v3816
    %v3833 = vmul.f32 %v3742, %v3817
    %v3834 = vmul.f32 %v3744, %v3818
    %v3835 = vmul.f32 %v3746, %v3819
    %v3836 = vmul.f32 %v3748, %v3820
    %v3837 = vmul.f32 %v3750, %v3821
    %v3838 = vmul.f32 %v3752, %v3822
    %v3839 = vmul.f32 %v3754, %v3823
    %v3840 = vmul.f32 %v3756, %v3824
    %v3841 = vmul.f32 %v3758, %v3825
    %v3842 = vmul.f32 %v3760, %v3826
    %v3843 = vmul.f32 %v3762, %v3827
    %v3844 = vmul.f32 %v3764, %v3828
    %v3846 = vsel %vm569, %v3829, 0
    %v3849 = vsel %vm569, %v3830, 0
    %3851 = vmatprep.subr.mxu0 0.0
    %3852 = vmatpush1.msra.mxu0 0.0
    %3853 = vmatprep.subr.mxu0 0.0
    %3854 = vmatpush1.msra.mxu0 0.0
    %3855 = vmatprep.subr.mxu0 0.0
    %3856 = vmatpush1.msra.mxu0 0.0
    %3857 = vmatprep.subr.mxu0 0.0
    %3858 = vmatpush1.msra.mxu0 0.0
    %3859 = vmatprep.subr.mxu0 0.0
    %3860 = vmatpush1.msra.mxu0 0.0
    %3861 = vmatprep.subr.mxu0 0.0
    %3862 = vmatpush1.msra.mxu0 0.0
    %3863 = vmatprep.subr.mxu0 0.0
    %3864 = vmatpush1.msra.mxu0 0.0
    %3865 = vmatprep.subr.mxu0 0.0
    %3866 = vmatpush1.msra.mxu0 0.0
    %3867 = vmatprep.subr.mxu0 0.0
    %3868 = vmatpush1.msra.mxu0 0.0
    %3869 = vmatprep.subr.mxu0 0.0
    %3870 = vmatpush1.msra.mxu0 0.0
    %3871 = vmatprep.subr.mxu0 0.0
    %3872 = vmatpush1.msra.mxu0 0.0
    %3873 = vmatprep.subr.mxu0 0.0
    %3874 = vmatpush1.msra.mxu0 0.0
    %3875 = vmatprep.subr.mxu0 0.0
    %3876 = vmatpush1.msra.mxu0 0.0
    %3877 = vmatprep.subr.mxu0 0.0
    %3878 = vmatpush1.msra.mxu0 0.0
    %3879 = vmatprep.subr.mxu0 0.0
    %3880 = vmatpush1.msra.mxu0 %v2896
    %3881 = vmatprep.subr.mxu0 0.0
    %3882 = vmatpush1.msra.mxu0 %v2893
    %3883 = vmatprep.subr.mxu0 0.0
    %3884 = vmatpush2.msra.mxu0 0.0
    %3885 = vmatprep.subr.mxu0 0.0
    %3886 = vmatpush2.msra.mxu0 0.0
    %3887 = vmatprep.subr.mxu0 0.0
    %3888 = vmatpush2.msra.mxu0 0.0
    %3889 = vmatprep.subr.mxu0 0.0
    %3890 = vmatpush2.msra.mxu0 0.0
    %3891 = vmatprep.subr.mxu0 0.0
    %3892 = vmatpush2.msra.mxu0 0.0
    %3893 = vmatprep.subr.mxu0 0.0
    %3894 = vmatpush2.msra.mxu0 0.0
    %3895 = vmatprep.subr.mxu0 0.0
    %3896 = vmatpush2.msra.mxu0 0.0
    %3897 = vmatprep.subr.mxu0 0.0
    %3898 = vmatpush2.msra.mxu0 0.0
    %3899 = vmatprep.subr.mxu0 0.0
    %3900 = vmatpush2.msra.mxu0 0.0
    %3901 = vmatprep.subr.mxu0 0.0
    %3902 = vmatpush2.msra.mxu0 0.0
    %3903 = vmatprep.subr.mxu0 0.0
    %3904 = vmatpush2.msra.mxu0 0.0
    %3905 = vmatprep.subr.mxu0 0.0
    %3906 = vmatpush2.msra.mxu0 0.0
    %3907 = vmatprep.subr.mxu0 0.0
    %3908 = vmatpush2.msra.mxu0 0.0
    %3909 = vmatprep.subr.mxu0 0.0
    %3910 = vmatpush2.msra.mxu0 0.0
    %3911 = vmatprep.subr.mxu0 0.0
    %3912 = vmatpush2.msra.mxu0 0.0
    %3913 = vmatprep.subr.mxu0 0.0
    %3914 = vmatpush2.msra.mxu0 0.0
    %3915 = vmatprep.mubr.f32.mxu0 0.0
    %3916 = vmatmul.mubr.f32.gmra.mxu0 %v3846
    %v3917 = vpop.f32.mrf.mxu0
    %v3918 = vadd.f32 0.0, %v3917
    %v3919 = vpop.f32.mrf.mxu0
    %3920 = vmatprep.mubr.f32.mxu0 0.0
    %3921 = vmatmul.mubr.f32.gmra.mxu0 %v3849
    %v3922 = vpop.f32.mrf.mxu0
    %v3923 = vadd.f32 0.0, %v3922
    %v3924 = vpop.f32.mrf.mxu0
    %3925 = vdwg.mxu0
    %v3927 = vsel %vm569, %v3831, 0
    %v3930 = vsel %vm569, %v3832, 0
    %3932 = vmatprep.subr.mxu0 0.0
    %3933 = vmatpush1.msra.mxu0 0.0
    %3934 = vmatprep.subr.mxu0 0.0
    %3935 = vmatpush1.msra.mxu0 0.0
    %3936 = vmatprep.subr.mxu0 0.0
    %3937 = vmatpush1.msra.mxu0 0.0
    %3938 = vmatprep.subr.mxu0 0.0
    %3939 = vmatpush1.msra.mxu0 0.0
    %3940 = vmatprep.subr.mxu0 0.0
    %3941 = vmatpush1.msra.mxu0 0.0
    %3942 = vmatprep.subr.mxu0 0.0
    %3943 = vmatpush1.msra.mxu0 0.0
    %3944 = vmatprep.subr.mxu0 0.0
    %3945 = vmatpush1.msra.mxu0 0.0
    %3946 = vmatprep.subr.mxu0 0.0
    %3947 = vmatpush1.msra.mxu0 0.0
    %3948 = vmatprep.subr.mxu0 0.0
    %3949 = vmatpush1.msra.mxu0 0.0
    %3950 = vmatprep.subr.mxu0 0.0
    %3951 = vmatpush1.msra.mxu0 0.0
    %3952 = vmatprep.subr.mxu0 0.0
    %3953 = vmatpush1.msra.mxu0 0.0
    %3954 = vmatprep.subr.mxu0 0.0
    %3955 = vmatpush1.msra.mxu0 0.0
    %3956 = vmatprep.subr.mxu0 0.0
    %3957 = vmatpush1.msra.mxu0 0.0
    %3958 = vmatprep.subr.mxu0 0.0
    %3959 = vmatpush1.msra.mxu0 0.0
    %3960 = vmatprep.subr.mxu0 0.0
    %3961 = vmatpush1.msra.mxu0 %v2934
    %3962 = vmatprep.subr.mxu0 0.0
    %3963 = vmatpush1.msra.mxu0 %v2932
    %3964 = vmatprep.subr.mxu0 0.0
    %3965 = vmatpush2.msra.mxu0 0.0
    %3966 = vmatprep.subr.mxu0 0.0
    %3967 = vmatpush2.msra.mxu0 0.0
    %3968 = vmatprep.subr.mxu0 0.0
    %3969 = vmatpush2.msra.mxu0 0.0
    %3970 = vmatprep.subr.mxu0 0.0
    %3971 = vmatpush2.msra.mxu0 0.0
    %3972 = vmatprep.subr.mxu0 0.0
    %3973 = vmatpush2.msra.mxu0 0.0
    %3974 = vmatprep.subr.mxu0 0.0
    %3975 = vmatpush2.msra.mxu0 0.0
    %3976 = vmatprep.subr.mxu0 0.0
    %3977 = vmatpush2.msra.mxu0 0.0
    %3978 = vmatprep.subr.mxu0 0.0
    %3979 = vmatpush2.msra.mxu0 0.0
    %3980 = vmatprep.subr.mxu0 0.0
    %3981 = vmatpush2.msra.mxu0 0.0
    %3982 = vmatprep.subr.mxu0 0.0
    %3983 = vmatpush2.msra.mxu0 0.0
    %3984 = vmatprep.subr.mxu0 0.0
    %3985 = vmatpush2.msra.mxu0 0.0
    %3986 = vmatprep.subr.mxu0 0.0
    %3987 = vmatpush2.msra.mxu0 0.0
    %3988 = vmatprep.subr.mxu0 0.0
    %3989 = vmatpush2.msra.mxu0 0.0
    %3990 = vmatprep.subr.mxu0 0.0
    %3991 = vmatpush2.msra.mxu0 0.0
    %3992 = vmatprep.subr.mxu0 0.0
    %3993 = vmatpush2.msra.mxu0 0.0
    %3994 = vmatprep.subr.mxu0 0.0
    %3995 = vmatpush2.msra.mxu0 0.0
    %3996 = vmatprep.mubr.f32.mxu0 0.0
    %3997 = vmatmul.mubr.f32.gmra.mxu0 %v3927
    %v3998 = vpop.f32.mrf.mxu0
    %v3999 = vadd.f32 0.0, %v3998
    %v4000 = vpop.f32.mrf.mxu0
    %4001 = vmatprep.mubr.f32.mxu0 0.0
    %4002 = vmatmul.mubr.f32.gmra.mxu0 %v3930
    %v4003 = vpop.f32.mrf.mxu0
    %v4004 = vadd.f32 0.0, %v4003
    %v4005 = vpop.f32.mrf.mxu0
    %4006 = vdwg.mxu0
    %v4008 = vsel %vm569, %v3833, 0
    %v4011 = vsel %vm569, %v3834, 0
    %4013 = vmatprep.subr.mxu0 0.0
    %4014 = vmatpush1.msra.mxu0 0.0
    %4015 = vmatprep.subr.mxu0 0.0
    %4016 = vmatpush1.msra.mxu0 0.0
    %4017 = vmatprep.subr.mxu0 0.0
    %4018 = vmatpush1.msra.mxu0 0.0
    %4019 = vmatprep.subr.mxu0 0.0
    %4020 = vmatpush1.msra.mxu0 0.0
    %4021 = vmatprep.subr.mxu0 0.0
    %4022 = vmatpush1.msra.mxu0 0.0
    %4023 = vmatprep.subr.mxu0 0.0
    %4024 = vmatpush1.msra.mxu0 0.0
    %4025 = vmatprep.subr.mxu0 0.0
    %4026 = vmatpush1.msra.mxu0 0.0
    %4027 = vmatprep.subr.mxu0 0.0
    %4028 = vmatpush1.msra.mxu0 0.0
    %4029 = vmatprep.subr.mxu0 0.0
    %4030 = vmatpush1.msra.mxu0 0.0
    %4031 = vmatprep.subr.mxu0 0.0
    %4032 = vmatpush1.msra.mxu0 0.0
    %4033 = vmatprep.subr.mxu0 0.0
    %4034 = vmatpush1.msra.mxu0 0.0
    %4035 = vmatprep.subr.mxu0 0.0
    %4036 = vmatpush1.msra.mxu0 0.0
    %4037 = vmatprep.subr.mxu0 0.0
    %4038 = vmatpush1.msra.mxu0 0.0
    %4039 = vmatprep.subr.mxu0 0.0
    %4040 = vmatpush1.msra.mxu0 0.0
    %4041 = vmatprep.subr.mxu0 0.0
    %4042 = vmatpush1.msra.mxu0 %v2940
    %4043 = vmatprep.subr.mxu0 0.0
    %4044 = vmatpush1.msra.mxu0 %v2938
    %4045 = vmatprep.subr.mxu0 0.0
    %4046 = vmatpush2.msra.mxu0 0.0
    %4047 = vmatprep.subr.mxu0 0.0
    %4048 = vmatpush2.msra.mxu0 0.0
    %4049 = vmatprep.subr.mxu0 0.0
    %4050 = vmatpush2.msra.mxu0 0.0
    %4051 = vmatprep.subr.mxu0 0.0
    %4052 = vmatpush2.msra.mxu0 0.0
    %4053 = vmatprep.subr.mxu0 0.0
    %4054 = vmatpush2.msra.mxu0 0.0
    %4055 = vmatprep.subr.mxu0 0.0
    %4056 = vmatpush2.msra.mxu0 0.0
    %4057 = vmatprep.subr.mxu0 0.0
    %4058 = vmatpush2.msra.mxu0 0.0
    %4059 = vmatprep.subr.mxu0 0.0
    %4060 = vmatpush2.msra.mxu0 0.0
    %4061 = vmatprep.subr.mxu0 0.0
    %4062 = vmatpush2.msra.mxu0 0.0
    %4063 = vmatprep.subr.mxu0 0.0
    %4064 = vmatpush2.msra.mxu0 0.0
    %4065 = vmatprep.subr.mxu0 0.0
    %4066 = vmatpush2.msra.mxu0 0.0
    %4067 = vmatprep.subr.mxu0 0.0
    %4068 = vmatpush2.msra.mxu0 0.0
    %4069 = vmatprep.subr.mxu0 0.0
    %4070 = vmatpush2.msra.mxu0 0.0
    %4071 = vmatprep.subr.mxu0 0.0
    %4072 = vmatpush2.msra.mxu0 0.0
    %4073 = vmatprep.subr.mxu0 0.0
    %4074 = vmatpush2.msra.mxu0 0.0
    %4075 = vmatprep.subr.mxu0 0.0
    %4076 = vmatpush2.msra.mxu0 0.0
    %4077 = vmatprep.mubr.f32.mxu0 0.0
    %4078 = vmatmul.mubr.f32.gmra.mxu0 %v4008
    %v4079 = vpop.f32.mrf.mxu0
    %v4080 = vadd.f32 0.0, %v4079
    %v4081 = vpop.f32.mrf.mxu0
    %4082 = vmatprep.mubr.f32.mxu0 0.0
    %4083 = vmatmul.mubr.f32.gmra.mxu0 %v4011
    %v4084 = vpop.f32.mrf.mxu0
    %v4085 = vadd.f32 0.0, %v4084
    %v4086 = vpop.f32.mrf.mxu0
    %4087 = vdwg.mxu0
    %v4089 = vsel %vm569, %v3835, 0
    %v4092 = vsel %vm569, %v3836, 0
    %4094 = vmatprep.subr.mxu0 0.0
    %4095 = vmatpush1.msra.mxu0 0.0
    %4096 = vmatprep.subr.mxu0 0.0
    %4097 = vmatpush1.msra.mxu0 0.0
    %4098 = vmatprep.subr.mxu0 0.0
    %4099 = vmatpush1.msra.mxu0 0.0
    %4100 = vmatprep.subr.mxu0 0.0
    %4101 = vmatpush1.msra.mxu0 0.0
    %4102 = vmatprep.subr.mxu0 0.0
    %4103 = vmatpush1.msra.mxu0 0.0
    %4104 = vmatprep.subr.mxu0 0.0
    %4105 = vmatpush1.msra.mxu0 0.0
    %4106 = vmatprep.subr.mxu0 0.0
    %4107 = vmatpush1.msra.mxu0 0.0
    %4108 = vmatprep.subr.mxu0 0.0
    %4109 = vmatpush1.msra.mxu0 0.0
    %4110 = vmatprep.subr.mxu0 0.0
    %4111 = vmatpush1.msra.mxu0 0.0
    %4112 = vmatprep.subr.mxu0 0.0
    %4113 = vmatpush1.msra.mxu0 0.0
    %4114 = vmatprep.subr.mxu0 0.0
    %4115 = vmatpush1.msra.mxu0 0.0
    %4116 = vmatprep.subr.mxu0 0.0
    %4117 = vmatpush1.msra.mxu0 0.0
    %4118 = vmatprep.subr.mxu0 0.0
    %4119 = vmatpush1.msra.mxu0 0.0
    %4120 = vmatprep.subr.mxu0 0.0
    %4121 = vmatpush1.msra.mxu0 0.0
    %4122 = vmatprep.subr.mxu0 0.0
    %4123 = vmatpush1.msra.mxu0 %v2946
    %4124 = vmatprep.subr.mxu0 0.0
    %4125 = vmatpush1.msra.mxu0 %v2944
    %4126 = vmatprep.subr.mxu0 0.0
    %4127 = vmatpush2.msra.mxu0 0.0
    %4128 = vmatprep.subr.mxu0 0.0
    %4129 = vmatpush2.msra.mxu0 0.0
    %4130 = vmatprep.subr.mxu0 0.0
    %4131 = vmatpush2.msra.mxu0 0.0
    %4132 = vmatprep.subr.mxu0 0.0
    %4133 = vmatpush2.msra.mxu0 0.0
    %4134 = vmatprep.subr.mxu0 0.0
    %4135 = vmatpush2.msra.mxu0 0.0
    %4136 = vmatprep.subr.mxu0 0.0
    %4137 = vmatpush2.msra.mxu0 0.0
    %4138 = vmatprep.subr.mxu0 0.0
    %4139 = vmatpush2.msra.mxu0 0.0
    %4140 = vmatprep.subr.mxu0 0.0
    %4141 = vmatpush2.msra.mxu0 0.0
    %4142 = vmatprep.subr.mxu0 0.0
    %4143 = vmatpush2.msra.mxu0 0.0
    %4144 = vmatprep.subr.mxu0 0.0
    %4145 = vmatpush2.msra.mxu0 0.0
    %4146 = vmatprep.subr.mxu0 0.0
    %4147 = vmatpush2.msra.mxu0 0.0
    %4148 = vmatprep.subr.mxu0 0.0
    %4149 = vmatpush2.msra.mxu0 0.0
    %4150 = vmatprep.subr.mxu0 0.0
    %4151 = vmatpush2.msra.mxu0 0.0
    %4152 = vmatprep.subr.mxu0 0.0
    %4153 = vmatpush2.msra.mxu0 0.0
    %4154 = vmatprep.subr.mxu0 0.0
    %4155 = vmatpush2.msra.mxu0 0.0
    %4156 = vmatprep.subr.mxu0 0.0
    %4157 = vmatpush2.msra.mxu0 0.0
    %4158 = vmatprep.mubr.f32.mxu0 0.0
    %4159 = vmatmul.mubr.f32.gmra.mxu0 %v4089
    %v4160 = vpop.f32.mrf.mxu0
    %v4161 = vadd.f32 0.0, %v4160
    %v4162 = vpop.f32.mrf.mxu0
    %4163 = vmatprep.mubr.f32.mxu0 0.0
    %4164 = vmatmul.mubr.f32.gmra.mxu0 %v4092
    %v4165 = vpop.f32.mrf.mxu0
    %v4166 = vadd.f32 0.0, %v4165
    %v4167 = vpop.f32.mrf.mxu0
    %4168 = vdwg.mxu0
    %v4170 = vsel %vm569, %v3837, 0
    %v4173 = vsel %vm569, %v3838, 0
    %4175 = vmatprep.subr.mxu0 0.0
    %4176 = vmatpush1.msra.mxu0 0.0
    %4177 = vmatprep.subr.mxu0 0.0
    %4178 = vmatpush1.msra.mxu0 0.0
    %4179 = vmatprep.subr.mxu0 0.0
    %4180 = vmatpush1.msra.mxu0 0.0
    %4181 = vmatprep.subr.mxu0 0.0
    %4182 = vmatpush1.msra.mxu0 0.0
    %4183 = vmatprep.subr.mxu0 0.0
    %4184 = vmatpush1.msra.mxu0 0.0
    %4185 = vmatprep.subr.mxu0 0.0
    %4186 = vmatpush1.msra.mxu0 0.0
    %4187 = vmatprep.subr.mxu0 0.0
    %4188 = vmatpush1.msra.mxu0 0.0
    %4189 = vmatprep.subr.mxu0 0.0
    %4190 = vmatpush1.msra.mxu0 0.0
    %4191 = vmatprep.subr.mxu0 0.0
    %4192 = vmatpush1.msra.mxu0 0.0
    %4193 = vmatprep.subr.mxu0 0.0
    %4194 = vmatpush1.msra.mxu0 0.0
    %4195 = vmatprep.subr.mxu0 0.0
    %4196 = vmatpush1.msra.mxu0 0.0
    %4197 = vmatprep.subr.mxu0 0.0
    %4198 = vmatpush1.msra.mxu0 0.0
    %4199 = vmatprep.subr.mxu0 0.0
    %4200 = vmatpush1.msra.mxu0 0.0
    %4201 = vmatprep.subr.mxu0 0.0
    %4202 = vmatpush1.msra.mxu0 0.0
    %4203 = vmatprep.subr.mxu0 0.0
    %4204 = vmatpush1.msra.mxu0 %v2952
    %4205 = vmatprep.subr.mxu0 0.0
    %4206 = vmatpush1.msra.mxu0 %v2950
    %4207 = vmatprep.subr.mxu0 0.0
    %4208 = vmatpush2.msra.mxu0 0.0
    %4209 = vmatprep.subr.mxu0 0.0
    %4210 = vmatpush2.msra.mxu0 0.0
    %4211 = vmatprep.subr.mxu0 0.0
    %4212 = vmatpush2.msra.mxu0 0.0
    %4213 = vmatprep.subr.mxu0 0.0
    %4214 = vmatpush2.msra.mxu0 0.0
    %4215 = vmatprep.subr.mxu0 0.0
    %4216 = vmatpush2.msra.mxu0 0.0
    %4217 = vmatprep.subr.mxu0 0.0
    %4218 = vmatpush2.msra.mxu0 0.0
    %4219 = vmatprep.subr.mxu0 0.0
    %4220 = vmatpush2.msra.mxu0 0.0
    %4221 = vmatprep.subr.mxu0 0.0
    %4222 = vmatpush2.msra.mxu0 0.0
    %4223 = vmatprep.subr.mxu0 0.0
    %4224 = vmatpush2.msra.mxu0 0.0
    %4225 = vmatprep.subr.mxu0 0.0
    %4226 = vmatpush2.msra.mxu0 0.0
    %4227 = vmatprep.subr.mxu0 0.0
    %4228 = vmatpush2.msra.mxu0 0.0
    %4229 = vmatprep.subr.mxu0 0.0
    %4230 = vmatpush2.msra.mxu0 0.0
    %4231 = vmatprep.subr.mxu0 0.0
    %4232 = vmatpush2.msra.mxu0 0.0
    %4233 = vmatprep.subr.mxu0 0.0
    %4234 = vmatpush2.msra.mxu0 0.0
    %4235 = vmatprep.subr.mxu0 0.0
    %4236 = vmatpush2.msra.mxu0 0.0
    %4237 = vmatprep.subr.mxu0 0.0
    %4238 = vmatpush2.msra.mxu0 0.0
    %4239 = vmatprep.mubr.f32.mxu0 0.0
    %4240 = vmatmul.mubr.f32.gmra.mxu0 %v4170
    %v4241 = vpop.f32.mrf.mxu0
    %v4242 = vadd.f32 0.0, %v4241
    %v4243 = vpop.f32.mrf.mxu0
    %4244 = vmatprep.mubr.f32.mxu0 0.0
    %4245 = vmatmul.mubr.f32.gmra.mxu0 %v4173
    %v4246 = vpop.f32.mrf.mxu0
    %v4247 = vadd.f32 0.0, %v4246
    %v4248 = vpop.f32.mrf.mxu0
    %4249 = vdwg.mxu0
    %v4251 = vsel %vm569, %v3839, 0
    %v4254 = vsel %vm569, %v3840, 0
    %4256 = vmatprep.subr.mxu0 0.0
    %4257 = vmatpush1.msra.mxu0 0.0
    %4258 = vmatprep.subr.mxu0 0.0
    %4259 = vmatpush1.msra.mxu0 0.0
    %4260 = vmatprep.subr.mxu0 0.0
    %4261 = vmatpush1.msra.mxu0 0.0
    %4262 = vmatprep.subr.mxu0 0.0
    %4263 = vmatpush1.msra.mxu0 0.0
    %4264 = vmatprep.subr.mxu0 0.0
    %4265 = vmatpush1.msra.mxu0 0.0
    %4266 = vmatprep.subr.mxu0 0.0
    %4267 = vmatpush1.msra.mxu0 0.0
    %4268 = vmatprep.subr.mxu0 0.0
    %4269 = vmatpush1.msra.mxu0 0.0
    %4270 = vmatprep.subr.mxu0 0.0
    %4271 = vmatpush1.msra.mxu0 0.0
    %4272 = vmatprep.subr.mxu0 0.0
    %4273 = vmatpush1.msra.mxu0 0.0
    %4274 = vmatprep.subr.mxu0 0.0
    %4275 = vmatpush1.msra.mxu0 0.0
    %4276 = vmatprep.subr.mxu0 0.0
    %4277 = vmatpush1.msra.mxu0 0.0
    %4278 = vmatprep.subr.mxu0 0.0
    %4279 = vmatpush1.msra.mxu0 0.0
    %4280 = vmatprep.subr.mxu0 0.0
    %4281 = vmatpush1.msra.mxu0 0.0
    %4282 = vmatprep.subr.mxu0 0.0
    %4283 = vmatpush1.msra.mxu0 0.0
    %4284 = vmatprep.subr.mxu0 0.0
    %4285 = vmatpush1.msra.mxu0 %v2958
    %4286 = vmatprep.subr.mxu0 0.0
    %4287 = vmatpush1.msra.mxu0 %v2956
    %4288 = vmatprep.subr.mxu0 0.0
    %4289 = vmatpush2.msra.mxu0 0.0
    %4290 = vmatprep.subr.mxu0 0.0
    %4291 = vmatpush2.msra.mxu0 0.0
    %4292 = vmatprep.subr.mxu0 0.0
    %4293 = vmatpush2.msra.mxu0 0.0
    %4294 = vmatprep.subr.mxu0 0.0
    %4295 = vmatpush2.msra.mxu0 0.0
    %4296 = vmatprep.subr.mxu0 0.0
    %4297 = vmatpush2.msra.mxu0 0.0
    %4298 = vmatprep.subr.mxu0 0.0
    %4299 = vmatpush2.msra.mxu0 0.0
    %4300 = vmatprep.subr.mxu0 0.0
    %4301 = vmatpush2.msra.mxu0 0.0
    %4302 = vmatprep.subr.mxu0 0.0
    %4303 = vmatpush2.msra.mxu0 0.0
    %4304 = vmatprep.subr.mxu0 0.0
    %4305 = vmatpush2.msra.mxu0 0.0
    %4306 = vmatprep.subr.mxu0 0.0
    %4307 = vmatpush2.msra.mxu0 0.0
    %4308 = vmatprep.subr.mxu0 0.0
    %4309 = vmatpush2.msra.mxu0 0.0
    %4310 = vmatprep.subr.mxu0 0.0
    %4311 = vmatpush2.msra.mxu0 0.0
    %4312 = vmatprep.subr.mxu0 0.0
    %4313 = vmatpush2.msra.mxu0 0.0
    %4314 = vmatprep.subr.mxu0 0.0
    %4315 = vmatpush2.msra.mxu0 0.0
    %4316 = vmatprep.subr.mxu0 0.0
    %4317 = vmatpush2.msra.mxu0 0.0
    %4318 = vmatprep.subr.mxu0 0.0
    %4319 = vmatpush2.msra.mxu0 0.0
    %4320 = vmatprep.mubr.f32.mxu0 0.0
    %4321 = vmatmul.mubr.f32.gmra.mxu0 %v4251
    %v4322 = vpop.f32.mrf.mxu0
    %v4323 = vadd.f32 0.0, %v4322
    %v4324 = vpop.f32.mrf.mxu0
    %4325 = vmatprep.mubr.f32.mxu0 0.0
    %4326 = vmatmul.mubr.f32.gmra.mxu0 %v4254
    %v4327 = vpop.f32.mrf.mxu0
    %v4328 = vadd.f32 0.0, %v4327
    %v4329 = vpop.f32.mrf.mxu0
    %4330 = vdwg.mxu0
    %v4332 = vsel %vm569, %v3841, 0
    %v4335 = vsel %vm569, %v3842, 0
    %4337 = vmatprep.subr.mxu0 0.0
    %4338 = vmatpush1.msra.mxu0 0.0
    %4339 = vmatprep.subr.mxu0 0.0
    %4340 = vmatpush1.msra.mxu0 0.0
    %4341 = vmatprep.subr.mxu0 0.0
    %4342 = vmatpush1.msra.mxu0 0.0
    %4343 = vmatprep.subr.mxu0 0.0
    %4344 = vmatpush1.msra.mxu0 0.0
    %4345 = vmatprep.subr.mxu0 0.0
    %4346 = vmatpush1.msra.mxu0 0.0
    %4347 = vmatprep.subr.mxu0 0.0
    %4348 = vmatpush1.msra.mxu0 0.0
    %4349 = vmatprep.subr.mxu0 0.0
    %4350 = vmatpush1.msra.mxu0 0.0
    %4351 = vmatprep.subr.mxu0 0.0
    %4352 = vmatpush1.msra.mxu0 0.0
    %4353 = vmatprep.subr.mxu0 0.0
    %4354 = vmatpush1.msra.mxu0 0.0
    %4355 = vmatprep.subr.mxu0 0.0
    %4356 = vmatpush1.msra.mxu0 0.0
    %4357 = vmatprep.subr.mxu0 0.0
    %4358 = vmatpush1.msra.mxu0 0.0
    %4359 = vmatprep.subr.mxu0 0.0
    %4360 = vmatpush1.msra.mxu0 0.0
    %4361 = vmatprep.subr.mxu0 0.0
    %4362 = vmatpush1.msra.mxu0 0.0
    %4363 = vmatprep.subr.mxu0 0.0
    %4364 = vmatpush1.msra.mxu0 0.0
    %4365 = vmatprep.subr.mxu0 0.0
    %4366 = vmatpush1.msra.mxu0 %v2964
    %4367 = vmatprep.subr.mxu0 0.0
    %4368 = vmatpush1.msra.mxu0 %v2962
    %4369 = vmatprep.subr.mxu0 0.0
    %4370 = vmatpush2.msra.mxu0 0.0
    %4371 = vmatprep.subr.mxu0 0.0
    %4372 = vmatpush2.msra.mxu0 0.0
    %4373 = vmatprep.subr.mxu0 0.0
    %4374 = vmatpush2.msra.mxu0 0.0
    %4375 = vmatprep.subr.mxu0 0.0
    %4376 = vmatpush2.msra.mxu0 0.0
    %4377 = vmatprep.subr.mxu0 0.0
    %4378 = vmatpush2.msra.mxu0 0.0
    %4379 = vmatprep.subr.mxu0 0.0
    %4380 = vmatpush2.msra.mxu0 0.0
    %4381 = vmatprep.subr.mxu0 0.0
    %4382 = vmatpush2.msra.mxu0 0.0
    %4383 = vmatprep.subr.mxu0 0.0
    %4384 = vmatpush2.msra.mxu0 0.0
    %4385 = vmatprep.subr.mxu0 0.0
    %4386 = vmatpush2.msra.mxu0 0.0
    %4387 = vmatprep.subr.mxu0 0.0
    %4388 = vmatpush2.msra.mxu0 0.0
    %4389 = vmatprep.subr.mxu0 0.0
    %4390 = vmatpush2.msra.mxu0 0.0
    %4391 = vmatprep.subr.mxu0 0.0
    %4392 = vmatpush2.msra.mxu0 0.0
    %4393 = vmatprep.subr.mxu0 0.0
    %4394 = vmatpush2.msra.mxu0 0.0
    %4395 = vmatprep.subr.mxu0 0.0
    %4396 = vmatpush2.msra.mxu0 0.0
    %4397 = vmatprep.subr.mxu0 0.0
    %4398 = vmatpush2.msra.mxu0 0.0
    %4399 = vmatprep.subr.mxu0 0.0
    %4400 = vmatpush2.msra.mxu0 0.0
    %4401 = vmatprep.mubr.f32.mxu0 0.0
    %4402 = vmatmul.mubr.f32.gmra.mxu0 %v4332
    %v4403 = vpop.f32.mrf.mxu0
    %v4404 = vadd.f32 0.0, %v4403
    %v4405 = vpop.f32.mrf.mxu0
    %4406 = vmatprep.mubr.f32.mxu0 0.0
    %4407 = vmatmul.mubr.f32.gmra.mxu0 %v4335
    %v4408 = vpop.f32.mrf.mxu0
    %v4409 = vadd.f32 0.0, %v4408
    %v4410 = vpop.f32.mrf.mxu0
    %4411 = vdwg.mxu0
    %v4413 = vsel %vm569, %v3843, 0
    %v4416 = vsel %vm569, %v3844, 0
    %4418 = vmatprep.subr.mxu0 0.0
    %4419 = vmatpush1.msra.mxu0 0.0
    %4420 = vmatprep.subr.mxu0 0.0
    %4421 = vmatpush1.msra.mxu0 0.0
    %4422 = vmatprep.subr.mxu0 0.0
    %4423 = vmatpush1.msra.mxu0 0.0
    %4424 = vmatprep.subr.mxu0 0.0
    %4425 = vmatpush1.msra.mxu0 0.0
    %4426 = vmatprep.subr.mxu0 0.0
    %4427 = vmatpush1.msra.mxu0 0.0
    %4428 = vmatprep.subr.mxu0 0.0
    %4429 = vmatpush1.msra.mxu0 0.0
    %4430 = vmatprep.subr.mxu0 0.0
    %4431 = vmatpush1.msra.mxu0 0.0
    %4432 = vmatprep.subr.mxu0 0.0
    %4433 = vmatpush1.msra.mxu0 0.0
    %4434 = vmatprep.subr.mxu0 0.0
    %4435 = vmatpush1.msra.mxu0 0.0
    %4436 = vmatprep.subr.mxu0 0.0
    %4437 = vmatpush1.msra.mxu0 0.0
    %4438 = vmatprep.subr.mxu0 0.0
    %4439 = vmatpush1.msra.mxu0 0.0
    %4440 = vmatprep.subr.mxu0 0.0
    %4441 = vmatpush1.msra.mxu0 0.0
    %4442 = vmatprep.subr.mxu0 0.0
    %4443 = vmatpush1.msra.mxu0 0.0
    %4444 = vmatprep.subr.mxu0 0.0
    %4445 = vmatpush1.msra.mxu0 0.0
    %4446 = vmatprep.subr.mxu0 0.0
    %4447 = vmatpush1.msra.mxu0 %v2970
    %4448 = vmatprep.subr.mxu0 0.0
    %4449 = vmatpush1.msra.mxu0 %v2968
    %4450 = vmatprep.subr.mxu0 0.0
    %4451 = vmatpush2.msra.mxu0 0.0
    %4452 = vmatprep.subr.mxu0 0.0
    %4453 = vmatpush2.msra.mxu0 0.0
    %4454 = vmatprep.subr.mxu0 0.0
    %4455 = vmatpush2.msra.mxu0 0.0
    %4456 = vmatprep.subr.mxu0 0.0
    %4457 = vmatpush2.msra.mxu0 0.0
    %4458 = vmatprep.subr.mxu0 0.0
    %4459 = vmatpush2.msra.mxu0 0.0
    %4460 = vmatprep.subr.mxu0 0.0
    %4461 = vmatpush2.msra.mxu0 0.0
    %4462 = vmatprep.subr.mxu0 0.0
    %4463 = vmatpush2.msra.mxu0 0.0
    %4464 = vmatprep.subr.mxu0 0.0
    %4465 = vmatpush2.msra.mxu0 0.0
    %4466 = vmatprep.subr.mxu0 0.0
    %4467 = vmatpush2.msra.mxu0 0.0
    %4468 = vmatprep.subr.mxu0 0.0
    %4469 = vmatpush2.msra.mxu0 0.0
    %4470 = vmatprep.subr.mxu0 0.0
    %4471 = vmatpush2.msra.mxu0 0.0
    %4472 = vmatprep.subr.mxu0 0.0
    %4473 = vmatpush2.msra.mxu0 0.0
    %4474 = vmatprep.subr.mxu0 0.0
    %4475 = vmatpush2.msra.mxu0 0.0
    %4476 = vmatprep.subr.mxu0 0.0
    %4477 = vmatpush2.msra.mxu0 0.0
    %4478 = vmatprep.subr.mxu0 0.0
    %4479 = vmatpush2.msra.mxu0 0.0
    %4480 = vmatprep.subr.mxu0 0.0
    %4481 = vmatpush2.msra.mxu0 0.0
    %4482 = vmatprep.mubr.f32.mxu0 0.0
    %4483 = vmatmul.mubr.f32.gmra.mxu0 %v4413
    %v4484 = vpop.f32.mrf.mxu0
    %v4485 = vadd.f32 0.0, %v4484
    %v4486 = vpop.f32.mrf.mxu0
    %4487 = vmatprep.mubr.f32.mxu0 0.0
    %4488 = vmatmul.mubr.f32.gmra.mxu0 %v4416
    %v4489 = vpop.f32.mrf.mxu0
    %v4490 = vadd.f32 0.0, %v4489
    %v4491 = vpop.f32.mrf.mxu0
    %4492 = vdwg.mxu0
    %4495 = vrot.lane.b32.xlu0 %v3999, 16
    %v4496 = vpop.permute.xlu0 %4495
    %4497 = vrot.lane.b32.xlu0 %v4004, 16
    %v4498 = vpop.permute.xlu0 %4497
    %4503 = vrot.lane.b32.xlu0 %v4080, 32
    %v4504 = vpop.permute.xlu0 %4503
    %4505 = vrot.lane.b32.xlu0 %v4085, 32
    %v4506 = vpop.permute.xlu0 %4505
    %4511 = vrot.lane.b32.xlu0 %v4161, 48
    %v4512 = vpop.permute.xlu0 %4511
    %4513 = vrot.lane.b32.xlu0 %v4166, 48
    %v4514 = vpop.permute.xlu0 %4513
    %4519 = vrot.lane.b32.xlu0 %v4242, 64
    %v4520 = vpop.permute.xlu0 %4519
    %4521 = vrot.lane.b32.xlu0 %v4247, 64
    %v4522 = vpop.permute.xlu0 %4521
    %4527 = vrot.lane.b32.xlu0 %v4323, 80
    %v4528 = vpop.permute.xlu0 %4527
    %4529 = vrot.lane.b32.xlu0 %v4328, 80
    %v4530 = vpop.permute.xlu0 %4529
    %4535 = vrot.lane.b32.xlu0 %v4404, 96
    %v4536 = vpop.permute.xlu0 %4535
    %4537 = vrot.lane.b32.xlu0 %v4409, 96
    %v4538 = vpop.permute.xlu0 %4537
    %4543 = vrot.lane.b32.xlu0 %v4485, 112
    %v4544 = vpop.permute.xlu0 %4543
    %4545 = vrot.lane.b32.xlu0 %v4490, 112
    %v4546 = vpop.permute.xlu0 %4545
    %v4549 = vsel %vm569, %v3918, %v4496
    %v4550 = vsel %vm569, %v3923, %v4498
    %v4551 = vsel %vm2148, %v4549, %v4504
    %v4552 = vsel %vm2148, %v4550, %v4506
    %v4553 = vsel %vm2151, %v4551, %v4512
    %v4554 = vsel %vm2151, %v4552, %v4514
    %v4555 = vsel %vm2154, %v4553, %v4520
    %v4556 = vsel %vm2154, %v4554, %v4522
    %v4557 = vsel %vm2157, %v4555, %v4528
    %v4558 = vsel %vm2157, %v4556, %v4530
    %v4559 = vsel %vm2160, %v4557, %v4536
    %v4560 = vsel %vm2160, %v4558, %v4538
    %v4561 = vsel %vm2163, %v4559, %v4544
    %v4562 = vsel %vm2163, %v4560, %v4546
    %v4563 = vpack.c.bf16 %v4562, %v4561
    %v4580 = vunpack.c.l.b16 %v2704
    %v4581 = vunpack.c.l.b16 %v2705
    %v4582 = vunpack.c.l.b16 %v2706
    %v4583 = vunpack.c.l.b16 %v2707
    %v4584 = vunpack.c.l.b16 %v2708
    %v4585 = vunpack.c.l.b16 %v2709
    %v4586 = vunpack.c.l.b16 %v2710
    %v4587 = vunpack.c.l.b16 %v2711
    %v4588 = vunpack.c.l.b16 %v2712
    %v4589 = vunpack.c.l.b16 %v2713
    %v4590 = vunpack.c.l.b16 %v2714
    %v4591 = vunpack.c.l.b16 %v2715
    %v4592 = vunpack.c.l.b16 %v2716
    %v4593 = vunpack.c.l.b16 %v2717
    %v4594 = vunpack.c.l.b16 %v2718
    %v4595 = vunpack.c.l.b16 %v2719
    %v4596 = vpack.c.b16 %v4581, %v4580
    %v4597 = vpack.c.b16 %v4583, %v4582
    %v4598 = vpack.c.b16 %v4585, %v4584
    %v4599 = vpack.c.b16 %v4587, %v4586
    %v4600 = vpack.c.b16 %v4589, %v4588
    %v4601 = vpack.c.b16 %v4591, %v4590
    %v4602 = vpack.c.b16 %v4593, %v4592
    %v4603 = vpack.c.b16 %v4595, %v4594
    %4612 = vmatprep.subr.bf16.mxu0 0
    %4613 = vmatpush1.bf16.msra.mxu0 %v4603
    %4614 = vmatprep.subr.bf16.mxu0 0
    %4615 = vmatpush1.bf16.msra.mxu0 %v4602
    %4616 = vmatprep.subr.bf16.mxu0 0
    %4617 = vmatpush1.bf16.msra.mxu0 %v4601
    %4618 = vmatprep.subr.bf16.mxu0 0
    %4619 = vmatpush1.bf16.msra.mxu0 %v4600
    %4620 = vmatprep.subr.bf16.mxu0 0
    %4621 = vmatpush1.bf16.msra.mxu0 %v4599
    %4622 = vmatprep.subr.bf16.mxu0 0
    %4623 = vmatpush1.bf16.msra.mxu0 %v4598
    %4624 = vmatprep.subr.bf16.mxu0 0
    %4625 = vmatpush1.bf16.msra.mxu0 %v4597
    %4626 = vmatprep.subr.bf16.mxu0 0
    %4627 = vmatpush1.bf16.msra.mxu0 %v4596
    %4628 = vmatprep.subr.bf16.mxu0 0
    %4629 = vmatpush2.bf16.msra.mxu0 0
    %4630 = vmatprep.subr.bf16.mxu0 0
    %4631 = vmatpush2.bf16.msra.mxu0 0
    %4632 = vmatprep.subr.bf16.mxu0 0
    %4633 = vmatpush2.bf16.msra.mxu0 0
    %4634 = vmatprep.subr.bf16.mxu0 0
    %4635 = vmatpush2.bf16.msra.mxu0 0
    %4636 = vmatprep.subr.bf16.mxu0 0
    %4637 = vmatpush2.bf16.msra.mxu0 0
    %4638 = vmatprep.subr.bf16.mxu0 0
    %4639 = vmatpush2.bf16.msra.mxu0 0
    %4640 = vmatprep.subr.bf16.mxu0 0
    %4641 = vmatpush2.bf16.msra.mxu0 0
    %4642 = vmatprep.subr.bf16.mxu0 0
    %4643 = vmatpush2.bf16.msra.mxu0 0
    %4644 = vmatprep.mubr.bf16.mxu0 0
    %4645 = vmatmul.mubr.bf16.gmra.mxu0 %v4563
    %v4646 = vpop.f32.mrf.mxu0
    %v4647 = vadd.f32 0.0, %v4646
    %v4648 = vpop.f32.mrf.mxu0
    %v4649 = vpop.f32.mrf.mxu0
    %v4650 = vadd.f32 0.0, %v4649
    %v4651 = vpop.f32.mrf.mxu0
    %4652 = vdwg.mxu0
    %v4653 = vadd.f32 %v2631, %v4647
    %v4654 = vadd.f32 %v2632, %v4650
    %s4655 = scalar_lea.vmem %s10, 6
    %v4656 = vld [vmem:[%s4655] sm:$0x3]
    %4657 = vadd.xlane.f32.xlu0 %v4653
    %v4658 = vpop.xlane.xlu0 %4657
    %4659 = vadd.xlane.f32.xlu0 %v4654
    %v4660 = vpop.xlane.xlu0 %4659
    %v4661 = vmul.f32 %v4658, %v235
    %v4662 = vmul.f32 %v4660, %v235
    %v4663 = vsub.f32 %v4653, %v4661
    %v4664 = vsub.f32 %v4654, %v4662
    %v4665 = vmul.f32 %v4663, %v4663
    %v4666 = vmul.f32 %v4664, %v4664
    %4667 = vadd.xlane.f32.xlu0 %v4665
    %v4668 = vpop.xlane.xlu0 %4667
    %4669 = vadd.xlane.f32.xlu0 %v4666
    %v4670 = vpop.xlane.xlu0 %4669
    %v4671 = vmul.f32 %v4668, %v235
    %v4672 = vmul.f32 %v4670, %v235
    %v4673 = vadd.f32 %v4671, 1e-05
    %v4674 = vadd.f32 %v4672, 1e-05
    %v4675 = vrsqrt.pop %v4673
    %v4676 = vrsqrt.pop %v4674
    %v4677 = vmul.f32 %v4663, %v4675
    %v4678 = vmul.f32 %v4664, %v4676
    %v4679 = vlaneseq
    %v4680 = vshrl.u32 %v4679, 7
    %v4681 = vsub.s32 0, %v4680
    %v4682 = vrot.slane %v4656, %v4681
    %v4683 = vmul.f32 %v4677, %v4682
    %v4684 = vmul.f32 %v4678, %v4682
    %v4685 = vlaneseq
    %v4686 = vshrl.u32 %v4685, 7
    %v4687 = vsub.s32 1, %v4686
    %v4688 = vrot.slane %v4656, %v4687
    %v4689 = vadd.f32 %v4683, %v4688
    %v4690 = vadd.f32 %v4684, %v4688
    %v4691 = vpack.c.bf16 %v4690, %v4689
    %s4692 = scalar_lea.vmem [#allocation13], 128
    %v4693 = vld [vmem:[%s4692] sm:$0xff]
    %v4694 = vld [vmem:[%s4692 + $0x8] sm:$0xff]
    %v4695 = vld [vmem:[%s4692 + $0x10] sm:$0xff]
    %v4696 = vld [vmem:[%s4692 + $0x18] sm:$0xff]
    %v4697 = vld [vmem:[%s4692 + $0x20] sm:$0xff]
    %v4698 = vld [vmem:[%s4692 + $0x28] sm:$0xff]
    %v4699 = vld [vmem:[%s4692 + $0x30] sm:$0xff]
    %v4700 = vld [vmem:[%s4692 + $0x38] sm:$0xff]
    %v4701 = vld [vmem:[%s4692 + $0x40] sm:$0xff]
    %v4702 = vld [vmem:[%s4692 + $0x48] sm:$0xff]
    %v4703 = vld [vmem:[%s4692 + $0x50] sm:$0xff]
    %v4704 = vld [vmem:[%s4692 + $0x58] sm:$0xff]
    %v4705 = vld [vmem:[%s4692 + $0x60] sm:$0xff]
    %v4706 = vld [vmem:[%s4692 + $0x68] sm:$0xff]
    %v4707 = vld [vmem:[%s4692 + $0x70] sm:$0xff]
    %v4708 = vld [vmem:[%s4692 + $0x78] sm:$0xff]
    %s4709 = scalar_lea.vmem %s12, 2
    %v4710 = vld [vmem:[%s4709] sm:$0x3]
    %v4712 = vlaneseq
    %v4713 = vshrl.u32 %v4712, 7
    %v4714 = vsub.s32 0, %v4713
    %v4715 = vrot.slane %v4710, %v4714
    %v4716 = vlaneseq
    %v4717 = vshrl.u32 %v4716, 7
    %v4718 = vsub.s32 1, %v4717
    %v4719 = vrot.slane %v4710, %v4718
    %v4738 = vunpack.c.l.b16 %v4693
    %v4739 = vunpack.c.h.b16 %v4693
    %v4740 = vunpack.c.l.b16 %v4694
    %v4741 = vunpack.c.h.b16 %v4694
    %v4742 = vunpack.c.l.b16 %v4695
    %v4743 = vunpack.c.h.b16 %v4695
    %v4744 = vunpack.c.l.b16 %v4696
    %v4745 = vunpack.c.h.b16 %v4696
    %v4746 = vunpack.c.l.b16 %v4697
    %v4747 = vunpack.c.h.b16 %v4697
    %v4748 = vunpack.c.l.b16 %v4698
    %v4749 = vunpack.c.h.b16 %v4698
    %v4750 = vunpack.c.l.b16 %v4699
    %v4751 = vunpack.c.h.b16 %v4699
    %v4752 = vunpack.c.l.b16 %v4700
    %v4753 = vunpack.c.h.b16 %v4700
    %v4754 = vunpack.c.l.b16 %v4701
    %v4755 = vunpack.c.h.b16 %v4701
    %v4756 = vunpack.c.l.b16 %v4702
    %v4757 = vunpack.c.h.b16 %v4702
    %v4758 = vunpack.c.l.b16 %v4703
    %v4759 = vunpack.c.h.b16 %v4703
    %v4760 = vunpack.c.l.b16 %v4704
    %v4761 = vunpack.c.h.b16 %v4704
    %v4762 = vunpack.c.l.b16 %v4705
    %v4763 = vunpack.c.h.b16 %v4705
    %v4764 = vunpack.c.l.b16 %v4706
    %v4765 = vunpack.c.h.b16 %v4706
    %v4766 = vunpack.c.l.b16 %v4707
    %v4767 = vunpack.c.h.b16 %v4707
    %v4768 = vunpack.c.l.b16 %v4708
    %v4769 = vunpack.c.h.b16 %v4708
    %v4770 = vpack.c.b16 %v4740, %v4738
    %v4771 = vpack.c.b16 %v4741, %v4739
    %v4772 = vpack.c.b16 %v4744, %v4742
    %v4773 = vpack.c.b16 %v4745, %v4743
    %v4774 = vpack.c.b16 %v4748, %v4746
    %v4775 = vpack.c.b16 %v4749, %v4747
    %v4776 = vpack.c.b16 %v4752, %v4750
    %v4777 = vpack.c.b16 %v4753, %v4751
    %v4778 = vpack.c.b16 %v4756, %v4754
    %v4779 = vpack.c.b16 %v4757, %v4755
    %v4780 = vpack.c.b16 %v4760, %v4758
    %v4781 = vpack.c.b16 %v4761, %v4759
    %v4782 = vpack.c.b16 %v4764, %v4762
    %v4783 = vpack.c.b16 %v4765, %v4763
    %v4784 = vpack.c.b16 %v4768, %v4766
    %v4785 = vpack.c.b16 %v4769, %v4767
    %4802 = vmatprep.subr.bf16.mxu0 %v4785
    %4803 = vmatpush1.bf16.msra.mxu0 %v4784
    %4804 = vmatprep.subr.bf16.mxu0 %v4783
    %4805 = vmatpush1.bf16.msra.mxu0 %v4782
    %4806 = vmatprep.subr.bf16.mxu0 %v4781
    %4807 = vmatpush1.bf16.msra.mxu0 %v4780
    %4808 = vmatprep.subr.bf16.mxu0 %v4779
    %4809 = vmatpush1.bf16.msra.mxu0 %v4778
    %4810 = vmatprep.subr.bf16.mxu0 %v4777
    %4811 = vmatpush1.bf16.msra.mxu0 %v4776
    %4812 = vmatprep.subr.bf16.mxu0 %v4775
    %4813 = vmatpush1.bf16.msra.mxu0 %v4774
    %4814 = vmatprep.subr.bf16.mxu0 %v4773
    %4815 = vmatpush1.bf16.msra.mxu0 %v4772
    %4816 = vmatprep.subr.bf16.mxu0 %v4771
    %4817 = vmatpush1.bf16.msra.mxu0 %v4770
    %4818 = vmatprep.subr.bf16.mxu0 0
    %4819 = vmatpush2.bf16.msra.mxu0 0
    %4820 = vmatprep.subr.bf16.mxu0 0
    %4821 = vmatpush2.bf16.msra.mxu0 0
    %4822 = vmatprep.subr.bf16.mxu0 0
    %4823 = vmatpush2.bf16.msra.mxu0 0
    %4824 = vmatprep.subr.bf16.mxu0 0
    %4825 = vmatpush2.bf16.msra.mxu0 0
    %4826 = vmatprep.subr.bf16.mxu0 0
    %4827 = vmatpush2.bf16.msra.mxu0 0
    %4828 = vmatprep.subr.bf16.mxu0 0
    %4829 = vmatpush2.bf16.msra.mxu0 0
    %4830 = vmatprep.subr.bf16.mxu0 0
    %4831 = vmatpush2.bf16.msra.mxu0 0
    %4832 = vmatprep.subr.bf16.mxu0 0
    %4833 = vmatpush2.bf16.msra.mxu0 0
    %4834 = vmatprep.mubr.bf16.mxu0 0
    %4835 = vmatmul.mubr.bf16.gmra.mxu0 %v4691
    %v4836 = vpop.f32.mrf.mxu0
    %v4837 = vadd.f32 %v4715, %v4836
    %v4838 = vpop.f32.mrf.mxu0
    %v4839 = vadd.f32 %v4719, %v4838
    %v4840 = vpop.f32.mrf.mxu0
    %v4841 = vadd.f32 %v4715, %v4840
    %v4842 = vpop.f32.mrf.mxu0
    %v4843 = vadd.f32 %v4719, %v4842
    %4844 = vdwg.mxu0
    %v4845 = vmax.f32 %v4837, 0.0
    %v4846 = vmax.f32 %v4839, 0.0
    %v4847 = vmax.f32 %v4841, 0.0
    %v4848 = vmax.f32 %v4843, 0.0
    %v4849 = vpack.c.bf16 %v4847, %v4845
    %v4850 = vpack.c.bf16 %v4848, %v4846
    %s4851 = scalar_lea.vmem [#allocation14], 128
    %v4852 = vld [vmem:[%s4851] sm:$0xf]
    %v4853 = vld [vmem:[%s4851 + $0x4] sm:$0xf]
    %v4854 = vld [vmem:[%s4851 + $0x8] sm:$0xf]
    %v4855 = vld [vmem:[%s4851 + $0xc] sm:$0xf]
    %v4856 = vld [vmem:[%s4851 + $0x10] sm:$0xf]
    %v4857 = vld [vmem:[%s4851 + $0x14] sm:$0xf]
    %v4858 = vld [vmem:[%s4851 + $0x18] sm:$0xf]
    %v4859 = vld [vmem:[%s4851 + $0x1c] sm:$0xf]
    %v4860 = vld [vmem:[%s4851 + $0x20] sm:$0xf]
    %v4861 = vld [vmem:[%s4851 + $0x24] sm:$0xf]
    %v4862 = vld [vmem:[%s4851 + $0x28] sm:$0xf]
    %v4863 = vld [vmem:[%s4851 + $0x2c] sm:$0xf]
    %v4864 = vld [vmem:[%s4851 + $0x30] sm:$0xf]
    %v4865 = vld [vmem:[%s4851 + $0x34] sm:$0xf]
    %v4866 = vld [vmem:[%s4851 + $0x38] sm:$0xf]
    %v4867 = vld [vmem:[%s4851 + $0x3c] sm:$0xf]
    %v4868 = vld [vmem:[%s4851 + $0x40] sm:$0xf]
    %v4869 = vld [vmem:[%s4851 + $0x44] sm:$0xf]
    %v4870 = vld [vmem:[%s4851 + $0x48] sm:$0xf]
    %v4871 = vld [vmem:[%s4851 + $0x4c] sm:$0xf]
    %v4872 = vld [vmem:[%s4851 + $0x50] sm:$0xf]
    %v4873 = vld [vmem:[%s4851 + $0x54] sm:$0xf]
    %v4874 = vld [vmem:[%s4851 + $0x58] sm:$0xf]
    %v4875 = vld [vmem:[%s4851 + $0x5c] sm:$0xf]
    %v4876 = vld [vmem:[%s4851 + $0x60] sm:$0xf]
    %v4877 = vld [vmem:[%s4851 + $0x64] sm:$0xf]
    %v4878 = vld [vmem:[%s4851 + $0x68] sm:$0xf]
    %v4879 = vld [vmem:[%s4851 + $0x6c] sm:$0xf]
    %v4880 = vld [vmem:[%s4851 + $0x70] sm:$0xf]
    %v4881 = vld [vmem:[%s4851 + $0x74] sm:$0xf]
    %v4882 = vld [vmem:[%s4851 + $0x78] sm:$0xf]
    %v4883 = vld [vmem:[%s4851 + $0x7c] sm:$0xf]
    %v4916 = vunpack.c.l.b16 %v4852
    %v4917 = vunpack.c.l.b16 %v4853
    %v4918 = vunpack.c.l.b16 %v4854
    %v4919 = vunpack.c.l.b16 %v4855
    %v4920 = vunpack.c.l.b16 %v4856
    %v4921 = vunpack.c.l.b16 %v4857
    %v4922 = vunpack.c.l.b16 %v4858
    %v4923 = vunpack.c.l.b16 %v4859
    %v4924 = vunpack.c.l.b16 %v4860
    %v4925 = vunpack.c.l.b16 %v4861
    %v4926 = vunpack.c.l.b16 %v4862
    %v4927 = vunpack.c.l.b16 %v4863
    %v4928 = vunpack.c.l.b16 %v4864
    %v4929 = vunpack.c.l.b16 %v4865
    %v4930 = vunpack.c.l.b16 %v4866
    %v4931 = vunpack.c.l.b16 %v4867
    %v4932 = vunpack.c.l.b16 %v4868
    %v4933 = vunpack.c.l.b16 %v4869
    %v4934 = vunpack.c.l.b16 %v4870
    %v4935 = vunpack.c.l.b16 %v4871
    %v4936 = vunpack.c.l.b16 %v4872
    %v4937 = vunpack.c.l.b16 %v4873
    %v4938 = vunpack.c.l.b16 %v4874
    %v4939 = vunpack.c.l.b16 %v4875
    %v4940 = vunpack.c.l.b16 %v4876
    %v4941 = vunpack.c.l.b16 %v4877
    %v4942 = vunpack.c.l.b16 %v4878
    %v4943 = vunpack.c.l.b16 %v4879
    %v4944 = vunpack.c.l.b16 %v4880
    %v4945 = vunpack.c.l.b16 %v4881
    %v4946 = vunpack.c.l.b16 %v4882
    %v4947 = vunpack.c.l.b16 %v4883
    %v4948 = vpack.c.b16 %v4917, %v4916
    %v4949 = vpack.c.b16 %v4919, %v4918
    %v4950 = vpack.c.b16 %v4921, %v4920
    %v4951 = vpack.c.b16 %v4923, %v4922
    %v4952 = vpack.c.b16 %v4925, %v4924
    %v4953 = vpack.c.b16 %v4927, %v4926
    %v4954 = vpack.c.b16 %v4929, %v4928
    %v4955 = vpack.c.b16 %v4931, %v4930
    %v4956 = vpack.c.b16 %v4933, %v4932
    %v4957 = vpack.c.b16 %v4935, %v4934
    %v4958 = vpack.c.b16 %v4937, %v4936
    %v4959 = vpack.c.b16 %v4939, %v4938
    %v4960 = vpack.c.b16 %v4941, %v4940
    %v4961 = vpack.c.b16 %v4943, %v4942
    %v4962 = vpack.c.b16 %v4945, %v4944
    %v4963 = vpack.c.b16 %v4947, %v4946
    %4980 = vmatprep.subr.bf16.mxu0 0
    %4981 = vmatpush1.bf16.msra.mxu0 %v4955
    %4982 = vmatprep.subr.bf16.mxu0 0
    %4983 = vmatpush1.bf16.msra.mxu0 %v4954
    %4984 = vmatprep.subr.bf16.mxu0 0
    %4985 = vmatpush1.bf16.msra.mxu0 %v4953
    %4986 = vmatprep.subr.bf16.mxu0 0
    %4987 = vmatpush1.bf16.msra.mxu0 %v4952
    %4988 = vmatprep.subr.bf16.mxu0 0
    %4989 = vmatpush1.bf16.msra.mxu0 %v4951
    %4990 = vmatprep.subr.bf16.mxu0 0
    %4991 = vmatpush1.bf16.msra.mxu0 %v4950
    %4992 = vmatprep.subr.bf16.mxu0 0
    %4993 = vmatpush1.bf16.msra.mxu0 %v4949
    %4994 = vmatprep.subr.bf16.mxu0 0
    %4995 = vmatpush1.bf16.msra.mxu0 %v4948
    %4996 = vmatprep.subr.bf16.mxu0 0
    %4997 = vmatpush2.bf16.msra.mxu0 %v4963
    %4998 = vmatprep.subr.bf16.mxu0 0
    %4999 = vmatpush2.bf16.msra.mxu0 %v4962
    %5000 = vmatprep.subr.bf16.mxu0 0
    %5001 = vmatpush2.bf16.msra.mxu0 %v4961
    %5002 = vmatprep.subr.bf16.mxu0 0
    %5003 = vmatpush2.bf16.msra.mxu0 %v4960
    %5004 = vmatprep.subr.bf16.mxu0 0
    %5005 = vmatpush2.bf16.msra.mxu0 %v4959
    %5006 = vmatprep.subr.bf16.mxu0 0
    %5007 = vmatpush2.bf16.msra.mxu0 %v4958
    %5008 = vmatprep.subr.bf16.mxu0 0
    %5009 = vmatpush2.bf16.msra.mxu0 %v4957
    %5010 = vmatprep.subr.bf16.mxu0 0
    %5011 = vmatpush2.bf16.msra.mxu0 %v4956
    %5012 = vmatprep.mubr.bf16.mxu0 %v4850
    %5013 = vmatmul.mubr.bf16.gmra.mxu0 %v4849
    %v5014 = vpop.f32.mrf.mxu0
    %v5015 = vadd.f32 0.0, %v5014
    %v5016 = vpop.f32.mrf.mxu0
    %v5017 = vpop.f32.mrf.mxu0
    %v5018 = vadd.f32 0.0, %v5017
    %v5019 = vpop.f32.mrf.mxu0
    %5020 = vdwg.mxu0
    %v5021 = vadd.f32 %v4653, %v5015
    %v5022 = vadd.f32 %v4654, %v5018
    %s5023 = scalar_lea.vmem [#allocation16], 2
    %v5024 = vld [vmem:[%s5023] sm:$0x1]
    %v5026 = vlaneseq
    %v5027 = vshrl.u32 %v5026, 7
    %v5028 = vsub.s32 0, %v5027
    %v5029 = vrot.slane %v5024, %v5028
    %v5031 = vadd.f32 %v5021, %v5029
    %v5032 = vadd.f32 %v5022, %v5029
    %s5033 = scalar_lea.vmem %s10, 8
    %v5034 = vld [vmem:[%s5033] sm:$0x3]
    %5035 = vadd.xlane.f32.xlu0 %v5031
    %v5036 = vpop.xlane.xlu0 %5035
    %5037 = vadd.xlane.f32.xlu0 %v5032
    %v5038 = vpop.xlane.xlu0 %5037
    %v5039 = vmul.f32 %v5036, %v235
    %v5040 = vmul.f32 %v5038, %v235
    %v5041 = vsub.f32 %v5031, %v5039
    %v5042 = vsub.f32 %v5032, %v5040
    %v5043 = vmul.f32 %v5041, %v5041
    %v5044 = vmul.f32 %v5042, %v5042
    %5045 = vadd.xlane.f32.xlu0 %v5043
    %v5046 = vpop.xlane.xlu0 %5045
    %5047 = vadd.xlane.f32.xlu0 %v5044
    %v5048 = vpop.xlane.xlu0 %5047
    %v5049 = vmul.f32 %v5046, %v235
    %v5050 = vmul.f32 %v5048, %v235
    %v5051 = vadd.f32 %v5049, 1e-05
    %v5052 = vadd.f32 %v5050, 1e-05
    %v5053 = vrsqrt.pop %v5051
    %v5054 = vrsqrt.pop %v5052
    %v5055 = vmul.f32 %v5041, %v5053
    %v5056 = vmul.f32 %v5042, %v5054
    %v5057 = vlaneseq
    %v5058 = vshrl.u32 %v5057, 7
    %v5059 = vsub.s32 0, %v5058
    %v5060 = vrot.slane %v5034, %v5059
    %v5061 = vmul.f32 %v5055, %v5060
    %v5062 = vmul.f32 %v5056, %v5060
    %v5063 = vlaneseq
    %v5064 = vshrl.u32 %v5063, 7
    %v5065 = vsub.s32 1, %v5064
    %v5066 = vrot.slane %v5034, %v5065
    %v5067 = vadd.f32 %v5061, %v5066
    %v5068 = vadd.f32 %v5062, %v5066
    %v5070 = vsel %vm569, %v171, 0
    %5072 = vmatprep.subr.mxu0 0.0
    %5073 = vmatpush1.msra.mxu0 0.0
    %5074 = vmatprep.subr.mxu0 0.0
    %5075 = vmatpush1.msra.mxu0 0.0
    %5076 = vmatprep.subr.mxu0 0.0
    %5077 = vmatpush1.msra.mxu0 0.0
    %5078 = vmatprep.subr.mxu0 0.0
    %5079 = vmatpush1.msra.mxu0 0.0
    %5080 = vmatprep.subr.mxu0 0.0
    %5081 = vmatpush1.msra.mxu0 0.0
    %5082 = vmatprep.subr.mxu0 0.0
    %5083 = vmatpush1.msra.mxu0 0.0
    %5084 = vmatprep.subr.mxu0 0.0
    %5085 = vmatpush1.msra.mxu0 0.0
    %5086 = vmatprep.subr.mxu0 0.0
    %5087 = vmatpush1.msra.mxu0 0.0
    %5088 = vmatprep.subr.mxu0 0.0
    %5089 = vmatpush1.msra.mxu0 0.0
    %5090 = vmatprep.subr.mxu0 0.0
    %5091 = vmatpush1.msra.mxu0 0.0
    %5092 = vmatprep.subr.mxu0 0.0
    %5093 = vmatpush1.msra.mxu0 0.0
    %5094 = vmatprep.subr.mxu0 0.0
    %5095 = vmatpush1.msra.mxu0 0.0
    %5096 = vmatprep.subr.mxu0 0.0
    %5097 = vmatpush1.msra.mxu0 0.0
    %5098 = vmatprep.subr.mxu0 0.0
    %5099 = vmatpush1.msra.mxu0 0.0
    %5100 = vmatprep.subr.mxu0 0.0
    %5101 = vmatpush1.msra.mxu0 %v5068
    %5102 = vmatprep.subr.mxu0 0.0
    %5103 = vmatpush1.msra.mxu0 %v5067
    %5104 = vmatprep.subr.mxu0 0.0
    %5105 = vmatpush2.msra.mxu0 0.0
    %5106 = vmatprep.subr.mxu0 0.0
    %5107 = vmatpush2.msra.mxu0 0.0
    %5108 = vmatprep.subr.mxu0 0.0
    %5109 = vmatpush2.msra.mxu0 0.0
    %5110 = vmatprep.subr.mxu0 0.0
    %5111 = vmatpush2.msra.mxu0 0.0
    %5112 = vmatprep.subr.mxu0 0.0
    %5113 = vmatpush2.msra.mxu0 0.0
    %5114 = vmatprep.subr.mxu0 0.0
    %5115 = vmatpush2.msra.mxu0 0.0
    %5116 = vmatprep.subr.mxu0 0.0
    %5117 = vmatpush2.msra.mxu0 0.0
    %5118 = vmatprep.subr.mxu0 0.0
    %5119 = vmatpush2.msra.mxu0 0.0
    %5120 = vmatprep.subr.mxu0 0.0
    %5121 = vmatpush2.msra.mxu0 0.0
    %5122 = vmatprep.subr.mxu0 0.0
    %5123 = vmatpush2.msra.mxu0 0.0
    %5124 = vmatprep.subr.mxu0 0.0
    %5125 = vmatpush2.msra.mxu0 0.0
    %5126 = vmatprep.subr.mxu0 0.0
    %5127 = vmatpush2.msra.mxu0 0.0
    %5128 = vmatprep.subr.mxu0 0.0
    %5129 = vmatpush2.msra.mxu0 0.0
    %5130 = vmatprep.subr.mxu0 0.0
    %5131 = vmatpush2.msra.mxu0 0.0
    %5132 = vmatprep.subr.mxu0 0.0
    %5133 = vmatpush2.msra.mxu0 0.0
    %5134 = vmatprep.subr.mxu0 0.0
    %5135 = vmatpush2.msra.mxu0 0.0
    %5136 = vmatprep.mubr.f32.mxu0 0.0
    %5137 = vmatmul.mubr.f32.gmra.mxu0 %v5070
    %v5138 = vpop.f32.mrf.mxu0
    %v5139 = vadd.f32 0.0, %v5138
    %v5140 = vpop.f32.mrf.mxu0
    %5141 = vdwg.mxu0
    %s5142 = scalar_lea.vmem %s10, 10
    %v5143 = vld [vmem:[%s5142] sm:$0x3]
    %v5144 = vsel %vm185, %v5139, 0.0
    %5145 = vadd.xlane.f32.xlu0 %v5144
    %v5146 = vpop.xlane.xlu0 %5145
    %v5147 = vmul.f32 %v5146, %v235
    %v5148 = vsub.f32 %v5139, %v5147
    %v5149 = vmul.f32 %v5148, %v5148
    %v5150 = vsel %vm185, %v5149, 0.0
    %5151 = vadd.xlane.f32.xlu0 %v5150
    %v5152 = vpop.xlane.xlu0 %5151
    %v5153 = vmul.f32 %v5152, %v235
    %v5154 = vadd.f32 %v5153, 1e-05
    %v5155 = vrsqrt.pop %v5154
    %v5156 = vmul.f32 %v5148, %v5155
    %v5157 = vlaneseq
    %v5158 = vshrl.u32 %v5157, 7
    %v5159 = vsub.s32 0, %v5158
    %v5160 = vrot.slane %v5143, %v5159
    %v5161 = vmul.f32 %v5156, %v5160
    %v5162 = vlaneseq
    %v5163 = vshrl.u32 %v5162, 7
    %v5164 = vsub.s32 1, %v5163
    %v5165 = vrot.slane %v5143, %v5164
    %v5166 = vadd.f32 %v5161, %v5165
    %s5167 = scalar_lea.vmem [#allocation11], 384
    %v5168 = vld [vmem:[%s5167] sm:$0xf]
    %v5169 = vld [vmem:[%s5167 + $0x4] sm:$0xf]
    %v5170 = vld [vmem:[%s5167 + $0x8] sm:$0xf]
    %v5171 = vld [vmem:[%s5167 + $0xc] sm:$0xf]
    %v5172 = vld [vmem:[%s5167 + $0x10] sm:$0xf]
    %v5173 = vld [vmem:[%s5167 + $0x14] sm:$0xf]
    %v5174 = vld [vmem:[%s5167 + $0x18] sm:$0xf]
    %v5175 = vld [vmem:[%s5167 + $0x1c] sm:$0xf]
    %v5176 = vld [vmem:[%s5167 + $0x20] sm:$0xf]
    %v5177 = vld [vmem:[%s5167 + $0x24] sm:$0xf]
    %v5178 = vld [vmem:[%s5167 + $0x28] sm:$0xf]
    %v5179 = vld [vmem:[%s5167 + $0x2c] sm:$0xf]
    %v5180 = vld [vmem:[%s5167 + $0x30] sm:$0xf]
    %v5181 = vld [vmem:[%s5167 + $0x34] sm:$0xf]
    %v5182 = vld [vmem:[%s5167 + $0x38] sm:$0xf]
    %v5183 = vld [vmem:[%s5167 + $0x3c] sm:$0xf]
    %s5184 = scalar_lea.vmem [#allocation11], 448
    %v5185 = vld [vmem:[%s5184] sm:$0xf]
    %v5186 = vld [vmem:[%s5184 + $0x4] sm:$0xf]
    %v5187 = vld [vmem:[%s5184 + $0x8] sm:$0xf]
    %v5188 = vld [vmem:[%s5184 + $0xc] sm:$0xf]
    %v5189 = vld [vmem:[%s5184 + $0x10] sm:$0xf]
    %v5190 = vld [vmem:[%s5184 + $0x14] sm:$0xf]
    %v5191 = vld [vmem:[%s5184 + $0x18] sm:$0xf]
    %v5192 = vld [vmem:[%s5184 + $0x1c] sm:$0xf]
    %v5193 = vld [vmem:[%s5184 + $0x20] sm:$0xf]
    %v5194 = vld [vmem:[%s5184 + $0x24] sm:$0xf]
    %v5195 = vld [vmem:[%s5184 + $0x28] sm:$0xf]
    %v5196 = vld [vmem:[%s5184 + $0x2c] sm:$0xf]
    %v5197 = vld [vmem:[%s5184 + $0x30] sm:$0xf]
    %v5198 = vld [vmem:[%s5184 + $0x34] sm:$0xf]
    %v5199 = vld [vmem:[%s5184 + $0x38] sm:$0xf]
    %v5200 = vld [vmem:[%s5184 + $0x3c] sm:$0xf]
    %s5201 = scalar_lea.vmem [#allocation11], 512
    %v5202 = vld [vmem:[%s5201] sm:$0xf]
    %v5203 = vld [vmem:[%s5201 + $0x4] sm:$0xf]
    %v5204 = vld [vmem:[%s5201 + $0x8] sm:$0xf]
    %v5205 = vld [vmem:[%s5201 + $0xc] sm:$0xf]
    %v5206 = vld [vmem:[%s5201 + $0x10] sm:$0xf]
    %v5207 = vld [vmem:[%s5201 + $0x14] sm:$0xf]
    %v5208 = vld [vmem:[%s5201 + $0x18] sm:$0xf]
    %v5209 = vld [vmem:[%s5201 + $0x1c] sm:$0xf]
    %v5210 = vld [vmem:[%s5201 + $0x20] sm:$0xf]
    %v5211 = vld [vmem:[%s5201 + $0x24] sm:$0xf]
    %v5212 = vld [vmem:[%s5201 + $0x28] sm:$0xf]
    %v5213 = vld [vmem:[%s5201 + $0x2c] sm:$0xf]
    %v5214 = vld [vmem:[%s5201 + $0x30] sm:$0xf]
    %v5215 = vld [vmem:[%s5201 + $0x34] sm:$0xf]
    %v5216 = vld [vmem:[%s5201 + $0x38] sm:$0xf]
    %v5217 = vld [vmem:[%s5201 + $0x3c] sm:$0xf]
    %v5218 = vpack.c.bf16 %v5166, %v5166
    %v5235 = vunpack.c.l.b16 %v5168
    %v5236 = vunpack.c.l.b16 %v5169
    %v5237 = vunpack.c.l.b16 %v5170
    %v5238 = vunpack.c.l.b16 %v5171
    %v5239 = vunpack.c.l.b16 %v5172
    %v5240 = vunpack.c.l.b16 %v5173
    %v5241 = vunpack.c.l.b16 %v5174
    %v5242 = vunpack.c.l.b16 %v5175
    %v5243 = vunpack.c.l.b16 %v5176
    %v5244 = vunpack.c.l.b16 %v5177
    %v5245 = vunpack.c.l.b16 %v5178
    %v5246 = vunpack.c.l.b16 %v5179
    %v5247 = vunpack.c.l.b16 %v5180
    %v5248 = vunpack.c.l.b16 %v5181
    %v5249 = vunpack.c.l.b16 %v5182
    %v5250 = vunpack.c.l.b16 %v5183
    %v5251 = vpack.c.b16 %v5236, %v5235
    %v5252 = vpack.c.b16 %v5238, %v5237
    %v5253 = vpack.c.b16 %v5240, %v5239
    %v5254 = vpack.c.b16 %v5242, %v5241
    %v5255 = vpack.c.b16 %v5244, %v5243
    %v5256 = vpack.c.b16 %v5246, %v5245
    %v5257 = vpack.c.b16 %v5248, %v5247
    %v5258 = vpack.c.b16 %v5250, %v5249
    %5267 = vmatprep.subr.bf16.mxu0 0
    %5268 = vmatpush1.bf16.msra.mxu0 %v5258
    %5269 = vmatprep.subr.bf16.mxu0 0
    %5270 = vmatpush1.bf16.msra.mxu0 %v5257
    %5271 = vmatprep.subr.bf16.mxu0 0
    %5272 = vmatpush1.bf16.msra.mxu0 %v5256
    %5273 = vmatprep.subr.bf16.mxu0 0
    %5274 = vmatpush1.bf16.msra.mxu0 %v5255
    %5275 = vmatprep.subr.bf16.mxu0 0
    %5276 = vmatpush1.bf16.msra.mxu0 %v5254
    %5277 = vmatprep.subr.bf16.mxu0 0
    %5278 = vmatpush1.bf16.msra.mxu0 %v5253
    %5279 = vmatprep.subr.bf16.mxu0 0
    %5280 = vmatpush1.bf16.msra.mxu0 %v5252
    %5281 = vmatprep.subr.bf16.mxu0 0
    %5282 = vmatpush1.bf16.msra.mxu0 %v5251
    %5283 = vmatprep.subr.bf16.mxu0 0
    %5284 = vmatpush2.bf16.msra.mxu0 0
    %5285 = vmatprep.subr.bf16.mxu0 0
    %5286 = vmatpush2.bf16.msra.mxu0 0
    %5287 = vmatprep.subr.bf16.mxu0 0
    %5288 = vmatpush2.bf16.msra.mxu0 0
    %5289 = vmatprep.subr.bf16.mxu0 0
    %5290 = vmatpush2.bf16.msra.mxu0 0
    %5291 = vmatprep.subr.bf16.mxu0 0
    %5292 = vmatpush2.bf16.msra.mxu0 0
    %5293 = vmatprep.subr.bf16.mxu0 0
    %5294 = vmatpush2.bf16.msra.mxu0 0
    %5295 = vmatprep.subr.bf16.mxu0 0
    %5296 = vmatpush2.bf16.msra.mxu0 0
    %5297 = vmatprep.subr.bf16.mxu0 0
    %5298 = vmatpush2.bf16.msra.mxu0 0
    %5299 = vmatprep.mubr.bf16.mxu0 0
    %5300 = vmatmul.mubr.bf16.gmra.mxu0 %v5218
    %v5301 = vpop.f32.mrf.mxu0
    %v5302 = vadd.f32 0.0, %v5301
    %v5303 = vpop.f32.mrf.mxu0
    %v5304 = vpop.f32.mrf.mxu0
    %v5305 = vpop.f32.mrf.mxu0
    %5306 = vdwg.mxu0
    %v5307 = vpack.c.bf16 %v5068, %v5067
    %v5324 = vunpack.c.l.b16 %v5185
    %v5325 = vunpack.c.l.b16 %v5186
    %v5326 = vunpack.c.l.b16 %v5187
    %v5327 = vunpack.c.l.b16 %v5188
    %v5328 = vunpack.c.l.b16 %v5189
    %v5329 = vunpack.c.l.b16 %v5190
    %v5330 = vunpack.c.l.b16 %v5191
    %v5331 = vunpack.c.l.b16 %v5192
    %v5332 = vunpack.c.l.b16 %v5193
    %v5333 = vunpack.c.l.b16 %v5194
    %v5334 = vunpack.c.l.b16 %v5195
    %v5335 = vunpack.c.l.b16 %v5196
    %v5336 = vunpack.c.l.b16 %v5197
    %v5337 = vunpack.c.l.b16 %v5198
    %v5338 = vunpack.c.l.b16 %v5199
    %v5339 = vunpack.c.l.b16 %v5200
    %v5340 = vpack.c.b16 %v5325, %v5324
    %v5341 = vpack.c.b16 %v5327, %v5326
    %v5342 = vpack.c.b16 %v5329, %v5328
    %v5343 = vpack.c.b16 %v5331, %v5330
    %v5344 = vpack.c.b16 %v5333, %v5332
    %v5345 = vpack.c.b16 %v5335, %v5334
    %v5346 = vpack.c.b16 %v5337, %v5336
    %v5347 = vpack.c.b16 %v5339, %v5338
    %5356 = vmatprep.subr.bf16.mxu0 0
    %5357 = vmatpush1.bf16.msra.mxu0 %v5347
    %5358 = vmatprep.subr.bf16.mxu0 0
    %5359 = vmatpush1.bf16.msra.mxu0 %v5346
    %5360 = vmatprep.subr.bf16.mxu0 0
    %5361 = vmatpush1.bf16.msra.mxu0 %v5345
    %5362 = vmatprep.subr.bf16.mxu0 0
    %5363 = vmatpush1.bf16.msra.mxu0 %v5344
    %5364 = vmatprep.subr.bf16.mxu0 0
    %5365 = vmatpush1.bf16.msra.mxu0 %v5343
    %5366 = vmatprep.subr.bf16.mxu0 0
    %5367 = vmatpush1.bf16.msra.mxu0 %v5342
    %5368 = vmatprep.subr.bf16.mxu0 0
    %5369 = vmatpush1.bf16.msra.mxu0 %v5341
    %5370 = vmatprep.subr.bf16.mxu0 0
    %5371 = vmatpush1.bf16.msra.mxu0 %v5340
    %5372 = vmatprep.subr.bf16.mxu0 0
    %5373 = vmatpush2.bf16.msra.mxu0 0
    %5374 = vmatprep.subr.bf16.mxu0 0
    %5375 = vmatpush2.bf16.msra.mxu0 0
    %5376 = vmatprep.subr.bf16.mxu0 0
    %5377 = vmatpush2.bf16.msra.mxu0 0
    %5378 = vmatprep.subr.bf16.mxu0 0
    %5379 = vmatpush2.bf16.msra.mxu0 0
    %5380 = vmatprep.subr.bf16.mxu0 0
    %5381 = vmatpush2.bf16.msra.mxu0 0
    %5382 = vmatprep.subr.bf16.mxu0 0
    %5383 = vmatpush2.bf16.msra.mxu0 0
    %5384 = vmatprep.subr.bf16.mxu0 0
    %5385 = vmatpush2.bf16.msra.mxu0 0
    %5386 = vmatprep.subr.bf16.mxu0 0
    %5387 = vmatpush2.bf16.msra.mxu0 0
    %5388 = vmatprep.mubr.bf16.mxu0 0
    %5389 = vmatmul.mubr.bf16.gmra.mxu0 %v5307
    %v5390 = vpop.f32.mrf.mxu0
    %v5391 = vadd.f32 0.0, %v5390
    %v5392 = vpop.f32.mrf.mxu0
    %v5393 = vpop.f32.mrf.mxu0
    %v5394 = vadd.f32 0.0, %v5393
    %v5395 = vpop.f32.mrf.mxu0
    %5396 = vdwg.mxu0
    %5398 = vrot.lane.b32.xlu0 %v5302, 112
    %v5399 = vpop.permute.xlu0 %5398
    %5400 = vrot.lane.b32.xlu0 %v5302, 96
    %v5401 = vpop.permute.xlu0 %5400
    %5402 = vrot.lane.b32.xlu0 %v5302, 80
    %v5403 = vpop.permute.xlu0 %5402
    %5404 = vrot.lane.b32.xlu0 %v5302, 64
    %v5405 = vpop.permute.xlu0 %5404
    %5406 = vrot.lane.b32.xlu0 %v5302, 48
    %v5407 = vpop.permute.xlu0 %5406
    %5408 = vrot.lane.b32.xlu0 %v5302, 32
    %v5409 = vpop.permute.xlu0 %5408
    %5410 = vrot.lane.b32.xlu0 %v5302, 16
    %v5411 = vpop.permute.xlu0 %5410
    %5414 = vrot.lane.b32.xlu0 %v5391, 112
    %v5415 = vpop.permute.xlu0 %5414
    %5416 = vrot.lane.b32.xlu0 %v5394, 112
    %v5417 = vpop.permute.xlu0 %5416
    %5420 = vrot.lane.b32.xlu0 %v5391, 96
    %v5421 = vpop.permute.xlu0 %5420
    %5422 = vrot.lane.b32.xlu0 %v5394, 96
    %v5423 = vpop.permute.xlu0 %5422
    %5426 = vrot.lane.b32.xlu0 %v5391, 80
    %v5427 = vpop.permute.xlu0 %5426
    %5428 = vrot.lane.b32.xlu0 %v5394, 80
    %v5429 = vpop.permute.xlu0 %5428
    %5432 = vrot.lane.b32.xlu0 %v5391, 64
    %v5433 = vpop.permute.xlu0 %5432
    %5434 = vrot.lane.b32.xlu0 %v5394, 64
    %v5435 = vpop.permute.xlu0 %5434
    %5438 = vrot.lane.b32.xlu0 %v5391, 48
    %v5439 = vpop.permute.xlu0 %5438
    %5440 = vrot.lane.b32.xlu0 %v5394, 48
    %v5441 = vpop.permute.xlu0 %5440
    %5444 = vrot.lane.b32.xlu0 %v5391, 32
    %v5445 = vpop.permute.xlu0 %5444
    %5446 = vrot.lane.b32.xlu0 %v5394, 32
    %v5447 = vpop.permute.xlu0 %5446
    %5450 = vrot.lane.b32.xlu0 %v5391, 16
    %v5451 = vpop.permute.xlu0 %5450
    %5452 = vrot.lane.b32.xlu0 %v5394, 16
    %v5453 = vpop.permute.xlu0 %5452
    %v5456 = vsel %vm569, %v5302, 0
    %v5458 = vsel %vm569, %v5391, 0
    %v5460 = vsel %vm569, %v5394, 0
    %5462 = vmatprep.subr.mxu0 0.0
    %5463 = vmatpush1.xpose.msra.mxu0 0.0
    %5464 = vmatprep.subr.mxu0 0.0
    %5465 = vmatpush1.xpose.msra.mxu0 0.0
    %5466 = vmatprep.subr.mxu0 0.0
    %5467 = vmatpush1.xpose.msra.mxu0 0.0
    %5468 = vmatprep.subr.mxu0 0.0
    %5469 = vmatpush1.xpose.msra.mxu0 0.0
    %5470 = vmatprep.subr.mxu0 0.0
    %5471 = vmatpush1.xpose.msra.mxu0 0.0
    %5472 = vmatprep.subr.mxu0 0.0
    %5473 = vmatpush1.xpose.msra.mxu0 0.0
    %5474 = vmatprep.subr.mxu0 0.0
    %5475 = vmatpush1.xpose.msra.mxu0 0.0
    %5476 = vmatprep.subr.mxu0 0.0
    %5477 = vmatpush1.xpose.msra.mxu0 0.0
    %5478 = vmatprep.subr.mxu0 0.0
    %5479 = vmatpush1.xpose.msra.mxu0 0.0
    %5480 = vmatprep.subr.mxu0 0.0
    %5481 = vmatpush1.xpose.msra.mxu0 0.0
    %5482 = vmatprep.subr.mxu0 0.0
    %5483 = vmatpush1.xpose.msra.mxu0 0.0
    %5484 = vmatprep.subr.mxu0 0.0
    %5485 = vmatpush1.xpose.msra.mxu0 0.0
    %5486 = vmatprep.subr.mxu0 0.0
    %5487 = vmatpush1.xpose.msra.mxu0 0.0
    %5488 = vmatprep.subr.mxu0 0.0
    %5489 = vmatpush1.xpose.msra.mxu0 0.0
    %5490 = vmatprep.subr.mxu0 0.0
    %5491 = vmatpush1.xpose.msra.mxu0 %v5460
    %5492 = vmatprep.subr.mxu0 0.0
    %5493 = vmatpush1.xpose.msra.mxu0 %v5458
    %5494 = vmatprep.subr.mxu0 0.0
    %5495 = vmatpush2.xpose.msra.mxu0 0.0
    %5496 = vmatprep.subr.mxu0 0.0
    %5497 = vmatpush2.xpose.msra.mxu0 0.0
    %5498 = vmatprep.subr.mxu0 0.0
    %5499 = vmatpush2.xpose.msra.mxu0 0.0
    %5500 = vmatprep.subr.mxu0 0.0
    %5501 = vmatpush2.xpose.msra.mxu0 0.0
    %5502 = vmatprep.subr.mxu0 0.0
    %5503 = vmatpush2.xpose.msra.mxu0 0.0
    %5504 = vmatprep.subr.mxu0 0.0
    %5505 = vmatpush2.xpose.msra.mxu0 0.0
    %5506 = vmatprep.subr.mxu0 0.0
    %5507 = vmatpush2.xpose.msra.mxu0 0.0
    %5508 = vmatprep.subr.mxu0 0.0
    %5509 = vmatpush2.xpose.msra.mxu0 0.0
    %5510 = vmatprep.subr.mxu0 0.0
    %5511 = vmatpush2.xpose.msra.mxu0 0.0
    %5512 = vmatprep.subr.mxu0 0.0
    %5513 = vmatpush2.xpose.msra.mxu0 0.0
    %5514 = vmatprep.subr.mxu0 0.0
    %5515 = vmatpush2.xpose.msra.mxu0 0.0
    %5516 = vmatprep.subr.mxu0 0.0
    %5517 = vmatpush2.xpose.msra.mxu0 0.0
    %5518 = vmatprep.subr.mxu0 0.0
    %5519 = vmatpush2.xpose.msra.mxu0 0.0
    %5520 = vmatprep.subr.mxu0 0.0
    %5521 = vmatpush2.xpose.msra.mxu0 0.0
    %5522 = vmatprep.subr.mxu0 0.0
    %5523 = vmatpush2.xpose.msra.mxu0 0.0
    %5524 = vmatprep.subr.mxu0 0.0
    %5525 = vmatpush2.xpose.msra.mxu0 0.0
    %5526 = vmatprep.mubr.f32.mxu0 0.0
    %5527 = vmatmul.mubr.f32.gmra.mxu0 %v5456
    %v5528 = vpop.f32.mrf.mxu0
    %v5529 = vadd.f32 0.0, %v5528
    %v5530 = vpop.f32.mrf.mxu0
    %5531 = vdwg.mxu0
    %v5532 = vsel %vm569, %v5399, 0
    %v5534 = vsel %vm569, %v5415, 0
    %v5536 = vsel %vm569, %v5417, 0
    %5538 = vmatprep.subr.mxu0 0.0
    %5539 = vmatpush1.xpose.msra.mxu0 0.0
    %5540 = vmatprep.subr.mxu0 0.0
    %5541 = vmatpush1.xpose.msra.mxu0 0.0
    %5542 = vmatprep.subr.mxu0 0.0
    %5543 = vmatpush1.xpose.msra.mxu0 0.0
    %5544 = vmatprep.subr.mxu0 0.0
    %5545 = vmatpush1.xpose.msra.mxu0 0.0
    %5546 = vmatprep.subr.mxu0 0.0
    %5547 = vmatpush1.xpose.msra.mxu0 0.0
    %5548 = vmatprep.subr.mxu0 0.0
    %5549 = vmatpush1.xpose.msra.mxu0 0.0
    %5550 = vmatprep.subr.mxu0 0.0
    %5551 = vmatpush1.xpose.msra.mxu0 0.0
    %5552 = vmatprep.subr.mxu0 0.0
    %5553 = vmatpush1.xpose.msra.mxu0 0.0
    %5554 = vmatprep.subr.mxu0 0.0
    %5555 = vmatpush1.xpose.msra.mxu0 0.0
    %5556 = vmatprep.subr.mxu0 0.0
    %5557 = vmatpush1.xpose.msra.mxu0 0.0
    %5558 = vmatprep.subr.mxu0 0.0
    %5559 = vmatpush1.xpose.msra.mxu0 0.0
    %5560 = vmatprep.subr.mxu0 0.0
    %5561 = vmatpush1.xpose.msra.mxu0 0.0
    %5562 = vmatprep.subr.mxu0 0.0
    %5563 = vmatpush1.xpose.msra.mxu0 0.0
    %5564 = vmatprep.subr.mxu0 0.0
    %5565 = vmatpush1.xpose.msra.mxu0 0.0
    %5566 = vmatprep.subr.mxu0 0.0
    %5567 = vmatpush1.xpose.msra.mxu0 %v5536
    %5568 = vmatprep.subr.mxu0 0.0
    %5569 = vmatpush1.xpose.msra.mxu0 %v5534
    %5570 = vmatprep.subr.mxu0 0.0
    %5571 = vmatpush2.xpose.msra.mxu0 0.0
    %5572 = vmatprep.subr.mxu0 0.0
    %5573 = vmatpush2.xpose.msra.mxu0 0.0
    %5574 = vmatprep.subr.mxu0 0.0
    %5575 = vmatpush2.xpose.msra.mxu0 0.0
    %5576 = vmatprep.subr.mxu0 0.0
    %5577 = vmatpush2.xpose.msra.mxu0 0.0
    %5578 = vmatprep.subr.mxu0 0.0
    %5579 = vmatpush2.xpose.msra.mxu0 0.0
    %5580 = vmatprep.subr.mxu0 0.0
    %5581 = vmatpush2.xpose.msra.mxu0 0.0
    %5582 = vmatprep.subr.mxu0 0.0
    %5583 = vmatpush2.xpose.msra.mxu0 0.0
    %5584 = vmatprep.subr.mxu0 0.0
    %5585 = vmatpush2.xpose.msra.mxu0 0.0
    %5586 = vmatprep.subr.mxu0 0.0
    %5587 = vmatpush2.xpose.msra.mxu0 0.0
    %5588 = vmatprep.subr.mxu0 0.0
    %5589 = vmatpush2.xpose.msra.mxu0 0.0
    %5590 = vmatprep.subr.mxu0 0.0
    %5591 = vmatpush2.xpose.msra.mxu0 0.0
    %5592 = vmatprep.subr.mxu0 0.0
    %5593 = vmatpush2.xpose.msra.mxu0 0.0
    %5594 = vmatprep.subr.mxu0 0.0
    %5595 = vmatpush2.xpose.msra.mxu0 0.0
    %5596 = vmatprep.subr.mxu0 0.0
    %5597 = vmatpush2.xpose.msra.mxu0 0.0
    %5598 = vmatprep.subr.mxu0 0.0
    %5599 = vmatpush2.xpose.msra.mxu0 0.0
    %5600 = vmatprep.subr.mxu0 0.0
    %5601 = vmatpush2.xpose.msra.mxu0 0.0
    %5602 = vmatprep.mubr.f32.mxu0 0.0
    %5603 = vmatmul.mubr.f32.gmra.mxu0 %v5532
    %v5604 = vpop.f32.mrf.mxu0
    %v5605 = vadd.f32 0.0, %v5604
    %v5606 = vpop.f32.mrf.mxu0
    %5607 = vdwg.mxu0
    %v5608 = vsel %vm569, %v5401, 0
    %v5610 = vsel %vm569, %v5421, 0
    %v5612 = vsel %vm569, %v5423, 0
    %5614 = vmatprep.subr.mxu0 0.0
    %5615 = vmatpush1.xpose.msra.mxu0 0.0
    %5616 = vmatprep.subr.mxu0 0.0
    %5617 = vmatpush1.xpose.msra.mxu0 0.0
    %5618 = vmatprep.subr.mxu0 0.0
    %5619 = vmatpush1.xpose.msra.mxu0 0.0
    %5620 = vmatprep.subr.mxu0 0.0
    %5621 = vmatpush1.xpose.msra.mxu0 0.0
    %5622 = vmatprep.subr.mxu0 0.0
    %5623 = vmatpush1.xpose.msra.mxu0 0.0
    %5624 = vmatprep.subr.mxu0 0.0
    %5625 = vmatpush1.xpose.msra.mxu0 0.0
    %5626 = vmatprep.subr.mxu0 0.0
    %5627 = vmatpush1.xpose.msra.mxu0 0.0
    %5628 = vmatprep.subr.mxu0 0.0
    %5629 = vmatpush1.xpose.msra.mxu0 0.0
    %5630 = vmatprep.subr.mxu0 0.0
    %5631 = vmatpush1.xpose.msra.mxu0 0.0
    %5632 = vmatprep.subr.mxu0 0.0
    %5633 = vmatpush1.xpose.msra.mxu0 0.0
    %5634 = vmatprep.subr.mxu0 0.0
    %5635 = vmatpush1.xpose.msra.mxu0 0.0
    %5636 = vmatprep.subr.mxu0 0.0
    %5637 = vmatpush1.xpose.msra.mxu0 0.0
    %5638 = vmatprep.subr.mxu0 0.0
    %5639 = vmatpush1.xpose.msra.mxu0 0.0
    %5640 = vmatprep.subr.mxu0 0.0
    %5641 = vmatpush1.xpose.msra.mxu0 0.0
    %5642 = vmatprep.subr.mxu0 0.0
    %5643 = vmatpush1.xpose.msra.mxu0 %v5612
    %5644 = vmatprep.subr.mxu0 0.0
    %5645 = vmatpush1.xpose.msra.mxu0 %v5610
    %5646 = vmatprep.subr.mxu0 0.0
    %5647 = vmatpush2.xpose.msra.mxu0 0.0
    %5648 = vmatprep.subr.mxu0 0.0
    %5649 = vmatpush2.xpose.msra.mxu0 0.0
    %5650 = vmatprep.subr.mxu0 0.0
    %5651 = vmatpush2.xpose.msra.mxu0 0.0
    %5652 = vmatprep.subr.mxu0 0.0
    %5653 = vmatpush2.xpose.msra.mxu0 0.0
    %5654 = vmatprep.subr.mxu0 0.0
    %5655 = vmatpush2.xpose.msra.mxu0 0.0
    %5656 = vmatprep.subr.mxu0 0.0
    %5657 = vmatpush2.xpose.msra.mxu0 0.0
    %5658 = vmatprep.subr.mxu0 0.0
    %5659 = vmatpush2.xpose.msra.mxu0 0.0
    %5660 = vmatprep.subr.mxu0 0.0
    %5661 = vmatpush2.xpose.msra.mxu0 0.0
    %5662 = vmatprep.subr.mxu0 0.0
    %5663 = vmatpush2.xpose.msra.mxu0 0.0
    %5664 = vmatprep.subr.mxu0 0.0
    %5665 = vmatpush2.xpose.msra.mxu0 0.0
    %5666 = vmatprep.subr.mxu0 0.0
    %5667 = vmatpush2.xpose.msra.mxu0 0.0
    %5668 = vmatprep.subr.mxu0 0.0
    %5669 = vmatpush2.xpose.msra.mxu0 0.0
    %5670 = vmatprep.subr.mxu0 0.0
    %5671 = vmatpush2.xpose.msra.mxu0 0.0
    %5672 = vmatprep.subr.mxu0 0.0
    %5673 = vmatpush2.xpose.msra.mxu0 0.0
    %5674 = vmatprep.subr.mxu0 0.0
    %5675 = vmatpush2.xpose.msra.mxu0 0.0
    %5676 = vmatprep.subr.mxu0 0.0
    %5677 = vmatpush2.xpose.msra.mxu0 0.0
    %5678 = vmatprep.mubr.f32.mxu0 0.0
    %5679 = vmatmul.mubr.f32.gmra.mxu0 %v5608
    %v5680 = vpop.f32.mrf.mxu0
    %v5681 = vadd.f32 0.0, %v5680
    %v5682 = vpop.f32.mrf.mxu0
    %5683 = vdwg.mxu0
    %v5684 = vsel %vm569, %v5403, 0
    %v5686 = vsel %vm569, %v5427, 0
    %v5688 = vsel %vm569, %v5429, 0
    %5690 = vmatprep.subr.mxu0 0.0
    %5691 = vmatpush1.xpose.msra.mxu0 0.0
    %5692 = vmatprep.subr.mxu0 0.0
    %5693 = vmatpush1.xpose.msra.mxu0 0.0
    %5694 = vmatprep.subr.mxu0 0.0
    %5695 = vmatpush1.xpose.msra.mxu0 0.0
    %5696 = vmatprep.subr.mxu0 0.0
    %5697 = vmatpush1.xpose.msra.mxu0 0.0
    %5698 = vmatprep.subr.mxu0 0.0
    %5699 = vmatpush1.xpose.msra.mxu0 0.0
    %5700 = vmatprep.subr.mxu0 0.0
    %5701 = vmatpush1.xpose.msra.mxu0 0.0
    %5702 = vmatprep.subr.mxu0 0.0
    %5703 = vmatpush1.xpose.msra.mxu0 0.0
    %5704 = vmatprep.subr.mxu0 0.0
    %5705 = vmatpush1.xpose.msra.mxu0 0.0
    %5706 = vmatprep.subr.mxu0 0.0
    %5707 = vmatpush1.xpose.msra.mxu0 0.0
    %5708 = vmatprep.subr.mxu0 0.0
    %5709 = vmatpush1.xpose.msra.mxu0 0.0
    %5710 = vmatprep.subr.mxu0 0.0
    %5711 = vmatpush1.xpose.msra.mxu0 0.0
    %5712 = vmatprep.subr.mxu0 0.0
    %5713 = vmatpush1.xpose.msra.mxu0 0.0
    %5714 = vmatprep.subr.mxu0 0.0
    %5715 = vmatpush1.xpose.msra.mxu0 0.0
    %5716 = vmatprep.subr.mxu0 0.0
    %5717 = vmatpush1.xpose.msra.mxu0 0.0
    %5718 = vmatprep.subr.mxu0 0.0
    %5719 = vmatpush1.xpose.msra.mxu0 %v5688
    %5720 = vmatprep.subr.mxu0 0.0
    %5721 = vmatpush1.xpose.msra.mxu0 %v5686
    %5722 = vmatprep.subr.mxu0 0.0
    %5723 = vmatpush2.xpose.msra.mxu0 0.0
    %5724 = vmatprep.subr.mxu0 0.0
    %5725 = vmatpush2.xpose.msra.mxu0 0.0
    %5726 = vmatprep.subr.mxu0 0.0
    %5727 = vmatpush2.xpose.msra.mxu0 0.0
    %5728 = vmatprep.subr.mxu0 0.0
    %5729 = vmatpush2.xpose.msra.mxu0 0.0
    %5730 = vmatprep.subr.mxu0 0.0
    %5731 = vmatpush2.xpose.msra.mxu0 0.0
    %5732 = vmatprep.subr.mxu0 0.0
    %5733 = vmatpush2.xpose.msra.mxu0 0.0
    %5734 = vmatprep.subr.mxu0 0.0
    %5735 = vmatpush2.xpose.msra.mxu0 0.0
    %5736 = vmatprep.subr.mxu0 0.0
    %5737 = vmatpush2.xpose.msra.mxu0 0.0
    %5738 = vmatprep.subr.mxu0 0.0
    %5739 = vmatpush2.xpose.msra.mxu0 0.0
    %5740 = vmatprep.subr.mxu0 0.0
    %5741 = vmatpush2.xpose.msra.mxu0 0.0
    %5742 = vmatprep.subr.mxu0 0.0
    %5743 = vmatpush2.xpose.msra.mxu0 0.0
    %5744 = vmatprep.subr.mxu0 0.0
    %5745 = vmatpush2.xpose.msra.mxu0 0.0
    %5746 = vmatprep.subr.mxu0 0.0
    %5747 = vmatpush2.xpose.msra.mxu0 0.0
    %5748 = vmatprep.subr.mxu0 0.0
    %5749 = vmatpush2.xpose.msra.mxu0 0.0
    %5750 = vmatprep.subr.mxu0 0.0
    %5751 = vmatpush2.xpose.msra.mxu0 0.0
    %5752 = vmatprep.subr.mxu0 0.0
    %5753 = vmatpush2.xpose.msra.mxu0 0.0
    %5754 = vmatprep.mubr.f32.mxu0 0.0
    %5755 = vmatmul.mubr.f32.gmra.mxu0 %v5684
    %v5756 = vpop.f32.mrf.mxu0
    %v5757 = vadd.f32 0.0, %v5756
    %v5758 = vpop.f32.mrf.mxu0
    %5759 = vdwg.mxu0
    %v5760 = vsel %vm569, %v5405, 0
    %v5762 = vsel %vm569, %v5433, 0
    %v5764 = vsel %vm569, %v5435, 0
    %5766 = vmatprep.subr.mxu0 0.0
    %5767 = vmatpush1.xpose.msra.mxu0 0.0
    %5768 = vmatprep.subr.mxu0 0.0
    %5769 = vmatpush1.xpose.msra.mxu0 0.0
    %5770 = vmatprep.subr.mxu0 0.0
    %5771 = vmatpush1.xpose.msra.mxu0 0.0
    %5772 = vmatprep.subr.mxu0 0.0
    %5773 = vmatpush1.xpose.msra.mxu0 0.0
    %5774 = vmatprep.subr.mxu0 0.0
    %5775 = vmatpush1.xpose.msra.mxu0 0.0
    %5776 = vmatprep.subr.mxu0 0.0
    %5777 = vmatpush1.xpose.msra.mxu0 0.0
    %5778 = vmatprep.subr.mxu0 0.0
    %5779 = vmatpush1.xpose.msra.mxu0 0.0
    %5780 = vmatprep.subr.mxu0 0.0
    %5781 = vmatpush1.xpose.msra.mxu0 0.0
    %5782 = vmatprep.subr.mxu0 0.0
    %5783 = vmatpush1.xpose.msra.mxu0 0.0
    %5784 = vmatprep.subr.mxu0 0.0
    %5785 = vmatpush1.xpose.msra.mxu0 0.0
    %5786 = vmatprep.subr.mxu0 0.0
    %5787 = vmatpush1.xpose.msra.mxu0 0.0
    %5788 = vmatprep.subr.mxu0 0.0
    %5789 = vmatpush1.xpose.msra.mxu0 0.0
    %5790 = vmatprep.subr.mxu0 0.0
    %5791 = vmatpush1.xpose.msra.mxu0 0.0
    %5792 = vmatprep.subr.mxu0 0.0
    %5793 = vmatpush1.xpose.msra.mxu0 0.0
    %5794 = vmatprep.subr.mxu0 0.0
    %5795 = vmatpush1.xpose.msra.mxu0 %v5764
    %5796 = vmatprep.subr.mxu0 0.0
    %5797 = vmatpush1.xpose.msra.mxu0 %v5762
    %5798 = vmatprep.subr.mxu0 0.0
    %5799 = vmatpush2.xpose.msra.mxu0 0.0
    %5800 = vmatprep.subr.mxu0 0.0
    %5801 = vmatpush2.xpose.msra.mxu0 0.0
    %5802 = vmatprep.subr.mxu0 0.0
    %5803 = vmatpush2.xpose.msra.mxu0 0.0
    %5804 = vmatprep.subr.mxu0 0.0
    %5805 = vmatpush2.xpose.msra.mxu0 0.0
    %5806 = vmatprep.subr.mxu0 0.0
    %5807 = vmatpush2.xpose.msra.mxu0 0.0
    %5808 = vmatprep.subr.mxu0 0.0
    %5809 = vmatpush2.xpose.msra.mxu0 0.0
    %5810 = vmatprep.subr.mxu0 0.0
    %5811 = vmatpush2.xpose.msra.mxu0 0.0
    %5812 = vmatprep.subr.mxu0 0.0
    %5813 = vmatpush2.xpose.msra.mxu0 0.0
    %5814 = vmatprep.subr.mxu0 0.0
    %5815 = vmatpush2.xpose.msra.mxu0 0.0
    %5816 = vmatprep.subr.mxu0 0.0
    %5817 = vmatpush2.xpose.msra.mxu0 0.0
    %5818 = vmatprep.subr.mxu0 0.0
    %5819 = vmatpush2.xpose.msra.mxu0 0.0
    %5820 = vmatprep.subr.mxu0 0.0
    %5821 = vmatpush2.xpose.msra.mxu0 0.0
    %5822 = vmatprep.subr.mxu0 0.0
    %5823 = vmatpush2.xpose.msra.mxu0 0.0
    %5824 = vmatprep.subr.mxu0 0.0
    %5825 = vmatpush2.xpose.msra.mxu0 0.0
    %5826 = vmatprep.subr.mxu0 0.0
    %5827 = vmatpush2.xpose.msra.mxu0 0.0
    %5828 = vmatprep.subr.mxu0 0.0
    %5829 = vmatpush2.xpose.msra.mxu0 0.0
    %5830 = vmatprep.mubr.f32.mxu0 0.0
    %5831 = vmatmul.mubr.f32.gmra.mxu0 %v5760
    %v5832 = vpop.f32.mrf.mxu0
    %v5833 = vadd.f32 0.0, %v5832
    %v5834 = vpop.f32.mrf.mxu0
    %5835 = vdwg.mxu0
    %v5836 = vsel %vm569, %v5407, 0
    %v5838 = vsel %vm569, %v5439, 0
    %v5840 = vsel %vm569, %v5441, 0
    %5842 = vmatprep.subr.mxu0 0.0
    %5843 = vmatpush1.xpose.msra.mxu0 0.0
    %5844 = vmatprep.subr.mxu0 0.0
    %5845 = vmatpush1.xpose.msra.mxu0 0.0
    %5846 = vmatprep.subr.mxu0 0.0
    %5847 = vmatpush1.xpose.msra.mxu0 0.0
    %5848 = vmatprep.subr.mxu0 0.0
    %5849 = vmatpush1.xpose.msra.mxu0 0.0
    %5850 = vmatprep.subr.mxu0 0.0
    %5851 = vmatpush1.xpose.msra.mxu0 0.0
    %5852 = vmatprep.subr.mxu0 0.0
    %5853 = vmatpush1.xpose.msra.mxu0 0.0
    %5854 = vmatprep.subr.mxu0 0.0
    %5855 = vmatpush1.xpose.msra.mxu0 0.0
    %5856 = vmatprep.subr.mxu0 0.0
    %5857 = vmatpush1.xpose.msra.mxu0 0.0
    %5858 = vmatprep.subr.mxu0 0.0
    %5859 = vmatpush1.xpose.msra.mxu0 0.0
    %5860 = vmatprep.subr.mxu0 0.0
    %5861 = vmatpush1.xpose.msra.mxu0 0.0
    %5862 = vmatprep.subr.mxu0 0.0
    %5863 = vmatpush1.xpose.msra.mxu0 0.0
    %5864 = vmatprep.subr.mxu0 0.0
    %5865 = vmatpush1.xpose.msra.mxu0 0.0
    %5866 = vmatprep.subr.mxu0 0.0
    %5867 = vmatpush1.xpose.msra.mxu0 0.0
    %5868 = vmatprep.subr.mxu0 0.0
    %5869 = vmatpush1.xpose.msra.mxu0 0.0
    %5870 = vmatprep.subr.mxu0 0.0
    %5871 = vmatpush1.xpose.msra.mxu0 %v5840
    %5872 = vmatprep.subr.mxu0 0.0
    %5873 = vmatpush1.xpose.msra.mxu0 %v5838
    %5874 = vmatprep.subr.mxu0 0.0
    %5875 = vmatpush2.xpose.msra.mxu0 0.0
    %5876 = vmatprep.subr.mxu0 0.0
    %5877 = vmatpush2.xpose.msra.mxu0 0.0
    %5878 = vmatprep.subr.mxu0 0.0
    %5879 = vmatpush2.xpose.msra.mxu0 0.0
    %5880 = vmatprep.subr.mxu0 0.0
    %5881 = vmatpush2.xpose.msra.mxu0 0.0
    %5882 = vmatprep.subr.mxu0 0.0
    %5883 = vmatpush2.xpose.msra.mxu0 0.0
    %5884 = vmatprep.subr.mxu0 0.0
    %5885 = vmatpush2.xpose.msra.mxu0 0.0
    %5886 = vmatprep.subr.mxu0 0.0
    %5887 = vmatpush2.xpose.msra.mxu0 0.0
    %5888 = vmatprep.subr.mxu0 0.0
    %5889 = vmatpush2.xpose.msra.mxu0 0.0
    %5890 = vmatprep.subr.mxu0 0.0
    %5891 = vmatpush2.xpose.msra.mxu0 0.0
    %5892 = vmatprep.subr.mxu0 0.0
    %5893 = vmatpush2.xpose.msra.mxu0 0.0
    %5894 = vmatprep.subr.mxu0 0.0
    %5895 = vmatpush2.xpose.msra.mxu0 0.0
    %5896 = vmatprep.subr.mxu0 0.0
    %5897 = vmatpush2.xpose.msra.mxu0 0.0
    %5898 = vmatprep.subr.mxu0 0.0
    %5899 = vmatpush2.xpose.msra.mxu0 0.0
    %5900 = vmatprep.subr.mxu0 0.0
    %5901 = vmatpush2.xpose.msra.mxu0 0.0
    %5902 = vmatprep.subr.mxu0 0.0
    %5903 = vmatpush2.xpose.msra.mxu0 0.0
    %5904 = vmatprep.subr.mxu0 0.0
    %5905 = vmatpush2.xpose.msra.mxu0 0.0
    %5906 = vmatprep.mubr.f32.mxu0 0.0
    %5907 = vmatmul.mubr.f32.gmra.mxu0 %v5836
    %v5908 = vpop.f32.mrf.mxu0
    %v5909 = vadd.f32 0.0, %v5908
    %v5910 = vpop.f32.mrf.mxu0
    %5911 = vdwg.mxu0
    %v5912 = vsel %vm569, %v5409, 0
    %v5914 = vsel %vm569, %v5445, 0
    %v5916 = vsel %vm569, %v5447, 0
    %5918 = vmatprep.subr.mxu0 0.0
    %5919 = vmatpush1.xpose.msra.mxu0 0.0
    %5920 = vmatprep.subr.mxu0 0.0
    %5921 = vmatpush1.xpose.msra.mxu0 0.0
    %5922 = vmatprep.subr.mxu0 0.0
    %5923 = vmatpush1.xpose.msra.mxu0 0.0
    %5924 = vmatprep.subr.mxu0 0.0
    %5925 = vmatpush1.xpose.msra.mxu0 0.0
    %5926 = vmatprep.subr.mxu0 0.0
    %5927 = vmatpush1.xpose.msra.mxu0 0.0
    %5928 = vmatprep.subr.mxu0 0.0
    %5929 = vmatpush1.xpose.msra.mxu0 0.0
    %5930 = vmatprep.subr.mxu0 0.0
    %5931 = vmatpush1.xpose.msra.mxu0 0.0
    %5932 = vmatprep.subr.mxu0 0.0
    %5933 = vmatpush1.xpose.msra.mxu0 0.0
    %5934 = vmatprep.subr.mxu0 0.0
    %5935 = vmatpush1.xpose.msra.mxu0 0.0
    %5936 = vmatprep.subr.mxu0 0.0
    %5937 = vmatpush1.xpose.msra.mxu0 0.0
    %5938 = vmatprep.subr.mxu0 0.0
    %5939 = vmatpush1.xpose.msra.mxu0 0.0
    %5940 = vmatprep.subr.mxu0 0.0
    %5941 = vmatpush1.xpose.msra.mxu0 0.0
    %5942 = vmatprep.subr.mxu0 0.0
    %5943 = vmatpush1.xpose.msra.mxu0 0.0
    %5944 = vmatprep.subr.mxu0 0.0
    %5945 = vmatpush1.xpose.msra.mxu0 0.0
    %5946 = vmatprep.subr.mxu0 0.0
    %5947 = vmatpush1.xpose.msra.mxu0 %v5916
    %5948 = vmatprep.subr.mxu0 0.0
    %5949 = vmatpush1.xpose.msra.mxu0 %v5914
    %5950 = vmatprep.subr.mxu0 0.0
    %5951 = vmatpush2.xpose.msra.mxu0 0.0
    %5952 = vmatprep.subr.mxu0 0.0
    %5953 = vmatpush2.xpose.msra.mxu0 0.0
    %5954 = vmatprep.subr.mxu0 0.0
    %5955 = vmatpush2.xpose.msra.mxu0 0.0
    %5956 = vmatprep.subr.mxu0 0.0
    %5957 = vmatpush2.xpose.msra.mxu0 0.0
    %5958 = vmatprep.subr.mxu0 0.0
    %5959 = vmatpush2.xpose.msra.mxu0 0.0
    %5960 = vmatprep.subr.mxu0 0.0
    %5961 = vmatpush2.xpose.msra.mxu0 0.0
    %5962 = vmatprep.subr.mxu0 0.0
    %5963 = vmatpush2.xpose.msra.mxu0 0.0
    %5964 = vmatprep.subr.mxu0 0.0
    %5965 = vmatpush2.xpose.msra.mxu0 0.0
    %5966 = vmatprep.subr.mxu0 0.0
    %5967 = vmatpush2.xpose.msra.mxu0 0.0
    %5968 = vmatprep.subr.mxu0 0.0
    %5969 = vmatpush2.xpose.msra.mxu0 0.0
    %5970 = vmatprep.subr.mxu0 0.0
    %5971 = vmatpush2.xpose.msra.mxu0 0.0
    %5972 = vmatprep.subr.mxu0 0.0
    %5973 = vmatpush2.xpose.msra.mxu0 0.0
    %5974 = vmatprep.subr.mxu0 0.0
    %5975 = vmatpush2.xpose.msra.mxu0 0.0
    %5976 = vmatprep.subr.mxu0 0.0
    %5977 = vmatpush2.xpose.msra.mxu0 0.0
    %5978 = vmatprep.subr.mxu0 0.0
    %5979 = vmatpush2.xpose.msra.mxu0 0.0
    %5980 = vmatprep.subr.mxu0 0.0
    %5981 = vmatpush2.xpose.msra.mxu0 0.0
    %5982 = vmatprep.mubr.f32.mxu0 0.0
    %5983 = vmatmul.mubr.f32.gmra.mxu0 %v5912
    %v5984 = vpop.f32.mrf.mxu0
    %v5985 = vadd.f32 0.0, %v5984
    %v5986 = vpop.f32.mrf.mxu0
    %5987 = vdwg.mxu0
    %v5988 = vsel %vm569, %v5411, 0
    %v5990 = vsel %vm569, %v5451, 0
    %v5992 = vsel %vm569, %v5453, 0
    %5994 = vmatprep.subr.mxu0 0.0
    %5995 = vmatpush1.xpose.msra.mxu0 0.0
    %5996 = vmatprep.subr.mxu0 0.0
    %5997 = vmatpush1.xpose.msra.mxu0 0.0
    %5998 = vmatprep.subr.mxu0 0.0
    %5999 = vmatpush1.xpose.msra.mxu0 0.0
    %6000 = vmatprep.subr.mxu0 0.0
    %6001 = vmatpush1.xpose.msra.mxu0 0.0
    %6002 = vmatprep.subr.mxu0 0.0
    %6003 = vmatpush1.xpose.msra.mxu0 0.0
    %6004 = vmatprep.subr.mxu0 0.0
    %6005 = vmatpush1.xpose.msra.mxu0 0.0
    %6006 = vmatprep.subr.mxu0 0.0
    %6007 = vmatpush1.xpose.msra.mxu0 0.0
    %6008 = vmatprep.subr.mxu0 0.0
    %6009 = vmatpush1.xpose.msra.mxu0 0.0
    %6010 = vmatprep.subr.mxu0 0.0
    %6011 = vmatpush1.xpose.msra.mxu0 0.0
    %6012 = vmatprep.subr.mxu0 0.0
    %6013 = vmatpush1.xpose.msra.mxu0 0.0
    %6014 = vmatprep.subr.mxu0 0.0
    %6015 = vmatpush1.xpose.msra.mxu0 0.0
    %6016 = vmatprep.subr.mxu0 0.0
    %6017 = vmatpush1.xpose.msra.mxu0 0.0
    %6018 = vmatprep.subr.mxu0 0.0
    %6019 = vmatpush1.xpose.msra.mxu0 0.0
    %6020 = vmatprep.subr.mxu0 0.0
    %6021 = vmatpush1.xpose.msra.mxu0 0.0
    %6022 = vmatprep.subr.mxu0 0.0
    %6023 = vmatpush1.xpose.msra.mxu0 %v5992
    %6024 = vmatprep.subr.mxu0 0.0
    %6025 = vmatpush1.xpose.msra.mxu0 %v5990
    %6026 = vmatprep.subr.mxu0 0.0
    %6027 = vmatpush2.xpose.msra.mxu0 0.0
    %6028 = vmatprep.subr.mxu0 0.0
    %6029 = vmatpush2.xpose.msra.mxu0 0.0
    %6030 = vmatprep.subr.mxu0 0.0
    %6031 = vmatpush2.xpose.msra.mxu0 0.0
    %6032 = vmatprep.subr.mxu0 0.0
    %6033 = vmatpush2.xpose.msra.mxu0 0.0
    %6034 = vmatprep.subr.mxu0 0.0
    %6035 = vmatpush2.xpose.msra.mxu0 0.0
    %6036 = vmatprep.subr.mxu0 0.0
    %6037 = vmatpush2.xpose.msra.mxu0 0.0
    %6038 = vmatprep.subr.mxu0 0.0
    %6039 = vmatpush2.xpose.msra.mxu0 0.0
    %6040 = vmatprep.subr.mxu0 0.0
    %6041 = vmatpush2.xpose.msra.mxu0 0.0
    %6042 = vmatprep.subr.mxu0 0.0
    %6043 = vmatpush2.xpose.msra.mxu0 0.0
    %6044 = vmatprep.subr.mxu0 0.0
    %6045 = vmatpush2.xpose.msra.mxu0 0.0
    %6046 = vmatprep.subr.mxu0 0.0
    %6047 = vmatpush2.xpose.msra.mxu0 0.0
    %6048 = vmatprep.subr.mxu0 0.0
    %6049 = vmatpush2.xpose.msra.mxu0 0.0
    %6050 = vmatprep.subr.mxu0 0.0
    %6051 = vmatpush2.xpose.msra.mxu0 0.0
    %6052 = vmatprep.subr.mxu0 0.0
    %6053 = vmatpush2.xpose.msra.mxu0 0.0
    %6054 = vmatprep.subr.mxu0 0.0
    %6055 = vmatpush2.xpose.msra.mxu0 0.0
    %6056 = vmatprep.subr.mxu0 0.0
    %6057 = vmatpush2.xpose.msra.mxu0 0.0
    %6058 = vmatprep.mubr.f32.mxu0 0.0
    %6059 = vmatmul.mubr.f32.gmra.mxu0 %v5988
    %v6060 = vpop.f32.mrf.mxu0
    %v6061 = vadd.f32 0.0, %v6060
    %v6062 = vpop.f32.mrf.mxu0
    %6063 = vdwg.mxu0
    %v6064 = vmul.f32 %v5529, %v169
    %v6065 = vmul.f32 %v5605, %v169
    %v6066 = vmul.f32 %v5681, %v169
    %v6067 = vmul.f32 %v5757, %v169
    %v6068 = vmul.f32 %v5833, %v169
    %v6069 = vmul.f32 %v5909, %v169
    %v6070 = vmul.f32 %v5985, %v169
    %v6071 = vmul.f32 %v6061, %v169
    %v6072 = vadd.f32 %v6064, %v170
    %v6073 = vadd.f32 %v6065, %v170
    %v6074 = vadd.f32 %v6066, %v170
    %v6075 = vadd.f32 %v6067, %v170
    %v6076 = vadd.f32 %v6068, %v170
    %v6077 = vadd.f32 %v6069, %v170
    %v6078 = vadd.f32 %v6070, %v170
    %v6079 = vadd.f32 %v6071, %v170
    %vm6080 = vcmask 123904
    %v6081 = vsel %vm6080, %v6072, -inf
    %6082 = vmax.xlane.f32.xlu0 %v6081
    %v6083 = vpop.xlane.xlu0 %6082
    %v6084 = vsel %vm6080, %v6073, -inf
    %6085 = vmax.xlane.f32.xlu0 %v6084
    %v6086 = vpop.xlane.xlu0 %6085
    %v6087 = vsel %vm6080, %v6074, -inf
    %6088 = vmax.xlane.f32.xlu0 %v6087
    %v6089 = vpop.xlane.xlu0 %6088
    %v6090 = vsel %vm6080, %v6075, -inf
    %6091 = vmax.xlane.f32.xlu0 %v6090
    %v6092 = vpop.xlane.xlu0 %6091
    %v6093 = vsel %vm6080, %v6076, -inf
    %6094 = vmax.xlane.f32.xlu0 %v6093
    %v6095 = vpop.xlane.xlu0 %6094
    %v6096 = vsel %vm6080, %v6077, -inf
    %6097 = vmax.xlane.f32.xlu0 %v6096
    %v6098 = vpop.xlane.xlu0 %6097
    %v6099 = vsel %vm6080, %v6078, -inf
    %6100 = vmax.xlane.f32.xlu0 %v6099
    %v6101 = vpop.xlane.xlu0 %6100
    %v6102 = vsel %vm6080, %v6079, -inf
    %6103 = vmax.xlane.f32.xlu0 %v6102
    %v6104 = vpop.xlane.xlu0 %6103
    %v6105 = vsub.f32 %v6072, %v6083
    %v6106 = vsub.f32 %v6073, %v6086
    %v6107 = vsub.f32 %v6074, %v6089
    %v6108 = vsub.f32 %v6075, %v6092
    %v6109 = vsub.f32 %v6076, %v6095
    %v6110 = vsub.f32 %v6077, %v6098
    %v6111 = vsub.f32 %v6078, %v6101
    %v6112 = vsub.f32 %v6079, %v6104
    %v6113 = vmul.f32 %v6105, 1.442695
    %v6114 = vpow.pop %v6113
    %v6115 = vmul.f32 %v6106, 1.442695
    %v6116 = vpow.pop %v6115
    %v6117 = vmul.f32 %v6107, 1.442695
    %v6118 = vpow.pop %v6117
    %v6119 = vmul.f32 %v6108, 1.442695
    %v6120 = vpow.pop %v6119
    %v6121 = vmul.f32 %v6109, 1.442695
    %v6122 = vpow.pop %v6121
    %v6123 = vmul.f32 %v6110, 1.442695
    %v6124 = vpow.pop %v6123
    %v6125 = vmul.f32 %v6111, 1.442695
    %v6126 = vpow.pop %v6125
    %v6127 = vmul.f32 %v6112, 1.442695
    %v6128 = vpow.pop %v6127
    %v6129 = vsel %vm6080, %v6114, 0.0
    %6130 = vadd.xlane.f32.xlu0 %v6129
    %v6131 = vpop.xlane.xlu0 %6130
    %v6132 = vsel %vm6080, %v6116, 0.0
    %6133 = vadd.xlane.f32.xlu0 %v6132
    %v6134 = vpop.xlane.xlu0 %6133
    %v6135 = vsel %vm6080, %v6118, 0.0
    %6136 = vadd.xlane.f32.xlu0 %v6135
    %v6137 = vpop.xlane.xlu0 %6136
    %v6138 = vsel %vm6080, %v6120, 0.0
    %6139 = vadd.xlane.f32.xlu0 %v6138
    %v6140 = vpop.xlane.xlu0 %6139
    %v6141 = vsel %vm6080, %v6122, 0.0
    %6142 = vadd.xlane.f32.xlu0 %v6141
    %v6143 = vpop.xlane.xlu0 %6142
    %v6144 = vsel %vm6080, %v6124, 0.0
    %6145 = vadd.xlane.f32.xlu0 %v6144
    %v6146 = vpop.xlane.xlu0 %6145
    %v6147 = vsel %vm6080, %v6126, 0.0
    %6148 = vadd.xlane.f32.xlu0 %v6147
    %v6149 = vpop.xlane.xlu0 %6148
    %v6150 = vsel %vm6080, %v6128, 0.0
    %6151 = vadd.xlane.f32.xlu0 %v6150
    %v6152 = vpop.xlane.xlu0 %6151
    %v6153 = vrcp.pop %v6131
    %v6154 = vrcp.pop %v6134
    %v6155 = vrcp.pop %v6137
    %v6156 = vrcp.pop %v6140
    %v6157 = vrcp.pop %v6143
    %v6158 = vrcp.pop %v6146
    %v6159 = vrcp.pop %v6149
    %v6160 = vrcp.pop %v6152
    %v6161 = vmul.f32 %v6114, %v6153
    %v6162 = vmul.f32 %v6116, %v6154
    %v6163 = vmul.f32 %v6118, %v6155
    %v6164 = vmul.f32 %v6120, %v6156
    %v6165 = vmul.f32 %v6122, %v6157
    %v6166 = vmul.f32 %v6124, %v6158
    %v6167 = vmul.f32 %v6126, %v6159
    %v6168 = vmul.f32 %v6128, %v6160
    %v6170 = vsel %vm569, %v6161, 0
    %6172 = vmatprep.subr.mxu0 0.0
    %6173 = vmatpush1.msra.mxu0 0.0
    %6174 = vmatprep.subr.mxu0 0.0
    %6175 = vmatpush1.msra.mxu0 0.0
    %6176 = vmatprep.subr.mxu0 0.0
    %6177 = vmatpush1.msra.mxu0 0.0
    %6178 = vmatprep.subr.mxu0 0.0
    %6179 = vmatpush1.msra.mxu0 0.0
    %6180 = vmatprep.subr.mxu0 0.0
    %6181 = vmatpush1.msra.mxu0 0.0
    %6182 = vmatprep.subr.mxu0 0.0
    %6183 = vmatpush1.msra.mxu0 0.0
    %6184 = vmatprep.subr.mxu0 0.0
    %6185 = vmatpush1.msra.mxu0 0.0
    %6186 = vmatprep.subr.mxu0 0.0
    %6187 = vmatpush1.msra.mxu0 0.0
    %6188 = vmatprep.subr.mxu0 0.0
    %6189 = vmatpush1.msra.mxu0 0.0
    %6190 = vmatprep.subr.mxu0 0.0
    %6191 = vmatpush1.msra.mxu0 0.0
    %6192 = vmatprep.subr.mxu0 0.0
    %6193 = vmatpush1.msra.mxu0 0.0
    %6194 = vmatprep.subr.mxu0 0.0
    %6195 = vmatpush1.msra.mxu0 0.0
    %6196 = vmatprep.subr.mxu0 0.0
    %6197 = vmatpush1.msra.mxu0 0.0
    %6198 = vmatprep.subr.mxu0 0.0
    %6199 = vmatpush1.msra.mxu0 0.0
    %6200 = vmatprep.subr.mxu0 0.0
    %6201 = vmatpush1.msra.mxu0 %v5394
    %6202 = vmatprep.subr.mxu0 0.0
    %6203 = vmatpush1.msra.mxu0 %v5391
    %6204 = vmatprep.subr.mxu0 0.0
    %6205 = vmatpush2.msra.mxu0 0.0
    %6206 = vmatprep.subr.mxu0 0.0
    %6207 = vmatpush2.msra.mxu0 0.0
    %6208 = vmatprep.subr.mxu0 0.0
    %6209 = vmatpush2.msra.mxu0 0.0
    %6210 = vmatprep.subr.mxu0 0.0
    %6211 = vmatpush2.msra.mxu0 0.0
    %6212 = vmatprep.subr.mxu0 0.0
    %6213 = vmatpush2.msra.mxu0 0.0
    %6214 = vmatprep.subr.mxu0 0.0
    %6215 = vmatpush2.msra.mxu0 0.0
    %6216 = vmatprep.subr.mxu0 0.0
    %6217 = vmatpush2.msra.mxu0 0.0
    %6218 = vmatprep.subr.mxu0 0.0
    %6219 = vmatpush2.msra.mxu0 0.0
    %6220 = vmatprep.subr.mxu0 0.0
    %6221 = vmatpush2.msra.mxu0 0.0
    %6222 = vmatprep.subr.mxu0 0.0
    %6223 = vmatpush2.msra.mxu0 0.0
    %6224 = vmatprep.subr.mxu0 0.0
    %6225 = vmatpush2.msra.mxu0 0.0
    %6226 = vmatprep.subr.mxu0 0.0
    %6227 = vmatpush2.msra.mxu0 0.0
    %6228 = vmatprep.subr.mxu0 0.0
    %6229 = vmatpush2.msra.mxu0 0.0
    %6230 = vmatprep.subr.mxu0 0.0
    %6231 = vmatpush2.msra.mxu0 0.0
    %6232 = vmatprep.subr.mxu0 0.0
    %6233 = vmatpush2.msra.mxu0 0.0
    %6234 = vmatprep.subr.mxu0 0.0
    %6235 = vmatpush2.msra.mxu0 0.0
    %6236 = vmatprep.mubr.f32.mxu0 0.0
    %6237 = vmatmul.mubr.f32.gmra.mxu0 %v6170
    %v6238 = vpop.f32.mrf.mxu0
    %v6239 = vadd.f32 0.0, %v6238
    %v6240 = vpop.f32.mrf.mxu0
    %6241 = vdwg.mxu0
    %v6243 = vsel %vm569, %v6162, 0
    %6245 = vmatprep.subr.mxu0 0.0
    %6246 = vmatpush1.msra.mxu0 0.0
    %6247 = vmatprep.subr.mxu0 0.0
    %6248 = vmatpush1.msra.mxu0 0.0
    %6249 = vmatprep.subr.mxu0 0.0
    %6250 = vmatpush1.msra.mxu0 0.0
    %6251 = vmatprep.subr.mxu0 0.0
    %6252 = vmatpush1.msra.mxu0 0.0
    %6253 = vmatprep.subr.mxu0 0.0
    %6254 = vmatpush1.msra.mxu0 0.0
    %6255 = vmatprep.subr.mxu0 0.0
    %6256 = vmatpush1.msra.mxu0 0.0
    %6257 = vmatprep.subr.mxu0 0.0
    %6258 = vmatpush1.msra.mxu0 0.0
    %6259 = vmatprep.subr.mxu0 0.0
    %6260 = vmatpush1.msra.mxu0 0.0
    %6261 = vmatprep.subr.mxu0 0.0
    %6262 = vmatpush1.msra.mxu0 0.0
    %6263 = vmatprep.subr.mxu0 0.0
    %6264 = vmatpush1.msra.mxu0 0.0
    %6265 = vmatprep.subr.mxu0 0.0
    %6266 = vmatpush1.msra.mxu0 0.0
    %6267 = vmatprep.subr.mxu0 0.0
    %6268 = vmatpush1.msra.mxu0 0.0
    %6269 = vmatprep.subr.mxu0 0.0
    %6270 = vmatpush1.msra.mxu0 0.0
    %6271 = vmatprep.subr.mxu0 0.0
    %6272 = vmatpush1.msra.mxu0 0.0
    %6273 = vmatprep.subr.mxu0 0.0
    %6274 = vmatpush1.msra.mxu0 %v5417
    %6275 = vmatprep.subr.mxu0 0.0
    %6276 = vmatpush1.msra.mxu0 %v5415
    %6277 = vmatprep.subr.mxu0 0.0
    %6278 = vmatpush2.msra.mxu0 0.0
    %6279 = vmatprep.subr.mxu0 0.0
    %6280 = vmatpush2.msra.mxu0 0.0
    %6281 = vmatprep.subr.mxu0 0.0
    %6282 = vmatpush2.msra.mxu0 0.0
    %6283 = vmatprep.subr.mxu0 0.0
    %6284 = vmatpush2.msra.mxu0 0.0
    %6285 = vmatprep.subr.mxu0 0.0
    %6286 = vmatpush2.msra.mxu0 0.0
    %6287 = vmatprep.subr.mxu0 0.0
    %6288 = vmatpush2.msra.mxu0 0.0
    %6289 = vmatprep.subr.mxu0 0.0
    %6290 = vmatpush2.msra.mxu0 0.0
    %6291 = vmatprep.subr.mxu0 0.0
    %6292 = vmatpush2.msra.mxu0 0.0
    %6293 = vmatprep.subr.mxu0 0.0
    %6294 = vmatpush2.msra.mxu0 0.0
    %6295 = vmatprep.subr.mxu0 0.0
    %6296 = vmatpush2.msra.mxu0 0.0
    %6297 = vmatprep.subr.mxu0 0.0
    %6298 = vmatpush2.msra.mxu0 0.0
    %6299 = vmatprep.subr.mxu0 0.0
    %6300 = vmatpush2.msra.mxu0 0.0
    %6301 = vmatprep.subr.mxu0 0.0
    %6302 = vmatpush2.msra.mxu0 0.0
    %6303 = vmatprep.subr.mxu0 0.0
    %6304 = vmatpush2.msra.mxu0 0.0
    %6305 = vmatprep.subr.mxu0 0.0
    %6306 = vmatpush2.msra.mxu0 0.0
    %6307 = vmatprep.subr.mxu0 0.0
    %6308 = vmatpush2.msra.mxu0 0.0
    %6309 = vmatprep.mubr.f32.mxu0 0.0
    %6310 = vmatmul.mubr.f32.gmra.mxu0 %v6243
    %v6311 = vpop.f32.mrf.mxu0
    %v6312 = vadd.f32 0.0, %v6311
    %v6313 = vpop.f32.mrf.mxu0
    %6314 = vdwg.mxu0
    %v6316 = vsel %vm569, %v6163, 0
    %6318 = vmatprep.subr.mxu0 0.0
    %6319 = vmatpush1.msra.mxu0 0.0
    %6320 = vmatprep.subr.mxu0 0.0
    %6321 = vmatpush1.msra.mxu0 0.0
    %6322 = vmatprep.subr.mxu0 0.0
    %6323 = vmatpush1.msra.mxu0 0.0
    %6324 = vmatprep.subr.mxu0 0.0
    %6325 = vmatpush1.msra.mxu0 0.0
    %6326 = vmatprep.subr.mxu0 0.0
    %6327 = vmatpush1.msra.mxu0 0.0
    %6328 = vmatprep.subr.mxu0 0.0
    %6329 = vmatpush1.msra.mxu0 0.0
    %6330 = vmatprep.subr.mxu0 0.0
    %6331 = vmatpush1.msra.mxu0 0.0
    %6332 = vmatprep.subr.mxu0 0.0
    %6333 = vmatpush1.msra.mxu0 0.0
    %6334 = vmatprep.subr.mxu0 0.0
    %6335 = vmatpush1.msra.mxu0 0.0
    %6336 = vmatprep.subr.mxu0 0.0
    %6337 = vmatpush1.msra.mxu0 0.0
    %6338 = vmatprep.subr.mxu0 0.0
    %6339 = vmatpush1.msra.mxu0 0.0
    %6340 = vmatprep.subr.mxu0 0.0
    %6341 = vmatpush1.msra.mxu0 0.0
    %6342 = vmatprep.subr.mxu0 0.0
    %6343 = vmatpush1.msra.mxu0 0.0
    %6344 = vmatprep.subr.mxu0 0.0
    %6345 = vmatpush1.msra.mxu0 0.0
    %6346 = vmatprep.subr.mxu0 0.0
    %6347 = vmatpush1.msra.mxu0 %v5423
    %6348 = vmatprep.subr.mxu0 0.0
    %6349 = vmatpush1.msra.mxu0 %v5421
    %6350 = vmatprep.subr.mxu0 0.0
    %6351 = vmatpush2.msra.mxu0 0.0
    %6352 = vmatprep.subr.mxu0 0.0
    %6353 = vmatpush2.msra.mxu0 0.0
    %6354 = vmatprep.subr.mxu0 0.0
    %6355 = vmatpush2.msra.mxu0 0.0
    %6356 = vmatprep.subr.mxu0 0.0
    %6357 = vmatpush2.msra.mxu0 0.0
    %6358 = vmatprep.subr.mxu0 0.0
    %6359 = vmatpush2.msra.mxu0 0.0
    %6360 = vmatprep.subr.mxu0 0.0
    %6361 = vmatpush2.msra.mxu0 0.0
    %6362 = vmatprep.subr.mxu0 0.0
    %6363 = vmatpush2.msra.mxu0 0.0
    %6364 = vmatprep.subr.mxu0 0.0
    %6365 = vmatpush2.msra.mxu0 0.0
    %6366 = vmatprep.subr.mxu0 0.0
    %6367 = vmatpush2.msra.mxu0 0.0
    %6368 = vmatprep.subr.mxu0 0.0
    %6369 = vmatpush2.msra.mxu0 0.0
    %6370 = vmatprep.subr.mxu0 0.0
    %6371 = vmatpush2.msra.mxu0 0.0
    %6372 = vmatprep.subr.mxu0 0.0
    %6373 = vmatpush2.msra.mxu0 0.0
    %6374 = vmatprep.subr.mxu0 0.0
    %6375 = vmatpush2.msra.mxu0 0.0
    %6376 = vmatprep.subr.mxu0 0.0
    %6377 = vmatpush2.msra.mxu0 0.0
    %6378 = vmatprep.subr.mxu0 0.0
    %6379 = vmatpush2.msra.mxu0 0.0
    %6380 = vmatprep.subr.mxu0 0.0
    %6381 = vmatpush2.msra.mxu0 0.0
    %6382 = vmatprep.mubr.f32.mxu0 0.0
    %6383 = vmatmul.mubr.f32.gmra.mxu0 %v6316
    %v6384 = vpop.f32.mrf.mxu0
    %v6385 = vadd.f32 0.0, %v6384
    %v6386 = vpop.f32.mrf.mxu0
    %6387 = vdwg.mxu0
    %v6389 = vsel %vm569, %v6164, 0
    %6391 = vmatprep.subr.mxu0 0.0
    %6392 = vmatpush1.msra.mxu0 0.0
    %6393 = vmatprep.subr.mxu0 0.0
    %6394 = vmatpush1.msra.mxu0 0.0
    %6395 = vmatprep.subr.mxu0 0.0
    %6396 = vmatpush1.msra.mxu0 0.0
    %6397 = vmatprep.subr.mxu0 0.0
    %6398 = vmatpush1.msra.mxu0 0.0
    %6399 = vmatprep.subr.mxu0 0.0
    %6400 = vmatpush1.msra.mxu0 0.0
    %6401 = vmatprep.subr.mxu0 0.0
    %6402 = vmatpush1.msra.mxu0 0.0
    %6403 = vmatprep.subr.mxu0 0.0
    %6404 = vmatpush1.msra.mxu0 0.0
    %6405 = vmatprep.subr.mxu0 0.0
    %6406 = vmatpush1.msra.mxu0 0.0
    %6407 = vmatprep.subr.mxu0 0.0
    %6408 = vmatpush1.msra.mxu0 0.0
    %6409 = vmatprep.subr.mxu0 0.0
    %6410 = vmatpush1.msra.mxu0 0.0
    %6411 = vmatprep.subr.mxu0 0.0
    %6412 = vmatpush1.msra.mxu0 0.0
    %6413 = vmatprep.subr.mxu0 0.0
    %6414 = vmatpush1.msra.mxu0 0.0
    %6415 = vmatprep.subr.mxu0 0.0
    %6416 = vmatpush1.msra.mxu0 0.0
    %6417 = vmatprep.subr.mxu0 0.0
    %6418 = vmatpush1.msra.mxu0 0.0
    %6419 = vmatprep.subr.mxu0 0.0
    %6420 = vmatpush1.msra.mxu0 %v5429
    %6421 = vmatprep.subr.mxu0 0.0
    %6422 = vmatpush1.msra.mxu0 %v5427
    %6423 = vmatprep.subr.mxu0 0.0
    %6424 = vmatpush2.msra.mxu0 0.0
    %6425 = vmatprep.subr.mxu0 0.0
    %6426 = vmatpush2.msra.mxu0 0.0
    %6427 = vmatprep.subr.mxu0 0.0
    %6428 = vmatpush2.msra.mxu0 0.0
    %6429 = vmatprep.subr.mxu0 0.0
    %6430 = vmatpush2.msra.mxu0 0.0
    %6431 = vmatprep.subr.mxu0 0.0
    %6432 = vmatpush2.msra.mxu0 0.0
    %6433 = vmatprep.subr.mxu0 0.0
    %6434 = vmatpush2.msra.mxu0 0.0
    %6435 = vmatprep.subr.mxu0 0.0
    %6436 = vmatpush2.msra.mxu0 0.0
    %6437 = vmatprep.subr.mxu0 0.0
    %6438 = vmatpush2.msra.mxu0 0.0
    %6439 = vmatprep.subr.mxu0 0.0
    %6440 = vmatpush2.msra.mxu0 0.0
    %6441 = vmatprep.subr.mxu0 0.0
    %6442 = vmatpush2.msra.mxu0 0.0
    %6443 = vmatprep.subr.mxu0 0.0
    %6444 = vmatpush2.msra.mxu0 0.0
    %6445 = vmatprep.subr.mxu0 0.0
    %6446 = vmatpush2.msra.mxu0 0.0
    %6447 = vmatprep.subr.mxu0 0.0
    %6448 = vmatpush2.msra.mxu0 0.0
    %6449 = vmatprep.subr.mxu0 0.0
    %6450 = vmatpush2.msra.mxu0 0.0
    %6451 = vmatprep.subr.mxu0 0.0
    %6452 = vmatpush2.msra.mxu0 0.0
    %6453 = vmatprep.subr.mxu0 0.0
    %6454 = vmatpush2.msra.mxu0 0.0
    %6455 = vmatprep.mubr.f32.mxu0 0.0
    %6456 = vmatmul.mubr.f32.gmra.mxu0 %v6389
    %v6457 = vpop.f32.mrf.mxu0
    %v6458 = vadd.f32 0.0, %v6457
    %v6459 = vpop.f32.mrf.mxu0
    %6460 = vdwg.mxu0
    %v6462 = vsel %vm569, %v6165, 0
    %6464 = vmatprep.subr.mxu0 0.0
    %6465 = vmatpush1.msra.mxu0 0.0
    %6466 = vmatprep.subr.mxu0 0.0
    %6467 = vmatpush1.msra.mxu0 0.0
    %6468 = vmatprep.subr.mxu0 0.0
    %6469 = vmatpush1.msra.mxu0 0.0
    %6470 = vmatprep.subr.mxu0 0.0
    %6471 = vmatpush1.msra.mxu0 0.0
    %6472 = vmatprep.subr.mxu0 0.0
    %6473 = vmatpush1.msra.mxu0 0.0
    %6474 = vmatprep.subr.mxu0 0.0
    %6475 = vmatpush1.msra.mxu0 0.0
    %6476 = vmatprep.subr.mxu0 0.0
    %6477 = vmatpush1.msra.mxu0 0.0
    %6478 = vmatprep.subr.mxu0 0.0
    %6479 = vmatpush1.msra.mxu0 0.0
    %6480 = vmatprep.subr.mxu0 0.0
    %6481 = vmatpush1.msra.mxu0 0.0
    %6482 = vmatprep.subr.mxu0 0.0
    %6483 = vmatpush1.msra.mxu0 0.0
    %6484 = vmatprep.subr.mxu0 0.0
    %6485 = vmatpush1.msra.mxu0 0.0
    %6486 = vmatprep.subr.mxu0 0.0
    %6487 = vmatpush1.msra.mxu0 0.0
    %6488 = vmatprep.subr.mxu0 0.0
    %6489 = vmatpush1.msra.mxu0 0.0
    %6490 = vmatprep.subr.mxu0 0.0
    %6491 = vmatpush1.msra.mxu0 0.0
    %6492 = vmatprep.subr.mxu0 0.0
    %6493 = vmatpush1.msra.mxu0 %v5435
    %6494 = vmatprep.subr.mxu0 0.0
    %6495 = vmatpush1.msra.mxu0 %v5433
    %6496 = vmatprep.subr.mxu0 0.0
    %6497 = vmatpush2.msra.mxu0 0.0
    %6498 = vmatprep.subr.mxu0 0.0
    %6499 = vmatpush2.msra.mxu0 0.0
    %6500 = vmatprep.subr.mxu0 0.0
    %6501 = vmatpush2.msra.mxu0 0.0
    %6502 = vmatprep.subr.mxu0 0.0
    %6503 = vmatpush2.msra.mxu0 0.0
    %6504 = vmatprep.subr.mxu0 0.0
    %6505 = vmatpush2.msra.mxu0 0.0
    %6506 = vmatprep.subr.mxu0 0.0
    %6507 = vmatpush2.msra.mxu0 0.0
    %6508 = vmatprep.subr.mxu0 0.0
    %6509 = vmatpush2.msra.mxu0 0.0
    %6510 = vmatprep.subr.mxu0 0.0
    %6511 = vmatpush2.msra.mxu0 0.0
    %6512 = vmatprep.subr.mxu0 0.0
    %6513 = vmatpush2.msra.mxu0 0.0
    %6514 = vmatprep.subr.mxu0 0.0
    %6515 = vmatpush2.msra.mxu0 0.0
    %6516 = vmatprep.subr.mxu0 0.0
    %6517 = vmatpush2.msra.mxu0 0.0
    %6518 = vmatprep.subr.mxu0 0.0
    %6519 = vmatpush2.msra.mxu0 0.0
    %6520 = vmatprep.subr.mxu0 0.0
    %6521 = vmatpush2.msra.mxu0 0.0
    %6522 = vmatprep.subr.mxu0 0.0
    %6523 = vmatpush2.msra.mxu0 0.0
    %6524 = vmatprep.subr.mxu0 0.0
    %6525 = vmatpush2.msra.mxu0 0.0
    %6526 = vmatprep.subr.mxu0 0.0
    %6527 = vmatpush2.msra.mxu0 0.0
    %6528 = vmatprep.mubr.f32.mxu0 0.0
    %6529 = vmatmul.mubr.f32.gmra.mxu0 %v6462
    %v6530 = vpop.f32.mrf.mxu0
    %v6531 = vadd.f32 0.0, %v6530
    %v6532 = vpop.f32.mrf.mxu0
    %6533 = vdwg.mxu0
    %v6535 = vsel %vm569, %v6166, 0
    %6537 = vmatprep.subr.mxu0 0.0
    %6538 = vmatpush1.msra.mxu0 0.0
    %6539 = vmatprep.subr.mxu0 0.0
    %6540 = vmatpush1.msra.mxu0 0.0
    %6541 = vmatprep.subr.mxu0 0.0
    %6542 = vmatpush1.msra.mxu0 0.0
    %6543 = vmatprep.subr.mxu0 0.0
    %6544 = vmatpush1.msra.mxu0 0.0
    %6545 = vmatprep.subr.mxu0 0.0
    %6546 = vmatpush1.msra.mxu0 0.0
    %6547 = vmatprep.subr.mxu0 0.0
    %6548 = vmatpush1.msra.mxu0 0.0
    %6549 = vmatprep.subr.mxu0 0.0
    %6550 = vmatpush1.msra.mxu0 0.0
    %6551 = vmatprep.subr.mxu0 0.0
    %6552 = vmatpush1.msra.mxu0 0.0
    %6553 = vmatprep.subr.mxu0 0.0
    %6554 = vmatpush1.msra.mxu0 0.0
    %6555 = vmatprep.subr.mxu0 0.0
    %6556 = vmatpush1.msra.mxu0 0.0
    %6557 = vmatprep.subr.mxu0 0.0
    %6558 = vmatpush1.msra.mxu0 0.0
    %6559 = vmatprep.subr.mxu0 0.0
    %6560 = vmatpush1.msra.mxu0 0.0
    %6561 = vmatprep.subr.mxu0 0.0
    %6562 = vmatpush1.msra.mxu0 0.0
    %6563 = vmatprep.subr.mxu0 0.0
    %6564 = vmatpush1.msra.mxu0 0.0
    %6565 = vmatprep.subr.mxu0 0.0
    %6566 = vmatpush1.msra.mxu0 %v5441
    %6567 = vmatprep.subr.mxu0 0.0
    %6568 = vmatpush1.msra.mxu0 %v5439
    %6569 = vmatprep.subr.mxu0 0.0
    %6570 = vmatpush2.msra.mxu0 0.0
    %6571 = vmatprep.subr.mxu0 0.0
    %6572 = vmatpush2.msra.mxu0 0.0
    %6573 = vmatprep.subr.mxu0 0.0
    %6574 = vmatpush2.msra.mxu0 0.0
    %6575 = vmatprep.subr.mxu0 0.0
    %6576 = vmatpush2.msra.mxu0 0.0
    %6577 = vmatprep.subr.mxu0 0.0
    %6578 = vmatpush2.msra.mxu0 0.0
    %6579 = vmatprep.subr.mxu0 0.0
    %6580 = vmatpush2.msra.mxu0 0.0
    %6581 = vmatprep.subr.mxu0 0.0
    %6582 = vmatpush2.msra.mxu0 0.0
    %6583 = vmatprep.subr.mxu0 0.0
    %6584 = vmatpush2.msra.mxu0 0.0
    %6585 = vmatprep.subr.mxu0 0.0
    %6586 = vmatpush2.msra.mxu0 0.0
    %6587 = vmatprep.subr.mxu0 0.0
    %6588 = vmatpush2.msra.mxu0 0.0
    %6589 = vmatprep.subr.mxu0 0.0
    %6590 = vmatpush2.msra.mxu0 0.0
    %6591 = vmatprep.subr.mxu0 0.0
    %6592 = vmatpush2.msra.mxu0 0.0
    %6593 = vmatprep.subr.mxu0 0.0
    %6594 = vmatpush2.msra.mxu0 0.0
    %6595 = vmatprep.subr.mxu0 0.0
    %6596 = vmatpush2.msra.mxu0 0.0
    %6597 = vmatprep.subr.mxu0 0.0
    %6598 = vmatpush2.msra.mxu0 0.0
    %6599 = vmatprep.subr.mxu0 0.0
    %6600 = vmatpush2.msra.mxu0 0.0
    %6601 = vmatprep.mubr.f32.mxu0 0.0
    %6602 = vmatmul.mubr.f32.gmra.mxu0 %v6535
    %v6603 = vpop.f32.mrf.mxu0
    %v6604 = vadd.f32 0.0, %v6603
    %v6605 = vpop.f32.mrf.mxu0
    %6606 = vdwg.mxu0
    %v6608 = vsel %vm569, %v6167, 0
    %6610 = vmatprep.subr.mxu0 0.0
    %6611 = vmatpush1.msra.mxu0 0.0
    %6612 = vmatprep.subr.mxu0 0.0
    %6613 = vmatpush1.msra.mxu0 0.0
    %6614 = vmatprep.subr.mxu0 0.0
    %6615 = vmatpush1.msra.mxu0 0.0
    %6616 = vmatprep.subr.mxu0 0.0
    %6617 = vmatpush1.msra.mxu0 0.0
    %6618 = vmatprep.subr.mxu0 0.0
    %6619 = vmatpush1.msra.mxu0 0.0
    %6620 = vmatprep.subr.mxu0 0.0
    %6621 = vmatpush1.msra.mxu0 0.0
    %6622 = vmatprep.subr.mxu0 0.0
    %6623 = vmatpush1.msra.mxu0 0.0
    %6624 = vmatprep.subr.mxu0 0.0
    %6625 = vmatpush1.msra.mxu0 0.0
    %6626 = vmatprep.subr.mxu0 0.0
    %6627 = vmatpush1.msra.mxu0 0.0
    %6628 = vmatprep.subr.mxu0 0.0
    %6629 = vmatpush1.msra.mxu0 0.0
    %6630 = vmatprep.subr.mxu0 0.0
    %6631 = vmatpush1.msra.mxu0 0.0
    %6632 = vmatprep.subr.mxu0 0.0
    %6633 = vmatpush1.msra.mxu0 0.0
    %6634 = vmatprep.subr.mxu0 0.0
    %6635 = vmatpush1.msra.mxu0 0.0
    %6636 = vmatprep.subr.mxu0 0.0
    %6637 = vmatpush1.msra.mxu0 0.0
    %6638 = vmatprep.subr.mxu0 0.0
    %6639 = vmatpush1.msra.mxu0 %v5447
    %6640 = vmatprep.subr.mxu0 0.0
    %6641 = vmatpush1.msra.mxu0 %v5445
    %6642 = vmatprep.subr.mxu0 0.0
    %6643 = vmatpush2.msra.mxu0 0.0
    %6644 = vmatprep.subr.mxu0 0.0
    %6645 = vmatpush2.msra.mxu0 0.0
    %6646 = vmatprep.subr.mxu0 0.0
    %6647 = vmatpush2.msra.mxu0 0.0
    %6648 = vmatprep.subr.mxu0 0.0
    %6649 = vmatpush2.msra.mxu0 0.0
    %6650 = vmatprep.subr.mxu0 0.0
    %6651 = vmatpush2.msra.mxu0 0.0
    %6652 = vmatprep.subr.mxu0 0.0
    %6653 = vmatpush2.msra.mxu0 0.0
    %6654 = vmatprep.subr.mxu0 0.0
    %6655 = vmatpush2.msra.mxu0 0.0
    %6656 = vmatprep.subr.mxu0 0.0
    %6657 = vmatpush2.msra.mxu0 0.0
    %6658 = vmatprep.subr.mxu0 0.0
    %6659 = vmatpush2.msra.mxu0 0.0
    %6660 = vmatprep.subr.mxu0 0.0
    %6661 = vmatpush2.msra.mxu0 0.0
    %6662 = vmatprep.subr.mxu0 0.0
    %6663 = vmatpush2.msra.mxu0 0.0
    %6664 = vmatprep.subr.mxu0 0.0
    %6665 = vmatpush2.msra.mxu0 0.0
    %6666 = vmatprep.subr.mxu0 0.0
    %6667 = vmatpush2.msra.mxu0 0.0
    %6668 = vmatprep.subr.mxu0 0.0
    %6669 = vmatpush2.msra.mxu0 0.0
    %6670 = vmatprep.subr.mxu0 0.0
    %6671 = vmatpush2.msra.mxu0 0.0
    %6672 = vmatprep.subr.mxu0 0.0
    %6673 = vmatpush2.msra.mxu0 0.0
    %6674 = vmatprep.mubr.f32.mxu0 0.0
    %6675 = vmatmul.mubr.f32.gmra.mxu0 %v6608
    %v6676 = vpop.f32.mrf.mxu0
    %v6677 = vadd.f32 0.0, %v6676
    %v6678 = vpop.f32.mrf.mxu0
    %6679 = vdwg.mxu0
    %v6681 = vsel %vm569, %v6168, 0
    %6683 = vmatprep.subr.mxu0 0.0
    %6684 = vmatpush1.msra.mxu0 0.0
    %6685 = vmatprep.subr.mxu0 0.0
    %6686 = vmatpush1.msra.mxu0 0.0
    %6687 = vmatprep.subr.mxu0 0.0
    %6688 = vmatpush1.msra.mxu0 0.0
    %6689 = vmatprep.subr.mxu0 0.0
    %6690 = vmatpush1.msra.mxu0 0.0
    %6691 = vmatprep.subr.mxu0 0.0
    %6692 = vmatpush1.msra.mxu0 0.0
    %6693 = vmatprep.subr.mxu0 0.0
    %6694 = vmatpush1.msra.mxu0 0.0
    %6695 = vmatprep.subr.mxu0 0.0
    %6696 = vmatpush1.msra.mxu0 0.0
    %6697 = vmatprep.subr.mxu0 0.0
    %6698 = vmatpush1.msra.mxu0 0.0
    %6699 = vmatprep.subr.mxu0 0.0
    %6700 = vmatpush1.msra.mxu0 0.0
    %6701 = vmatprep.subr.mxu0 0.0
    %6702 = vmatpush1.msra.mxu0 0.0
    %6703 = vmatprep.subr.mxu0 0.0
    %6704 = vmatpush1.msra.mxu0 0.0
    %6705 = vmatprep.subr.mxu0 0.0
    %6706 = vmatpush1.msra.mxu0 0.0
    %6707 = vmatprep.subr.mxu0 0.0
    %6708 = vmatpush1.msra.mxu0 0.0
    %6709 = vmatprep.subr.mxu0 0.0
    %6710 = vmatpush1.msra.mxu0 0.0
    %6711 = vmatprep.subr.mxu0 0.0
    %6712 = vmatpush1.msra.mxu0 %v5453
    %6713 = vmatprep.subr.mxu0 0.0
    %6714 = vmatpush1.msra.mxu0 %v5451
    %6715 = vmatprep.subr.mxu0 0.0
    %6716 = vmatpush2.msra.mxu0 0.0
    %6717 = vmatprep.subr.mxu0 0.0
    %6718 = vmatpush2.msra.mxu0 0.0
    %6719 = vmatprep.subr.mxu0 0.0
    %6720 = vmatpush2.msra.mxu0 0.0
    %6721 = vmatprep.subr.mxu0 0.0
    %6722 = vmatpush2.msra.mxu0 0.0
    %6723 = vmatprep.subr.mxu0 0.0
    %6724 = vmatpush2.msra.mxu0 0.0
    %6725 = vmatprep.subr.mxu0 0.0
    %6726 = vmatpush2.msra.mxu0 0.0
    %6727 = vmatprep.subr.mxu0 0.0
    %6728 = vmatpush2.msra.mxu0 0.0
    %6729 = vmatprep.subr.mxu0 0.0
    %6730 = vmatpush2.msra.mxu0 0.0
    %6731 = vmatprep.subr.mxu0 0.0
    %6732 = vmatpush2.msra.mxu0 0.0
    %6733 = vmatprep.subr.mxu0 0.0
    %6734 = vmatpush2.msra.mxu0 0.0
    %6735 = vmatprep.subr.mxu0 0.0
    %6736 = vmatpush2.msra.mxu0 0.0
    %6737 = vmatprep.subr.mxu0 0.0
    %6738 = vmatpush2.msra.mxu0 0.0
    %6739 = vmatprep.subr.mxu0 0.0
    %6740 = vmatpush2.msra.mxu0 0.0
    %6741 = vmatprep.subr.mxu0 0.0
    %6742 = vmatpush2.msra.mxu0 0.0
    %6743 = vmatprep.subr.mxu0 0.0
    %6744 = vmatpush2.msra.mxu0 0.0
    %6745 = vmatprep.subr.mxu0 0.0
    %6746 = vmatpush2.msra.mxu0 0.0
    %6747 = vmatprep.mubr.f32.mxu0 0.0
    %6748 = vmatmul.mubr.f32.gmra.mxu0 %v6681
    %v6749 = vpop.f32.mrf.mxu0
    %v6750 = vadd.f32 0.0, %v6749
    %v6751 = vpop.f32.mrf.mxu0
    %6752 = vdwg.mxu0
    %6754 = vrot.lane.b32.xlu0 %v6312, 16
    %v6755 = vpop.permute.xlu0 %6754
    %6758 = vrot.lane.b32.xlu0 %v6385, 32
    %v6759 = vpop.permute.xlu0 %6758
    %6762 = vrot.lane.b32.xlu0 %v6458, 48
    %v6763 = vpop.permute.xlu0 %6762
    %6766 = vrot.lane.b32.xlu0 %v6531, 64
    %v6767 = vpop.permute.xlu0 %6766
    %6770 = vrot.lane.b32.xlu0 %v6604, 80
    %v6771 = vpop.permute.xlu0 %6770
    %6774 = vrot.lane.b32.xlu0 %v6677, 96
    %v6775 = vpop.permute.xlu0 %6774
    %6778 = vrot.lane.b32.xlu0 %v6750, 112
    %v6779 = vpop.permute.xlu0 %6778
    %v6781 = vsel %vm569, %v6239, %v6755
    %v6782 = vsel %vm2148, %v6781, %v6759
    %v6783 = vsel %vm2151, %v6782, %v6763
    %v6784 = vsel %vm2154, %v6783, %v6767
    %v6785 = vsel %vm2157, %v6784, %v6771
    %v6786 = vsel %vm2160, %v6785, %v6775
    %v6787 = vsel %vm2163, %v6786, %v6779
    %v6788 = vpack.c.bf16 %v6787, %v6787
    %v6805 = vunpack.c.l.b16 %v5202
    %v6806 = vunpack.c.l.b16 %v5203
    %v6807 = vunpack.c.l.b16 %v5204
    %v6808 = vunpack.c.l.b16 %v5205
    %v6809 = vunpack.c.l.b16 %v5206
    %v6810 = vunpack.c.l.b16 %v5207
    %v6811 = vunpack.c.l.b16 %v5208
    %v6812 = vunpack.c.l.b16 %v5209
    %v6813 = vunpack.c.l.b16 %v5210
    %v6814 = vunpack.c.l.b16 %v5211
    %v6815 = vunpack.c.l.b16 %v5212
    %v6816 = vunpack.c.l.b16 %v5213
    %v6817 = vunpack.c.l.b16 %v5214
    %v6818 = vunpack.c.l.b16 %v5215
    %v6819 = vunpack.c.l.b16 %v5216
    %v6820 = vunpack.c.l.b16 %v5217
    %v6821 = vpack.c.b16 %v6806, %v6805
    %v6822 = vpack.c.b16 %v6808, %v6807
    %v6823 = vpack.c.b16 %v6810, %v6809
    %v6824 = vpack.c.b16 %v6812, %v6811
    %v6825 = vpack.c.b16 %v6814, %v6813
    %v6826 = vpack.c.b16 %v6816, %v6815
    %v6827 = vpack.c.b16 %v6818, %v6817
    %v6828 = vpack.c.b16 %v6820, %v6819
    %6837 = vmatprep.subr.bf16.mxu0 0
    %6838 = vmatpush1.bf16.msra.mxu0 %v6828
    %6839 = vmatprep.subr.bf16.mxu0 0
    %6840 = vmatpush1.bf16.msra.mxu0 %v6827
    %6841 = vmatprep.subr.bf16.mxu0 0
    %6842 = vmatpush1.bf16.msra.mxu0 %v6826
    %6843 = vmatprep.subr.bf16.mxu0 0
    %6844 = vmatpush1.bf16.msra.mxu0 %v6825
    %6845 = vmatprep.subr.bf16.mxu0 0
    %6846 = vmatpush1.bf16.msra.mxu0 %v6824
    %6847 = vmatprep.subr.bf16.mxu0 0
    %6848 = vmatpush1.bf16.msra.mxu0 %v6823
    %6849 = vmatprep.subr.bf16.mxu0 0
    %6850 = vmatpush1.bf16.msra.mxu0 %v6822
    %6851 = vmatprep.subr.bf16.mxu0 0
    %6852 = vmatpush1.bf16.msra.mxu0 %v6821
    %6853 = vmatprep.subr.bf16.mxu0 0
    %6854 = vmatpush2.bf16.msra.mxu0 0
    %6855 = vmatprep.subr.bf16.mxu0 0
    %6856 = vmatpush2.bf16.msra.mxu0 0
    %6857 = vmatprep.subr.bf16.mxu0 0
    %6858 = vmatpush2.bf16.msra.mxu0 0
    %6859 = vmatprep.subr.bf16.mxu0 0
    %6860 = vmatpush2.bf16.msra.mxu0 0
    %6861 = vmatprep.subr.bf16.mxu0 0
    %6862 = vmatpush2.bf16.msra.mxu0 0
    %6863 = vmatprep.subr.bf16.mxu0 0
    %6864 = vmatpush2.bf16.msra.mxu0 0
    %6865 = vmatprep.subr.bf16.mxu0 0
    %6866 = vmatpush2.bf16.msra.mxu0 0
    %6867 = vmatprep.subr.bf16.mxu0 0
    %6868 = vmatpush2.bf16.msra.mxu0 0
    %6869 = vmatprep.mubr.bf16.mxu0 0
    %6870 = vmatmul.mubr.bf16.gmra.mxu0 %v6788
    %v6871 = vpop.f32.mrf.mxu0
    %v6872 = vadd.f32 0.0, %v6871
    %v6873 = vpop.f32.mrf.mxu0
    %v6874 = vpop.f32.mrf.mxu0
    %v6875 = vpop.f32.mrf.mxu0
    %6876 = vdwg.mxu0
    %v6877 = vadd.f32 %v5139, %v6872
    %s6878 = scalar_lea.vmem %s10, 12
    %v6879 = vld [vmem:[%s6878] sm:$0x3]
    %v6880 = vsel %vm185, %v6877, 0.0
    %6881 = vadd.xlane.f32.xlu0 %v6880
    %v6882 = vpop.xlane.xlu0 %6881
    %v6883 = vmul.f32 %v6882, %v235
    %v6884 = vsub.f32 %v6877, %v6883
    %v6885 = vmul.f32 %v6884, %v6884
    %v6886 = vsel %vm185, %v6885, 0.0
    %6887 = vadd.xlane.f32.xlu0 %v6886
    %v6888 = vpop.xlane.xlu0 %6887
    %v6889 = vmul.f32 %v6888, %v235
    %v6890 = vadd.f32 %v6889, 1e-05
    %v6891 = vrsqrt.pop %v6890
    %v6892 = vmul.f32 %v6884, %v6891
    %v6893 = vlaneseq
    %v6894 = vshrl.u32 %v6893, 7
    %v6895 = vsub.s32 0, %v6894
    %v6896 = vrot.slane %v6879, %v6895
    %v6897 = vmul.f32 %v6892, %v6896
    %v6898 = vlaneseq
    %v6899 = vshrl.u32 %v6898, 7
    %v6900 = vsub.s32 1, %v6899
    %v6901 = vrot.slane %v6879, %v6900
    %v6902 = vadd.f32 %v6897, %v6901
    %v6903 = vpack.c.bf16 %v6902, %v6902
    %s6904 = scalar_lea.vmem [#allocation13], 256
    %v6905 = vld [vmem:[%s6904] sm:$0xff]
    %v6906 = vld [vmem:[%s6904 + $0x8] sm:$0xff]
    %v6907 = vld [vmem:[%s6904 + $0x10] sm:$0xff]
    %v6908 = vld [vmem:[%s6904 + $0x18] sm:$0xff]
    %v6909 = vld [vmem:[%s6904 + $0x20] sm:$0xff]
    %v6910 = vld [vmem:[%s6904 + $0x28] sm:$0xff]
    %v6911 = vld [vmem:[%s6904 + $0x30] sm:$0xff]
    %v6912 = vld [vmem:[%s6904 + $0x38] sm:$0xff]
    %v6913 = vld [vmem:[%s6904 + $0x40] sm:$0xff]
    %v6914 = vld [vmem:[%s6904 + $0x48] sm:$0xff]
    %v6915 = vld [vmem:[%s6904 + $0x50] sm:$0xff]
    %v6916 = vld [vmem:[%s6904 + $0x58] sm:$0xff]
    %v6917 = vld [vmem:[%s6904 + $0x60] sm:$0xff]
    %v6918 = vld [vmem:[%s6904 + $0x68] sm:$0xff]
    %v6919 = vld [vmem:[%s6904 + $0x70] sm:$0xff]
    %v6920 = vld [vmem:[%s6904 + $0x78] sm:$0xff]
    %s6921 = scalar_lea.vmem %s12, 4
    %v6922 = vld [vmem:[%s6921] sm:$0x3]
    %v6924 = vlaneseq
    %v6925 = vshrl.u32 %v6924, 7
    %v6926 = vsub.s32 0, %v6925
    %v6927 = vrot.slane %v6922, %v6926
    %v6928 = vlaneseq
    %v6929 = vshrl.u32 %v6928, 7
    %v6930 = vsub.s32 1, %v6929
    %v6931 = vrot.slane %v6922, %v6930
    %v6950 = vunpack.c.l.b16 %v6905
    %v6951 = vunpack.c.h.b16 %v6905
    %v6952 = vunpack.c.l.b16 %v6906
    %v6953 = vunpack.c.h.b16 %v6906
    %v6954 = vunpack.c.l.b16 %v6907
    %v6955 = vunpack.c.h.b16 %v6907
    %v6956 = vunpack.c.l.b16 %v6908
    %v6957 = vunpack.c.h.b16 %v6908
    %v6958 = vunpack.c.l.b16 %v6909
    %v6959 = vunpack.c.h.b16 %v6909
    %v6960 = vunpack.c.l.b16 %v6910
    %v6961 = vunpack.c.h.b16 %v6910
    %v6962 = vunpack.c.l.b16 %v6911
    %v6963 = vunpack.c.h.b16 %v6911
    %v6964 = vunpack.c.l.b16 %v6912
    %v6965 = vunpack.c.h.b16 %v6912
    %v6966 = vunpack.c.l.b16 %v6913
    %v6967 = vunpack.c.h.b16 %v6913
    %v6968 = vunpack.c.l.b16 %v6914
    %v6969 = vunpack.c.h.b16 %v6914
    %v6970 = vunpack.c.l.b16 %v6915
    %v6971 = vunpack.c.h.b16 %v6915
    %v6972 = vunpack.c.l.b16 %v6916
    %v6973 = vunpack.c.h.b16 %v6916
    %v6974 = vunpack.c.l.b16 %v6917
    %v6975 = vunpack.c.h.b16 %v6917
    %v6976 = vunpack.c.l.b16 %v6918
    %v6977 = vunpack.c.h.b16 %v6918
    %v6978 = vunpack.c.l.b16 %v6919
    %v6979 = vunpack.c.h.b16 %v6919
    %v6980 = vunpack.c.l.b16 %v6920
    %v6981 = vunpack.c.h.b16 %v6920
    %v6982 = vpack.c.b16 %v6952, %v6950
    %v6983 = vpack.c.b16 %v6953, %v6951
    %v6984 = vpack.c.b16 %v6956, %v6954
    %v6985 = vpack.c.b16 %v6957, %v6955
    %v6986 = vpack.c.b16 %v6960, %v6958
    %v6987 = vpack.c.b16 %v6961, %v6959
    %v6988 = vpack.c.b16 %v6964, %v6962
    %v6989 = vpack.c.b16 %v6965, %v6963
    %v6990 = vpack.c.b16 %v6968, %v6966
    %v6991 = vpack.c.b16 %v6969, %v6967
    %v6992 = vpack.c.b16 %v6972, %v6970
    %v6993 = vpack.c.b16 %v6973, %v6971
    %v6994 = vpack.c.b16 %v6976, %v6974
    %v6995 = vpack.c.b16 %v6977, %v6975
    %v6996 = vpack.c.b16 %v6980, %v6978
    %v6997 = vpack.c.b16 %v6981, %v6979
    %7014 = vmatprep.subr.bf16.mxu0 %v6997
    %7015 = vmatpush1.bf16.msra.mxu0 %v6996
    %7016 = vmatprep.subr.bf16.mxu0 %v6995
    %7017 = vmatpush1.bf16.msra.mxu0 %v6994
    %7018 = vmatprep.subr.bf16.mxu0 %v6993
    %7019 = vmatpush1.bf16.msra.mxu0 %v6992
    %7020 = vmatprep.subr.bf16.mxu0 %v6991
    %7021 = vmatpush1.bf16.msra.mxu0 %v6990
    %7022 = vmatprep.subr.bf16.mxu0 %v6989
    %7023 = vmatpush1.bf16.msra.mxu0 %v6988
    %7024 = vmatprep.subr.bf16.mxu0 %v6987
    %7025 = vmatpush1.bf16.msra.mxu0 %v6986
    %7026 = vmatprep.subr.bf16.mxu0 %v6985
    %7027 = vmatpush1.bf16.msra.mxu0 %v6984
    %7028 = vmatprep.subr.bf16.mxu0 %v6983
    %7029 = vmatpush1.bf16.msra.mxu0 %v6982
    %7030 = vmatprep.subr.bf16.mxu0 0
    %7031 = vmatpush2.bf16.msra.mxu0 0
    %7032 = vmatprep.subr.bf16.mxu0 0
    %7033 = vmatpush2.bf16.msra.mxu0 0
    %7034 = vmatprep.subr.bf16.mxu0 0
    %7035 = vmatpush2.bf16.msra.mxu0 0
    %7036 = vmatprep.subr.bf16.mxu0 0
    %7037 = vmatpush2.bf16.msra.mxu0 0
    %7038 = vmatprep.subr.bf16.mxu0 0
    %7039 = vmatpush2.bf16.msra.mxu0 0
    %7040 = vmatprep.subr.bf16.mxu0 0
    %7041 = vmatpush2.bf16.msra.mxu0 0
    %7042 = vmatprep.subr.bf16.mxu0 0
    %7043 = vmatpush2.bf16.msra.mxu0 0
    %7044 = vmatprep.subr.bf16.mxu0 0
    %7045 = vmatpush2.bf16.msra.mxu0 0
    %7046 = vmatprep.mubr.bf16.mxu0 0
    %7047 = vmatmul.mubr.bf16.gmra.mxu0 %v6903
    %v7048 = vpop.f32.mrf.mxu0
    %v7049 = vadd.f32 %v6927, %v7048
    %v7050 = vpop.f32.mrf.mxu0
    %v7051 = vadd.f32 %v6931, %v7050
    %v7052 = vpop.f32.mrf.mxu0
    %v7053 = vpop.f32.mrf.mxu0
    %7054 = vdwg.mxu0
    %v7055 = vmax.f32 %v7049, 0.0
    %v7056 = vmax.f32 %v7051, 0.0
    %v7057 = vpack.c.bf16 %v7055, %v7055
    %v7058 = vpack.c.bf16 %v7056, %v7056
    %s7059 = scalar_lea.vmem [#allocation14], 256
    %v7060 = vld [vmem:[%s7059] sm:$0xf]
    %v7061 = vld [vmem:[%s7059 + $0x4] sm:$0xf]
    %v7062 = vld [vmem:[%s7059 + $0x8] sm:$0xf]
    %v7063 = vld [vmem:[%s7059 + $0xc] sm:$0xf]
    %v7064 = vld [vmem:[%s7059 + $0x10] sm:$0xf]
    %v7065 = vld [vmem:[%s7059 + $0x14] sm:$0xf]
    %v7066 = vld [vmem:[%s7059 + $0x18] sm:$0xf]
    %v7067 = vld [vmem:[%s7059 + $0x1c] sm:$0xf]
    %v7068 = vld [vmem:[%s7059 + $0x20] sm:$0xf]
    %v7069 = vld [vmem:[%s7059 + $0x24] sm:$0xf]
    %v7070 = vld [vmem:[%s7059 + $0x28] sm:$0xf]
    %v7071 = vld [vmem:[%s7059 + $0x2c] sm:$0xf]
    %v7072 = vld [vmem:[%s7059 + $0x30] sm:$0xf]
    %v7073 = vld [vmem:[%s7059 + $0x34] sm:$0xf]
    %v7074 = vld [vmem:[%s7059 + $0x38] sm:$0xf]
    %v7075 = vld [vmem:[%s7059 + $0x3c] sm:$0xf]
    %v7076 = vld [vmem:[%s7059 + $0x40] sm:$0xf]
    %v7077 = vld [vmem:[%s7059 + $0x44] sm:$0xf]
    %v7078 = vld [vmem:[%s7059 + $0x48] sm:$0xf]
    %v7079 = vld [vmem:[%s7059 + $0x4c] sm:$0xf]
    %v7080 = vld [vmem:[%s7059 + $0x50] sm:$0xf]
    %v7081 = vld [vmem:[%s7059 + $0x54] sm:$0xf]
    %v7082 = vld [vmem:[%s7059 + $0x58] sm:$0xf]
    %v7083 = vld [vmem:[%s7059 + $0x5c] sm:$0xf]
    %v7084 = vld [vmem:[%s7059 + $0x60] sm:$0xf]
    %v7085 = vld [vmem:[%s7059 + $0x64] sm:$0xf]
    %v7086 = vld [vmem:[%s7059 + $0x68] sm:$0xf]
    %v7087 = vld [vmem:[%s7059 + $0x6c] sm:$0xf]
    %v7088 = vld [vmem:[%s7059 + $0x70] sm:$0xf]
    %v7089 = vld [vmem:[%s7059 + $0x74] sm:$0xf]
    %v7090 = vld [vmem:[%s7059 + $0x78] sm:$0xf]
    %v7091 = vld [vmem:[%s7059 + $0x7c] sm:$0xf]
    %v7124 = vunpack.c.l.b16 %v7060
    %v7125 = vunpack.c.l.b16 %v7061
    %v7126 = vunpack.c.l.b16 %v7062
    %v7127 = vunpack.c.l.b16 %v7063
    %v7128 = vunpack.c.l.b16 %v7064
    %v7129 = vunpack.c.l.b16 %v7065
    %v7130 = vunpack.c.l.b16 %v7066
    %v7131 = vunpack.c.l.b16 %v7067
    %v7132 = vunpack.c.l.b16 %v7068
    %v7133 = vunpack.c.l.b16 %v7069
    %v7134 = vunpack.c.l.b16 %v7070
    %v7135 = vunpack.c.l.b16 %v7071
    %v7136 = vunpack.c.l.b16 %v7072
    %v7137 = vunpack.c.l.b16 %v7073
    %v7138 = vunpack.c.l.b16 %v7074
    %v7139 = vunpack.c.l.b16 %v7075
    %v7140 = vunpack.c.l.b16 %v7076
    %v7141 = vunpack.c.l.b16 %v7077
    %v7142 = vunpack.c.l.b16 %v7078
    %v7143 = vunpack.c.l.b16 %v7079
    %v7144 = vunpack.c.l.b16 %v7080
    %v7145 = vunpack.c.l.b16 %v7081
    %v7146 = vunpack.c.l.b16 %v7082
    %v7147 = vunpack.c.l.b16 %v7083
    %v7148 = vunpack.c.l.b16 %v7084
    %v7149 = vunpack.c.l.b16 %v7085
    %v7150 = vunpack.c.l.b16 %v7086
    %v7151 = vunpack.c.l.b16 %v7087
    %v7152 = vunpack.c.l.b16 %v7088
    %v7153 = vunpack.c.l.b16 %v7089
    %v7154 = vunpack.c.l.b16 %v7090
    %v7155 = vunpack.c.l.b16 %v7091
    %v7156 = vpack.c.b16 %v7125, %v7124
    %v7157 = vpack.c.b16 %v7127, %v7126
    %v7158 = vpack.c.b16 %v7129, %v7128
    %v7159 = vpack.c.b16 %v7131, %v7130
    %v7160 = vpack.c.b16 %v7133, %v7132
    %v7161 = vpack.c.b16 %v7135, %v7134
    %v7162 = vpack.c.b16 %v7137, %v7136
    %v7163 = vpack.c.b16 %v7139, %v7138
    %v7164 = vpack.c.b16 %v7141, %v7140
    %v7165 = vpack.c.b16 %v7143, %v7142
    %v7166 = vpack.c.b16 %v7145, %v7144
    %v7167 = vpack.c.b16 %v7147, %v7146
    %v7168 = vpack.c.b16 %v7149, %v7148
    %v7169 = vpack.c.b16 %v7151, %v7150
    %v7170 = vpack.c.b16 %v7153, %v7152
    %v7171 = vpack.c.b16 %v7155, %v7154
    %7188 = vmatprep.subr.bf16.mxu0 0
    %7189 = vmatpush1.bf16.msra.mxu0 %v7163
    %7190 = vmatprep.subr.bf16.mxu0 0
    %7191 = vmatpush1.bf16.msra.mxu0 %v7162
    %7192 = vmatprep.subr.bf16.mxu0 0
    %7193 = vmatpush1.bf16.msra.mxu0 %v7161
    %7194 = vmatprep.subr.bf16.mxu0 0
    %7195 = vmatpush1.bf16.msra.mxu0 %v7160
    %7196 = vmatprep.subr.bf16.mxu0 0
    %7197 = vmatpush1.bf16.msra.mxu0 %v7159
    %7198 = vmatprep.subr.bf16.mxu0 0
    %7199 = vmatpush1.bf16.msra.mxu0 %v7158
    %7200 = vmatprep.subr.bf16.mxu0 0
    %7201 = vmatpush1.bf16.msra.mxu0 %v7157
    %7202 = vmatprep.subr.bf16.mxu0 0
    %7203 = vmatpush1.bf16.msra.mxu0 %v7156
    %7204 = vmatprep.subr.bf16.mxu0 0
    %7205 = vmatpush2.bf16.msra.mxu0 %v7171
    %7206 = vmatprep.subr.bf16.mxu0 0
    %7207 = vmatpush2.bf16.msra.mxu0 %v7170
    %7208 = vmatprep.subr.bf16.mxu0 0
    %7209 = vmatpush2.bf16.msra.mxu0 %v7169
    %7210 = vmatprep.subr.bf16.mxu0 0
    %7211 = vmatpush2.bf16.msra.mxu0 %v7168
    %7212 = vmatprep.subr.bf16.mxu0 0
    %7213 = vmatpush2.bf16.msra.mxu0 %v7167
    %7214 = vmatprep.subr.bf16.mxu0 0
    %7215 = vmatpush2.bf16.msra.mxu0 %v7166
    %7216 = vmatprep.subr.bf16.mxu0 0
    %7217 = vmatpush2.bf16.msra.mxu0 %v7165
    %7218 = vmatprep.subr.bf16.mxu0 0
    %7219 = vmatpush2.bf16.msra.mxu0 %v7164
    %7220 = vmatprep.mubr.bf16.mxu0 %v7058
    %7221 = vmatmul.mubr.bf16.gmra.mxu0 %v7057
    %v7222 = vpop.f32.mrf.mxu0
    %v7223 = vadd.f32 0.0, %v7222
    %v7224 = vpop.f32.mrf.mxu0
    %v7225 = vpop.f32.mrf.mxu0
    %v7226 = vpop.f32.mrf.mxu0
    %7227 = vdwg.mxu0
    %v7228 = vadd.f32 %v6877, %v7223
    %s7229 = scalar_lea.vmem [#allocation16], 3
    %v7230 = vld [vmem:[%s7229] sm:$0x1]
    %v7232 = vlaneseq
    %v7233 = vshrl.u32 %v7232, 7
    %v7234 = vsub.s32 0, %v7233
    %v7235 = vrot.slane %v7230, %v7234
    %v7237 = vadd.f32 %v7228, %v7235
    %s7238 = scalar_lea.vmem %s10, 14
    %v7239 = vld [vmem:[%s7238] sm:$0x3]
    %v7240 = vsel %vm185, %v7237, 0.0
    %7241 = vadd.xlane.f32.xlu0 %v7240
    %v7242 = vpop.xlane.xlu0 %7241
    %v7243 = vmul.f32 %v7242, %v235
    %v7244 = vsub.f32 %v7237, %v7243
    %v7245 = vmul.f32 %v7244, %v7244
    %v7246 = vsel %vm185, %v7245, 0.0
    %7247 = vadd.xlane.f32.xlu0 %v7246
    %v7248 = vpop.xlane.xlu0 %7247
    %v7249 = vmul.f32 %v7248, %v235
    %v7250 = vadd.f32 %v7249, 1e-05
    %v7251 = vrsqrt.pop %v7250
    %v7252 = vmul.f32 %v7244, %v7251
    %v7253 = vlaneseq
    %v7254 = vshrl.u32 %v7253, 7
    %v7255 = vsub.s32 0, %v7254
    %v7256 = vrot.slane %v7239, %v7255
    %v7257 = vmul.f32 %v7252, %v7256
    %v7258 = vlaneseq
    %v7259 = vshrl.u32 %v7258, 7
    %v7260 = vsub.s32 1, %v7259
    %v7261 = vrot.slane %v7239, %v7260
    %v7262 = vadd.f32 %v7257, %v7261
    %v7263 = vpack.c.bf16 %v7262, %v7262
    %s7264 = scalar_lea.vmem [#allocation11], 576
    %v7265 = vld [vmem:[%s7264] sm:$0xf]
    %v7266 = vld [vmem:[%s7264 + $0x4] sm:$0xf]
    %v7267 = vld [vmem:[%s7264 + $0x8] sm:$0xf]
    %v7268 = vld [vmem:[%s7264 + $0xc] sm:$0xf]
    %v7269 = vld [vmem:[%s7264 + $0x10] sm:$0xf]
    %v7270 = vld [vmem:[%s7264 + $0x14] sm:$0xf]
    %v7271 = vld [vmem:[%s7264 + $0x18] sm:$0xf]
    %v7272 = vld [vmem:[%s7264 + $0x1c] sm:$0xf]
    %v7273 = vld [vmem:[%s7264 + $0x20] sm:$0xf]
    %v7274 = vld [vmem:[%s7264 + $0x24] sm:$0xf]
    %v7275 = vld [vmem:[%s7264 + $0x28] sm:$0xf]
    %v7276 = vld [vmem:[%s7264 + $0x2c] sm:$0xf]
    %v7277 = vld [vmem:[%s7264 + $0x30] sm:$0xf]
    %v7278 = vld [vmem:[%s7264 + $0x34] sm:$0xf]
    %v7279 = vld [vmem:[%s7264 + $0x38] sm:$0xf]
    %v7280 = vld [vmem:[%s7264 + $0x3c] sm:$0xf]
    %v7297 = vunpack.c.l.b16 %v7265
    %v7298 = vunpack.c.l.b16 %v7266
    %v7299 = vunpack.c.l.b16 %v7267
    %v7300 = vunpack.c.l.b16 %v7268
    %v7301 = vunpack.c.l.b16 %v7269
    %v7302 = vunpack.c.l.b16 %v7270
    %v7303 = vunpack.c.l.b16 %v7271
    %v7304 = vunpack.c.l.b16 %v7272
    %v7305 = vunpack.c.l.b16 %v7273
    %v7306 = vunpack.c.l.b16 %v7274
    %v7307 = vunpack.c.l.b16 %v7275
    %v7308 = vunpack.c.l.b16 %v7276
    %v7309 = vunpack.c.l.b16 %v7277
    %v7310 = vunpack.c.l.b16 %v7278
    %v7311 = vunpack.c.l.b16 %v7279
    %v7312 = vunpack.c.l.b16 %v7280
    %v7313 = vpack.c.b16 %v7298, %v7297
    %v7314 = vpack.c.b16 %v7300, %v7299
    %v7315 = vpack.c.b16 %v7302, %v7301
    %v7316 = vpack.c.b16 %v7304, %v7303
    %v7317 = vpack.c.b16 %v7306, %v7305
    %v7318 = vpack.c.b16 %v7308, %v7307
    %v7319 = vpack.c.b16 %v7310, %v7309
    %v7320 = vpack.c.b16 %v7312, %v7311
    %7329 = vmatprep.subr.bf16.mxu0 0
    %7330 = vmatpush1.bf16.msra.mxu0 %v7320
    %7331 = vmatprep.subr.bf16.mxu0 0
    %7332 = vmatpush1.bf16.msra.mxu0 %v7319
    %7333 = vmatprep.subr.bf16.mxu0 0
    %7334 = vmatpush1.bf16.msra.mxu0 %v7318
    %7335 = vmatprep.subr.bf16.mxu0 0
    %7336 = vmatpush1.bf16.msra.mxu0 %v7317
    %7337 = vmatprep.subr.bf16.mxu0 0
    %7338 = vmatpush1.bf16.msra.mxu0 %v7316
    %7339 = vmatprep.subr.bf16.mxu0 0
    %7340 = vmatpush1.bf16.msra.mxu0 %v7315
    %7341 = vmatprep.subr.bf16.mxu0 0
    %7342 = vmatpush1.bf16.msra.mxu0 %v7314
    %7343 = vmatprep.subr.bf16.mxu0 0
    %7344 = vmatpush1.bf16.msra.mxu0 %v7313
    %7345 = vmatprep.subr.bf16.mxu0 0
    %7346 = vmatpush2.bf16.msra.mxu0 0
    %7347 = vmatprep.subr.bf16.mxu0 0
    %7348 = vmatpush2.bf16.msra.mxu0 0
    %7349 = vmatprep.subr.bf16.mxu0 0
    %7350 = vmatpush2.bf16.msra.mxu0 0
    %7351 = vmatprep.subr.bf16.mxu0 0
    %7352 = vmatpush2.bf16.msra.mxu0 0
    %7353 = vmatprep.subr.bf16.mxu0 0
    %7354 = vmatpush2.bf16.msra.mxu0 0
    %7355 = vmatprep.subr.bf16.mxu0 0
    %7356 = vmatpush2.bf16.msra.mxu0 0
    %7357 = vmatprep.subr.bf16.mxu0 0
    %7358 = vmatpush2.bf16.msra.mxu0 0
    %7359 = vmatprep.subr.bf16.mxu0 0
    %7360 = vmatpush2.bf16.msra.mxu0 0
    %7361 = vmatprep.mubr.bf16.mxu0 0
    %7362 = vmatmul.mubr.bf16.gmra.mxu0 %v7263
    %v7363 = vpop.f32.mrf.mxu0
    %v7364 = vadd.f32 0.0, %v7363
    %v7365 = vpop.f32.mrf.mxu0
    %v7366 = vpop.f32.mrf.mxu0
    %v7367 = vpop.f32.mrf.mxu0
    %7368 = vdwg.mxu0
    %s7369 = scalar_lea.vmem [#allocation11], 640
    %v7370 = vld [vmem:[%s7369] sm:$0xf]
    %v7371 = vld [vmem:[%s7369 + $0x4] sm:$0xf]
    %v7372 = vld [vmem:[%s7369 + $0x8] sm:$0xf]
    %v7373 = vld [vmem:[%s7369 + $0xc] sm:$0xf]
    %v7374 = vld [vmem:[%s7369 + $0x10] sm:$0xf]
    %v7375 = vld [vmem:[%s7369 + $0x14] sm:$0xf]
    %v7376 = vld [vmem:[%s7369 + $0x18] sm:$0xf]
    %v7377 = vld [vmem:[%s7369 + $0x1c] sm:$0xf]
    %v7378 = vld [vmem:[%s7369 + $0x20] sm:$0xf]
    %v7379 = vld [vmem:[%s7369 + $0x24] sm:$0xf]
    %v7380 = vld [vmem:[%s7369 + $0x28] sm:$0xf]
    %v7381 = vld [vmem:[%s7369 + $0x2c] sm:$0xf]
    %v7382 = vld [vmem:[%s7369 + $0x30] sm:$0xf]
    %v7383 = vld [vmem:[%s7369 + $0x34] sm:$0xf]
    %v7384 = vld [vmem:[%s7369 + $0x38] sm:$0xf]
    %v7385 = vld [vmem:[%s7369 + $0x3c] sm:$0xf]
    %v7402 = vunpack.c.l.b16 %v7370
    %v7403 = vunpack.c.l.b16 %v7371
    %v7404 = vunpack.c.l.b16 %v7372
    %v7405 = vunpack.c.l.b16 %v7373
    %v7406 = vunpack.c.l.b16 %v7374
    %v7407 = vunpack.c.l.b16 %v7375
    %v7408 = vunpack.c.l.b16 %v7376
    %v7409 = vunpack.c.l.b16 %v7377
    %v7410 = vunpack.c.l.b16 %v7378
    %v7411 = vunpack.c.l.b16 %v7379
    %v7412 = vunpack.c.l.b16 %v7380
    %v7413 = vunpack.c.l.b16 %v7381
    %v7414 = vunpack.c.l.b16 %v7382
    %v7415 = vunpack.c.l.b16 %v7383
    %v7416 = vunpack.c.l.b16 %v7384
    %v7417 = vunpack.c.l.b16 %v7385
    %v7418 = vpack.c.b16 %v7403, %v7402
    %v7419 = vpack.c.b16 %v7405, %v7404
    %v7420 = vpack.c.b16 %v7407, %v7406
    %v7421 = vpack.c.b16 %v7409, %v7408
    %v7422 = vpack.c.b16 %v7411, %v7410
    %v7423 = vpack.c.b16 %v7413, %v7412
    %v7424 = vpack.c.b16 %v7415, %v7414
    %v7425 = vpack.c.b16 %v7417, %v7416
    %7434 = vmatprep.subr.bf16.mxu0 0
    %7435 = vmatpush1.bf16.msra.mxu0 %v7425
    %7436 = vmatprep.subr.bf16.mxu0 0
    %7437 = vmatpush1.bf16.msra.mxu0 %v7424
    %7438 = vmatprep.subr.bf16.mxu0 0
    %7439 = vmatpush1.bf16.msra.mxu0 %v7423
    %7440 = vmatprep.subr.bf16.mxu0 0
    %7441 = vmatpush1.bf16.msra.mxu0 %v7422
    %7442 = vmatprep.subr.bf16.mxu0 0
    %7443 = vmatpush1.bf16.msra.mxu0 %v7421
    %7444 = vmatprep.subr.bf16.mxu0 0
    %7445 = vmatpush1.bf16.msra.mxu0 %v7420
    %7446 = vmatprep.subr.bf16.mxu0 0
    %7447 = vmatpush1.bf16.msra.mxu0 %v7419
    %7448 = vmatprep.subr.bf16.mxu0 0
    %7449 = vmatpush1.bf16.msra.mxu0 %v7418
    %7450 = vmatprep.subr.bf16.mxu0 0
    %7451 = vmatpush2.bf16.msra.mxu0 0
    %7452 = vmatprep.subr.bf16.mxu0 0
    %7453 = vmatpush2.bf16.msra.mxu0 0
    %7454 = vmatprep.subr.bf16.mxu0 0
    %7455 = vmatpush2.bf16.msra.mxu0 0
    %7456 = vmatprep.subr.bf16.mxu0 0
    %7457 = vmatpush2.bf16.msra.mxu0 0
    %7458 = vmatprep.subr.bf16.mxu0 0
    %7459 = vmatpush2.bf16.msra.mxu0 0
    %7460 = vmatprep.subr.bf16.mxu0 0
    %7461 = vmatpush2.bf16.msra.mxu0 0
    %7462 = vmatprep.subr.bf16.mxu0 0
    %7463 = vmatpush2.bf16.msra.mxu0 0
    %7464 = vmatprep.subr.bf16.mxu0 0
    %7465 = vmatpush2.bf16.msra.mxu0 0
    %7466 = vmatprep.mubr.bf16.mxu0 0
    %7467 = vmatmul.mubr.bf16.gmra.mxu0 %v5307
    %v7468 = vpop.f32.mrf.mxu0
    %v7469 = vadd.f32 0.0, %v7468
    %v7470 = vpop.f32.mrf.mxu0
    %v7471 = vpop.f32.mrf.mxu0
    %v7472 = vadd.f32 0.0, %v7471
    %v7473 = vpop.f32.mrf.mxu0
    %7474 = vdwg.mxu0
    %7475 = vmatprep.subr.mxu0 0.0
    %7476 = vmatpush1.xpose.msra.mxu0 0.0
    %7477 = vmatprep.subr.mxu0 0.0
    %7478 = vmatpush1.xpose.msra.mxu0 0.0
    %7479 = vmatprep.subr.mxu0 0.0
    %7480 = vmatpush1.xpose.msra.mxu0 0.0
    %7481 = vmatprep.subr.mxu0 0.0
    %7482 = vmatpush1.xpose.msra.mxu0 0.0
    %7483 = vmatprep.subr.mxu0 0.0
    %7484 = vmatpush1.xpose.msra.mxu0 0.0
    %7485 = vmatprep.subr.mxu0 0.0
    %7486 = vmatpush1.xpose.msra.mxu0 0.0
    %7487 = vmatprep.subr.mxu0 0.0
    %7488 = vmatpush1.xpose.msra.mxu0 0.0
    %7489 = vmatprep.subr.mxu0 0.0
    %7490 = vmatpush1.xpose.msra.mxu0 0.0
    %7491 = vmatprep.subr.mxu0 0.0
    %7492 = vmatpush1.xpose.msra.mxu0 0.0
    %7493 = vmatprep.subr.mxu0 0.0
    %7494 = vmatpush1.xpose.msra.mxu0 0.0
    %7495 = vmatprep.subr.mxu0 0.0
    %7496 = vmatpush1.xpose.msra.mxu0 0.0
    %7497 = vmatprep.subr.mxu0 0.0
    %7498 = vmatpush1.xpose.msra.mxu0 0.0
    %7499 = vmatprep.subr.mxu0 0.0
    %7500 = vmatpush1.xpose.msra.mxu0 0.0
    %7501 = vmatprep.subr.mxu0 0.0
    %7502 = vmatpush1.xpose.msra.mxu0 0.0
    %7503 = vmatprep.subr.mxu0 0.0
    %7504 = vmatpush1.xpose.msra.mxu0 %v7472
    %7505 = vmatprep.subr.mxu0 0.0
    %7506 = vmatpush1.xpose.msra.mxu0 %v7469
    %7507 = vmatprep.subr.mxu0 0.0
    %7508 = vmatpush2.xpose.msra.mxu0 0.0
    %7509 = vmatprep.subr.mxu0 0.0
    %7510 = vmatpush2.xpose.msra.mxu0 0.0
    %7511 = vmatprep.subr.mxu0 0.0
    %7512 = vmatpush2.xpose.msra.mxu0 0.0
    %7513 = vmatprep.subr.mxu0 0.0
    %7514 = vmatpush2.xpose.msra.mxu0 0.0
    %7515 = vmatprep.subr.mxu0 0.0
    %7516 = vmatpush2.xpose.msra.mxu0 0.0
    %7517 = vmatprep.subr.mxu0 0.0
    %7518 = vmatpush2.xpose.msra.mxu0 0.0
    %7519 = vmatprep.subr.mxu0 0.0
    %7520 = vmatpush2.xpose.msra.mxu0 0.0
    %7521 = vmatprep.subr.mxu0 0.0
    %7522 = vmatpush2.xpose.msra.mxu0 0.0
    %7523 = vmatprep.subr.mxu0 0.0
    %7524 = vmatpush2.xpose.msra.mxu0 0.0
    %7525 = vmatprep.subr.mxu0 0.0
    %7526 = vmatpush2.xpose.msra.mxu0 0.0
    %7527 = vmatprep.subr.mxu0 0.0
    %7528 = vmatpush2.xpose.msra.mxu0 0.0
    %7529 = vmatprep.subr.mxu0 0.0
    %7530 = vmatpush2.xpose.msra.mxu0 0.0
    %7531 = vmatprep.subr.mxu0 0.0
    %7532 = vmatpush2.xpose.msra.mxu0 0.0
    %7533 = vmatprep.subr.mxu0 0.0
    %7534 = vmatpush2.xpose.msra.mxu0 0.0
    %7535 = vmatprep.subr.mxu0 0.0
    %7536 = vmatpush2.xpose.msra.mxu0 0.0
    %7537 = vmatprep.subr.mxu0 0.0
    %7538 = vmatpush2.xpose.msra.mxu0 0.0
    %7539 = vmatprep.mubr.f32.mxu0 0.0
    %7540 = vmatmul.mubr.f32.gmra.mxu0 %v7364
    %v7541 = vpop.f32.mrf.mxu0
    %v7542 = vadd.f32 0.0, %v7541
    %v7543 = vpop.f32.mrf.mxu0
    %7544 = vdwg.mxu0
    %v7545 = vtanh.pop %v7542
    %v7546 = vmul.f32 %v7545, 0.53333336
    %v7547 = vmul.f32 %v7546, %v169
    %v7548 = vmax.f32 %v7542, -10.0
    %v7549 = vmin.f32 %v7548, -2.0
    %v7550 = vmul.f32 %v7549, 1.442695
    %v7551 = vpow.pop %v7550
    %7553 = vrot.lane.b32.xlu0 %v7551, 16
    %v7554 = vpop.permute.xlu0 %7553
    %v7556 = vsel %vm569, %v7547, %v7554
    %v7557 = vsel %vm2148, %v7556, 0.0
    %7558 = vst [vmem:[#allocation17] sm:$0x3] %v7557
    %7559 = vst [vmem:[#allocation18] sm:$0x3] %v5139
    // Predicated region
    $region90: #{tpu_custom_call.1} parent=1 // pred_check
      _
    $region91: #{tpu_custom_call.1} parent=1 // pred_check_branch
      %7561 = sbr.rel (0) target = $region93
    $region92: #{tpu_custom_call.1} parent=1 // pred_region
      %s7563 = ssub.s32 32, 32
      %7564 = vsyncadd [#allocation4], %s7563
      %s7566 = sshll.u32 [#allocation17], 4
      %s7567 = int_to_ptr.vmem [resolvable:$true] %s7566
      %7569 = dma.vmem_to_hbm [thread:$0]  %s7567, 32, %s13, [#allocation4]
    $region93: #{tpu_custom_call.1} parent=1 // pred_fallthru
      _
    // Predicated region
    $region94: #{tpu_custom_call.1} parent=1 // pred_check
      _
    $region95: #{tpu_custom_call.1} parent=1 // pred_check_branch
      %7571 = sbr.rel (0) target = $region97
    $region96: #{tpu_custom_call.1} parent=1 // pred_region
      %s7573 = ssub.s32 32, 32
      %7574 = vsyncadd [#allocation19], %s7573
      %s7576 = sshll.u32 [#allocation18], 4
      %s7577 = int_to_ptr.vmem [resolvable:$true] %s7576
      %7579 = dma.vmem_to_hbm [thread:$0]  %s7577, 32, %s14, [#allocation19]
    $region97: #{tpu_custom_call.1} parent=1 // pred_fallthru
      _
    // Predicated region
    $region98: #{tpu_custom_call.1} parent=1 // pred_check
      _
    $region99: #{tpu_custom_call.1} parent=1 // pred_check_branch
      %7581 = sbr.rel (0) target = $region101
    $region100: #{tpu_custom_call.1} parent=1 // pred_region
      %7582 = dma.done [#allocation4], 32
    $region101: #{tpu_custom_call.1} parent=1 // pred_fallthru
      _
    // Predicated region
    $region102: #{tpu_custom_call.1} parent=1 // pred_check
      _
    $region103: #{tpu_custom_call.1} parent=1 // pred_check_branch
      %7584 = sbr.rel (0) target = $region105
    $region104: #{tpu_custom_call.1} parent=1 // pred_region
      %7585 = dma.done [#allocation19], 32
    $region105: #{tpu_custom_call.1} parent=1 // pred_fallthru
      _
    %7586 = vsyncpa [#allocation3], 1
    %7587 = vsyncpa [#allocation6], 1
    %7588 = vsyncpa [#allocation9], 1
    %7589 = vsyncpa [#allocation12], 1
    %7590 = vsyncpa [#allocation15], 1
    %7591 = vsyncpa [#allocation4], 1
    %7592 = vsyncpa [#allocation19], 1

</llo_original>
